<compile_context>
chip_gen: v7x
topology: tpu7x:2x2x1
jax: 0.10.0
libtpu: 0.0.40
codegen_flags: <defaults>
</compile_context>

<pallas_src>
import jax
import jax.numpy as jnp
from jax import lax
from jax.experimental import pallas as pl
from jax.experimental.pallas import tpu as pltpu

# ----------------------------- hyper-parameters -----------------------------
LSTM_HIDDEN = 32                           # lstm_hidden_dim
NUM_MODES = 20                             # num_modes
HIST = 8                                   # history length (scene[:, :8])
FUT = 12                                   # predicted timesteps
BATCH = 2                                  # num_peds in the example
B_TILE = 8                                 # batch rows per grid step (one sublane group)
ENC_DIM = 4 * LSTM_HIDDEN                  # 128 = 2*lstm_hidden*2 dirs
GRU_HID = 2 * NUM_MODES                    # 40
ACT_DIM = 12                               # self.action out_features
GRU_IN = ENC_DIM + ACT_DIM + NUM_MODES     # 160
FUSED_IN = 12                              # pav(6) + combined_neighbors(6)
FUSED_H = 4 * LSTM_HIDDEN                  # 128 = 4 LSTMs x 32

# decoder output lane layout (128 lanes per future step):
#  [mu_x(20)|mu_y(20)|sig_x(20)|sig_y(20)|corrs(20)|sample(2)|log_pis(20, step0 only)|pad(6)]
_LP_OFF = 5 * NUM_MODES + 2                # 102


def _sig(x):
    # sigmoid(x) == 0.5*tanh(0.5*x) + 0.5  -> single EUP push instead of exp + reciprocal
    return 0.5 * jnp.tanh(0.5 * x) + 0.5


# =============================== the fused Pallas kernel =============================
def _cvae_kernel(x_ref, noise_ref,
                 wih_f_ref, whh_f_ref, bf_ref, wih_r_ref, br_ref,
                 mlp_w1_ref, mlp_b1_ref, mlp_w2_ref, mlp_b2_ref,
                 gwih_enc_ref, gbih_ref, act_gru_w_ref, gwhh_ref, gbhh_ref,
                 head1_w_ref, head1_b_ref, head2_w_ref, head2_b_ref,
                 dec_ref, xproj_ref):
    f32 = jnp.float32
    Bp = noise_ref.shape[1]                        # batch rows in this tile
    M = NUM_MODES
    H = LSTM_HIDDEN
    FH = FUSED_H                                   # 128 fused LSTM hidden
    GH = GRU_HID                                   # 40 GRU hidden
    T = HIST

    x_all = x_ref[...]                             # (T*Bp, 12), time-major within the tile

    # ---- fused 4x bidirectional LSTM encoders (forward recurrence) ------------------
    # Hoisted input projection: one matmul for all timesteps, stored to VMEM scratch.
    xproj_ref[...] = (jnp.dot(x_all, wih_f_ref[...], preferred_element_type=f32)
                      + bf_ref[...])               # (T*Bp, 4*FH)

    h = jnp.zeros((Bp, FH), f32)
    c = jnp.zeros((Bp, FH), f32)
    for t in range(T):                             # fully unrolled serial recurrence
        g = (xproj_ref[pl.ds(t * Bp, Bp), :]
             + jnp.dot(h, whh_f_ref[...], preferred_element_type=f32))
        i_g = _sig(g[:, 0:FH])
        f_g = _sig(g[:, FH:2 * FH])
        g_g = jnp.tanh(g[:, 2 * FH:3 * FH])
        o_g = _sig(g[:, 3 * FH:4 * FH])
        c = f_g * c + i_g * g_g
        h = o_g * jnp.tanh(c)
    h_fwd = h

    # Reverse direction: only the hidden at t = T-1 is consumed downstream, which is a
    # single reverse cell on x[T-1] from zero state (c0 = 0 => forget unused; h0 = 0).
    x_last = x_all[(T - 1) * Bp:, :]               # (Bp, 12)
    gr = jnp.dot(x_last, wih_r_ref[...], preferred_element_type=f32) + br_ref[...]
    c_r = _sig(gr[:, 0:FH]) * jnp.tanh(gr[:, 2 * FH:3 * FH])
    h_rev = _sig(gr[:, 3 * FH:4 * FH]) * jnp.tanh(c_r)

    # encoded_history = [(poses+vel+acc) fwd | (poses+vel+acc) rev | edge fwd | edge rev]
    sum_f = h_fwd[:, 0:H] + h_fwd[:, H:2 * H] + h_fwd[:, 2 * H:3 * H]
    sum_r = h_rev[:, 0:H] + h_rev[:, H:2 * H] + h_rev[:, 2 * H:3 * H]
    enc = jnp.concatenate(
        [sum_f, sum_r, h_fwd[:, 3 * H:4 * H], h_rev[:, 3 * H:4 * H]], axis=-1)  # (Bp,128)

    # ---- fused proj_p / state MLPs ---------------------------------------------------
    h1 = _sig(jnp.dot(enc, mlp_w1_ref[...], preferred_element_type=f32) + mlp_b1_ref[...])
    h2 = jnp.dot(h1, mlp_w2_ref[...], preferred_element_type=f32) + mlp_b2_ref[...]
    p_logits = h2[:, 0:M]                                       # (Bp, 20)
    state = h2[:, M:M + GH]                                     # (Bp, 40)  GRU init state

    # ---- z ~ Categorical(p_logits) via Gumbel-max (lowest-index tie-break) -----------
    noise0 = noise_ref[0]                                       # (Bp, 128) one dense load
    col = lax.broadcasted_iota(jnp.int32, (Bp, M), 1).astype(f32)
    sc_z = p_logits + noise0[:, 0:M]
    zmax = jnp.max(sc_z, axis=-1, keepdims=True)
    zfirst = jnp.min(jnp.where(sc_z >= zmax, col, float(M)), axis=-1, keepdims=True)
    onehot = (col == zfirst).astype(f32)
    mmax = jnp.max(onehot, axis=-1, keepdims=True)
    log_pis = onehot - (jnp.log(jnp.sum(jnp.exp(onehot - mmax), axis=-1, keepdims=True))
                        + mmax)                                 # log_softmax(one_hot(z))

    # ---- 12-step autoregressive GRU decoder with fused GMM head + in-loop sampling ---
    # Loop-invariant GRU input-gate contribution (encoded history + folded action bias;
    # the one-hot lp part of the GRU input is multiplied by 0 in the reference).
    gi_enc = jnp.dot(enc, gwih_enc_ref[...], preferred_element_type=f32) + gbih_ref[...]
    aw0 = act_gru_w_ref[0:1, :]                                 # (1, 120) hoisted
    aw1 = act_gru_w_ref[1:2, :]

    lane80 = lax.broadcasted_iota(jnp.int32, (Bp, 4 * M), 1)
    is_mu = lane80 < 2 * M                                      # mu lanes of [dx|dy|lsx|lsy]
    lane40 = lax.broadcasted_iota(jnp.int32, (Bp, 2 * M), 1)
    lane_is_x = lane40 < M
    col40mod = jnp.where(lane_is_x, lane40, lane40 - M).astype(f32)
    pad6 = jnp.zeros((Bp, 128 - _LP_OFF - M), f32)              # step-0 tail pad
    pad26 = jnp.zeros((Bp, 128 - _LP_OFF), f32)                 # other-step tail pad
    sig_lo = 0.001 ** 0.5
    sig_hi = 1000.0 ** 0.5

    cs0 = x_last[:, 0:2]                                        # poses at t = 7
    ax_prev = cs0[:, 0:1]                                       # action Linear folded away
    ay_prev = cs0[:, 1:2]
    cs_xy = jnp.where(lane80 < M, ax_prev,
                      jnp.where(is_mu, ay_prev, 0.0))           # (Bp,80): [cs_x|cs_y|0|0]

    for i in range(FUT):                                        # fully unrolled
        # GRUCell (PyTorch gate order r, z, n); action->GRU projection is 2 VPU FMAs
        gi = gi_enc + ax_prev * aw0 + ay_prev * aw1
        gh = jnp.dot(state, gwhh_ref[...], preferred_element_type=f32) + gbhh_ref[...]
        r_g = _sig(gi[:, 0:GH] + gh[:, 0:GH])
        z_g = _sig(gi[:, GH:2 * GH] + gh[:, GH:2 * GH])
        n_g = jnp.tanh(gi[:, 2 * GH:3 * GH] + r_g * gh[:, 2 * GH:3 * GH])
        h_state = (1.0 - z_g) * n_g + z_g * state

        # fused GMM head: [mus_l1 | ls_l1 | corr] then block-diag [mus_l2 | ls_l2]
        h1d = (jnp.dot(h_state, head1_w_ref[...], preferred_element_type=f32)
               + head1_b_ref[...])                               # (Bp, 100)
        hid = _sig(h1d[:, 0:2 * GH])                             # (Bp, 80)
        corrs = jnp.tanh(h1d[:, 2 * GH:2 * GH + M])              # (Bp, 20)
        h2d = (jnp.dot(hid, head2_w_ref[...], preferred_element_type=f32)
               + head2_b_ref[...])                               # (Bp, 80) = [dx|dy|lsx|lsy]
        # single lane-masked post-processing pass over the 80-lane block:
        #   mu lanes:  clamp(delta, +-1.5) + current_state
        #   sig lanes: clamp(exp(log_sigma), sqrt(.001), sqrt(1000))  (== sqrt(clamped var))
        musig = jnp.where(is_mu,
                          jnp.clip(h2d, -1.5, 1.5) + cs_xy,
                          jnp.clip(jnp.exp(h2d), sig_lo, sig_hi))

        # a_t ~ MixtureSameFamily(Categorical(log_pis), MVN(mu, diag(sig^2)))
        row = noise_ref[1 + i]                                   # (Bp, 128) one dense load
        sc = log_pis + row[:, 0:M]
        smax = jnp.max(sc, axis=-1, keepdims=True)
        first = jnp.min(jnp.where(sc >= smax, col, float(M)), axis=-1, keepdims=True)
        sel40 = (col40mod == first).astype(f32)                  # one-hot mode, tiled x|y
        eps40 = jnp.where(lane_is_x, row[:, M:M + 1], row[:, M + 1:M + 2])
        val = sel40 * (musig[:, 0:2 * M] + musig[:, 2 * M:4 * M] * eps40)
        a_x = jnp.sum(val[:, 0:M], axis=-1, keepdims=True)
        a_y = jnp.sum(val[:, M:2 * M], axis=-1, keepdims=True)
        a_t = jnp.concatenate([a_x, a_y], axis=-1)               # (Bp, 2)

        # one lane-dense 128-wide store per step; log_pis rides in step 0's pad lanes
        if i == 0:
            dec_ref[i] = jnp.concatenate([musig, corrs, a_t, log_pis, pad6], axis=-1)
        else:
            dec_ref[i] = jnp.concatenate([musig, corrs, a_t, pad26], axis=-1)

        cs_xy = jnp.where(is_mu, musig, 0.0)
        state = h_state
        ax_prev = a_x
        ay_prev = a_y


# =============================== weight packing (done once) ==========================
def _pack_bidir_lstm(params, d):
    """Block-diagonal fusion of 4 LSTMs; gates grouped by type: [i|f|g|o] x [poses|vel|acc|edge]."""
    H = LSTM_HIDDEN
    FH = FUSED_H
    wih = jnp.zeros((FUSED_IN, 4 * FH), jnp.float32)
    whh = jnp.zeros((FH, 4 * FH), jnp.float32)
    bias = jnp.zeros((4 * FH,), jnp.float32)
    # fused input cols: [poses(0:2) vel(2:4) acc(4:6) neighbors(6:12)]
    specs = [
        ("poses", [(slice(0, 2), slice(0, 2))]),
        ("vel", [(slice(2, 4), slice(0, 2))]),
        ("acc", [(slice(4, 6), slice(0, 2))]),
        # edge LSTM's PyTorch input order is [neighbors(0:6), pav(6:12)]
        ("edge", [(slice(0, 6), slice(6, 12)), (slice(6, 12), slice(0, 6))]),
    ]
    for k, (name, rowmaps) in enumerate(specs):
        w_ih, w_hh, b_ih, b_hh = params[f"lstm_{name}_{d}"]
        wiT = w_ih.T                        # (Din, 4H) gate blocks [i f g o]
        whT = w_hh.T                        # (H, 4H)
        bsum = b_ih + b_hh
        for gi in range(4):
            cols = slice(gi * FH + k * H, gi * FH + (k + 1) * H)
            src = slice(gi * H, (gi + 1) * H)
            for frows, srows in rowmaps:
                wih = wih.at[frows, cols].set(wiT[srows, src])
            whh = whh.at[k * H:(k + 1) * H, cols].set(whT[:, src])
            bias = bias.at[cols].set(bsum[src])
    return wih, whh, bias.reshape(1, -1)


def prepare_params(params):
    """Pack PyTorch-layout parameters into kernel-ready fused arrays (run once at init)."""
    M = NUM_MODES
    fused = {}
    wih_f, whh_f, bf = _pack_bidir_lstm(params, "f")
    wih_r, _, br = _pack_bidir_lstm(params, "r")     # reverse W_hh unused (single step, h0=0)
    fused.update(wih_f=wih_f, whh_f=whh_f, bf=bf, wih_r=wih_r, br=br)

    # proj_p / state MLPs fused: concat first layer, block-diag second layer
    w1p, b1p = params["projp_l1"]
    w2p, b2p = params["projp_l2"]
    w1s, b1s = params["state_l1"]
    w2s, b2s = params["state_l2"]
    fused["mlp_w1"] = jnp.concatenate([w1p.T, w1s.T], axis=1)            # (128, 256)
    fused["mlp_b1"] = jnp.concatenate([b1p, b1s]).reshape(1, -1)
    w2 = jnp.zeros((2 * ENC_DIM, M + GRU_HID), jnp.float32)
    w2 = w2.at[0:ENC_DIM, 0:M].set(w2p.T).at[ENC_DIM:, M:].set(w2s.T)    # (256, 60)
    fused["mlp_w2"] = w2
    fused["mlp_b2"] = jnp.concatenate([b2p, b2s]).reshape(1, -1)

    # GRU input projection; the action Linear(2->12) is folded in algebraically
    # (a = x@act_w.T + act_b feeds only the GRU input matmul -> one combined (2,120) weight).
    aw, ab = params["action"]                                            # (12,2), (12,)
    gwih = params["gru_w_ih"].T                                          # (160, 120)
    gwih_a = gwih[ENC_DIM:ENC_DIM + ACT_DIM, :]                          # lp rows: 0*lp
    fused["gwih_enc"] = gwih[0:ENC_DIM, :]
    fused["act_gru_w"] = aw.T @ gwih_a                                   # (2, 120)
    fused["gbih"] = (params["gru_b_ih"] + ab @ gwih_a).reshape(1, -1)
    fused["gwhh"] = params["gru_w_hh"].T                                 # (40, 120)
    fused["gbhh"] = params["gru_b_hh"].reshape(1, -1)

    # GMM head fusion; permute mus_l2 / ls_l2 output rows so x/y come out de-interleaved
    mw1, mb1 = params["mus_l1"]
    mw2, mb2 = params["mus_l2"]
    lw1, lb1 = params["ls_l1"]
    lw2, lb2 = params["ls_l2"]
    cw, cb = params["corr"]
    fused["head1_w"] = jnp.concatenate([mw1.T, lw1.T, cw.T], axis=1)     # (40, 100)
    fused["head1_b"] = jnp.concatenate([mb1, lb1, cb]).reshape(1, -1)
    perm = jnp.concatenate([jnp.arange(0, 2 * M, 2), jnp.arange(1, 2 * M, 2)])
    h2w = jnp.zeros((2 * GRU_HID, 2 * GRU_HID), jnp.float32)
    h2w = h2w.at[0:GRU_HID, 0:GRU_HID].set(mw2[perm, :].T)
    h2w = h2w.at[GRU_HID:, GRU_HID:].set(lw2[perm, :].T)                 # (80, 80)
    fused["head2_w"] = h2w
    fused["head2_b"] = jnp.concatenate([mb2[perm], lb2[perm]]).reshape(1, -1)
    return fused


_WEIGHT_ORDER = ("wih_f", "whh_f", "bf", "wih_r", "br",
                 "mlp_w1", "mlp_b1", "mlp_w2", "mlp_b2",
                 "gwih_enc", "gbih", "act_gru_w", "gwhh", "gbhh",
                 "head1_w", "head1_b", "head2_w", "head2_b")


def _full_spec(a):
    zeros = (0,) * a.ndim
    return pl.BlockSpec(a.shape, lambda b: zeros)        # same weight block for every tile


# =============================== forward (single pallas_call) ========================
def cvae_future_forward(scene, neighbors, fused, key):
    """Inference forward (train=False).  scene: (B, HIST+FUT, 6); neighbors: list of
    (n_i, HIST, 6) arrays.  Returns GMM parameters + per-step samples for 12 future steps."""
    scene = scene.astype(jnp.float32)
    Bn = scene.shape[0]
    n_tiles = pl.cdiv(Bn, B_TILE)
    NB = n_tiles * B_TILE
    M = NUM_MODES

    pav = scene[:, :HIST, 0:6]
    combined = jnp.stack([jnp.sum(n, axis=0) for n in neighbors], axis=0).astype(jnp.float32)
    x = jnp.concatenate([pav, combined], axis=-1)                # (B, T, 12)
    x = jnp.transpose(x, (1, 0, 2))                              # (T, B, 12) time-major
    x = jnp.pad(x, ((0, 0), (0, NB - Bn), (0, 0)))               # pad batch to tile multiple
    x = x.reshape(HIST, n_tiles, B_TILE, FUSED_IN)
    x = jnp.transpose(x, (1, 0, 2, 3)).reshape(n_tiles, HIST * B_TILE, FUSED_IN)

    # all random draws packed into ONE lane-dense (1+FUT, NB, 128) tensor:
    #   row 0 lanes 0:M       -> Gumbel noise for z ~ Categorical(p_logits)
    #   row 1+i lanes 0:M     -> Gumbel noise for the per-step mode pick
    #   row 1+i lanes M:M+2   -> N(0,1) noise for the per-step MVN sample
    gkey, nkey = jax.random.split(key, 2)
    g_all = jax.random.gumbel(gkey, (1 + FUT, NB, M), jnp.float32)
    eps = jax.random.normal(nkey, (FUT, NB, 2), jnp.float32)
    noise = jnp.zeros((1 + FUT, NB, 128), jnp.float32)
    noise = noise.at[:, :, 0:M].set(g_all)
    noise = noise.at[1:, :, M:M + 2].set(eps)

    weights = [fused[k] for k in _WEIGHT_ORDER]

    dec = pl.pallas_call(
        _cvae_kernel,
        out_shape=jax.ShapeDtypeStruct((FUT, NB, 128), jnp.float32),
        grid_spec=pltpu.PrefetchScalarGridSpec(
            num_scalar_prefetch=0,
            grid=(n_tiles,),
            in_specs=[pl.BlockSpec((None, HIST * B_TILE, FUSED_IN), lambda b: (b, 0, 0)),
                      pl.BlockSpec((1 + FUT, B_TILE, 128), lambda b: (0, b, 0))]
                     + [_full_spec(w) for w in weights],
            out_specs=pl.BlockSpec((FUT, B_TILE, 128), lambda b: (0, b, 0)),
            scratch_shapes=[pltpu.VMEM((HIST * B_TILE, 4 * FUSED_H), jnp.float32)]),
        compiler_params=pltpu.CompilerParams(dimension_semantics=("parallel",)),
    )(x, noise, *weights)

    d = dec[:, :Bn, :]
    mus = jnp.stack([d[..., 0:M], d[..., M:2 * M]], axis=-1)             # (FUT, B, M, 2)
    sig = jnp.stack([d[..., 2 * M:3 * M], d[..., 3 * M:4 * M]], axis=-1)  # (FUT, B, M, 2)
    corrs = d[..., 4 * M:5 * M]                                          # (FUT, B, M)
    samples = d[..., 5 * M:5 * M + 2]                                    # (FUT, B, 2)
    log_pis = dec[0, :Bn, _LP_OFF:_LP_OFF + M]                           # (B, M)
    z = jnp.argmax(log_pis, axis=-1)
    return {"mus": mus, "scale_diag": sig, "corrs": corrs,
            "log_pis": log_pis, "samples": samples, "z": z}


# =============================== parameter init =====================================
def init_params(key):
    params = {}
    keys = [key]

    def nxt():
        keys[0], sub = jax.random.split(keys[0])
        return sub

    def lin(out_f, in_f):
        w = jax.random.normal(nxt(), (out_f, in_f), jnp.float32) * 0.1
        b = jax.random.normal(nxt(), (out_f,), jnp.float32) * 0.1
        return (w, b)

    H = LSTM_HIDDEN
    for name, din in (("vel", 2), ("poses", 2), ("acc", 2), ("edge", 12)):
        for d in ("f", "r"):
            params[f"lstm_{name}_{d}"] = (
                jax.random.normal(nxt(), (4 * H, din), jnp.float32) * 0.1,  # w_ih
                jax.random.normal(nxt(), (4 * H, H), jnp.float32) * 0.1,    # w_hh
                jax.random.normal(nxt(), (4 * H,), jnp.float32) * 0.1,      # b_ih
                jax.random.normal(nxt(), (4 * H,), jnp.float32) * 0.1,      # b_hh
            )
    params["action"] = lin(ACT_DIM, 2)
    params["state_l1"] = lin(ENC_DIM, ENC_DIM)
    params["state_l2"] = lin(GRU_HID, ENC_DIM)
    params["projp_l1"] = lin(ENC_DIM, ENC_DIM)
    params["projp_l2"] = lin(NUM_MODES, ENC_DIM)
    params["gru_w_ih"] = jax.random.normal(nxt(), (3 * GRU_HID, GRU_IN), jnp.float32) * 0.1
    params["gru_w_hh"] = jax.random.normal(nxt(), (3 * GRU_HID, GRU_HID), jnp.float32) * 0.1
    params["gru_b_ih"] = jax.random.normal(nxt(), (3 * GRU_HID,), jnp.float32) * 0.1
    params["gru_b_hh"] = jax.random.normal(nxt(), (3 * GRU_HID,), jnp.float32) * 0.1
    params["mus_l1"] = lin(GRU_HID, GRU_HID)
    params["mus_l2"] = lin(GRU_HID, GRU_HID)
    params["ls_l1"] = lin(GRU_HID, GRU_HID)
    params["ls_l2"] = lin(GRU_HID, GRU_HID)
    params["corr"] = lin(NUM_MODES, GRU_HID)
    return params


if __name__ == "__main__":
    root = jax.random.PRNGKey(0)
    pkey, skey, n1key, n2key, fkey = jax.random.split(root, 5)
    params = init_params(pkey)
    fused = prepare_params(params)                      # kernel-layout weights, packed once
    scene = jax.random.normal(skey, (BATCH, HIST + FUT, 6), jnp.float32)
    neighbors = [
        jax.random.normal(n1key, (3, HIST, 6), jnp.float32),
        jax.random.normal(n2key, (2, HIST, 6), jnp.float32),
    ]
    fwd = jax.jit(cvae_future_forward)
    out = fwd(scene, neighbors, fused, fkey)
    out = jax.tree_util.tree_map(jax.block_until_ready, out)
    print("KERNEL_OK")
</pallas_src>

<mosaic_0001>
module attributes {stable_mosaic.version = 11 : i64} {
  func.func @_cvae_kernel(%arg0: i32, %arg1: memref<1x64x12xf32, #tpu.memory_space<vmem>>, %arg2: memref<13x8x128xf32, #tpu.memory_space<vmem>>, %arg3: memref<12x512xf32, #tpu.memory_space<vmem>>, %arg4: memref<128x512xf32, #tpu.memory_space<vmem>>, %arg5: memref<1x512xf32, #tpu.memory_space<vmem>>, %arg6: memref<12x512xf32, #tpu.memory_space<vmem>>, %arg7: memref<1x512xf32, #tpu.memory_space<vmem>>, %arg8: memref<128x256xf32, #tpu.memory_space<vmem>>, %arg9: memref<1x256xf32, #tpu.memory_space<vmem>>, %arg10: memref<256x60xf32, #tpu.memory_space<vmem>>, %arg11: memref<1x60xf32, #tpu.memory_space<vmem>>, %arg12: memref<128x120xf32, #tpu.memory_space<vmem>>, %arg13: memref<1x120xf32, #tpu.memory_space<vmem>>, %arg14: memref<2x120xf32, #tpu.memory_space<vmem>>, %arg15: memref<40x120xf32, #tpu.memory_space<vmem>>, %arg16: memref<1x120xf32, #tpu.memory_space<vmem>>, %arg17: memref<40x100xf32, #tpu.memory_space<vmem>>, %arg18: memref<1x100xf32, #tpu.memory_space<vmem>>, %arg19: memref<80x80xf32, #tpu.memory_space<vmem>>, %arg20: memref<1x80xf32, #tpu.memory_space<vmem>>, %arg21: memref<12x8x128xf32, #tpu.memory_space<vmem>>, %arg22: memref<64x512xf32, #tpu.memory_space<vmem>>) attributes {dimension_semantics = [#tpu.dimension_semantics<parallel>], iteration_bounds = array<i64: 1>, scalar_prefetch = 0 : i64, scratch_operands = 1 : i64, tpu.core_type = #tpu.core_type<tc>, window_params = [{transform_indices = @transform_0, window_bounds = array<i64: 1, 64, 12>}, {transform_indices = @transform_1, window_bounds = array<i64: 13, 8, 128>}, {pipeline_mode = #tpu.pipeline_mode<synchronous>, transform_indices = @transform_2, window_bounds = array<i64: 12, 512>}, {pipeline_mode = #tpu.pipeline_mode<synchronous>, transform_indices = @transform_3, window_bounds = array<i64: 128, 512>}, {pipeline_mode = #tpu.pipeline_mode<synchronous>, transform_indices = @transform_4, window_bounds = array<i64: 1, 512>}, {pipeline_mode = #tpu.pipeline_mode<synchronous>, transform_indices = @transform_5, window_bounds = array<i64: 12, 512>}, {pipeline_mode = #tpu.pipeline_mode<synchronous>, transform_indices = @transform_6, window_bounds = array<i64: 1, 512>}, {pipeline_mode = #tpu.pipeline_mode<synchronous>, transform_indices = @transform_7, window_bounds = array<i64: 128, 256>}, {pipeline_mode = #tpu.pipeline_mode<synchronous>, transform_indices = @transform_8, window_bounds = array<i64: 1, 256>}, {pipeline_mode = #tpu.pipeline_mode<synchronous>, transform_indices = @transform_9, window_bounds = array<i64: 256, 60>}, {pipeline_mode = #tpu.pipeline_mode<synchronous>, transform_indices = @transform_10, window_bounds = array<i64: 1, 60>}, {pipeline_mode = #tpu.pipeline_mode<synchronous>, transform_indices = @transform_11, window_bounds = array<i64: 128, 120>}, {pipeline_mode = #tpu.pipeline_mode<synchronous>, transform_indices = @transform_12, window_bounds = array<i64: 1, 120>}, {pipeline_mode = #tpu.pipeline_mode<synchronous>, transform_indices = @transform_13, window_bounds = array<i64: 2, 120>}, {pipeline_mode = #tpu.pipeline_mode<synchronous>, transform_indices = @transform_14, window_bounds = array<i64: 40, 120>}, {pipeline_mode = #tpu.pipeline_mode<synchronous>, transform_indices = @transform_15, window_bounds = array<i64: 1, 120>}, {pipeline_mode = #tpu.pipeline_mode<synchronous>, transform_indices = @transform_16, window_bounds = array<i64: 40, 100>}, {pipeline_mode = #tpu.pipeline_mode<synchronous>, transform_indices = @transform_17, window_bounds = array<i64: 1, 100>}, {pipeline_mode = #tpu.pipeline_mode<synchronous>, transform_indices = @transform_18, window_bounds = array<i64: 80, 80>}, {pipeline_mode = #tpu.pipeline_mode<synchronous>, transform_indices = @transform_19, window_bounds = array<i64: 1, 80>}, {transform_indices = @transform_20, window_bounds = array<i64: 12, 8, 128>}]} {
    %c0 = arith.constant 0 : index
    %c0_0 = arith.constant 0 : index
    %c0_1 = arith.constant 0 : index
    %0 = vector.load %arg1[%c0, %c0_0, %c0_1] : memref<1x64x12xf32, #tpu.memory_space<vmem>>, vector<1x64x12xf32>
    %1 = vector.shape_cast %0 : vector<1x64x12xf32> to vector<64x12xf32>
    %c0_2 = arith.constant 0 : index
    %c0_3 = arith.constant 0 : index
    %2 = vector.load %arg3[%c0_2, %c0_3] : memref<12x512xf32, #tpu.memory_space<vmem>>, vector<12x512xf32>
    %cst = arith.constant dense<0.000000e+00> : vector<64x512xf32>
    %3 = tpu.matmul %1, %2, %cst {dimension_numbers = #tpu.dot_dimension_numbers<[1], [0], [0], [1], [0, 0, 1, 1], [], []>} : vector<64x12xf32>, vector<12x512xf32>, vector<64x512xf32> -> vector<64x512xf32>
    %c0_4 = arith.constant 0 : index
    %c0_5 = arith.constant 0 : index
    %4 = vector.load %arg5[%c0_4, %c0_5] : memref<1x512xf32, #tpu.memory_space<vmem>>, vector<1x512xf32>
    %5 = vector.broadcast %4 : vector<1x512xf32> to vector<64x512xf32>
    %6 = arith.addf %3, %5 : vector<64x512xf32>
    %c0_6 = arith.constant 0 : index
    %c0_7 = arith.constant 0 : index
    %7 = vector.load %arg22[%c0_6, %c0_7] : memref<64x512xf32, #tpu.memory_space<vmem>>, vector<64x512xf32>
    tpu.vector_store %arg22[%c0_6, %c0_7], %6 {strides = array<i32>} : memref<64x512xf32, #tpu.memory_space<vmem>>, vector<64x512xf32>,
    %cst_8 = arith.constant 0.000000e+00 : f32
    %8 = vector.broadcast %cst_8 : f32 to vector<8x128xf32>
    %cst_9 = arith.constant 0.000000e+00 : f32
    %9 = vector.broadcast %cst_9 : f32 to vector<8x128xf32>
    %c0_10 = arith.constant 0 : index
    %c0_11 = arith.constant 0 : index
    %10 = vector.load %arg22[%c0_10, %c0_11] : memref<64x512xf32, #tpu.memory_space<vmem>>, vector<8x512xf32>
    %c0_12 = arith.constant 0 : index
    %c0_13 = arith.constant 0 : index
    %11 = vector.load %arg4[%c0_12, %c0_13] : memref<128x512xf32, #tpu.memory_space<vmem>>, vector<128x512xf32>
    %cst_14 = arith.constant dense<0.000000e+00> : vector<8x512xf32>
    %12 = tpu.matmul %8, %11, %cst_14 {dimension_numbers = #tpu.dot_dimension_numbers<[1], [0], [0], [1], [0, 0, 1, 1], [], []>} : vector<8x128xf32>, vector<128x512xf32>, vector<8x512xf32> -> vector<8x512xf32>
    %13 = arith.addf %10, %12 : vector<8x512xf32>
    %14 = vector.extract_strided_slice %13 {offsets = [0, 0], sizes = [8, 128], strides = [1, 1]} : vector<8x512xf32> to vector<8x128xf32>
    %cst_15 = arith.constant 5.000000e-01 : f32
    %15 = vector.broadcast %cst_15 : f32 to vector<8x128xf32>
    %16 = arith.mulf %15, %14 : vector<8x128xf32>
    %17 = math.tanh %16 : vector<8x128xf32>
    %cst_16 = arith.constant 5.000000e-01 : f32
    %18 = vector.broadcast %cst_16 : f32 to vector<8x128xf32>
    %19 = arith.mulf %18, %17 : vector<8x128xf32>
    %cst_17 = arith.constant 5.000000e-01 : f32
    %20 = vector.broadcast %cst_17 : f32 to vector<8x128xf32>
    %21 = arith.addf %19, %20 : vector<8x128xf32>
    %22 = vector.extract_strided_slice %13 {offsets = [0, 128], sizes = [8, 128], strides = [1, 1]} : vector<8x512xf32> to vector<8x128xf32>
    %cst_18 = arith.constant 5.000000e-01 : f32
    %23 = vector.broadcast %cst_18 : f32 to vector<8x128xf32>
    %24 = arith.mulf %23, %22 : vector<8x128xf32>
    %25 = math.tanh %24 : vector<8x128xf32>
    %cst_19 = arith.constant 5.000000e-01 : f32
    %26 = vector.broadcast %cst_19 : f32 to vector<8x128xf32>
    %27 = arith.mulf %26, %25 : vector<8x128xf32>
    %cst_20 = arith.constant 5.000000e-01 : f32
    %28 = vector.broadcast %cst_20 : f32 to vector<8x128xf32>
    %29 = arith.addf %27, %28 : vector<8x128xf32>
    %30 = vector.extract_strided_slice %13 {offsets = [0, 256], sizes = [8, 128], strides = [1, 1]} : vector<8x512xf32> to vector<8x128xf32>
    %31 = math.tanh %30 : vector<8x128xf32>
    %32 = vector.extract_strided_slice %13 {offsets = [0, 384], sizes = [8, 128], strides = [1, 1]} : vector<8x512xf32> to vector<8x128xf32>
    %cst_21 = arith.constant 5.000000e-01 : f32
    %33 = vector.broadcast %cst_21 : f32 to vector<8x128xf32>
    %34 = arith.mulf %33, %32 : vector<8x128xf32>
    %35 = math.tanh %34 : vector<8x128xf32>
    %cst_22 = arith.constant 5.000000e-01 : f32
    %36 = vector.broadcast %cst_22 : f32 to vector<8x128xf32>
    %37 = arith.mulf %36, %35 : vector<8x128xf32>
    %cst_23 = arith.constant 5.000000e-01 : f32
    %38 = vector.broadcast %cst_23 : f32 to vector<8x128xf32>
    %39 = arith.addf %37, %38 : vector<8x128xf32>
    %40 = arith.mulf %29, %9 : vector<8x128xf32>
    %41 = arith.mulf %21, %31 : vector<8x128xf32>
    %42 = arith.addf %40, %41 : vector<8x128xf32>
    %43 = math.tanh %42 : vector<8x128xf32>
    %44 = arith.mulf %39, %43 : vector<8x128xf32>
    %c8 = arith.constant 8 : index
    %c0_24 = arith.constant 0 : index
    %45 = vector.load %arg22[%c8, %c0_24] : memref<64x512xf32, #tpu.memory_space<vmem>>, vector<8x512xf32>
    %c0_25 = arith.constant 0 : index
    %c0_26 = arith.constant 0 : index
    %46 = vector.load %arg4[%c0_25, %c0_26] : memref<128x512xf32, #tpu.memory_space<vmem>>, vector<128x512xf32>
    %cst_27 = arith.constant dense<0.000000e+00> : vector<8x512xf32>
    %47 = tpu.matmul %44, %46, %cst_27 {dimension_numbers = #tpu.dot_dimension_numbers<[1], [0], [0], [1], [0, 0, 1, 1], [], []>} : vector<8x128xf32>, vector<128x512xf32>, vector<8x512xf32> -> vector<8x512xf32>
    %48 = arith.addf %45, %47 : vector<8x512xf32>
    %49 = vector.extract_strided_slice %48 {offsets = [0, 0], sizes = [8, 128], strides = [1, 1]} : vector<8x512xf32> to vector<8x128xf32>
    %cst_28 = arith.constant 5.000000e-01 : f32
    %50 = vector.broadcast %cst_28 : f32 to vector<8x128xf32>
    %51 = arith.mulf %50, %49 : vector<8x128xf32>
    %52 = math.tanh %51 : vector<8x128xf32>
    %cst_29 = arith.constant 5.000000e-01 : f32
    %53 = vector.broadcast %cst_29 : f32 to vector<8x128xf32>
    %54 = arith.mulf %53, %52 : vector<8x128xf32>
    %cst_30 = arith.constant 5.000000e-01 : f32
    %55 = vector.broadcast %cst_30 : f32 to vector<8x128xf32>
    %56 = arith.addf %54, %55 : vector<8x128xf32>
    %57 = vector.extract_strided_slice %48 {offsets = [0, 128], sizes = [8, 128], strides = [1, 1]} : vector<8x512xf32> to vector<8x128xf32>
    %cst_31 = arith.constant 5.000000e-01 : f32
    %58 = vector.broadcast %cst_31 : f32 to vector<8x128xf32>
    %59 = arith.mulf %58, %57 : vector<8x128xf32>
    %60 = math.tanh %59 : vector<8x128xf32>
    %cst_32 = arith.constant 5.000000e-01 : f32
    %61 = vector.broadcast %cst_32 : f32 to vector<8x128xf32>
    %62 = arith.mulf %61, %60 : vector<8x128xf32>
    %cst_33 = arith.constant 5.000000e-01 : f32
    %63 = vector.broadcast %cst_33 : f32 to vector<8x128xf32>
    %64 = arith.addf %62, %63 : vector<8x128xf32>
    %65 = vector.extract_strided_slice %48 {offsets = [0, 256], sizes = [8, 128], strides = [1, 1]} : vector<8x512xf32> to vector<8x128xf32>
    %66 = math.tanh %65 : vector<8x128xf32>
    %67 = vector.extract_strided_slice %48 {offsets = [0, 384], sizes = [8, 128], strides = [1, 1]} : vector<8x512xf32> to vector<8x128xf32>
    %cst_34 = arith.constant 5.000000e-01 : f32
    %68 = vector.broadcast %cst_34 : f32 to vector<8x128xf32>
    %69 = arith.mulf %68, %67 : vector<8x128xf32>
    %70 = math.tanh %69 : vector<8x128xf32>
    %cst_35 = arith.constant 5.000000e-01 : f32
    %71 = vector.broadcast %cst_35 : f32 to vector<8x128xf32>
    %72 = arith.mulf %71, %70 : vector<8x128xf32>
    %cst_36 = arith.constant 5.000000e-01 : f32
    %73 = vector.broadcast %cst_36 : f32 to vector<8x128xf32>
    %74 = arith.addf %72, %73 : vector<8x128xf32>
    %75 = arith.mulf %64, %42 : vector<8x128xf32>
    %76 = arith.mulf %56, %66 : vector<8x128xf32>
    %77 = arith.addf %75, %76 : vector<8x128xf32>
    %78 = math.tanh %77 : vector<8x128xf32>
    %79 = arith.mulf %74, %78 : vector<8x128xf32>
    %c16 = arith.constant 16 : index
    %c0_37 = arith.constant 0 : index
    %80 = vector.load %arg22[%c16, %c0_37] : memref<64x512xf32, #tpu.memory_space<vmem>>, vector<8x512xf32>
    %c0_38 = arith.constant 0 : index
    %c0_39 = arith.constant 0 : index
    %81 = vector.load %arg4[%c0_38, %c0_39] : memref<128x512xf32, #tpu.memory_space<vmem>>, vector<128x512xf32>
    %cst_40 = arith.constant dense<0.000000e+00> : vector<8x512xf32>
    %82 = tpu.matmul %79, %81, %cst_40 {dimension_numbers = #tpu.dot_dimension_numbers<[1], [0], [0], [1], [0, 0, 1, 1], [], []>} : vector<8x128xf32>, vector<128x512xf32>, vector<8x512xf32> -> vector<8x512xf32>
    %83 = arith.addf %80, %82 : vector<8x512xf32>
    %84 = vector.extract_strided_slice %83 {offsets = [0, 0], sizes = [8, 128], strides = [1, 1]} : vector<8x512xf32> to vector<8x128xf32>
    %cst_41 = arith.constant 5.000000e-01 : f32
    %85 = vector.broadcast %cst_41 : f32 to vector<8x128xf32>
    %86 = arith.mulf %85, %84 : vector<8x128xf32>
    %87 = math.tanh %86 : vector<8x128xf32>
    %cst_42 = arith.constant 5.000000e-01 : f32
    %88 = vector.broadcast %cst_42 : f32 to vector<8x128xf32>
    %89 = arith.mulf %88, %87 : vector<8x128xf32>
    %cst_43 = arith.constant 5.000000e-01 : f32
    %90 = vector.broadcast %cst_43 : f32 to vector<8x128xf32>
    %91 = arith.addf %89, %90 : vector<8x128xf32>
    %92 = vector.extract_strided_slice %83 {offsets = [0, 128], sizes = [8, 128], strides = [1, 1]} : vector<8x512xf32> to vector<8x128xf32>
    %cst_44 = arith.constant 5.000000e-01 : f32
    %93 = vector.broadcast %cst_44 : f32 to vector<8x128xf32>
    %94 = arith.mulf %93, %92 : vector<8x128xf32>
    %95 = math.tanh %94 : vector<8x128xf32>
    %cst_45 = arith.constant 5.000000e-01 : f32
    %96 = vector.broadcast %cst_45 : f32 to vector<8x128xf32>
    %97 = arith.mulf %96, %95 : vector<8x128xf32>
    %cst_46 = arith.constant 5.000000e-01 : f32
    %98 = vector.broadcast %cst_46 : f32 to vector<8x128xf32>
    %99 = arith.addf %97, %98 : vector<8x128xf32>
    %100 = vector.extract_strided_slice %83 {offsets = [0, 256], sizes = [8, 128], strides = [1, 1]} : vector<8x512xf32> to vector<8x128xf32>
    %101 = math.tanh %100 : vector<8x128xf32>
    %102 = vector.extract_strided_slice %83 {offsets = [0, 384], sizes = [8, 128], strides = [1, 1]} : vector<8x512xf32> to vector<8x128xf32>
    %cst_47 = arith.constant 5.000000e-01 : f32
    %103 = vector.broadcast %cst_47 : f32 to vector<8x128xf32>
    %104 = arith.mulf %103, %102 : vector<8x128xf32>
    %105 = math.tanh %104 : vector<8x128xf32>
    %cst_48 = arith.constant 5.000000e-01 : f32
    %106 = vector.broadcast %cst_48 : f32 to vector<8x128xf32>
    %107 = arith.mulf %106, %105 : vector<8x128xf32>
    %cst_49 = arith.constant 5.000000e-01 : f32
    %108 = vector.broadcast %cst_49 : f32 to vector<8x128xf32>
    %109 = arith.addf %107, %108 : vector<8x128xf32>
    %110 = arith.mulf %99, %77 : vector<8x128xf32>
    %111 = arith.mulf %91, %101 : vector<8x128xf32>
    %112 = arith.addf %110, %111 : vector<8x128xf32>
    %113 = math.tanh %112 : vector<8x128xf32>
    %114 = arith.mulf %109, %113 : vector<8x128xf32>
    %c24 = arith.constant 24 : index
    %c0_50 = arith.constant 0 : index
    %115 = vector.load %arg22[%c24, %c0_50] : memref<64x512xf32, #tpu.memory_space<vmem>>, vector<8x512xf32>
    %c0_51 = arith.constant 0 : index
    %c0_52 = arith.constant 0 : index
    %116 = vector.load %arg4[%c0_51, %c0_52] : memref<128x512xf32, #tpu.memory_space<vmem>>, vector<128x512xf32>
    %cst_53 = arith.constant dense<0.000000e+00> : vector<8x512xf32>
    %117 = tpu.matmul %114, %116, %cst_53 {dimension_numbers = #tpu.dot_dimension_numbers<[1], [0], [0], [1], [0, 0, 1, 1], [], []>} : vector<8x128xf32>, vector<128x512xf32>, vector<8x512xf32> -> vector<8x512xf32>
    %118 = arith.addf %115, %117 : vector<8x512xf32>
    %119 = vector.extract_strided_slice %118 {offsets = [0, 0], sizes = [8, 128], strides = [1, 1]} : vector<8x512xf32> to vector<8x128xf32>
    %cst_54 = arith.constant 5.000000e-01 : f32
    %120 = vector.broadcast %cst_54 : f32 to vector<8x128xf32>
    %121 = arith.mulf %120, %119 : vector<8x128xf32>
    %122 = math.tanh %121 : vector<8x128xf32>
    %cst_55 = arith.constant 5.000000e-01 : f32
    %123 = vector.broadcast %cst_55 : f32 to vector<8x128xf32>
    %124 = arith.mulf %123, %122 : vector<8x128xf32>
    %cst_56 = arith.constant 5.000000e-01 : f32
    %125 = vector.broadcast %cst_56 : f32 to vector<8x128xf32>
    %126 = arith.addf %124, %125 : vector<8x128xf32>
    %127 = vector.extract_strided_slice %118 {offsets = [0, 128], sizes = [8, 128], strides = [1, 1]} : vector<8x512xf32> to vector<8x128xf32>
    %cst_57 = arith.constant 5.000000e-01 : f32
    %128 = vector.broadcast %cst_57 : f32 to vector<8x128xf32>
    %129 = arith.mulf %128, %127 : vector<8x128xf32>
    %130 = math.tanh %129 : vector<8x128xf32>
    %cst_58 = arith.constant 5.000000e-01 : f32
    %131 = vector.broadcast %cst_58 : f32 to vector<8x128xf32>
    %132 = arith.mulf %131, %130 : vector<8x128xf32>
    %cst_59 = arith.constant 5.000000e-01 : f32
    %133 = vector.broadcast %cst_59 : f32 to vector<8x128xf32>
    %134 = arith.addf %132, %133 : vector<8x128xf32>
    %135 = vector.extract_strided_slice %118 {offsets = [0, 256], sizes = [8, 128], strides = [1, 1]} : vector<8x512xf32> to vector<8x128xf32>
    %136 = math.tanh %135 : vector<8x128xf32>
    %137 = vector.extract_strided_slice %118 {offsets = [0, 384], sizes = [8, 128], strides = [1, 1]} : vector<8x512xf32> to vector<8x128xf32>
    %cst_60 = arith.constant 5.000000e-01 : f32
    %138 = vector.broadcast %cst_60 : f32 to vector<8x128xf32>
    %139 = arith.mulf %138, %137 : vector<8x128xf32>
    %140 = math.tanh %139 : vector<8x128xf32>
    %cst_61 = arith.constant 5.000000e-01 : f32
    %141 = vector.broadcast %cst_61 : f32 to vector<8x128xf32>
    %142 = arith.mulf %141, %140 : vector<8x128xf32>
    %cst_62 = arith.constant 5.000000e-01 : f32
    %143 = vector.broadcast %cst_62 : f32 to vector<8x128xf32>
    %144 = arith.addf %142, %143 : vector<8x128xf32>
    %145 = arith.mulf %134, %112 : vector<8x128xf32>
    %146 = arith.mulf %126, %136 : vector<8x128xf32>
    %147 = arith.addf %145, %146 : vector<8x128xf32>
    %148 = math.tanh %147 : vector<8x128xf32>
    %149 = arith.mulf %144, %148 : vector<8x128xf32>
    %c32 = arith.constant 32 : index
    %c0_63 = arith.constant 0 : index
    %150 = vector.load %arg22[%c32, %c0_63] : memref<64x512xf32, #tpu.memory_space<vmem>>, vector<8x512xf32>
    %c0_64 = arith.constant 0 : index
    %c0_65 = arith.constant 0 : index
    %151 = vector.load %arg4[%c0_64, %c0_65] : memref<128x512xf32, #tpu.memory_space<vmem>>, vector<128x512xf32>
    %cst_66 = arith.constant dense<0.000000e+00> : vector<8x512xf32>
    %152 = tpu.matmul %149, %151, %cst_66 {dimension_numbers = #tpu.dot_dimension_numbers<[1], [0], [0], [1], [0, 0, 1, 1], [], []>} : vector<8x128xf32>, vector<128x512xf32>, vector<8x512xf32> -> vector<8x512xf32>
    %153 = arith.addf %150, %152 : vector<8x512xf32>
    %154 = vector.extract_strided_slice %153 {offsets = [0, 0], sizes = [8, 128], strides = [1, 1]} : vector<8x512xf32> to vector<8x128xf32>
    %cst_67 = arith.constant 5.000000e-01 : f32
    %155 = vector.broadcast %cst_67 : f32 to vector<8x128xf32>
    %156 = arith.mulf %155, %154 : vector<8x128xf32>
    %157 = math.tanh %156 : vector<8x128xf32>
    %cst_68 = arith.constant 5.000000e-01 : f32
    %158 = vector.broadcast %cst_68 : f32 to vector<8x128xf32>
    %159 = arith.mulf %158, %157 : vector<8x128xf32>
    %cst_69 = arith.constant 5.000000e-01 : f32
    %160 = vector.broadcast %cst_69 : f32 to vector<8x128xf32>
    %161 = arith.addf %159, %160 : vector<8x128xf32>
    %162 = vector.extract_strided_slice %153 {offsets = [0, 128], sizes = [8, 128], strides = [1, 1]} : vector<8x512xf32> to vector<8x128xf32>
    %cst_70 = arith.constant 5.000000e-01 : f32
    %163 = vector.broadcast %cst_70 : f32 to vector<8x128xf32>
    %164 = arith.mulf %163, %162 : vector<8x128xf32>
    %165 = math.tanh %164 : vector<8x128xf32>
    %cst_71 = arith.constant 5.000000e-01 : f32
    %166 = vector.broadcast %cst_71 : f32 to vector<8x128xf32>
    %167 = arith.mulf %166, %165 : vector<8x128xf32>
    %cst_72 = arith.constant 5.000000e-01 : f32
    %168 = vector.broadcast %cst_72 : f32 to vector<8x128xf32>
    %169 = arith.addf %167, %168 : vector<8x128xf32>
    %170 = vector.extract_strided_slice %153 {offsets = [0, 256], sizes = [8, 128], strides = [1, 1]} : vector<8x512xf32> to vector<8x128xf32>
    %171 = math.tanh %170 : vector<8x128xf32>
    %172 = vector.extract_strided_slice %153 {offsets = [0, 384], sizes = [8, 128], strides = [1, 1]} : vector<8x512xf32> to vector<8x128xf32>
    %cst_73 = arith.constant 5.000000e-01 : f32
    %173 = vector.broadcast %cst_73 : f32 to vector<8x128xf32>
    %174 = arith.mulf %173, %172 : vector<8x128xf32>
    %175 = math.tanh %174 : vector<8x128xf32>
    %cst_74 = arith.constant 5.000000e-01 : f32
    %176 = vector.broadcast %cst_74 : f32 to vector<8x128xf32>
    %177 = arith.mulf %176, %175 : vector<8x128xf32>
    %cst_75 = arith.constant 5.000000e-01 : f32
    %178 = vector.broadcast %cst_75 : f32 to vector<8x128xf32>
    %179 = arith.addf %177, %178 : vector<8x128xf32>
    %180 = arith.mulf %169, %147 : vector<8x128xf32>
    %181 = arith.mulf %161, %171 : vector<8x128xf32>
    %182 = arith.addf %180, %181 : vector<8x128xf32>
    %183 = math.tanh %182 : vector<8x128xf32>
    %184 = arith.mulf %179, %183 : vector<8x128xf32>
    %c40 = arith.constant 40 : index
    %c0_76 = arith.constant 0 : index
    %185 = vector.load %arg22[%c40, %c0_76] : memref<64x512xf32, #tpu.memory_space<vmem>>, vector<8x512xf32>
    %c0_77 = arith.constant 0 : index
    %c0_78 = arith.constant 0 : index
    %186 = vector.load %arg4[%c0_77, %c0_78] : memref<128x512xf32, #tpu.memory_space<vmem>>, vector<128x512xf32>
    %cst_79 = arith.constant dense<0.000000e+00> : vector<8x512xf32>
    %187 = tpu.matmul %184, %186, %cst_79 {dimension_numbers = #tpu.dot_dimension_numbers<[1], [0], [0], [1], [0, 0, 1, 1], [], []>} : vector<8x128xf32>, vector<128x512xf32>, vector<8x512xf32> -> vector<8x512xf32>
    %188 = arith.addf %185, %187 : vector<8x512xf32>
    %189 = vector.extract_strided_slice %188 {offsets = [0, 0], sizes = [8, 128], strides = [1, 1]} : vector<8x512xf32> to vector<8x128xf32>
    %cst_80 = arith.constant 5.000000e-01 : f32
    %190 = vector.broadcast %cst_80 : f32 to vector<8x128xf32>
    %191 = arith.mulf %190, %189 : vector<8x128xf32>
    %192 = math.tanh %191 : vector<8x128xf32>
    %cst_81 = arith.constant 5.000000e-01 : f32
    %193 = vector.broadcast %cst_81 : f32 to vector<8x128xf32>
    %194 = arith.mulf %193, %192 : vector<8x128xf32>
    %cst_82 = arith.constant 5.000000e-01 : f32
    %195 = vector.broadcast %cst_82 : f32 to vector<8x128xf32>
    %196 = arith.addf %194, %195 : vector<8x128xf32>
    %197 = vector.extract_strided_slice %188 {offsets = [0, 128], sizes = [8, 128], strides = [1, 1]} : vector<8x512xf32> to vector<8x128xf32>
    %cst_83 = arith.constant 5.000000e-01 : f32
    %198 = vector.broadcast %cst_83 : f32 to vector<8x128xf32>
    %199 = arith.mulf %198, %197 : vector<8x128xf32>
    %200 = math.tanh %199 : vector<8x128xf32>
    %cst_84 = arith.constant 5.000000e-01 : f32
    %201 = vector.broadcast %cst_84 : f32 to vector<8x128xf32>
    %202 = arith.mulf %201, %200 : vector<8x128xf32>
    %cst_85 = arith.constant 5.000000e-01 : f32
    %203 = vector.broadcast %cst_85 : f32 to vector<8x128xf32>
    %204 = arith.addf %202, %203 : vector<8x128xf32>
    %205 = vector.extract_strided_slice %188 {offsets = [0, 256], sizes = [8, 128], strides = [1, 1]} : vector<8x512xf32> to vector<8x128xf32>
    %206 = math.tanh %205 : vector<8x128xf32>
    %207 = vector.extract_strided_slice %188 {offsets = [0, 384], sizes = [8, 128], strides = [1, 1]} : vector<8x512xf32> to vector<8x128xf32>
    %cst_86 = arith.constant 5.000000e-01 : f32
    %208 = vector.broadcast %cst_86 : f32 to vector<8x128xf32>
    %209 = arith.mulf %208, %207 : vector<8x128xf32>
    %210 = math.tanh %209 : vector<8x128xf32>
    %cst_87 = arith.constant 5.000000e-01 : f32
    %211 = vector.broadcast %cst_87 : f32 to vector<8x128xf32>
    %212 = arith.mulf %211, %210 : vector<8x128xf32>
    %cst_88 = arith.constant 5.000000e-01 : f32
    %213 = vector.broadcast %cst_88 : f32 to vector<8x128xf32>
    %214 = arith.addf %212, %213 : vector<8x128xf32>
    %215 = arith.mulf %204, %182 : vector<8x128xf32>
    %216 = arith.mulf %196, %206 : vector<8x128xf32>
    %217 = arith.addf %215, %216 : vector<8x128xf32>
    %218 = math.tanh %217 : vector<8x128xf32>
    %219 = arith.mulf %214, %218 : vector<8x128xf32>
    %c48 = arith.constant 48 : index
    %c0_89 = arith.constant 0 : index
    %220 = vector.load %arg22[%c48, %c0_89] : memref<64x512xf32, #tpu.memory_space<vmem>>, vector<8x512xf32>
    %c0_90 = arith.constant 0 : index
    %c0_91 = arith.constant 0 : index
    %221 = vector.load %arg4[%c0_90, %c0_91] : memref<128x512xf32, #tpu.memory_space<vmem>>, vector<128x512xf32>
    %cst_92 = arith.constant dense<0.000000e+00> : vector<8x512xf32>
    %222 = tpu.matmul %219, %221, %cst_92 {dimension_numbers = #tpu.dot_dimension_numbers<[1], [0], [0], [1], [0, 0, 1, 1], [], []>} : vector<8x128xf32>, vector<128x512xf32>, vector<8x512xf32> -> vector<8x512xf32>
    %223 = arith.addf %220, %222 : vector<8x512xf32>
    %224 = vector.extract_strided_slice %223 {offsets = [0, 0], sizes = [8, 128], strides = [1, 1]} : vector<8x512xf32> to vector<8x128xf32>
    %cst_93 = arith.constant 5.000000e-01 : f32
    %225 = vector.broadcast %cst_93 : f32 to vector<8x128xf32>
    %226 = arith.mulf %225, %224 : vector<8x128xf32>
    %227 = math.tanh %226 : vector<8x128xf32>
    %cst_94 = arith.constant 5.000000e-01 : f32
    %228 = vector.broadcast %cst_94 : f32 to vector<8x128xf32>
    %229 = arith.mulf %228, %227 : vector<8x128xf32>
    %cst_95 = arith.constant 5.000000e-01 : f32
    %230 = vector.broadcast %cst_95 : f32 to vector<8x128xf32>
    %231 = arith.addf %229, %230 : vector<8x128xf32>
    %232 = vector.extract_strided_slice %223 {offsets = [0, 128], sizes = [8, 128], strides = [1, 1]} : vector<8x512xf32> to vector<8x128xf32>
    %cst_96 = arith.constant 5.000000e-01 : f32
    %233 = vector.broadcast %cst_96 : f32 to vector<8x128xf32>
    %234 = arith.mulf %233, %232 : vector<8x128xf32>
    %235 = math.tanh %234 : vector<8x128xf32>
    %cst_97 = arith.constant 5.000000e-01 : f32
    %236 = vector.broadcast %cst_97 : f32 to vector<8x128xf32>
    %237 = arith.mulf %236, %235 : vector<8x128xf32>
    %cst_98 = arith.constant 5.000000e-01 : f32
    %238 = vector.broadcast %cst_98 : f32 to vector<8x128xf32>
    %239 = arith.addf %237, %238 : vector<8x128xf32>
    %240 = vector.extract_strided_slice %223 {offsets = [0, 256], sizes = [8, 128], strides = [1, 1]} : vector<8x512xf32> to vector<8x128xf32>
    %241 = math.tanh %240 : vector<8x128xf32>
    %242 = vector.extract_strided_slice %223 {offsets = [0, 384], sizes = [8, 128], strides = [1, 1]} : vector<8x512xf32> to vector<8x128xf32>
    %cst_99 = arith.constant 5.000000e-01 : f32
    %243 = vector.broadcast %cst_99 : f32 to vector<8x128xf32>
    %244 = arith.mulf %243, %242 : vector<8x128xf32>
    %245 = math.tanh %244 : vector<8x128xf32>
    %cst_100 = arith.constant 5.000000e-01 : f32
    %246 = vector.broadcast %cst_100 : f32 to vector<8x128xf32>
    %247 = arith.mulf %246, %245 : vector<8x128xf32>
    %cst_101 = arith.constant 5.000000e-01 : f32
    %248 = vector.broadcast %cst_101 : f32 to vector<8x128xf32>
    %249 = arith.addf %247, %248 : vector<8x128xf32>
    %250 = arith.mulf %239, %217 : vector<8x128xf32>
    %251 = arith.mulf %231, %241 : vector<8x128xf32>
    %252 = arith.addf %250, %251 : vector<8x128xf32>
    %253 = math.tanh %252 : vector<8x128xf32>
    %254 = arith.mulf %249, %253 : vector<8x128xf32>
    %c56 = arith.constant 56 : index
    %c0_102 = arith.constant 0 : index
    %255 = vector.load %arg22[%c56, %c0_102] : memref<64x512xf32, #tpu.memory_space<vmem>>, vector<8x512xf32>
    %c0_103 = arith.constant 0 : index
    %c0_104 = arith.constant 0 : index
    %256 = vector.load %arg4[%c0_103, %c0_104] : memref<128x512xf32, #tpu.memory_space<vmem>>, vector<128x512xf32>
    %cst_105 = arith.constant dense<0.000000e+00> : vector<8x512xf32>
    %257 = tpu.matmul %254, %256, %cst_105 {dimension_numbers = #tpu.dot_dimension_numbers<[1], [0], [0], [1], [0, 0, 1, 1], [], []>} : vector<8x128xf32>, vector<128x512xf32>, vector<8x512xf32> -> vector<8x512xf32>
    %258 = arith.addf %255, %257 : vector<8x512xf32>
    %259 = vector.extract_strided_slice %258 {offsets = [0, 0], sizes = [8, 128], strides = [1, 1]} : vector<8x512xf32> to vector<8x128xf32>
    %cst_106 = arith.constant 5.000000e-01 : f32
    %260 = vector.broadcast %cst_106 : f32 to vector<8x128xf32>
    %261 = arith.mulf %260, %259 : vector<8x128xf32>
    %262 = math.tanh %261 : vector<8x128xf32>
    %cst_107 = arith.constant 5.000000e-01 : f32
    %263 = vector.broadcast %cst_107 : f32 to vector<8x128xf32>
    %264 = arith.mulf %263, %262 : vector<8x128xf32>
    %cst_108 = arith.constant 5.000000e-01 : f32
    %265 = vector.broadcast %cst_108 : f32 to vector<8x128xf32>
    %266 = arith.addf %264, %265 : vector<8x128xf32>
    %267 = vector.extract_strided_slice %258 {offsets = [0, 128], sizes = [8, 128], strides = [1, 1]} : vector<8x512xf32> to vector<8x128xf32>
    %cst_109 = arith.constant 5.000000e-01 : f32
    %268 = vector.broadcast %cst_109 : f32 to vector<8x128xf32>
    %269 = arith.mulf %268, %267 : vector<8x128xf32>
    %270 = math.tanh %269 : vector<8x128xf32>
    %cst_110 = arith.constant 5.000000e-01 : f32
    %271 = vector.broadcast %cst_110 : f32 to vector<8x128xf32>
    %272 = arith.mulf %271, %270 : vector<8x128xf32>
    %cst_111 = arith.constant 5.000000e-01 : f32
    %273 = vector.broadcast %cst_111 : f32 to vector<8x128xf32>
    %274 = arith.addf %272, %273 : vector<8x128xf32>
    %275 = vector.extract_strided_slice %258 {offsets = [0, 256], sizes = [8, 128], strides = [1, 1]} : vector<8x512xf32> to vector<8x128xf32>
    %276 = math.tanh %275 : vector<8x128xf32>
    %277 = vector.extract_strided_slice %258 {offsets = [0, 384], sizes = [8, 128], strides = [1, 1]} : vector<8x512xf32> to vector<8x128xf32>
    %cst_112 = arith.constant 5.000000e-01 : f32
    %278 = vector.broadcast %cst_112 : f32 to vector<8x128xf32>
    %279 = arith.mulf %278, %277 : vector<8x128xf32>
    %280 = math.tanh %279 : vector<8x128xf32>
    %cst_113 = arith.constant 5.000000e-01 : f32
    %281 = vector.broadcast %cst_113 : f32 to vector<8x128xf32>
    %282 = arith.mulf %281, %280 : vector<8x128xf32>
    %cst_114 = arith.constant 5.000000e-01 : f32
    %283 = vector.broadcast %cst_114 : f32 to vector<8x128xf32>
    %284 = arith.addf %282, %283 : vector<8x128xf32>
    %285 = arith.mulf %274, %252 : vector<8x128xf32>
    %286 = arith.mulf %266, %276 : vector<8x128xf32>
    %287 = arith.addf %285, %286 : vector<8x128xf32>
    %288 = math.tanh %287 : vector<8x128xf32>
    %289 = arith.mulf %284, %288 : vector<8x128xf32>
    %290 = vector.extract_strided_slice %1 {offsets = [56, 0], sizes = [8, 12], strides = [1, 1]} : vector<64x12xf32> to vector<8x12xf32>
    %c0_115 = arith.constant 0 : index
    %c0_116 = arith.constant 0 : index
    %291 = vector.load %arg6[%c0_115, %c0_116] : memref<12x512xf32, #tpu.memory_space<vmem>>, vector<12x512xf32>
    %cst_117 = arith.constant dense<0.000000e+00> : vector<8x512xf32>
    %292 = tpu.matmul %290, %291, %cst_117 {dimension_numbers = #tpu.dot_dimension_numbers<[1], [0], [0], [1], [0, 0, 1, 1], [], []>} : vector<8x12xf32>, vector<12x512xf32>, vector<8x512xf32> -> vector<8x512xf32>
    %c0_118 = arith.constant 0 : index
    %c0_119 = arith.constant 0 : index
    %293 = vector.load %arg7[%c0_118, %c0_119] : memref<1x512xf32, #tpu.memory_space<vmem>>, vector<1x512xf32>
    %294 = vector.broadcast %293 : vector<1x512xf32> to vector<8x512xf32>
    %295 = arith.addf %292, %294 : vector<8x512xf32>
    %296 = vector.extract_strided_slice %295 {offsets = [0, 0], sizes = [8, 128], strides = [1, 1]} : vector<8x512xf32> to vector<8x128xf32>
    %cst_120 = arith.constant 5.000000e-01 : f32
    %297 = vector.broadcast %cst_120 : f32 to vector<8x128xf32>
    %298 = arith.mulf %297, %296 : vector<8x128xf32>
    %299 = math.tanh %298 : vector<8x128xf32>
    %cst_121 = arith.constant 5.000000e-01 : f32
    %300 = vector.broadcast %cst_121 : f32 to vector<8x128xf32>
    %301 = arith.mulf %300, %299 : vector<8x128xf32>
    %cst_122 = arith.constant 5.000000e-01 : f32
    %302 = vector.broadcast %cst_122 : f32 to vector<8x128xf32>
    %303 = arith.addf %301, %302 : vector<8x128xf32>
    %304 = vector.extract_strided_slice %295 {offsets = [0, 256], sizes = [8, 128], strides = [1, 1]} : vector<8x512xf32> to vector<8x128xf32>
    %305 = math.tanh %304 : vector<8x128xf32>
    %306 = arith.mulf %303, %305 : vector<8x128xf32>
    %307 = vector.extract_strided_slice %295 {offsets = [0, 384], sizes = [8, 128], strides = [1, 1]} : vector<8x512xf32> to vector<8x128xf32>
    %cst_123 = arith.constant 5.000000e-01 : f32
    %308 = vector.broadcast %cst_123 : f32 to vector<8x128xf32>
    %309 = arith.mulf %308, %307 : vector<8x128xf32>
    %310 = math.tanh %309 : vector<8x128xf32>
    %cst_124 = arith.constant 5.000000e-01 : f32
    %311 = vector.broadcast %cst_124 : f32 to vector<8x128xf32>
    %312 = arith.mulf %311, %310 : vector<8x128xf32>
    %cst_125 = arith.constant 5.000000e-01 : f32
    %313 = vector.broadcast %cst_125 : f32 to vector<8x128xf32>
    %314 = arith.addf %312, %313 : vector<8x128xf32>
    %315 = math.tanh %306 : vector<8x128xf32>
    %316 = arith.mulf %314, %315 : vector<8x128xf32>
    %317 = vector.extract_strided_slice %289 {offsets = [0, 0], sizes = [8, 32], strides = [1, 1]} : vector<8x128xf32> to vector<8x32xf32>
    %318 = vector.extract_strided_slice %289 {offsets = [0, 32], sizes = [8, 32], strides = [1, 1]} : vector<8x128xf32> to vector<8x32xf32>
    %319 = arith.addf %317, %318 : vector<8x32xf32>
    %320 = vector.extract_strided_slice %289 {offsets = [0, 64], sizes = [8, 32], strides = [1, 1]} : vector<8x128xf32> to vector<8x32xf32>
    %321 = arith.addf %319, %320 : vector<8x32xf32>
    %322 = vector.extract_strided_slice %316 {offsets = [0, 0], sizes = [8, 32], strides = [1, 1]} : vector<8x128xf32> to vector<8x32xf32>
    %323 = vector.extract_strided_slice %316 {offsets = [0, 32], sizes = [8, 32], strides = [1, 1]} : vector<8x128xf32> to vector<8x32xf32>
    %324 = arith.addf %322, %323 : vector<8x32xf32>
    %325 = vector.extract_strided_slice %316 {offsets = [0, 64], sizes = [8, 32], strides = [1, 1]} : vector<8x128xf32> to vector<8x32xf32>
    %326 = arith.addf %324, %325 : vector<8x32xf32>
    %327 = vector.extract_strided_slice %289 {offsets = [0, 96], sizes = [8, 32], strides = [1, 1]} : vector<8x128xf32> to vector<8x32xf32>
    %328 = vector.extract_strided_slice %316 {offsets = [0, 96], sizes = [8, 32], strides = [1, 1]} : vector<8x128xf32> to vector<8x32xf32>
    %329 = tpu.concatenate %321, %326, %327, %328 in 1 : vector<8x32xf32>, vector<8x32xf32>, vector<8x32xf32>, vector<8x32xf32> -> vector<8x128xf32>
    %c0_126 = arith.constant 0 : index
    %c0_127 = arith.constant 0 : index
    %330 = vector.load %arg8[%c0_126, %c0_127] : memref<128x256xf32, #tpu.memory_space<vmem>>, vector<128x256xf32>
    %cst_128 = arith.constant dense<0.000000e+00> : vector<8x256xf32>
    %331 = tpu.matmul %329, %330, %cst_128 {dimension_numbers = #tpu.dot_dimension_numbers<[1], [0], [0], [1], [0, 0, 1, 1], [], []>} : vector<8x128xf32>, vector<128x256xf32>, vector<8x256xf32> -> vector<8x256xf32>
    %c0_129 = arith.constant 0 : index
    %c0_130 = arith.constant 0 : index
    %332 = vector.load %arg9[%c0_129, %c0_130] : memref<1x256xf32, #tpu.memory_space<vmem>>, vector<1x256xf32>
    %333 = vector.broadcast %332 : vector<1x256xf32> to vector<8x256xf32>
    %334 = arith.addf %331, %333 : vector<8x256xf32>
    %cst_131 = arith.constant 5.000000e-01 : f32
    %335 = vector.broadcast %cst_131 : f32 to vector<8x256xf32>
    %336 = arith.mulf %335, %334 : vector<8x256xf32>
    %337 = math.tanh %336 : vector<8x256xf32>
    %cst_132 = arith.constant 5.000000e-01 : f32
    %338 = vector.broadcast %cst_132 : f32 to vector<8x256xf32>
    %339 = arith.mulf %338, %337 : vector<8x256xf32>
    %cst_133 = arith.constant 5.000000e-01 : f32
    %340 = vector.broadcast %cst_133 : f32 to vector<8x256xf32>
    %341 = arith.addf %339, %340 : vector<8x256xf32>
    %c0_134 = arith.constant 0 : index
    %c0_135 = arith.constant 0 : index
    %342 = vector.load %arg10[%c0_134, %c0_135] : memref<256x60xf32, #tpu.memory_space<vmem>>, vector<256x60xf32>
    %cst_136 = arith.constant dense<0.000000e+00> : vector<8x60xf32>
    %343 = tpu.matmul %341, %342, %cst_136 {dimension_numbers = #tpu.dot_dimension_numbers<[1], [0], [0], [1], [0, 0, 1, 1], [], []>} : vector<8x256xf32>, vector<256x60xf32>, vector<8x60xf32> -> vector<8x60xf32>
    %c0_137 = arith.constant 0 : index
    %c0_138 = arith.constant 0 : index
    %344 = vector.load %arg11[%c0_137, %c0_138] : memref<1x60xf32, #tpu.memory_space<vmem>>, vector<1x60xf32>
    %345 = vector.broadcast %344 : vector<1x60xf32> to vector<8x60xf32>
    %346 = arith.addf %343, %345 : vector<8x60xf32>
    %347 = vector.extract_strided_slice %346 {offsets = [0, 0], sizes = [8, 20], strides = [1, 1]} : vector<8x60xf32> to vector<8x20xf32>
    %348 = vector.extract_strided_slice %346 {offsets = [0, 20], sizes = [8, 40], strides = [1, 1]} : vector<8x60xf32> to vector<8x40xf32>
    %c0_139 = arith.constant 0 : index
    %c0_140 = arith.constant 0 : index
    %c0_141 = arith.constant 0 : index
    %349 = vector.load %arg2[%c0_139, %c0_140, %c0_141] : memref<13x8x128xf32, #tpu.memory_space<vmem>>, vector<1x8x128xf32>
    %350 = vector.shape_cast %349 : vector<1x8x128xf32> to vector<8x128xf32>
    %351 = tpu.iota {dimensions = array<i32: 1>} : vector<8x20xi32>
    %352 = arith.sitofp %351 : vector<8x20xi32> to vector<8x20xf32>
    %353 = vector.extract_strided_slice %350 {offsets = [0, 0], sizes = [8, 20], strides = [1, 1]} : vector<8x128xf32> to vector<8x20xf32>
    %354 = arith.addf %347, %353 : vector<8x20xf32>
    %cst_142 = arith.constant dense<0xFF800000> : vector<8xf32>
    %355 = vector.multi_reduction <maximumf>, %354, %cst_142 [1] : vector<8x20xf32> to vector<8xf32>
    %356 = vector.shape_cast %355 : vector<8xf32> to vector<8x1xf32>
    %357 = vector.broadcast %356 : vector<8x1xf32> to vector<8x20xf32>
    %358 = arith.cmpf oge, %354, %357 : vector<8x20xf32>
    %cst_143 = arith.constant 2.000000e+01 : f32
    %359 = vector.broadcast %cst_143 : f32 to vector<8x20xf32>
    %360 = arith.select %358, %352, %359 : vector<8x20xi1>, vector<8x20xf32>
    %cst_144 = arith.constant dense<0x7F800000> : vector<8xf32>
    %361 = vector.multi_reduction <minimumf>, %360, %cst_144 [1] : vector<8x20xf32> to vector<8xf32>
    %362 = vector.shape_cast %361 : vector<8xf32> to vector<8x1xf32>
    %363 = vector.broadcast %362 : vector<8x1xf32> to vector<8x20xf32>
    %364 = arith.cmpf oeq, %352, %363 : vector<8x20xf32>
    %365 = arith.extui %364 : vector<8x20xi1> to vector<8x20xi32>
    %366 = arith.sitofp %365 : vector<8x20xi32> to vector<8x20xf32>
    %cst_145 = arith.constant dense<0xFF800000> : vector<8xf32>
    %367 = vector.multi_reduction <maximumf>, %366, %cst_145 [1] : vector<8x20xf32> to vector<8xf32>
    %368 = vector.shape_cast %367 : vector<8xf32> to vector<8x1xf32>
    %369 = vector.broadcast %368 : vector<8x1xf32> to vector<8x20xf32>
    %370 = arith.subf %366, %369 : vector<8x20xf32>
    %371 = math.exp %370 : vector<8x20xf32>
    %cst_146 = arith.constant dense<0.000000e+00> : vector<8xf32>
    %372 = vector.multi_reduction <add>, %371, %cst_146 [1] : vector<8x20xf32> to vector<8xf32>
    %373 = vector.shape_cast %372 : vector<8xf32> to vector<8x1xf32>
    %374 = math.log %373 : vector<8x1xf32>
    %375 = arith.addf %374, %368 : vector<8x1xf32>
    %376 = vector.broadcast %375 : vector<8x1xf32> to vector<8x20xf32>
    %377 = arith.subf %366, %376 : vector<8x20xf32>
    %c0_147 = arith.constant 0 : index
    %c0_148 = arith.constant 0 : index
    %378 = vector.load %arg12[%c0_147, %c0_148] : memref<128x120xf32, #tpu.memory_space<vmem>>, vector<128x120xf32>
    %cst_149 = arith.constant dense<0.000000e+00> : vector<8x120xf32>
    %379 = tpu.matmul %329, %378, %cst_149 {dimension_numbers = #tpu.dot_dimension_numbers<[1], [0], [0], [1], [0, 0, 1, 1], [], []>} : vector<8x128xf32>, vector<128x120xf32>, vector<8x120xf32> -> vector<8x120xf32>
    %c0_150 = arith.constant 0 : index
    %c0_151 = arith.constant 0 : index
    %380 = vector.load %arg13[%c0_150, %c0_151] : memref<1x120xf32, #tpu.memory_space<vmem>>, vector<1x120xf32>
    %381 = vector.broadcast %380 : vector<1x120xf32> to vector<8x120xf32>
    %382 = arith.addf %379, %381 : vector<8x120xf32>
    %c0_152 = arith.constant 0 : index
    %c0_153 = arith.constant 0 : index
    %383 = vector.load %arg14[%c0_152, %c0_153] : memref<2x120xf32, #tpu.memory_space<vmem>>, vector<1x120xf32>
    %c1 = arith.constant 1 : index
    %c0_154 = arith.constant 0 : index
    %384 = vector.load %arg14[%c1, %c0_154] : memref<2x120xf32, #tpu.memory_space<vmem>>, vector<1x120xf32>
    %385 = tpu.iota {dimensions = array<i32: 1>} : vector<8x80xi32>
    %c40_i32 = arith.constant 40 : i32
    %386 = vector.broadcast %c40_i32 : i32 to vector<8x80xi32>
    %387 = arith.cmpi slt, %385, %386 : vector<8x80xi32>
    %388 = tpu.iota {dimensions = array<i32: 1>} : vector<8x40xi32>
    %c20_i32 = arith.constant 20 : i32
    %389 = vector.broadcast %c20_i32 : i32 to vector<8x40xi32>
    %390 = arith.cmpi slt, %388, %389 : vector<8x40xi32>
    %c20_i32_155 = arith.constant 20 : i32
    %391 = vector.broadcast %c20_i32_155 : i32 to vector<8x40xi32>
    %392 = arith.subi %388, %391 : vector<8x40xi32>
    %393 = arith.select %390, %388, %392 : vector<8x40xi1>, vector<8x40xi32>
    %394 = arith.sitofp %393 : vector<8x40xi32> to vector<8x40xf32>
    %cst_156 = arith.constant 0.000000e+00 : f32
    %395 = vector.broadcast %cst_156 : f32 to vector<8x6xf32>
    %cst_157 = arith.constant 0.000000e+00 : f32
    %396 = vector.broadcast %cst_157 : f32 to vector<8x26xf32>
    %397 = vector.extract_strided_slice %290 {offsets = [0, 0], sizes = [8, 2], strides = [1, 1]} : vector<8x12xf32> to vector<8x2xf32>
    %398 = vector.extract_strided_slice %397 {offsets = [0, 0], sizes = [8, 1], strides = [1, 1]} : vector<8x2xf32> to vector<8x1xf32>
    %399 = vector.extract_strided_slice %397 {offsets = [0, 1], sizes = [8, 1], strides = [1, 1]} : vector<8x2xf32> to vector<8x1xf32>
    %c20_i32_158 = arith.constant 20 : i32
    %400 = vector.broadcast %c20_i32_158 : i32 to vector<8x80xi32>
    %401 = arith.cmpi slt, %385, %400 : vector<8x80xi32>
    %cst_159 = arith.constant 0.000000e+00 : f32
    %402 = vector.shape_cast %399 : vector<8x1xf32> to vector<8x1xf32>
    %403 = vector.broadcast %402 : vector<8x1xf32> to vector<8x80xf32>
    %404 = vector.broadcast %cst_159 : f32 to vector<8x80xf32>
    %405 = arith.select %387, %403, %404 : vector<8x80xi1>, vector<8x80xf32>
    %406 = vector.shape_cast %398 : vector<8x1xf32> to vector<8x1xf32>
    %407 = vector.broadcast %406 : vector<8x1xf32> to vector<8x80xf32>
    %408 = arith.select %401, %407, %405 : vector<8x80xi1>, vector<8x80xf32>
    %409 = vector.broadcast %398 : vector<8x1xf32> to vector<8x120xf32>
    %410 = vector.broadcast %383 : vector<1x120xf32> to vector<8x120xf32>
    %411 = arith.mulf %409, %410 : vector<8x120xf32>
    %412 = arith.addf %382, %411 : vector<8x120xf32>
    %413 = vector.broadcast %399 : vector<8x1xf32> to vector<8x120xf32>
    %414 = vector.broadcast %384 : vector<1x120xf32> to vector<8x120xf32>
    %415 = arith.mulf %413, %414 : vector<8x120xf32>
    %416 = arith.addf %412, %415 : vector<8x120xf32>
    %c0_160 = arith.constant 0 : index
    %c0_161 = arith.constant 0 : index
    %417 = vector.load %arg15[%c0_160, %c0_161] : memref<40x120xf32, #tpu.memory_space<vmem>>, vector<40x120xf32>
    %cst_162 = arith.constant dense<0.000000e+00> : vector<8x120xf32>
    %418 = tpu.matmul %348, %417, %cst_162 {dimension_numbers = #tpu.dot_dimension_numbers<[1], [0], [0], [1], [0, 0, 1, 1], [], []>} : vector<8x40xf32>, vector<40x120xf32>, vector<8x120xf32> -> vector<8x120xf32>
    %c0_163 = arith.constant 0 : index
    %c0_164 = arith.constant 0 : index
    %419 = vector.load %arg16[%c0_163, %c0_164] : memref<1x120xf32, #tpu.memory_space<vmem>>, vector<1x120xf32>
    %420 = vector.broadcast %419 : vector<1x120xf32> to vector<8x120xf32>
    %421 = arith.addf %418, %420 : vector<8x120xf32>
    %422 = vector.extract_strided_slice %416 {offsets = [0, 0], sizes = [8, 40], strides = [1, 1]} : vector<8x120xf32> to vector<8x40xf32>
    %423 = vector.extract_strided_slice %421 {offsets = [0, 0], sizes = [8, 40], strides = [1, 1]} : vector<8x120xf32> to vector<8x40xf32>
    %424 = arith.addf %422, %423 : vector<8x40xf32>
    %cst_165 = arith.constant 5.000000e-01 : f32
    %425 = vector.broadcast %cst_165 : f32 to vector<8x40xf32>
    %426 = arith.mulf %425, %424 : vector<8x40xf32>
    %427 = math.tanh %426 : vector<8x40xf32>
    %cst_166 = arith.constant 5.000000e-01 : f32
    %428 = vector.broadcast %cst_166 : f32 to vector<8x40xf32>
    %429 = arith.mulf %428, %427 : vector<8x40xf32>
    %cst_167 = arith.constant 5.000000e-01 : f32
    %430 = vector.broadcast %cst_167 : f32 to vector<8x40xf32>
    %431 = arith.addf %429, %430 : vector<8x40xf32>
    %432 = vector.extract_strided_slice %416 {offsets = [0, 40], sizes = [8, 40], strides = [1, 1]} : vector<8x120xf32> to vector<8x40xf32>
    %433 = vector.extract_strided_slice %421 {offsets = [0, 40], sizes = [8, 40], strides = [1, 1]} : vector<8x120xf32> to vector<8x40xf32>
    %434 = arith.addf %432, %433 : vector<8x40xf32>
    %cst_168 = arith.constant 5.000000e-01 : f32
    %435 = vector.broadcast %cst_168 : f32 to vector<8x40xf32>
    %436 = arith.mulf %435, %434 : vector<8x40xf32>
    %437 = math.tanh %436 : vector<8x40xf32>
    %cst_169 = arith.constant 5.000000e-01 : f32
    %438 = vector.broadcast %cst_169 : f32 to vector<8x40xf32>
    %439 = arith.mulf %438, %437 : vector<8x40xf32>
    %cst_170 = arith.constant 5.000000e-01 : f32
    %440 = vector.broadcast %cst_170 : f32 to vector<8x40xf32>
    %441 = arith.addf %439, %440 : vector<8x40xf32>
    %442 = vector.extract_strided_slice %416 {offsets = [0, 80], sizes = [8, 40], strides = [1, 1]} : vector<8x120xf32> to vector<8x40xf32>
    %443 = vector.extract_strided_slice %421 {offsets = [0, 80], sizes = [8, 40], strides = [1, 1]} : vector<8x120xf32> to vector<8x40xf32>
    %444 = arith.mulf %431, %443 : vector<8x40xf32>
    %445 = arith.addf %442, %444 : vector<8x40xf32>
    %446 = math.tanh %445 : vector<8x40xf32>
    %cst_171 = arith.constant 1.000000e+00 : f32
    %447 = vector.broadcast %cst_171 : f32 to vector<8x40xf32>
    %448 = arith.subf %447, %441 : vector<8x40xf32>
    %449 = arith.mulf %448, %446 : vector<8x40xf32>
    %450 = arith.mulf %441, %348 : vector<8x40xf32>
    %451 = arith.addf %449, %450 : vector<8x40xf32>
    %c0_172 = arith.constant 0 : index
    %c0_173 = arith.constant 0 : index
    %452 = vector.load %arg17[%c0_172, %c0_173] : memref<40x100xf32, #tpu.memory_space<vmem>>, vector<40x100xf32>
    %cst_174 = arith.constant dense<0.000000e+00> : vector<8x100xf32>
    %453 = tpu.matmul %451, %452, %cst_174 {dimension_numbers = #tpu.dot_dimension_numbers<[1], [0], [0], [1], [0, 0, 1, 1], [], []>} : vector<8x40xf32>, vector<40x100xf32>, vector<8x100xf32> -> vector<8x100xf32>
    %c0_175 = arith.constant 0 : index
    %c0_176 = arith.constant 0 : index
    %454 = vector.load %arg18[%c0_175, %c0_176] : memref<1x100xf32, #tpu.memory_space<vmem>>, vector<1x100xf32>
    %455 = vector.broadcast %454 : vector<1x100xf32> to vector<8x100xf32>
    %456 = arith.addf %453, %455 : vector<8x100xf32>
    %457 = vector.extract_strided_slice %456 {offsets = [0, 0], sizes = [8, 80], strides = [1, 1]} : vector<8x100xf32> to vector<8x80xf32>
    %cst_177 = arith.constant 5.000000e-01 : f32
    %458 = vector.broadcast %cst_177 : f32 to vector<8x80xf32>
    %459 = arith.mulf %458, %457 : vector<8x80xf32>
    %460 = math.tanh %459 : vector<8x80xf32>
    %cst_178 = arith.constant 5.000000e-01 : f32
    %461 = vector.broadcast %cst_178 : f32 to vector<8x80xf32>
    %462 = arith.mulf %461, %460 : vector<8x80xf32>
    %cst_179 = arith.constant 5.000000e-01 : f32
    %463 = vector.broadcast %cst_179 : f32 to vector<8x80xf32>
    %464 = arith.addf %462, %463 : vector<8x80xf32>
    %465 = vector.extract_strided_slice %456 {offsets = [0, 80], sizes = [8, 20], strides = [1, 1]} : vector<8x100xf32> to vector<8x20xf32>
    %466 = math.tanh %465 : vector<8x20xf32>
    %c0_180 = arith.constant 0 : index
    %c0_181 = arith.constant 0 : index
    %467 = vector.load %arg19[%c0_180, %c0_181] : memref<80x80xf32, #tpu.memory_space<vmem>>, vector<80x80xf32>
    %cst_182 = arith.constant dense<0.000000e+00> : vector<8x80xf32>
    %468 = tpu.matmul %464, %467, %cst_182 {dimension_numbers = #tpu.dot_dimension_numbers<[1], [0], [0], [1], [0, 0, 1, 1], [], []>} : vector<8x80xf32>, vector<80x80xf32>, vector<8x80xf32> -> vector<8x80xf32>
    %c0_183 = arith.constant 0 : index
    %c0_184 = arith.constant 0 : index
    %469 = vector.load %arg20[%c0_183, %c0_184] : memref<1x80xf32, #tpu.memory_space<vmem>>, vector<1x80xf32>
    %470 = vector.broadcast %469 : vector<1x80xf32> to vector<8x80xf32>
    %471 = arith.addf %468, %470 : vector<8x80xf32>
    %cst_185 = arith.constant -1.500000e+00 : f32
    %cst_186 = arith.constant 1.500000e+00 : f32
    %472 = vector.broadcast %cst_185 : f32 to vector<8x80xf32>
    %473 = arith.maximumf %472, %471 : vector<8x80xf32>
    %474 = vector.broadcast %cst_186 : f32 to vector<8x80xf32>
    %475 = arith.minimumf %474, %473 : vector<8x80xf32>
    %476 = arith.addf %475, %408 : vector<8x80xf32>
    %477 = math.exp %471 : vector<8x80xf32>
    %cst_187 = arith.constant 0.0316227749 : f32
    %cst_188 = arith.constant 31.622776 : f32
    %478 = vector.broadcast %cst_187 : f32 to vector<8x80xf32>
    %479 = arith.maximumf %478, %477 : vector<8x80xf32>
    %480 = vector.broadcast %cst_188 : f32 to vector<8x80xf32>
    %481 = arith.minimumf %480, %479 : vector<8x80xf32>
    %482 = arith.select %387, %476, %481 : vector<8x80xi1>, vector<8x80xf32>
    %c1_189 = arith.constant 1 : index
    %c0_190 = arith.constant 0 : index
    %c0_191 = arith.constant 0 : index
    %483 = vector.load %arg2[%c1_189, %c0_190, %c0_191] : memref<13x8x128xf32, #tpu.memory_space<vmem>>, vector<1x8x128xf32>
    %484 = vector.shape_cast %483 : vector<1x8x128xf32> to vector<8x128xf32>
    %485 = vector.extract_strided_slice %484 {offsets = [0, 0], sizes = [8, 20], strides = [1, 1]} : vector<8x128xf32> to vector<8x20xf32>
    %486 = arith.addf %377, %485 : vector<8x20xf32>
    %cst_192 = arith.constant dense<0xFF800000> : vector<8xf32>
    %487 = vector.multi_reduction <maximumf>, %486, %cst_192 [1] : vector<8x20xf32> to vector<8xf32>
    %488 = vector.shape_cast %487 : vector<8xf32> to vector<8x1xf32>
    %489 = vector.broadcast %488 : vector<8x1xf32> to vector<8x20xf32>
    %490 = arith.cmpf oge, %486, %489 : vector<8x20xf32>
    %cst_193 = arith.constant 2.000000e+01 : f32
    %491 = vector.broadcast %cst_193 : f32 to vector<8x20xf32>
    %492 = arith.select %490, %352, %491 : vector<8x20xi1>, vector<8x20xf32>
    %cst_194 = arith.constant dense<0x7F800000> : vector<8xf32>
    %493 = vector.multi_reduction <minimumf>, %492, %cst_194 [1] : vector<8x20xf32> to vector<8xf32>
    %494 = vector.shape_cast %493 : vector<8xf32> to vector<8x1xf32>
    %495 = vector.broadcast %494 : vector<8x1xf32> to vector<8x40xf32>
    %496 = arith.cmpf oeq, %394, %495 : vector<8x40xf32>
    %497 = arith.extui %496 : vector<8x40xi1> to vector<8x40xi32>
    %498 = arith.sitofp %497 : vector<8x40xi32> to vector<8x40xf32>
    %499 = vector.extract_strided_slice %484 {offsets = [0, 20], sizes = [8, 1], strides = [1, 1]} : vector<8x128xf32> to vector<8x1xf32>
    %500 = vector.extract_strided_slice %484 {offsets = [0, 21], sizes = [8, 1], strides = [1, 1]} : vector<8x128xf32> to vector<8x1xf32>
    %501 = vector.shape_cast %499 : vector<8x1xf32> to vector<8x1xf32>
    %502 = vector.broadcast %501 : vector<8x1xf32> to vector<8x40xf32>
    %503 = vector.shape_cast %500 : vector<8x1xf32> to vector<8x1xf32>
    %504 = vector.broadcast %503 : vector<8x1xf32> to vector<8x40xf32>
    %505 = arith.select %390, %502, %504 : vector<8x40xi1>, vector<8x40xf32>
    %506 = vector.extract_strided_slice %482 {offsets = [0, 0], sizes = [8, 40], strides = [1, 1]} : vector<8x80xf32> to vector<8x40xf32>
    %507 = vector.extract_strided_slice %482 {offsets = [0, 40], sizes = [8, 40], strides = [1, 1]} : vector<8x80xf32> to vector<8x40xf32>
    %508 = arith.mulf %507, %505 : vector<8x40xf32>
    %509 = arith.addf %506, %508 : vector<8x40xf32>
    %510 = arith.mulf %498, %509 : vector<8x40xf32>
    %511 = vector.extract_strided_slice %510 {offsets = [0, 0], sizes = [8, 20], strides = [1, 1]} : vector<8x40xf32> to vector<8x20xf32>
    %cst_195 = arith.constant dense<0.000000e+00> : vector<8xf32>
    %512 = vector.multi_reduction <add>, %511, %cst_195 [1] : vector<8x20xf32> to vector<8xf32>
    %513 = vector.shape_cast %512 : vector<8xf32> to vector<8x1xf32>
    %514 = vector.extract_strided_slice %510 {offsets = [0, 20], sizes = [8, 20], strides = [1, 1]} : vector<8x40xf32> to vector<8x20xf32>
    %cst_196 = arith.constant dense<0.000000e+00> : vector<8xf32>
    %515 = vector.multi_reduction <add>, %514, %cst_196 [1] : vector<8x20xf32> to vector<8xf32>
    %516 = vector.shape_cast %515 : vector<8xf32> to vector<8x1xf32>
    %517 = tpu.concatenate %513, %516 in 1 : vector<8x1xf32>, vector<8x1xf32> -> vector<8x2xf32>
    %518 = tpu.concatenate %482, %466, %517, %377, %395 in 1 : vector<8x80xf32>, vector<8x20xf32>, vector<8x2xf32>, vector<8x20xf32>, vector<8x6xf32> -> vector<8x128xf32>
    %c0_197 = arith.constant 0 : index
    %c0_198 = arith.constant 0 : index
    %c0_199 = arith.constant 0 : index
    %519 = vector.load %arg21[%c0_197, %c0_198, %c0_199] : memref<12x8x128xf32, #tpu.memory_space<vmem>>, vector<1x8x128xf32>
    %520 = vector.shape_cast %519 : vector<1x8x128xf32> to vector<8x128xf32>
    %521 = vector.shape_cast %518 : vector<8x128xf32> to vector<1x8x128xf32>
    tpu.vector_store %arg21[%c0_197, %c0_198, %c0_199], %521 {strides = array<i32>} : memref<12x8x128xf32, #tpu.memory_space<vmem>>, vector<1x8x128xf32>,
    %cst_200 = arith.constant 0.000000e+00 : f32
    %522 = vector.broadcast %cst_200 : f32 to vector<8x80xf32>
    %523 = arith.select %387, %482, %522 : vector<8x80xi1>, vector<8x80xf32>
    %524 = vector.broadcast %513 : vector<8x1xf32> to vector<8x120xf32>
    %525 = vector.broadcast %383 : vector<1x120xf32> to vector<8x120xf32>
    %526 = arith.mulf %524, %525 : vector<8x120xf32>
    %527 = arith.addf %382, %526 : vector<8x120xf32>
    %528 = vector.broadcast %516 : vector<8x1xf32> to vector<8x120xf32>
    %529 = vector.broadcast %384 : vector<1x120xf32> to vector<8x120xf32>
    %530 = arith.mulf %528, %529 : vector<8x120xf32>
    %531 = arith.addf %527, %530 : vector<8x120xf32>
    %c0_201 = arith.constant 0 : index
    %c0_202 = arith.constant 0 : index
    %532 = vector.load %arg15[%c0_201, %c0_202] : memref<40x120xf32, #tpu.memory_space<vmem>>, vector<40x120xf32>
    %cst_203 = arith.constant dense<0.000000e+00> : vector<8x120xf32>
    %533 = tpu.matmul %451, %532, %cst_203 {dimension_numbers = #tpu.dot_dimension_numbers<[1], [0], [0], [1], [0, 0, 1, 1], [], []>} : vector<8x40xf32>, vector<40x120xf32>, vector<8x120xf32> -> vector<8x120xf32>
    %c0_204 = arith.constant 0 : index
    %c0_205 = arith.constant 0 : index
    %534 = vector.load %arg16[%c0_204, %c0_205] : memref<1x120xf32, #tpu.memory_space<vmem>>, vector<1x120xf32>
    %535 = vector.broadcast %534 : vector<1x120xf32> to vector<8x120xf32>
    %536 = arith.addf %533, %535 : vector<8x120xf32>
    %537 = vector.extract_strided_slice %531 {offsets = [0, 0], sizes = [8, 40], strides = [1, 1]} : vector<8x120xf32> to vector<8x40xf32>
    %538 = vector.extract_strided_slice %536 {offsets = [0, 0], sizes = [8, 40], strides = [1, 1]} : vector<8x120xf32> to vector<8x40xf32>
    %539 = arith.addf %537, %538 : vector<8x40xf32>
    %cst_206 = arith.constant 5.000000e-01 : f32
    %540 = vector.broadcast %cst_206 : f32 to vector<8x40xf32>
    %541 = arith.mulf %540, %539 : vector<8x40xf32>
    %542 = math.tanh %541 : vector<8x40xf32>
    %cst_207 = arith.constant 5.000000e-01 : f32
    %543 = vector.broadcast %cst_207 : f32 to vector<8x40xf32>
    %544 = arith.mulf %543, %542 : vector<8x40xf32>
    %cst_208 = arith.constant 5.000000e-01 : f32
    %545 = vector.broadcast %cst_208 : f32 to vector<8x40xf32>
    %546 = arith.addf %544, %545 : vector<8x40xf32>
    %547 = vector.extract_strided_slice %531 {offsets = [0, 40], sizes = [8, 40], strides = [1, 1]} : vector<8x120xf32> to vector<8x40xf32>
    %548 = vector.extract_strided_slice %536 {offsets = [0, 40], sizes = [8, 40], strides = [1, 1]} : vector<8x120xf32> to vector<8x40xf32>
    %549 = arith.addf %547, %548 : vector<8x40xf32>
    %cst_209 = arith.constant 5.000000e-01 : f32
    %550 = vector.broadcast %cst_209 : f32 to vector<8x40xf32>
    %551 = arith.mulf %550, %549 : vector<8x40xf32>
    %552 = math.tanh %551 : vector<8x40xf32>
    %cst_210 = arith.constant 5.000000e-01 : f32
    %553 = vector.broadcast %cst_210 : f32 to vector<8x40xf32>
    %554 = arith.mulf %553, %552 : vector<8x40xf32>
    %cst_211 = arith.constant 5.000000e-01 : f32
    %555 = vector.broadcast %cst_211 : f32 to vector<8x40xf32>
    %556 = arith.addf %554, %555 : vector<8x40xf32>
    %557 = vector.extract_strided_slice %531 {offsets = [0, 80], sizes = [8, 40], strides = [1, 1]} : vector<8x120xf32> to vector<8x40xf32>
    %558 = vector.extract_strided_slice %536 {offsets = [0, 80], sizes = [8, 40], strides = [1, 1]} : vector<8x120xf32> to vector<8x40xf32>
    %559 = arith.mulf %546, %558 : vector<8x40xf32>
    %560 = arith.addf %557, %559 : vector<8x40xf32>
    %561 = math.tanh %560 : vector<8x40xf32>
    %cst_212 = arith.constant 1.000000e+00 : f32
    %562 = vector.broadcast %cst_212 : f32 to vector<8x40xf32>
    %563 = arith.subf %562, %556 : vector<8x40xf32>
    %564 = arith.mulf %563, %561 : vector<8x40xf32>
    %565 = arith.mulf %556, %451 : vector<8x40xf32>
    %566 = arith.addf %564, %565 : vector<8x40xf32>
    %c0_213 = arith.constant 0 : index
    %c0_214 = arith.constant 0 : index
    %567 = vector.load %arg17[%c0_213, %c0_214] : memref<40x100xf32, #tpu.memory_space<vmem>>, vector<40x100xf32>
    %cst_215 = arith.constant dense<0.000000e+00> : vector<8x100xf32>
    %568 = tpu.matmul %566, %567, %cst_215 {dimension_numbers = #tpu.dot_dimension_numbers<[1], [0], [0], [1], [0, 0, 1, 1], [], []>} : vector<8x40xf32>, vector<40x100xf32>, vector<8x100xf32> -> vector<8x100xf32>
    %c0_216 = arith.constant 0 : index
    %c0_217 = arith.constant 0 : index
    %569 = vector.load %arg18[%c0_216, %c0_217] : memref<1x100xf32, #tpu.memory_space<vmem>>, vector<1x100xf32>
    %570 = vector.broadcast %569 : vector<1x100xf32> to vector<8x100xf32>
    %571 = arith.addf %568, %570 : vector<8x100xf32>
    %572 = vector.extract_strided_slice %571 {offsets = [0, 0], sizes = [8, 80], strides = [1, 1]} : vector<8x100xf32> to vector<8x80xf32>
    %cst_218 = arith.constant 5.000000e-01 : f32
    %573 = vector.broadcast %cst_218 : f32 to vector<8x80xf32>
    %574 = arith.mulf %573, %572 : vector<8x80xf32>
    %575 = math.tanh %574 : vector<8x80xf32>
    %cst_219 = arith.constant 5.000000e-01 : f32
    %576 = vector.broadcast %cst_219 : f32 to vector<8x80xf32>
    %577 = arith.mulf %576, %575 : vector<8x80xf32>
    %cst_220 = arith.constant 5.000000e-01 : f32
    %578 = vector.broadcast %cst_220 : f32 to vector<8x80xf32>
    %579 = arith.addf %577, %578 : vector<8x80xf32>
    %580 = vector.extract_strided_slice %571 {offsets = [0, 80], sizes = [8, 20], strides = [1, 1]} : vector<8x100xf32> to vector<8x20xf32>
    %581 = math.tanh %580 : vector<8x20xf32>
    %c0_221 = arith.constant 0 : index
    %c0_222 = arith.constant 0 : index
    %582 = vector.load %arg19[%c0_221, %c0_222] : memref<80x80xf32, #tpu.memory_space<vmem>>, vector<80x80xf32>
    %cst_223 = arith.constant dense<0.000000e+00> : vector<8x80xf32>
    %583 = tpu.matmul %579, %582, %cst_223 {dimension_numbers = #tpu.dot_dimension_numbers<[1], [0], [0], [1], [0, 0, 1, 1], [], []>} : vector<8x80xf32>, vector<80x80xf32>, vector<8x80xf32> -> vector<8x80xf32>
    %c0_224 = arith.constant 0 : index
    %c0_225 = arith.constant 0 : index
    %584 = vector.load %arg20[%c0_224, %c0_225] : memref<1x80xf32, #tpu.memory_space<vmem>>, vector<1x80xf32>
    %585 = vector.broadcast %584 : vector<1x80xf32> to vector<8x80xf32>
    %586 = arith.addf %583, %585 : vector<8x80xf32>
    %cst_226 = arith.constant -1.500000e+00 : f32
    %cst_227 = arith.constant 1.500000e+00 : f32
    %587 = vector.broadcast %cst_226 : f32 to vector<8x80xf32>
    %588 = arith.maximumf %587, %586 : vector<8x80xf32>
    %589 = vector.broadcast %cst_227 : f32 to vector<8x80xf32>
    %590 = arith.minimumf %589, %588 : vector<8x80xf32>
    %591 = arith.addf %590, %523 : vector<8x80xf32>
    %592 = math.exp %586 : vector<8x80xf32>
    %cst_228 = arith.constant 0.0316227749 : f32
    %cst_229 = arith.constant 31.622776 : f32
    %593 = vector.broadcast %cst_228 : f32 to vector<8x80xf32>
    %594 = arith.maximumf %593, %592 : vector<8x80xf32>
    %595 = vector.broadcast %cst_229 : f32 to vector<8x80xf32>
    %596 = arith.minimumf %595, %594 : vector<8x80xf32>
    %597 = arith.select %387, %591, %596 : vector<8x80xi1>, vector<8x80xf32>
    %c2 = arith.constant 2 : index
    %c0_230 = arith.constant 0 : index
    %c0_231 = arith.constant 0 : index
    %598 = vector.load %arg2[%c2, %c0_230, %c0_231] : memref<13x8x128xf32, #tpu.memory_space<vmem>>, vector<1x8x128xf32>
    %599 = vector.shape_cast %598 : vector<1x8x128xf32> to vector<8x128xf32>
    %600 = vector.extract_strided_slice %599 {offsets = [0, 0], sizes = [8, 20], strides = [1, 1]} : vector<8x128xf32> to vector<8x20xf32>
    %601 = arith.addf %377, %600 : vector<8x20xf32>
    %cst_232 = arith.constant dense<0xFF800000> : vector<8xf32>
    %602 = vector.multi_reduction <maximumf>, %601, %cst_232 [1] : vector<8x20xf32> to vector<8xf32>
    %603 = vector.shape_cast %602 : vector<8xf32> to vector<8x1xf32>
    %604 = vector.broadcast %603 : vector<8x1xf32> to vector<8x20xf32>
    %605 = arith.cmpf oge, %601, %604 : vector<8x20xf32>
    %cst_233 = arith.constant 2.000000e+01 : f32
    %606 = vector.broadcast %cst_233 : f32 to vector<8x20xf32>
    %607 = arith.select %605, %352, %606 : vector<8x20xi1>, vector<8x20xf32>
    %cst_234 = arith.constant dense<0x7F800000> : vector<8xf32>
    %608 = vector.multi_reduction <minimumf>, %607, %cst_234 [1] : vector<8x20xf32> to vector<8xf32>
    %609 = vector.shape_cast %608 : vector<8xf32> to vector<8x1xf32>
    %610 = vector.broadcast %609 : vector<8x1xf32> to vector<8x40xf32>
    %611 = arith.cmpf oeq, %394, %610 : vector<8x40xf32>
    %612 = arith.extui %611 : vector<8x40xi1> to vector<8x40xi32>
    %613 = arith.sitofp %612 : vector<8x40xi32> to vector<8x40xf32>
    %614 = vector.extract_strided_slice %599 {offsets = [0, 20], sizes = [8, 1], strides = [1, 1]} : vector<8x128xf32> to vector<8x1xf32>
    %615 = vector.extract_strided_slice %599 {offsets = [0, 21], sizes = [8, 1], strides = [1, 1]} : vector<8x128xf32> to vector<8x1xf32>
    %616 = vector.shape_cast %614 : vector<8x1xf32> to vector<8x1xf32>
    %617 = vector.broadcast %616 : vector<8x1xf32> to vector<8x40xf32>
    %618 = vector.shape_cast %615 : vector<8x1xf32> to vector<8x1xf32>
    %619 = vector.broadcast %618 : vector<8x1xf32> to vector<8x40xf32>
    %620 = arith.select %390, %617, %619 : vector<8x40xi1>, vector<8x40xf32>
    %621 = vector.extract_strided_slice %597 {offsets = [0, 0], sizes = [8, 40], strides = [1, 1]} : vector<8x80xf32> to vector<8x40xf32>
    %622 = vector.extract_strided_slice %597 {offsets = [0, 40], sizes = [8, 40], strides = [1, 1]} : vector<8x80xf32> to vector<8x40xf32>
    %623 = arith.mulf %622, %620 : vector<8x40xf32>
    %624 = arith.addf %621, %623 : vector<8x40xf32>
    %625 = arith.mulf %613, %624 : vector<8x40xf32>
    %626 = vector.extract_strided_slice %625 {offsets = [0, 0], sizes = [8, 20], strides = [1, 1]} : vector<8x40xf32> to vector<8x20xf32>
    %cst_235 = arith.constant dense<0.000000e+00> : vector<8xf32>
    %627 = vector.multi_reduction <add>, %626, %cst_235 [1] : vector<8x20xf32> to vector<8xf32>
    %628 = vector.shape_cast %627 : vector<8xf32> to vector<8x1xf32>
    %629 = vector.extract_strided_slice %625 {offsets = [0, 20], sizes = [8, 20], strides = [1, 1]} : vector<8x40xf32> to vector<8x20xf32>
    %cst_236 = arith.constant dense<0.000000e+00> : vector<8xf32>
    %630 = vector.multi_reduction <add>, %629, %cst_236 [1] : vector<8x20xf32> to vector<8xf32>
    %631 = vector.shape_cast %630 : vector<8xf32> to vector<8x1xf32>
    %632 = tpu.concatenate %628, %631 in 1 : vector<8x1xf32>, vector<8x1xf32> -> vector<8x2xf32>
    %633 = tpu.concatenate %597, %581, %632, %396 in 1 : vector<8x80xf32>, vector<8x20xf32>, vector<8x2xf32>, vector<8x26xf32> -> vector<8x128xf32>
    %c1_237 = arith.constant 1 : index
    %c0_238 = arith.constant 0 : index
    %c0_239 = arith.constant 0 : index
    %634 = vector.load %arg21[%c1_237, %c0_238, %c0_239] : memref<12x8x128xf32, #tpu.memory_space<vmem>>, vector<1x8x128xf32>
    %635 = vector.shape_cast %634 : vector<1x8x128xf32> to vector<8x128xf32>
    %636 = vector.shape_cast %633 : vector<8x128xf32> to vector<1x8x128xf32>
    tpu.vector_store %arg21[%c1_237, %c0_238, %c0_239], %636 {strides = array<i32>} : memref<12x8x128xf32, #tpu.memory_space<vmem>>, vector<1x8x128xf32>,
    %cst_240 = arith.constant 0.000000e+00 : f32
    %637 = vector.broadcast %cst_240 : f32 to vector<8x80xf32>
    %638 = arith.select %387, %597, %637 : vector<8x80xi1>, vector<8x80xf32>
    %639 = vector.broadcast %628 : vector<8x1xf32> to vector<8x120xf32>
    %640 = vector.broadcast %383 : vector<1x120xf32> to vector<8x120xf32>
    %641 = arith.mulf %639, %640 : vector<8x120xf32>
    %642 = arith.addf %382, %641 : vector<8x120xf32>
    %643 = vector.broadcast %631 : vector<8x1xf32> to vector<8x120xf32>
    %644 = vector.broadcast %384 : vector<1x120xf32> to vector<8x120xf32>
    %645 = arith.mulf %643, %644 : vector<8x120xf32>
    %646 = arith.addf %642, %645 : vector<8x120xf32>
    %c0_241 = arith.constant 0 : index
    %c0_242 = arith.constant 0 : index
    %647 = vector.load %arg15[%c0_241, %c0_242] : memref<40x120xf32, #tpu.memory_space<vmem>>, vector<40x120xf32>
    %cst_243 = arith.constant dense<0.000000e+00> : vector<8x120xf32>
    %648 = tpu.matmul %566, %647, %cst_243 {dimension_numbers = #tpu.dot_dimension_numbers<[1], [0], [0], [1], [0, 0, 1, 1], [], []>} : vector<8x40xf32>, vector<40x120xf32>, vector<8x120xf32> -> vector<8x120xf32>
    %c0_244 = arith.constant 0 : index
    %c0_245 = arith.constant 0 : index
    %649 = vector.load %arg16[%c0_244, %c0_245] : memref<1x120xf32, #tpu.memory_space<vmem>>, vector<1x120xf32>
    %650 = vector.broadcast %649 : vector<1x120xf32> to vector<8x120xf32>
    %651 = arith.addf %648, %650 : vector<8x120xf32>
    %652 = vector.extract_strided_slice %646 {offsets = [0, 0], sizes = [8, 40], strides = [1, 1]} : vector<8x120xf32> to vector<8x40xf32>
    %653 = vector.extract_strided_slice %651 {offsets = [0, 0], sizes = [8, 40], strides = [1, 1]} : vector<8x120xf32> to vector<8x40xf32>
    %654 = arith.addf %652, %653 : vector<8x40xf32>
    %cst_246 = arith.constant 5.000000e-01 : f32
    %655 = vector.broadcast %cst_246 : f32 to vector<8x40xf32>
    %656 = arith.mulf %655, %654 : vector<8x40xf32>
    %657 = math.tanh %656 : vector<8x40xf32>
    %cst_247 = arith.constant 5.000000e-01 : f32
    %658 = vector.broadcast %cst_247 : f32 to vector<8x40xf32>
    %659 = arith.mulf %658, %657 : vector<8x40xf32>
    %cst_248 = arith.constant 5.000000e-01 : f32
    %660 = vector.broadcast %cst_248 : f32 to vector<8x40xf32>
    %661 = arith.addf %659, %660 : vector<8x40xf32>
    %662 = vector.extract_strided_slice %646 {offsets = [0, 40], sizes = [8, 40], strides = [1, 1]} : vector<8x120xf32> to vector<8x40xf32>
    %663 = vector.extract_strided_slice %651 {offsets = [0, 40], sizes = [8, 40], strides = [1, 1]} : vector<8x120xf32> to vector<8x40xf32>
    %664 = arith.addf %662, %663 : vector<8x40xf32>
    %cst_249 = arith.constant 5.000000e-01 : f32
    %665 = vector.broadcast %cst_249 : f32 to vector<8x40xf32>
    %666 = arith.mulf %665, %664 : vector<8x40xf32>
    %667 = math.tanh %666 : vector<8x40xf32>
    %cst_250 = arith.constant 5.000000e-01 : f32
    %668 = vector.broadcast %cst_250 : f32 to vector<8x40xf32>
    %669 = arith.mulf %668, %667 : vector<8x40xf32>
    %cst_251 = arith.constant 5.000000e-01 : f32
    %670 = vector.broadcast %cst_251 : f32 to vector<8x40xf32>
    %671 = arith.addf %669, %670 : vector<8x40xf32>
    %672 = vector.extract_strided_slice %646 {offsets = [0, 80], sizes = [8, 40], strides = [1, 1]} : vector<8x120xf32> to vector<8x40xf32>
    %673 = vector.extract_strided_slice %651 {offsets = [0, 80], sizes = [8, 40], strides = [1, 1]} : vector<8x120xf32> to vector<8x40xf32>
    %674 = arith.mulf %661, %673 : vector<8x40xf32>
    %675 = arith.addf %672, %674 : vector<8x40xf32>
    %676 = math.tanh %675 : vector<8x40xf32>
    %cst_252 = arith.constant 1.000000e+00 : f32
    %677 = vector.broadcast %cst_252 : f32 to vector<8x40xf32>
    %678 = arith.subf %677, %671 : vector<8x40xf32>
    %679 = arith.mulf %678, %676 : vector<8x40xf32>
    %680 = arith.mulf %671, %566 : vector<8x40xf32>
    %681 = arith.addf %679, %680 : vector<8x40xf32>
    %c0_253 = arith.constant 0 : index
    %c0_254 = arith.constant 0 : index
    %682 = vector.load %arg17[%c0_253, %c0_254] : memref<40x100xf32, #tpu.memory_space<vmem>>, vector<40x100xf32>
    %cst_255 = arith.constant dense<0.000000e+00> : vector<8x100xf32>
    %683 = tpu.matmul %681, %682, %cst_255 {dimension_numbers = #tpu.dot_dimension_numbers<[1], [0], [0], [1], [0, 0, 1, 1], [], []>} : vector<8x40xf32>, vector<40x100xf32>, vector<8x100xf32> -> vector<8x100xf32>
    %c0_256 = arith.constant 0 : index
    %c0_257 = arith.constant 0 : index
    %684 = vector.load %arg18[%c0_256, %c0_257] : memref<1x100xf32, #tpu.memory_space<vmem>>, vector<1x100xf32>
    %685 = vector.broadcast %684 : vector<1x100xf32> to vector<8x100xf32>
    %686 = arith.addf %683, %685 : vector<8x100xf32>
    %687 = vector.extract_strided_slice %686 {offsets = [0, 0], sizes = [8, 80], strides = [1, 1]} : vector<8x100xf32> to vector<8x80xf32>
    %cst_258 = arith.constant 5.000000e-01 : f32
    %688 = vector.broadcast %cst_258 : f32 to vector<8x80xf32>
    %689 = arith.mulf %688, %687 : vector<8x80xf32>
    %690 = math.tanh %689 : vector<8x80xf32>
    %cst_259 = arith.constant 5.000000e-01 : f32
    %691 = vector.broadcast %cst_259 : f32 to vector<8x80xf32>
    %692 = arith.mulf %691, %690 : vector<8x80xf32>
    %cst_260 = arith.constant 5.000000e-01 : f32
    %693 = vector.broadcast %cst_260 : f32 to vector<8x80xf32>
    %694 = arith.addf %692, %693 : vector<8x80xf32>
    %695 = vector.extract_strided_slice %686 {offsets = [0, 80], sizes = [8, 20], strides = [1, 1]} : vector<8x100xf32> to vector<8x20xf32>
    %696 = math.tanh %695 : vector<8x20xf32>
    %c0_261 = arith.constant 0 : index
    %c0_262 = arith.constant 0 : index
    %697 = vector.load %arg19[%c0_261, %c0_262] : memref<80x80xf32, #tpu.memory_space<vmem>>, vector<80x80xf32>
    %cst_263 = arith.constant dense<0.000000e+00> : vector<8x80xf32>
    %698 = tpu.matmul %694, %697, %cst_263 {dimension_numbers = #tpu.dot_dimension_numbers<[1], [0], [0], [1], [0, 0, 1, 1], [], []>} : vector<8x80xf32>, vector<80x80xf32>, vector<8x80xf32> -> vector<8x80xf32>
    %c0_264 = arith.constant 0 : index
    %c0_265 = arith.constant 0 : index
    %699 = vector.load %arg20[%c0_264, %c0_265] : memref<1x80xf32, #tpu.memory_space<vmem>>, vector<1x80xf32>
    %700 = vector.broadcast %699 : vector<1x80xf32> to vector<8x80xf32>
    %701 = arith.addf %698, %700 : vector<8x80xf32>
    %cst_266 = arith.constant -1.500000e+00 : f32
    %cst_267 = arith.constant 1.500000e+00 : f32
    %702 = vector.broadcast %cst_266 : f32 to vector<8x80xf32>
    %703 = arith.maximumf %702, %701 : vector<8x80xf32>
    %704 = vector.broadcast %cst_267 : f32 to vector<8x80xf32>
    %705 = arith.minimumf %704, %703 : vector<8x80xf32>
    %706 = arith.addf %705, %638 : vector<8x80xf32>
    %707 = math.exp %701 : vector<8x80xf32>
    %cst_268 = arith.constant 0.0316227749 : f32
    %cst_269 = arith.constant 31.622776 : f32
    %708 = vector.broadcast %cst_268 : f32 to vector<8x80xf32>
    %709 = arith.maximumf %708, %707 : vector<8x80xf32>
    %710 = vector.broadcast %cst_269 : f32 to vector<8x80xf32>
    %711 = arith.minimumf %710, %709 : vector<8x80xf32>
    %712 = arith.select %387, %706, %711 : vector<8x80xi1>, vector<8x80xf32>
    %c3 = arith.constant 3 : index
    %c0_270 = arith.constant 0 : index
    %c0_271 = arith.constant 0 : index
    %713 = vector.load %arg2[%c3, %c0_270, %c0_271] : memref<13x8x128xf32, #tpu.memory_space<vmem>>, vector<1x8x128xf32>
    %714 = vector.shape_cast %713 : vector<1x8x128xf32> to vector<8x128xf32>
    %715 = vector.extract_strided_slice %714 {offsets = [0, 0], sizes = [8, 20], strides = [1, 1]} : vector<8x128xf32> to vector<8x20xf32>
    %716 = arith.addf %377, %715 : vector<8x20xf32>
    %cst_272 = arith.constant dense<0xFF800000> : vector<8xf32>
    %717 = vector.multi_reduction <maximumf>, %716, %cst_272 [1] : vector<8x20xf32> to vector<8xf32>
    %718 = vector.shape_cast %717 : vector<8xf32> to vector<8x1xf32>
    %719 = vector.broadcast %718 : vector<8x1xf32> to vector<8x20xf32>
    %720 = arith.cmpf oge, %716, %719 : vector<8x20xf32>
    %cst_273 = arith.constant 2.000000e+01 : f32
    %721 = vector.broadcast %cst_273 : f32 to vector<8x20xf32>
    %722 = arith.select %720, %352, %721 : vector<8x20xi1>, vector<8x20xf32>
    %cst_274 = arith.constant dense<0x7F800000> : vector<8xf32>
    %723 = vector.multi_reduction <minimumf>, %722, %cst_274 [1] : vector<8x20xf32> to vector<8xf32>
    %724 = vector.shape_cast %723 : vector<8xf32> to vector<8x1xf32>
    %725 = vector.broadcast %724 : vector<8x1xf32> to vector<8x40xf32>
    %726 = arith.cmpf oeq, %394, %725 : vector<8x40xf32>
    %727 = arith.extui %726 : vector<8x40xi1> to vector<8x40xi32>
    %728 = arith.sitofp %727 : vector<8x40xi32> to vector<8x40xf32>
    %729 = vector.extract_strided_slice %714 {offsets = [0, 20], sizes = [8, 1], strides = [1, 1]} : vector<8x128xf32> to vector<8x1xf32>
    %730 = vector.extract_strided_slice %714 {offsets = [0, 21], sizes = [8, 1], strides = [1, 1]} : vector<8x128xf32> to vector<8x1xf32>
    %731 = vector.shape_cast %729 : vector<8x1xf32> to vector<8x1xf32>
    %732 = vector.broadcast %731 : vector<8x1xf32> to vector<8x40xf32>
    %733 = vector.shape_cast %730 : vector<8x1xf32> to vector<8x1xf32>
    %734 = vector.broadcast %733 : vector<8x1xf32> to vector<8x40xf32>
    %735 = arith.select %390, %732, %734 : vector<8x40xi1>, vector<8x40xf32>
    %736 = vector.extract_strided_slice %712 {offsets = [0, 0], sizes = [8, 40], strides = [1, 1]} : vector<8x80xf32> to vector<8x40xf32>
    %737 = vector.extract_strided_slice %712 {offsets = [0, 40], sizes = [8, 40], strides = [1, 1]} : vector<8x80xf32> to vector<8x40xf32>
    %738 = arith.mulf %737, %735 : vector<8x40xf32>
    %739 = arith.addf %736, %738 : vector<8x40xf32>
    %740 = arith.mulf %728, %739 : vector<8x40xf32>
    %741 = vector.extract_strided_slice %740 {offsets = [0, 0], sizes = [8, 20], strides = [1, 1]} : vector<8x40xf32> to vector<8x20xf32>
    %cst_275 = arith.constant dense<0.000000e+00> : vector<8xf32>
    %742 = vector.multi_reduction <add>, %741, %cst_275 [1] : vector<8x20xf32> to vector<8xf32>
    %743 = vector.shape_cast %742 : vector<8xf32> to vector<8x1xf32>
    %744 = vector.extract_strided_slice %740 {offsets = [0, 20], sizes = [8, 20], strides = [1, 1]} : vector<8x40xf32> to vector<8x20xf32>
    %cst_276 = arith.constant dense<0.000000e+00> : vector<8xf32>
    %745 = vector.multi_reduction <add>, %744, %cst_276 [1] : vector<8x20xf32> to vector<8xf32>
    %746 = vector.shape_cast %745 : vector<8xf32> to vector<8x1xf32>
    %747 = tpu.concatenate %743, %746 in 1 : vector<8x1xf32>, vector<8x1xf32> -> vector<8x2xf32>
    %748 = tpu.concatenate %712, %696, %747, %396 in 1 : vector<8x80xf32>, vector<8x20xf32>, vector<8x2xf32>, vector<8x26xf32> -> vector<8x128xf32>
    %c2_277 = arith.constant 2 : index
    %c0_278 = arith.constant 0 : index
    %c0_279 = arith.constant 0 : index
    %749 = vector.load %arg21[%c2_277, %c0_278, %c0_279] : memref<12x8x128xf32, #tpu.memory_space<vmem>>, vector<1x8x128xf32>
    %750 = vector.shape_cast %749 : vector<1x8x128xf32> to vector<8x128xf32>
    %751 = vector.shape_cast %748 : vector<8x128xf32> to vector<1x8x128xf32>
    tpu.vector_store %arg21[%c2_277, %c0_278, %c0_279], %751 {strides = array<i32>} : memref<12x8x128xf32, #tpu.memory_space<vmem>>, vector<1x8x128xf32>,
    %cst_280 = arith.constant 0.000000e+00 : f32
    %752 = vector.broadcast %cst_280 : f32 to vector<8x80xf32>
    %753 = arith.select %387, %712, %752 : vector<8x80xi1>, vector<8x80xf32>
    %754 = vector.broadcast %743 : vector<8x1xf32> to vector<8x120xf32>
    %755 = vector.broadcast %383 : vector<1x120xf32> to vector<8x120xf32>
    %756 = arith.mulf %754, %755 : vector<8x120xf32>
    %757 = arith.addf %382, %756 : vector<8x120xf32>
    %758 = vector.broadcast %746 : vector<8x1xf32> to vector<8x120xf32>
    %759 = vector.broadcast %384 : vector<1x120xf32> to vector<8x120xf32>
    %760 = arith.mulf %758, %759 : vector<8x120xf32>
    %761 = arith.addf %757, %760 : vector<8x120xf32>
    %c0_281 = arith.constant 0 : index
    %c0_282 = arith.constant 0 : index
    %762 = vector.load %arg15[%c0_281, %c0_282] : memref<40x120xf32, #tpu.memory_space<vmem>>, vector<40x120xf32>
    %cst_283 = arith.constant dense<0.000000e+00> : vector<8x120xf32>
    %763 = tpu.matmul %681, %762, %cst_283 {dimension_numbers = #tpu.dot_dimension_numbers<[1], [0], [0], [1], [0, 0, 1, 1], [], []>} : vector<8x40xf32>, vector<40x120xf32>, vector<8x120xf32> -> vector<8x120xf32>
    %c0_284 = arith.constant 0 : index
    %c0_285 = arith.constant 0 : index
    %764 = vector.load %arg16[%c0_284, %c0_285] : memref<1x120xf32, #tpu.memory_space<vmem>>, vector<1x120xf32>
    %765 = vector.broadcast %764 : vector<1x120xf32> to vector<8x120xf32>
    %766 = arith.addf %763, %765 : vector<8x120xf32>
    %767 = vector.extract_strided_slice %761 {offsets = [0, 0], sizes = [8, 40], strides = [1, 1]} : vector<8x120xf32> to vector<8x40xf32>
    %768 = vector.extract_strided_slice %766 {offsets = [0, 0], sizes = [8, 40], strides = [1, 1]} : vector<8x120xf32> to vector<8x40xf32>
    %769 = arith.addf %767, %768 : vector<8x40xf32>
    %cst_286 = arith.constant 5.000000e-01 : f32
    %770 = vector.broadcast %cst_286 : f32 to vector<8x40xf32>
    %771 = arith.mulf %770, %769 : vector<8x40xf32>
    %772 = math.tanh %771 : vector<8x40xf32>
    %cst_287 = arith.constant 5.000000e-01 : f32
    %773 = vector.broadcast %cst_287 : f32 to vector<8x40xf32>
    %774 = arith.mulf %773, %772 : vector<8x40xf32>
    %cst_288 = arith.constant 5.000000e-01 : f32
    %775 = vector.broadcast %cst_288 : f32 to vector<8x40xf32>
    %776 = arith.addf %774, %775 : vector<8x40xf32>
    %777 = vector.extract_strided_slice %761 {offsets = [0, 40], sizes = [8, 40], strides = [1, 1]} : vector<8x120xf32> to vector<8x40xf32>
    %778 = vector.extract_strided_slice %766 {offsets = [0, 40], sizes = [8, 40], strides = [1, 1]} : vector<8x120xf32> to vector<8x40xf32>
    %779 = arith.addf %777, %778 : vector<8x40xf32>
    %cst_289 = arith.constant 5.000000e-01 : f32
    %780 = vector.broadcast %cst_289 : f32 to vector<8x40xf32>
    %781 = arith.mulf %780, %779 : vector<8x40xf32>
    %782 = math.tanh %781 : vector<8x40xf32>
    %cst_290 = arith.constant 5.000000e-01 : f32
    %783 = vector.broadcast %cst_290 : f32 to vector<8x40xf32>
    %784 = arith.mulf %783, %782 : vector<8x40xf32>
    %cst_291 = arith.constant 5.000000e-01 : f32
    %785 = vector.broadcast %cst_291 : f32 to vector<8x40xf32>
    %786 = arith.addf %784, %785 : vector<8x40xf32>
    %787 = vector.extract_strided_slice %761 {offsets = [0, 80], sizes = [8, 40], strides = [1, 1]} : vector<8x120xf32> to vector<8x40xf32>
    %788 = vector.extract_strided_slice %766 {offsets = [0, 80], sizes = [8, 40], strides = [1, 1]} : vector<8x120xf32> to vector<8x40xf32>
    %789 = arith.mulf %776, %788 : vector<8x40xf32>
    %790 = arith.addf %787, %789 : vector<8x40xf32>
    %791 = math.tanh %790 : vector<8x40xf32>
    %cst_292 = arith.constant 1.000000e+00 : f32
    %792 = vector.broadcast %cst_292 : f32 to vector<8x40xf32>
    %793 = arith.subf %792, %786 : vector<8x40xf32>
    %794 = arith.mulf %793, %791 : vector<8x40xf32>
    %795 = arith.mulf %786, %681 : vector<8x40xf32>
    %796 = arith.addf %794, %795 : vector<8x40xf32>
    %c0_293 = arith.constant 0 : index
    %c0_294 = arith.constant 0 : index
    %797 = vector.load %arg17[%c0_293, %c0_294] : memref<40x100xf32, #tpu.memory_space<vmem>>, vector<40x100xf32>
    %cst_295 = arith.constant dense<0.000000e+00> : vector<8x100xf32>
    %798 = tpu.matmul %796, %797, %cst_295 {dimension_numbers = #tpu.dot_dimension_numbers<[1], [0], [0], [1], [0, 0, 1, 1], [], []>} : vector<8x40xf32>, vector<40x100xf32>, vector<8x100xf32> -> vector<8x100xf32>
    %c0_296 = arith.constant 0 : index
    %c0_297 = arith.constant 0 : index
    %799 = vector.load %arg18[%c0_296, %c0_297] : memref<1x100xf32, #tpu.memory_space<vmem>>, vector<1x100xf32>
    %800 = vector.broadcast %799 : vector<1x100xf32> to vector<8x100xf32>
    %801 = arith.addf %798, %800 : vector<8x100xf32>
    %802 = vector.extract_strided_slice %801 {offsets = [0, 0], sizes = [8, 80], strides = [1, 1]} : vector<8x100xf32> to vector<8x80xf32>
    %cst_298 = arith.constant 5.000000e-01 : f32
    %803 = vector.broadcast %cst_298 : f32 to vector<8x80xf32>
    %804 = arith.mulf %803, %802 : vector<8x80xf32>
    %805 = math.tanh %804 : vector<8x80xf32>
    %cst_299 = arith.constant 5.000000e-01 : f32
    %806 = vector.broadcast %cst_299 : f32 to vector<8x80xf32>
    %807 = arith.mulf %806, %805 : vector<8x80xf32>
    %cst_300 = arith.constant 5.000000e-01 : f32
    %808 = vector.broadcast %cst_300 : f32 to vector<8x80xf32>
    %809 = arith.addf %807, %808 : vector<8x80xf32>
    %810 = vector.extract_strided_slice %801 {offsets = [0, 80], sizes = [8, 20], strides = [1, 1]} : vector<8x100xf32> to vector<8x20xf32>
    %811 = math.tanh %810 : vector<8x20xf32>
    %c0_301 = arith.constant 0 : index
    %c0_302 = arith.constant 0 : index
    %812 = vector.load %arg19[%c0_301, %c0_302] : memref<80x80xf32, #tpu.memory_space<vmem>>, vector<80x80xf32>
    %cst_303 = arith.constant dense<0.000000e+00> : vector<8x80xf32>
    %813 = tpu.matmul %809, %812, %cst_303 {dimension_numbers = #tpu.dot_dimension_numbers<[1], [0], [0], [1], [0, 0, 1, 1], [], []>} : vector<8x80xf32>, vector<80x80xf32>, vector<8x80xf32> -> vector<8x80xf32>
    %c0_304 = arith.constant 0 : index
    %c0_305 = arith.constant 0 : index
    %814 = vector.load %arg20[%c0_304, %c0_305] : memref<1x80xf32, #tpu.memory_space<vmem>>, vector<1x80xf32>
    %815 = vector.broadcast %814 : vector<1x80xf32> to vector<8x80xf32>
    %816 = arith.addf %813, %815 : vector<8x80xf32>
    %cst_306 = arith.constant -1.500000e+00 : f32
    %cst_307 = arith.constant 1.500000e+00 : f32
    %817 = vector.broadcast %cst_306 : f32 to vector<8x80xf32>
    %818 = arith.maximumf %817, %816 : vector<8x80xf32>
    %819 = vector.broadcast %cst_307 : f32 to vector<8x80xf32>
    %820 = arith.minimumf %819, %818 : vector<8x80xf32>
    %821 = arith.addf %820, %753 : vector<8x80xf32>
    %822 = math.exp %816 : vector<8x80xf32>
    %cst_308 = arith.constant 0.0316227749 : f32
    %cst_309 = arith.constant 31.622776 : f32
    %823 = vector.broadcast %cst_308 : f32 to vector<8x80xf32>
    %824 = arith.maximumf %823, %822 : vector<8x80xf32>
    %825 = vector.broadcast %cst_309 : f32 to vector<8x80xf32>
    %826 = arith.minimumf %825, %824 : vector<8x80xf32>
    %827 = arith.select %387, %821, %826 : vector<8x80xi1>, vector<8x80xf32>
    %c4 = arith.constant 4 : index
    %c0_310 = arith.constant 0 : index
    %c0_311 = arith.constant 0 : index
    %828 = vector.load %arg2[%c4, %c0_310, %c0_311] : memref<13x8x128xf32, #tpu.memory_space<vmem>>, vector<1x8x128xf32>
    %829 = vector.shape_cast %828 : vector<1x8x128xf32> to vector<8x128xf32>
    %830 = vector.extract_strided_slice %829 {offsets = [0, 0], sizes = [8, 20], strides = [1, 1]} : vector<8x128xf32> to vector<8x20xf32>
    %831 = arith.addf %377, %830 : vector<8x20xf32>
    %cst_312 = arith.constant dense<0xFF800000> : vector<8xf32>
    %832 = vector.multi_reduction <maximumf>, %831, %cst_312 [1] : vector<8x20xf32> to vector<8xf32>
    %833 = vector.shape_cast %832 : vector<8xf32> to vector<8x1xf32>
    %834 = vector.broadcast %833 : vector<8x1xf32> to vector<8x20xf32>
    %835 = arith.cmpf oge, %831, %834 : vector<8x20xf32>
    %cst_313 = arith.constant 2.000000e+01 : f32
    %836 = vector.broadcast %cst_313 : f32 to vector<8x20xf32>
    %837 = arith.select %835, %352, %836 : vector<8x20xi1>, vector<8x20xf32>
    %cst_314 = arith.constant dense<0x7F800000> : vector<8xf32>
    %838 = vector.multi_reduction <minimumf>, %837, %cst_314 [1] : vector<8x20xf32> to vector<8xf32>
    %839 = vector.shape_cast %838 : vector<8xf32> to vector<8x1xf32>
    %840 = vector.broadcast %839 : vector<8x1xf32> to vector<8x40xf32>
    %841 = arith.cmpf oeq, %394, %840 : vector<8x40xf32>
    %842 = arith.extui %841 : vector<8x40xi1> to vector<8x40xi32>
    %843 = arith.sitofp %842 : vector<8x40xi32> to vector<8x40xf32>
    %844 = vector.extract_strided_slice %829 {offsets = [0, 20], sizes = [8, 1], strides = [1, 1]} : vector<8x128xf32> to vector<8x1xf32>
    %845 = vector.extract_strided_slice %829 {offsets = [0, 21], sizes = [8, 1], strides = [1, 1]} : vector<8x128xf32> to vector<8x1xf32>
    %846 = vector.shape_cast %844 : vector<8x1xf32> to vector<8x1xf32>
    %847 = vector.broadcast %846 : vector<8x1xf32> to vector<8x40xf32>
    %848 = vector.shape_cast %845 : vector<8x1xf32> to vector<8x1xf32>
    %849 = vector.broadcast %848 : vector<8x1xf32> to vector<8x40xf32>
    %850 = arith.select %390, %847, %849 : vector<8x40xi1>, vector<8x40xf32>
    %851 = vector.extract_strided_slice %827 {offsets = [0, 0], sizes = [8, 40], strides = [1, 1]} : vector<8x80xf32> to vector<8x40xf32>
    %852 = vector.extract_strided_slice %827 {offsets = [0, 40], sizes = [8, 40], strides = [1, 1]} : vector<8x80xf32> to vector<8x40xf32>
    %853 = arith.mulf %852, %850 : vector<8x40xf32>
    %854 = arith.addf %851, %853 : vector<8x40xf32>
    %855 = arith.mulf %843, %854 : vector<8x40xf32>
    %856 = vector.extract_strided_slice %855 {offsets = [0, 0], sizes = [8, 20], strides = [1, 1]} : vector<8x40xf32> to vector<8x20xf32>
    %cst_315 = arith.constant dense<0.000000e+00> : vector<8xf32>
    %857 = vector.multi_reduction <add>, %856, %cst_315 [1] : vector<8x20xf32> to vector<8xf32>
    %858 = vector.shape_cast %857 : vector<8xf32> to vector<8x1xf32>
    %859 = vector.extract_strided_slice %855 {offsets = [0, 20], sizes = [8, 20], strides = [1, 1]} : vector<8x40xf32> to vector<8x20xf32>
    %cst_316 = arith.constant dense<0.000000e+00> : vector<8xf32>
    %860 = vector.multi_reduction <add>, %859, %cst_316 [1] : vector<8x20xf32> to vector<8xf32>
    %861 = vector.shape_cast %860 : vector<8xf32> to vector<8x1xf32>
    %862 = tpu.concatenate %858, %861 in 1 : vector<8x1xf32>, vector<8x1xf32> -> vector<8x2xf32>
    %863 = tpu.concatenate %827, %811, %862, %396 in 1 : vector<8x80xf32>, vector<8x20xf32>, vector<8x2xf32>, vector<8x26xf32> -> vector<8x128xf32>
    %c3_317 = arith.constant 3 : index
    %c0_318 = arith.constant 0 : index
    %c0_319 = arith.constant 0 : index
    %864 = vector.load %arg21[%c3_317, %c0_318, %c0_319] : memref<12x8x128xf32, #tpu.memory_space<vmem>>, vector<1x8x128xf32>
    %865 = vector.shape_cast %864 : vector<1x8x128xf32> to vector<8x128xf32>
    %866 = vector.shape_cast %863 : vector<8x128xf32> to vector<1x8x128xf32>
    tpu.vector_store %arg21[%c3_317, %c0_318, %c0_319], %866 {strides = array<i32>} : memref<12x8x128xf32, #tpu.memory_space<vmem>>, vector<1x8x128xf32>,
    %cst_320 = arith.constant 0.000000e+00 : f32
    %867 = vector.broadcast %cst_320 : f32 to vector<8x80xf32>
    %868 = arith.select %387, %827, %867 : vector<8x80xi1>, vector<8x80xf32>
    %869 = vector.broadcast %858 : vector<8x1xf32> to vector<8x120xf32>
    %870 = vector.broadcast %383 : vector<1x120xf32> to vector<8x120xf32>
    %871 = arith.mulf %869, %870 : vector<8x120xf32>
    %872 = arith.addf %382, %871 : vector<8x120xf32>
    %873 = vector.broadcast %861 : vector<8x1xf32> to vector<8x120xf32>
    %874 = vector.broadcast %384 : vector<1x120xf32> to vector<8x120xf32>
    %875 = arith.mulf %873, %874 : vector<8x120xf32>
    %876 = arith.addf %872, %875 : vector<8x120xf32>
    %c0_321 = arith.constant 0 : index
    %c0_322 = arith.constant 0 : index
    %877 = vector.load %arg15[%c0_321, %c0_322] : memref<40x120xf32, #tpu.memory_space<vmem>>, vector<40x120xf32>
    %cst_323 = arith.constant dense<0.000000e+00> : vector<8x120xf32>
    %878 = tpu.matmul %796, %877, %cst_323 {dimension_numbers = #tpu.dot_dimension_numbers<[1], [0], [0], [1], [0, 0, 1, 1], [], []>} : vector<8x40xf32>, vector<40x120xf32>, vector<8x120xf32> -> vector<8x120xf32>
    %c0_324 = arith.constant 0 : index
    %c0_325 = arith.constant 0 : index
    %879 = vector.load %arg16[%c0_324, %c0_325] : memref<1x120xf32, #tpu.memory_space<vmem>>, vector<1x120xf32>
    %880 = vector.broadcast %879 : vector<1x120xf32> to vector<8x120xf32>
    %881 = arith.addf %878, %880 : vector<8x120xf32>
    %882 = vector.extract_strided_slice %876 {offsets = [0, 0], sizes = [8, 40], strides = [1, 1]} : vector<8x120xf32> to vector<8x40xf32>
    %883 = vector.extract_strided_slice %881 {offsets = [0, 0], sizes = [8, 40], strides = [1, 1]} : vector<8x120xf32> to vector<8x40xf32>
    %884 = arith.addf %882, %883 : vector<8x40xf32>
    %cst_326 = arith.constant 5.000000e-01 : f32
    %885 = vector.broadcast %cst_326 : f32 to vector<8x40xf32>
    %886 = arith.mulf %885, %884 : vector<8x40xf32>
    %887 = math.tanh %886 : vector<8x40xf32>
    %cst_327 = arith.constant 5.000000e-01 : f32
    %888 = vector.broadcast %cst_327 : f32 to vector<8x40xf32>
    %889 = arith.mulf %888, %887 : vector<8x40xf32>
    %cst_328 = arith.constant 5.000000e-01 : f32
    %890 = vector.broadcast %cst_328 : f32 to vector<8x40xf32>
    %891 = arith.addf %889, %890 : vector<8x40xf32>
    %892 = vector.extract_strided_slice %876 {offsets = [0, 40], sizes = [8, 40], strides = [1, 1]} : vector<8x120xf32> to vector<8x40xf32>
    %893 = vector.extract_strided_slice %881 {offsets = [0, 40], sizes = [8, 40], strides = [1, 1]} : vector<8x120xf32> to vector<8x40xf32>
    %894 = arith.addf %892, %893 : vector<8x40xf32>
    %cst_329 = arith.constant 5.000000e-01 : f32
    %895 = vector.broadcast %cst_329 : f32 to vector<8x40xf32>
    %896 = arith.mulf %895, %894 : vector<8x40xf32>
    %897 = math.tanh %896 : vector<8x40xf32>
    %cst_330 = arith.constant 5.000000e-01 : f32
    %898 = vector.broadcast %cst_330 : f32 to vector<8x40xf32>
    %899 = arith.mulf %898, %897 : vector<8x40xf32>
    %cst_331 = arith.constant 5.000000e-01 : f32
    %900 = vector.broadcast %cst_331 : f32 to vector<8x40xf32>
    %901 = arith.addf %899, %900 : vector<8x40xf32>
    %902 = vector.extract_strided_slice %876 {offsets = [0, 80], sizes = [8, 40], strides = [1, 1]} : vector<8x120xf32> to vector<8x40xf32>
    %903 = vector.extract_strided_slice %881 {offsets = [0, 80], sizes = [8, 40], strides = [1, 1]} : vector<8x120xf32> to vector<8x40xf32>
    %904 = arith.mulf %891, %903 : vector<8x40xf32>
    %905 = arith.addf %902, %904 : vector<8x40xf32>
    %906 = math.tanh %905 : vector<8x40xf32>
    %cst_332 = arith.constant 1.000000e+00 : f32
    %907 = vector.broadcast %cst_332 : f32 to vector<8x40xf32>
    %908 = arith.subf %907, %901 : vector<8x40xf32>
    %909 = arith.mulf %908, %906 : vector<8x40xf32>
    %910 = arith.mulf %901, %796 : vector<8x40xf32>
    %911 = arith.addf %909, %910 : vector<8x40xf32>
    %c0_333 = arith.constant 0 : index
    %c0_334 = arith.constant 0 : index
    %912 = vector.load %arg17[%c0_333, %c0_334] : memref<40x100xf32, #tpu.memory_space<vmem>>, vector<40x100xf32>
    %cst_335 = arith.constant dense<0.000000e+00> : vector<8x100xf32>
    %913 = tpu.matmul %911, %912, %cst_335 {dimension_numbers = #tpu.dot_dimension_numbers<[1], [0], [0], [1], [0, 0, 1, 1], [], []>} : vector<8x40xf32>, vector<40x100xf32>, vector<8x100xf32> -> vector<8x100xf32>
    %c0_336 = arith.constant 0 : index
    %c0_337 = arith.constant 0 : index
    %914 = vector.load %arg18[%c0_336, %c0_337] : memref<1x100xf32, #tpu.memory_space<vmem>>, vector<1x100xf32>
    %915 = vector.broadcast %914 : vector<1x100xf32> to vector<8x100xf32>
    %916 = arith.addf %913, %915 : vector<8x100xf32>
    %917 = vector.extract_strided_slice %916 {offsets = [0, 0], sizes = [8, 80], strides = [1, 1]} : vector<8x100xf32> to vector<8x80xf32>
    %cst_338 = arith.constant 5.000000e-01 : f32
    %918 = vector.broadcast %cst_338 : f32 to vector<8x80xf32>
    %919 = arith.mulf %918, %917 : vector<8x80xf32>
    %920 = math.tanh %919 : vector<8x80xf32>
    %cst_339 = arith.constant 5.000000e-01 : f32
    %921 = vector.broadcast %cst_339 : f32 to vector<8x80xf32>
    %922 = arith.mulf %921, %920 : vector<8x80xf32>
    %cst_340 = arith.constant 5.000000e-01 : f32
    %923 = vector.broadcast %cst_340 : f32 to vector<8x80xf32>
    %924 = arith.addf %922, %923 : vector<8x80xf32>
    %925 = vector.extract_strided_slice %916 {offsets = [0, 80], sizes = [8, 20], strides = [1, 1]} : vector<8x100xf32> to vector<8x20xf32>
    %926 = math.tanh %925 : vector<8x20xf32>
    %c0_341 = arith.constant 0 : index
    %c0_342 = arith.constant 0 : index
    %927 = vector.load %arg19[%c0_341, %c0_342] : memref<80x80xf32, #tpu.memory_space<vmem>>, vector<80x80xf32>
    %cst_343 = arith.constant dense<0.000000e+00> : vector<8x80xf32>
    %928 = tpu.matmul %924, %927, %cst_343 {dimension_numbers = #tpu.dot_dimension_numbers<[1], [0], [0], [1], [0, 0, 1, 1], [], []>} : vector<8x80xf32>, vector<80x80xf32>, vector<8x80xf32> -> vector<8x80xf32>
    %c0_344 = arith.constant 0 : index
    %c0_345 = arith.constant 0 : index
    %929 = vector.load %arg20[%c0_344, %c0_345] : memref<1x80xf32, #tpu.memory_space<vmem>>, vector<1x80xf32>
    %930 = vector.broadcast %929 : vector<1x80xf32> to vector<8x80xf32>
    %931 = arith.addf %928, %930 : vector<8x80xf32>
    %cst_346 = arith.constant -1.500000e+00 : f32
    %cst_347 = arith.constant 1.500000e+00 : f32
    %932 = vector.broadcast %cst_346 : f32 to vector<8x80xf32>
    %933 = arith.maximumf %932, %931 : vector<8x80xf32>
    %934 = vector.broadcast %cst_347 : f32 to vector<8x80xf32>
    %935 = arith.minimumf %934, %933 : vector<8x80xf32>
    %936 = arith.addf %935, %868 : vector<8x80xf32>
    %937 = math.exp %931 : vector<8x80xf32>
    %cst_348 = arith.constant 0.0316227749 : f32
    %cst_349 = arith.constant 31.622776 : f32
    %938 = vector.broadcast %cst_348 : f32 to vector<8x80xf32>
    %939 = arith.maximumf %938, %937 : vector<8x80xf32>
    %940 = vector.broadcast %cst_349 : f32 to vector<8x80xf32>
    %941 = arith.minimumf %940, %939 : vector<8x80xf32>
    %942 = arith.select %387, %936, %941 : vector<8x80xi1>, vector<8x80xf32>
    %c5 = arith.constant 5 : index
    %c0_350 = arith.constant 0 : index
    %c0_351 = arith.constant 0 : index
    %943 = vector.load %arg2[%c5, %c0_350, %c0_351] : memref<13x8x128xf32, #tpu.memory_space<vmem>>, vector<1x8x128xf32>
    %944 = vector.shape_cast %943 : vector<1x8x128xf32> to vector<8x128xf32>
    %945 = vector.extract_strided_slice %944 {offsets = [0, 0], sizes = [8, 20], strides = [1, 1]} : vector<8x128xf32> to vector<8x20xf32>
    %946 = arith.addf %377, %945 : vector<8x20xf32>
    %cst_352 = arith.constant dense<0xFF800000> : vector<8xf32>
    %947 = vector.multi_reduction <maximumf>, %946, %cst_352 [1] : vector<8x20xf32> to vector<8xf32>
    %948 = vector.shape_cast %947 : vector<8xf32> to vector<8x1xf32>
    %949 = vector.broadcast %948 : vector<8x1xf32> to vector<8x20xf32>
    %950 = arith.cmpf oge, %946, %949 : vector<8x20xf32>
    %cst_353 = arith.constant 2.000000e+01 : f32
    %951 = vector.broadcast %cst_353 : f32 to vector<8x20xf32>
    %952 = arith.select %950, %352, %951 : vector<8x20xi1>, vector<8x20xf32>
    %cst_354 = arith.constant dense<0x7F800000> : vector<8xf32>
    %953 = vector.multi_reduction <minimumf>, %952, %cst_354 [1] : vector<8x20xf32> to vector<8xf32>
    %954 = vector.shape_cast %953 : vector<8xf32> to vector<8x1xf32>
    %955 = vector.broadcast %954 : vector<8x1xf32> to vector<8x40xf32>
    %956 = arith.cmpf oeq, %394, %955 : vector<8x40xf32>
    %957 = arith.extui %956 : vector<8x40xi1> to vector<8x40xi32>
    %958 = arith.sitofp %957 : vector<8x40xi32> to vector<8x40xf32>
    %959 = vector.extract_strided_slice %944 {offsets = [0, 20], sizes = [8, 1], strides = [1, 1]} : vector<8x128xf32> to vector<8x1xf32>
    %960 = vector.extract_strided_slice %944 {offsets = [0, 21], sizes = [8, 1], strides = [1, 1]} : vector<8x128xf32> to vector<8x1xf32>
    %961 = vector.shape_cast %959 : vector<8x1xf32> to vector<8x1xf32>
    %962 = vector.broadcast %961 : vector<8x1xf32> to vector<8x40xf32>
    %963 = vector.shape_cast %960 : vector<8x1xf32> to vector<8x1xf32>
    %964 = vector.broadcast %963 : vector<8x1xf32> to vector<8x40xf32>
    %965 = arith.select %390, %962, %964 : vector<8x40xi1>, vector<8x40xf32>
    %966 = vector.extract_strided_slice %942 {offsets = [0, 0], sizes = [8, 40], strides = [1, 1]} : vector<8x80xf32> to vector<8x40xf32>
    %967 = vector.extract_strided_slice %942 {offsets = [0, 40], sizes = [8, 40], strides = [1, 1]} : vector<8x80xf32> to vector<8x40xf32>
    %968 = arith.mulf %967, %965 : vector<8x40xf32>
    %969 = arith.addf %966, %968 : vector<8x40xf32>
    %970 = arith.mulf %958, %969 : vector<8x40xf32>
    %971 = vector.extract_strided_slice %970 {offsets = [0, 0], sizes = [8, 20], strides = [1, 1]} : vector<8x40xf32> to vector<8x20xf32>
    %cst_355 = arith.constant dense<0.000000e+00> : vector<8xf32>
    %972 = vector.multi_reduction <add>, %971, %cst_355 [1] : vector<8x20xf32> to vector<8xf32>
    %973 = vector.shape_cast %972 : vector<8xf32> to vector<8x1xf32>
    %974 = vector.extract_strided_slice %970 {offsets = [0, 20], sizes = [8, 20], strides = [1, 1]} : vector<8x40xf32> to vector<8x20xf32>
    %cst_356 = arith.constant dense<0.000000e+00> : vector<8xf32>
    %975 = vector.multi_reduction <add>, %974, %cst_356 [1] : vector<8x20xf32> to vector<8xf32>
    %976 = vector.shape_cast %975 : vector<8xf32> to vector<8x1xf32>
    %977 = tpu.concatenate %973, %976 in 1 : vector<8x1xf32>, vector<8x1xf32> -> vector<8x2xf32>
    %978 = tpu.concatenate %942, %926, %977, %396 in 1 : vector<8x80xf32>, vector<8x20xf32>, vector<8x2xf32>, vector<8x26xf32> -> vector<8x128xf32>
    %c4_357 = arith.constant 4 : index
    %c0_358 = arith.constant 0 : index
    %c0_359 = arith.constant 0 : index
    %979 = vector.load %arg21[%c4_357, %c0_358, %c0_359] : memref<12x8x128xf32, #tpu.memory_space<vmem>>, vector<1x8x128xf32>
    %980 = vector.shape_cast %979 : vector<1x8x128xf32> to vector<8x128xf32>
    %981 = vector.shape_cast %978 : vector<8x128xf32> to vector<1x8x128xf32>
    tpu.vector_store %arg21[%c4_357, %c0_358, %c0_359], %981 {strides = array<i32>} : memref<12x8x128xf32, #tpu.memory_space<vmem>>, vector<1x8x128xf32>,
    %cst_360 = arith.constant 0.000000e+00 : f32
    %982 = vector.broadcast %cst_360 : f32 to vector<8x80xf32>
    %983 = arith.select %387, %942, %982 : vector<8x80xi1>, vector<8x80xf32>
    %984 = vector.broadcast %973 : vector<8x1xf32> to vector<8x120xf32>
    %985 = vector.broadcast %383 : vector<1x120xf32> to vector<8x120xf32>
    %986 = arith.mulf %984, %985 : vector<8x120xf32>
    %987 = arith.addf %382, %986 : vector<8x120xf32>
    %988 = vector.broadcast %976 : vector<8x1xf32> to vector<8x120xf32>
    %989 = vector.broadcast %384 : vector<1x120xf32> to vector<8x120xf32>
    %990 = arith.mulf %988, %989 : vector<8x120xf32>
    %991 = arith.addf %987, %990 : vector<8x120xf32>
    %c0_361 = arith.constant 0 : index
    %c0_362 = arith.constant 0 : index
    %992 = vector.load %arg15[%c0_361, %c0_362] : memref<40x120xf32, #tpu.memory_space<vmem>>, vector<40x120xf32>
    %cst_363 = arith.constant dense<0.000000e+00> : vector<8x120xf32>
    %993 = tpu.matmul %911, %992, %cst_363 {dimension_numbers = #tpu.dot_dimension_numbers<[1], [0], [0], [1], [0, 0, 1, 1], [], []>} : vector<8x40xf32>, vector<40x120xf32>, vector<8x120xf32> -> vector<8x120xf32>
    %c0_364 = arith.constant 0 : index
    %c0_365 = arith.constant 0 : index
    %994 = vector.load %arg16[%c0_364, %c0_365] : memref<1x120xf32, #tpu.memory_space<vmem>>, vector<1x120xf32>
    %995 = vector.broadcast %994 : vector<1x120xf32> to vector<8x120xf32>
    %996 = arith.addf %993, %995 : vector<8x120xf32>
    %997 = vector.extract_strided_slice %991 {offsets = [0, 0], sizes = [8, 40], strides = [1, 1]} : vector<8x120xf32> to vector<8x40xf32>
    %998 = vector.extract_strided_slice %996 {offsets = [0, 0], sizes = [8, 40], strides = [1, 1]} : vector<8x120xf32> to vector<8x40xf32>
    %999 = arith.addf %997, %998 : vector<8x40xf32>
    %cst_366 = arith.constant 5.000000e-01 : f32
    %1000 = vector.broadcast %cst_366 : f32 to vector<8x40xf32>
    %1001 = arith.mulf %1000, %999 : vector<8x40xf32>
    %1002 = math.tanh %1001 : vector<8x40xf32>
    %cst_367 = arith.constant 5.000000e-01 : f32
    %1003 = vector.broadcast %cst_367 : f32 to vector<8x40xf32>
    %1004 = arith.mulf %1003, %1002 : vector<8x40xf32>
    %cst_368 = arith.constant 5.000000e-01 : f32
    %1005 = vector.broadcast %cst_368 : f32 to vector<8x40xf32>
    %1006 = arith.addf %1004, %1005 : vector<8x40xf32>
    %1007 = vector.extract_strided_slice %991 {offsets = [0, 40], sizes = [8, 40], strides = [1, 1]} : vector<8x120xf32> to vector<8x40xf32>
    %1008 = vector.extract_strided_slice %996 {offsets = [0, 40], sizes = [8, 40], strides = [1, 1]} : vector<8x120xf32> to vector<8x40xf32>
    %1009 = arith.addf %1007, %1008 : vector<8x40xf32>
    %cst_369 = arith.constant 5.000000e-01 : f32
    %1010 = vector.broadcast %cst_369 : f32 to vector<8x40xf32>
    %1011 = arith.mulf %1010, %1009 : vector<8x40xf32>
    %1012 = math.tanh %1011 : vector<8x40xf32>
    %cst_370 = arith.constant 5.000000e-01 : f32
    %1013 = vector.broadcast %cst_370 : f32 to vector<8x40xf32>
    %1014 = arith.mulf %1013, %1012 : vector<8x40xf32>
    %cst_371 = arith.constant 5.000000e-01 : f32
    %1015 = vector.broadcast %cst_371 : f32 to vector<8x40xf32>
    %1016 = arith.addf %1014, %1015 : vector<8x40xf32>
    %1017 = vector.extract_strided_slice %991 {offsets = [0, 80], sizes = [8, 40], strides = [1, 1]} : vector<8x120xf32> to vector<8x40xf32>
    %1018 = vector.extract_strided_slice %996 {offsets = [0, 80], sizes = [8, 40], strides = [1, 1]} : vector<8x120xf32> to vector<8x40xf32>
    %1019 = arith.mulf %1006, %1018 : vector<8x40xf32>
    %1020 = arith.addf %1017, %1019 : vector<8x40xf32>
    %1021 = math.tanh %1020 : vector<8x40xf32>
    %cst_372 = arith.constant 1.000000e+00 : f32
    %1022 = vector.broadcast %cst_372 : f32 to vector<8x40xf32>
    %1023 = arith.subf %1022, %1016 : vector<8x40xf32>
    %1024 = arith.mulf %1023, %1021 : vector<8x40xf32>
    %1025 = arith.mulf %1016, %911 : vector<8x40xf32>
    %1026 = arith.addf %1024, %1025 : vector<8x40xf32>
    %c0_373 = arith.constant 0 : index
    %c0_374 = arith.constant 0 : index
    %1027 = vector.load %arg17[%c0_373, %c0_374] : memref<40x100xf32, #tpu.memory_space<vmem>>, vector<40x100xf32>
    %cst_375 = arith.constant dense<0.000000e+00> : vector<8x100xf32>
    %1028 = tpu.matmul %1026, %1027, %cst_375 {dimension_numbers = #tpu.dot_dimension_numbers<[1], [0], [0], [1], [0, 0, 1, 1], [], []>} : vector<8x40xf32>, vector<40x100xf32>, vector<8x100xf32> -> vector<8x100xf32>
    %c0_376 = arith.constant 0 : index
    %c0_377 = arith.constant 0 : index
    %1029 = vector.load %arg18[%c0_376, %c0_377] : memref<1x100xf32, #tpu.memory_space<vmem>>, vector<1x100xf32>
    %1030 = vector.broadcast %1029 : vector<1x100xf32> to vector<8x100xf32>
    %1031 = arith.addf %1028, %1030 : vector<8x100xf32>
    %1032 = vector.extract_strided_slice %1031 {offsets = [0, 0], sizes = [8, 80], strides = [1, 1]} : vector<8x100xf32> to vector<8x80xf32>
    %cst_378 = arith.constant 5.000000e-01 : f32
    %1033 = vector.broadcast %cst_378 : f32 to vector<8x80xf32>
    %1034 = arith.mulf %1033, %1032 : vector<8x80xf32>
    %1035 = math.tanh %1034 : vector<8x80xf32>
    %cst_379 = arith.constant 5.000000e-01 : f32
    %1036 = vector.broadcast %cst_379 : f32 to vector<8x80xf32>
    %1037 = arith.mulf %1036, %1035 : vector<8x80xf32>
    %cst_380 = arith.constant 5.000000e-01 : f32
    %1038 = vector.broadcast %cst_380 : f32 to vector<8x80xf32>
    %1039 = arith.addf %1037, %1038 : vector<8x80xf32>
    %1040 = vector.extract_strided_slice %1031 {offsets = [0, 80], sizes = [8, 20], strides = [1, 1]} : vector<8x100xf32> to vector<8x20xf32>
    %1041 = math.tanh %1040 : vector<8x20xf32>
    %c0_381 = arith.constant 0 : index
    %c0_382 = arith.constant 0 : index
    %1042 = vector.load %arg19[%c0_381, %c0_382] : memref<80x80xf32, #tpu.memory_space<vmem>>, vector<80x80xf32>
    %cst_383 = arith.constant dense<0.000000e+00> : vector<8x80xf32>
    %1043 = tpu.matmul %1039, %1042, %cst_383 {dimension_numbers = #tpu.dot_dimension_numbers<[1], [0], [0], [1], [0, 0, 1, 1], [], []>} : vector<8x80xf32>, vector<80x80xf32>, vector<8x80xf32> -> vector<8x80xf32>
    %c0_384 = arith.constant 0 : index
    %c0_385 = arith.constant 0 : index
    %1044 = vector.load %arg20[%c0_384, %c0_385] : memref<1x80xf32, #tpu.memory_space<vmem>>, vector<1x80xf32>
    %1045 = vector.broadcast %1044 : vector<1x80xf32> to vector<8x80xf32>
    %1046 = arith.addf %1043, %1045 : vector<8x80xf32>
    %cst_386 = arith.constant -1.500000e+00 : f32
    %cst_387 = arith.constant 1.500000e+00 : f32
    %1047 = vector.broadcast %cst_386 : f32 to vector<8x80xf32>
    %1048 = arith.maximumf %1047, %1046 : vector<8x80xf32>
    %1049 = vector.broadcast %cst_387 : f32 to vector<8x80xf32>
    %1050 = arith.minimumf %1049, %1048 : vector<8x80xf32>
    %1051 = arith.addf %1050, %983 : vector<8x80xf32>
    %1052 = math.exp %1046 : vector<8x80xf32>
    %cst_388 = arith.constant 0.0316227749 : f32
    %cst_389 = arith.constant 31.622776 : f32
    %1053 = vector.broadcast %cst_388 : f32 to vector<8x80xf32>
    %1054 = arith.maximumf %1053, %1052 : vector<8x80xf32>
    %1055 = vector.broadcast %cst_389 : f32 to vector<8x80xf32>
    %1056 = arith.minimumf %1055, %1054 : vector<8x80xf32>
    %1057 = arith.select %387, %1051, %1056 : vector<8x80xi1>, vector<8x80xf32>
    %c6 = arith.constant 6 : index
    %c0_390 = arith.constant 0 : index
    %c0_391 = arith.constant 0 : index
    %1058 = vector.load %arg2[%c6, %c0_390, %c0_391] : memref<13x8x128xf32, #tpu.memory_space<vmem>>, vector<1x8x128xf32>
    %1059 = vector.shape_cast %1058 : vector<1x8x128xf32> to vector<8x128xf32>
    %1060 = vector.extract_strided_slice %1059 {offsets = [0, 0], sizes = [8, 20], strides = [1, 1]} : vector<8x128xf32> to vector<8x20xf32>
    %1061 = arith.addf %377, %1060 : vector<8x20xf32>
    %cst_392 = arith.constant dense<0xFF800000> : vector<8xf32>
    %1062 = vector.multi_reduction <maximumf>, %1061, %cst_392 [1] : vector<8x20xf32> to vector<8xf32>
    %1063 = vector.shape_cast %1062 : vector<8xf32> to vector<8x1xf32>
    %1064 = vector.broadcast %1063 : vector<8x1xf32> to vector<8x20xf32>
    %1065 = arith.cmpf oge, %1061, %1064 : vector<8x20xf32>
    %cst_393 = arith.constant 2.000000e+01 : f32
    %1066 = vector.broadcast %cst_393 : f32 to vector<8x20xf32>
    %1067 = arith.select %1065, %352, %1066 : vector<8x20xi1>, vector<8x20xf32>
    %cst_394 = arith.constant dense<0x7F800000> : vector<8xf32>
    %1068 = vector.multi_reduction <minimumf>, %1067, %cst_394 [1] : vector<8x20xf32> to vector<8xf32>
    %1069 = vector.shape_cast %1068 : vector<8xf32> to vector<8x1xf32>
    %1070 = vector.broadcast %1069 : vector<8x1xf32> to vector<8x40xf32>
    %1071 = arith.cmpf oeq, %394, %1070 : vector<8x40xf32>
    %1072 = arith.extui %1071 : vector<8x40xi1> to vector<8x40xi32>
    %1073 = arith.sitofp %1072 : vector<8x40xi32> to vector<8x40xf32>
    %1074 = vector.extract_strided_slice %1059 {offsets = [0, 20], sizes = [8, 1], strides = [1, 1]} : vector<8x128xf32> to vector<8x1xf32>
    %1075 = vector.extract_strided_slice %1059 {offsets = [0, 21], sizes = [8, 1], strides = [1, 1]} : vector<8x128xf32> to vector<8x1xf32>
    %1076 = vector.shape_cast %1074 : vector<8x1xf32> to vector<8x1xf32>
    %1077 = vector.broadcast %1076 : vector<8x1xf32> to vector<8x40xf32>
    %1078 = vector.shape_cast %1075 : vector<8x1xf32> to vector<8x1xf32>
    %1079 = vector.broadcast %1078 : vector<8x1xf32> to vector<8x40xf32>
    %1080 = arith.select %390, %1077, %1079 : vector<8x40xi1>, vector<8x40xf32>
    %1081 = vector.extract_strided_slice %1057 {offsets = [0, 0], sizes = [8, 40], strides = [1, 1]} : vector<8x80xf32> to vector<8x40xf32>
    %1082 = vector.extract_strided_slice %1057 {offsets = [0, 40], sizes = [8, 40], strides = [1, 1]} : vector<8x80xf32> to vector<8x40xf32>
    %1083 = arith.mulf %1082, %1080 : vector<8x40xf32>
    %1084 = arith.addf %1081, %1083 : vector<8x40xf32>
    %1085 = arith.mulf %1073, %1084 : vector<8x40xf32>
    %1086 = vector.extract_strided_slice %1085 {offsets = [0, 0], sizes = [8, 20], strides = [1, 1]} : vector<8x40xf32> to vector<8x20xf32>
    %cst_395 = arith.constant dense<0.000000e+00> : vector<8xf32>
    %1087 = vector.multi_reduction <add>, %1086, %cst_395 [1] : vector<8x20xf32> to vector<8xf32>
    %1088 = vector.shape_cast %1087 : vector<8xf32> to vector<8x1xf32>
    %1089 = vector.extract_strided_slice %1085 {offsets = [0, 20], sizes = [8, 20], strides = [1, 1]} : vector<8x40xf32> to vector<8x20xf32>
    %cst_396 = arith.constant dense<0.000000e+00> : vector<8xf32>
    %1090 = vector.multi_reduction <add>, %1089, %cst_396 [1] : vector<8x20xf32> to vector<8xf32>
    %1091 = vector.shape_cast %1090 : vector<8xf32> to vector<8x1xf32>
    %1092 = tpu.concatenate %1088, %1091 in 1 : vector<8x1xf32>, vector<8x1xf32> -> vector<8x2xf32>
    %1093 = tpu.concatenate %1057, %1041, %1092, %396 in 1 : vector<8x80xf32>, vector<8x20xf32>, vector<8x2xf32>, vector<8x26xf32> -> vector<8x128xf32>
    %c5_397 = arith.constant 5 : index
    %c0_398 = arith.constant 0 : index
    %c0_399 = arith.constant 0 : index
    %1094 = vector.load %arg21[%c5_397, %c0_398, %c0_399] : memref<12x8x128xf32, #tpu.memory_space<vmem>>, vector<1x8x128xf32>
    %1095 = vector.shape_cast %1094 : vector<1x8x128xf32> to vector<8x128xf32>
    %1096 = vector.shape_cast %1093 : vector<8x128xf32> to vector<1x8x128xf32>
    tpu.vector_store %arg21[%c5_397, %c0_398, %c0_399], %1096 {strides = array<i32>} : memref<12x8x128xf32, #tpu.memory_space<vmem>>, vector<1x8x128xf32>,
    %cst_400 = arith.constant 0.000000e+00 : f32
    %1097 = vector.broadcast %cst_400 : f32 to vector<8x80xf32>
    %1098 = arith.select %387, %1057, %1097 : vector<8x80xi1>, vector<8x80xf32>
    %1099 = vector.broadcast %1088 : vector<8x1xf32> to vector<8x120xf32>
    %1100 = vector.broadcast %383 : vector<1x120xf32> to vector<8x120xf32>
    %1101 = arith.mulf %1099, %1100 : vector<8x120xf32>
    %1102 = arith.addf %382, %1101 : vector<8x120xf32>
    %1103 = vector.broadcast %1091 : vector<8x1xf32> to vector<8x120xf32>
    %1104 = vector.broadcast %384 : vector<1x120xf32> to vector<8x120xf32>
    %1105 = arith.mulf %1103, %1104 : vector<8x120xf32>
    %1106 = arith.addf %1102, %1105 : vector<8x120xf32>
    %c0_401 = arith.constant 0 : index
    %c0_402 = arith.constant 0 : index
    %1107 = vector.load %arg15[%c0_401, %c0_402] : memref<40x120xf32, #tpu.memory_space<vmem>>, vector<40x120xf32>
    %cst_403 = arith.constant dense<0.000000e+00> : vector<8x120xf32>
    %1108 = tpu.matmul %1026, %1107, %cst_403 {dimension_numbers = #tpu.dot_dimension_numbers<[1], [0], [0], [1], [0, 0, 1, 1], [], []>} : vector<8x40xf32>, vector<40x120xf32>, vector<8x120xf32> -> vector<8x120xf32>
    %c0_404 = arith.constant 0 : index
    %c0_405 = arith.constant 0 : index
    %1109 = vector.load %arg16[%c0_404, %c0_405] : memref<1x120xf32, #tpu.memory_space<vmem>>, vector<1x120xf32>
    %1110 = vector.broadcast %1109 : vector<1x120xf32> to vector<8x120xf32>
    %1111 = arith.addf %1108, %1110 : vector<8x120xf32>
    %1112 = vector.extract_strided_slice %1106 {offsets = [0, 0], sizes = [8, 40], strides = [1, 1]} : vector<8x120xf32> to vector<8x40xf32>
    %1113 = vector.extract_strided_slice %1111 {offsets = [0, 0], sizes = [8, 40], strides = [1, 1]} : vector<8x120xf32> to vector<8x40xf32>
    %1114 = arith.addf %1112, %1113 : vector<8x40xf32>
    %cst_406 = arith.constant 5.000000e-01 : f32
    %1115 = vector.broadcast %cst_406 : f32 to vector<8x40xf32>
    %1116 = arith.mulf %1115, %1114 : vector<8x40xf32>
    %1117 = math.tanh %1116 : vector<8x40xf32>
    %cst_407 = arith.constant 5.000000e-01 : f32
    %1118 = vector.broadcast %cst_407 : f32 to vector<8x40xf32>
    %1119 = arith.mulf %1118, %1117 : vector<8x40xf32>
    %cst_408 = arith.constant 5.000000e-01 : f32
    %1120 = vector.broadcast %cst_408 : f32 to vector<8x40xf32>
    %1121 = arith.addf %1119, %1120 : vector<8x40xf32>
    %1122 = vector.extract_strided_slice %1106 {offsets = [0, 40], sizes = [8, 40], strides = [1, 1]} : vector<8x120xf32> to vector<8x40xf32>
    %1123 = vector.extract_strided_slice %1111 {offsets = [0, 40], sizes = [8, 40], strides = [1, 1]} : vector<8x120xf32> to vector<8x40xf32>
    %1124 = arith.addf %1122, %1123 : vector<8x40xf32>
    %cst_409 = arith.constant 5.000000e-01 : f32
    %1125 = vector.broadcast %cst_409 : f32 to vector<8x40xf32>
    %1126 = arith.mulf %1125, %1124 : vector<8x40xf32>
    %1127 = math.tanh %1126 : vector<8x40xf32>
    %cst_410 = arith.constant 5.000000e-01 : f32
    %1128 = vector.broadcast %cst_410 : f32 to vector<8x40xf32>
    %1129 = arith.mulf %1128, %1127 : vector<8x40xf32>
    %cst_411 = arith.constant 5.000000e-01 : f32
    %1130 = vector.broadcast %cst_411 : f32 to vector<8x40xf32>
    %1131 = arith.addf %1129, %1130 : vector<8x40xf32>
    %1132 = vector.extract_strided_slice %1106 {offsets = [0, 80], sizes = [8, 40], strides = [1, 1]} : vector<8x120xf32> to vector<8x40xf32>
    %1133 = vector.extract_strided_slice %1111 {offsets = [0, 80], sizes = [8, 40], strides = [1, 1]} : vector<8x120xf32> to vector<8x40xf32>
    %1134 = arith.mulf %1121, %1133 : vector<8x40xf32>
    %1135 = arith.addf %1132, %1134 : vector<8x40xf32>
    %1136 = math.tanh %1135 : vector<8x40xf32>
    %cst_412 = arith.constant 1.000000e+00 : f32
    %1137 = vector.broadcast %cst_412 : f32 to vector<8x40xf32>
    %1138 = arith.subf %1137, %1131 : vector<8x40xf32>
    %1139 = arith.mulf %1138, %1136 : vector<8x40xf32>
    %1140 = arith.mulf %1131, %1026 : vector<8x40xf32>
    %1141 = arith.addf %1139, %1140 : vector<8x40xf32>
    %c0_413 = arith.constant 0 : index
    %c0_414 = arith.constant 0 : index
    %1142 = vector.load %arg17[%c0_413, %c0_414] : memref<40x100xf32, #tpu.memory_space<vmem>>, vector<40x100xf32>
    %cst_415 = arith.constant dense<0.000000e+00> : vector<8x100xf32>
    %1143 = tpu.matmul %1141, %1142, %cst_415 {dimension_numbers = #tpu.dot_dimension_numbers<[1], [0], [0], [1], [0, 0, 1, 1], [], []>} : vector<8x40xf32>, vector<40x100xf32>, vector<8x100xf32> -> vector<8x100xf32>
    %c0_416 = arith.constant 0 : index
    %c0_417 = arith.constant 0 : index
    %1144 = vector.load %arg18[%c0_416, %c0_417] : memref<1x100xf32, #tpu.memory_space<vmem>>, vector<1x100xf32>
    %1145 = vector.broadcast %1144 : vector<1x100xf32> to vector<8x100xf32>
    %1146 = arith.addf %1143, %1145 : vector<8x100xf32>
    %1147 = vector.extract_strided_slice %1146 {offsets = [0, 0], sizes = [8, 80], strides = [1, 1]} : vector<8x100xf32> to vector<8x80xf32>
    %cst_418 = arith.constant 5.000000e-01 : f32
    %1148 = vector.broadcast %cst_418 : f32 to vector<8x80xf32>
    %1149 = arith.mulf %1148, %1147 : vector<8x80xf32>
    %1150 = math.tanh %1149 : vector<8x80xf32>
    %cst_419 = arith.constant 5.000000e-01 : f32
    %1151 = vector.broadcast %cst_419 : f32 to vector<8x80xf32>
    %1152 = arith.mulf %1151, %1150 : vector<8x80xf32>
    %cst_420 = arith.constant 5.000000e-01 : f32
    %1153 = vector.broadcast %cst_420 : f32 to vector<8x80xf32>
    %1154 = arith.addf %1152, %1153 : vector<8x80xf32>
    %1155 = vector.extract_strided_slice %1146 {offsets = [0, 80], sizes = [8, 20], strides = [1, 1]} : vector<8x100xf32> to vector<8x20xf32>
    %1156 = math.tanh %1155 : vector<8x20xf32>
    %c0_421 = arith.constant 0 : index
    %c0_422 = arith.constant 0 : index
    %1157 = vector.load %arg19[%c0_421, %c0_422] : memref<80x80xf32, #tpu.memory_space<vmem>>, vector<80x80xf32>
    %cst_423 = arith.constant dense<0.000000e+00> : vector<8x80xf32>
    %1158 = tpu.matmul %1154, %1157, %cst_423 {dimension_numbers = #tpu.dot_dimension_numbers<[1], [0], [0], [1], [0, 0, 1, 1], [], []>} : vector<8x80xf32>, vector<80x80xf32>, vector<8x80xf32> -> vector<8x80xf32>
    %c0_424 = arith.constant 0 : index
    %c0_425 = arith.constant 0 : index
    %1159 = vector.load %arg20[%c0_424, %c0_425] : memref<1x80xf32, #tpu.memory_space<vmem>>, vector<1x80xf32>
    %1160 = vector.broadcast %1159 : vector<1x80xf32> to vector<8x80xf32>
    %1161 = arith.addf %1158, %1160 : vector<8x80xf32>
    %cst_426 = arith.constant -1.500000e+00 : f32
    %cst_427 = arith.constant 1.500000e+00 : f32
    %1162 = vector.broadcast %cst_426 : f32 to vector<8x80xf32>
    %1163 = arith.maximumf %1162, %1161 : vector<8x80xf32>
    %1164 = vector.broadcast %cst_427 : f32 to vector<8x80xf32>
    %1165 = arith.minimumf %1164, %1163 : vector<8x80xf32>
    %1166 = arith.addf %1165, %1098 : vector<8x80xf32>
    %1167 = math.exp %1161 : vector<8x80xf32>
    %cst_428 = arith.constant 0.0316227749 : f32
    %cst_429 = arith.constant 31.622776 : f32
    %1168 = vector.broadcast %cst_428 : f32 to vector<8x80xf32>
    %1169 = arith.maximumf %1168, %1167 : vector<8x80xf32>
    %1170 = vector.broadcast %cst_429 : f32 to vector<8x80xf32>
    %1171 = arith.minimumf %1170, %1169 : vector<8x80xf32>
    %1172 = arith.select %387, %1166, %1171 : vector<8x80xi1>, vector<8x80xf32>
    %c7 = arith.constant 7 : index
    %c0_430 = arith.constant 0 : index
    %c0_431 = arith.constant 0 : index
    %1173 = vector.load %arg2[%c7, %c0_430, %c0_431] : memref<13x8x128xf32, #tpu.memory_space<vmem>>, vector<1x8x128xf32>
    %1174 = vector.shape_cast %1173 : vector<1x8x128xf32> to vector<8x128xf32>
    %1175 = vector.extract_strided_slice %1174 {offsets = [0, 0], sizes = [8, 20], strides = [1, 1]} : vector<8x128xf32> to vector<8x20xf32>
    %1176 = arith.addf %377, %1175 : vector<8x20xf32>
    %cst_432 = arith.constant dense<0xFF800000> : vector<8xf32>
    %1177 = vector.multi_reduction <maximumf>, %1176, %cst_432 [1] : vector<8x20xf32> to vector<8xf32>
    %1178 = vector.shape_cast %1177 : vector<8xf32> to vector<8x1xf32>
    %1179 = vector.broadcast %1178 : vector<8x1xf32> to vector<8x20xf32>
    %1180 = arith.cmpf oge, %1176, %1179 : vector<8x20xf32>
    %cst_433 = arith.constant 2.000000e+01 : f32
    %1181 = vector.broadcast %cst_433 : f32 to vector<8x20xf32>
    %1182 = arith.select %1180, %352, %1181 : vector<8x20xi1>, vector<8x20xf32>
    %cst_434 = arith.constant dense<0x7F800000> : vector<8xf32>
    %1183 = vector.multi_reduction <minimumf>, %1182, %cst_434 [1] : vector<8x20xf32> to vector<8xf32>
    %1184 = vector.shape_cast %1183 : vector<8xf32> to vector<8x1xf32>
    %1185 = vector.broadcast %1184 : vector<8x1xf32> to vector<8x40xf32>
    %1186 = arith.cmpf oeq, %394, %1185 : vector<8x40xf32>
    %1187 = arith.extui %1186 : vector<8x40xi1> to vector<8x40xi32>
    %1188 = arith.sitofp %1187 : vector<8x40xi32> to vector<8x40xf32>
    %1189 = vector.extract_strided_slice %1174 {offsets = [0, 20], sizes = [8, 1], strides = [1, 1]} : vector<8x128xf32> to vector<8x1xf32>
    %1190 = vector.extract_strided_slice %1174 {offsets = [0, 21], sizes = [8, 1], strides = [1, 1]} : vector<8x128xf32> to vector<8x1xf32>
    %1191 = vector.shape_cast %1189 : vector<8x1xf32> to vector<8x1xf32>
    %1192 = vector.broadcast %1191 : vector<8x1xf32> to vector<8x40xf32>
    %1193 = vector.shape_cast %1190 : vector<8x1xf32> to vector<8x1xf32>
    %1194 = vector.broadcast %1193 : vector<8x1xf32> to vector<8x40xf32>
    %1195 = arith.select %390, %1192, %1194 : vector<8x40xi1>, vector<8x40xf32>
    %1196 = vector.extract_strided_slice %1172 {offsets = [0, 0], sizes = [8, 40], strides = [1, 1]} : vector<8x80xf32> to vector<8x40xf32>
    %1197 = vector.extract_strided_slice %1172 {offsets = [0, 40], sizes = [8, 40], strides = [1, 1]} : vector<8x80xf32> to vector<8x40xf32>
    %1198 = arith.mulf %1197, %1195 : vector<8x40xf32>
    %1199 = arith.addf %1196, %1198 : vector<8x40xf32>
    %1200 = arith.mulf %1188, %1199 : vector<8x40xf32>
    %1201 = vector.extract_strided_slice %1200 {offsets = [0, 0], sizes = [8, 20], strides = [1, 1]} : vector<8x40xf32> to vector<8x20xf32>
    %cst_435 = arith.constant dense<0.000000e+00> : vector<8xf32>
    %1202 = vector.multi_reduction <add>, %1201, %cst_435 [1] : vector<8x20xf32> to vector<8xf32>
    %1203 = vector.shape_cast %1202 : vector<8xf32> to vector<8x1xf32>
    %1204 = vector.extract_strided_slice %1200 {offsets = [0, 20], sizes = [8, 20], strides = [1, 1]} : vector<8x40xf32> to vector<8x20xf32>
    %cst_436 = arith.constant dense<0.000000e+00> : vector<8xf32>
    %1205 = vector.multi_reduction <add>, %1204, %cst_436 [1] : vector<8x20xf32> to vector<8xf32>
    %1206 = vector.shape_cast %1205 : vector<8xf32> to vector<8x1xf32>
    %1207 = tpu.concatenate %1203, %1206 in 1 : vector<8x1xf32>, vector<8x1xf32> -> vector<8x2xf32>
    %1208 = tpu.concatenate %1172, %1156, %1207, %396 in 1 : vector<8x80xf32>, vector<8x20xf32>, vector<8x2xf32>, vector<8x26xf32> -> vector<8x128xf32>
    %c6_437 = arith.constant 6 : index
    %c0_438 = arith.constant 0 : index
    %c0_439 = arith.constant 0 : index
    %1209 = vector.load %arg21[%c6_437, %c0_438, %c0_439] : memref<12x8x128xf32, #tpu.memory_space<vmem>>, vector<1x8x128xf32>
    %1210 = vector.shape_cast %1209 : vector<1x8x128xf32> to vector<8x128xf32>
    %1211 = vector.shape_cast %1208 : vector<8x128xf32> to vector<1x8x128xf32>
    tpu.vector_store %arg21[%c6_437, %c0_438, %c0_439], %1211 {strides = array<i32>} : memref<12x8x128xf32, #tpu.memory_space<vmem>>, vector<1x8x128xf32>,
    %cst_440 = arith.constant 0.000000e+00 : f32
    %1212 = vector.broadcast %cst_440 : f32 to vector<8x80xf32>
    %1213 = arith.select %387, %1172, %1212 : vector<8x80xi1>, vector<8x80xf32>
    %1214 = vector.broadcast %1203 : vector<8x1xf32> to vector<8x120xf32>
    %1215 = vector.broadcast %383 : vector<1x120xf32> to vector<8x120xf32>
    %1216 = arith.mulf %1214, %1215 : vector<8x120xf32>
    %1217 = arith.addf %382, %1216 : vector<8x120xf32>
    %1218 = vector.broadcast %1206 : vector<8x1xf32> to vector<8x120xf32>
    %1219 = vector.broadcast %384 : vector<1x120xf32> to vector<8x120xf32>
    %1220 = arith.mulf %1218, %1219 : vector<8x120xf32>
    %1221 = arith.addf %1217, %1220 : vector<8x120xf32>
    %c0_441 = arith.constant 0 : index
    %c0_442 = arith.constant 0 : index
    %1222 = vector.load %arg15[%c0_441, %c0_442] : memref<40x120xf32, #tpu.memory_space<vmem>>, vector<40x120xf32>
    %cst_443 = arith.constant dense<0.000000e+00> : vector<8x120xf32>
    %1223 = tpu.matmul %1141, %1222, %cst_443 {dimension_numbers = #tpu.dot_dimension_numbers<[1], [0], [0], [1], [0, 0, 1, 1], [], []>} : vector<8x40xf32>, vector<40x120xf32>, vector<8x120xf32> -> vector<8x120xf32>
    %c0_444 = arith.constant 0 : index
    %c0_445 = arith.constant 0 : index
    %1224 = vector.load %arg16[%c0_444, %c0_445] : memref<1x120xf32, #tpu.memory_space<vmem>>, vector<1x120xf32>
    %1225 = vector.broadcast %1224 : vector<1x120xf32> to vector<8x120xf32>
    %1226 = arith.addf %1223, %1225 : vector<8x120xf32>
    %1227 = vector.extract_strided_slice %1221 {offsets = [0, 0], sizes = [8, 40], strides = [1, 1]} : vector<8x120xf32> to vector<8x40xf32>
    %1228 = vector.extract_strided_slice %1226 {offsets = [0, 0], sizes = [8, 40], strides = [1, 1]} : vector<8x120xf32> to vector<8x40xf32>
    %1229 = arith.addf %1227, %1228 : vector<8x40xf32>
    %cst_446 = arith.constant 5.000000e-01 : f32
    %1230 = vector.broadcast %cst_446 : f32 to vector<8x40xf32>
    %1231 = arith.mulf %1230, %1229 : vector<8x40xf32>
    %1232 = math.tanh %1231 : vector<8x40xf32>
    %cst_447 = arith.constant 5.000000e-01 : f32
    %1233 = vector.broadcast %cst_447 : f32 to vector<8x40xf32>
    %1234 = arith.mulf %1233, %1232 : vector<8x40xf32>
    %cst_448 = arith.constant 5.000000e-01 : f32
    %1235 = vector.broadcast %cst_448 : f32 to vector<8x40xf32>
    %1236 = arith.addf %1234, %1235 : vector<8x40xf32>
    %1237 = vector.extract_strided_slice %1221 {offsets = [0, 40], sizes = [8, 40], strides = [1, 1]} : vector<8x120xf32> to vector<8x40xf32>
    %1238 = vector.extract_strided_slice %1226 {offsets = [0, 40], sizes = [8, 40], strides = [1, 1]} : vector<8x120xf32> to vector<8x40xf32>
    %1239 = arith.addf %1237, %1238 : vector<8x40xf32>
    %cst_449 = arith.constant 5.000000e-01 : f32
    %1240 = vector.broadcast %cst_449 : f32 to vector<8x40xf32>
    %1241 = arith.mulf %1240, %1239 : vector<8x40xf32>
    %1242 = math.tanh %1241 : vector<8x40xf32>
    %cst_450 = arith.constant 5.000000e-01 : f32
    %1243 = vector.broadcast %cst_450 : f32 to vector<8x40xf32>
    %1244 = arith.mulf %1243, %1242 : vector<8x40xf32>
    %cst_451 = arith.constant 5.000000e-01 : f32
    %1245 = vector.broadcast %cst_451 : f32 to vector<8x40xf32>
    %1246 = arith.addf %1244, %1245 : vector<8x40xf32>
    %1247 = vector.extract_strided_slice %1221 {offsets = [0, 80], sizes = [8, 40], strides = [1, 1]} : vector<8x120xf32> to vector<8x40xf32>
    %1248 = vector.extract_strided_slice %1226 {offsets = [0, 80], sizes = [8, 40], strides = [1, 1]} : vector<8x120xf32> to vector<8x40xf32>
    %1249 = arith.mulf %1236, %1248 : vector<8x40xf32>
    %1250 = arith.addf %1247, %1249 : vector<8x40xf32>
    %1251 = math.tanh %1250 : vector<8x40xf32>
    %cst_452 = arith.constant 1.000000e+00 : f32
    %1252 = vector.broadcast %cst_452 : f32 to vector<8x40xf32>
    %1253 = arith.subf %1252, %1246 : vector<8x40xf32>
    %1254 = arith.mulf %1253, %1251 : vector<8x40xf32>
    %1255 = arith.mulf %1246, %1141 : vector<8x40xf32>
    %1256 = arith.addf %1254, %1255 : vector<8x40xf32>
    %c0_453 = arith.constant 0 : index
    %c0_454 = arith.constant 0 : index
    %1257 = vector.load %arg17[%c0_453, %c0_454] : memref<40x100xf32, #tpu.memory_space<vmem>>, vector<40x100xf32>
    %cst_455 = arith.constant dense<0.000000e+00> : vector<8x100xf32>
    %1258 = tpu.matmul %1256, %1257, %cst_455 {dimension_numbers = #tpu.dot_dimension_numbers<[1], [0], [0], [1], [0, 0, 1, 1], [], []>} : vector<8x40xf32>, vector<40x100xf32>, vector<8x100xf32> -> vector<8x100xf32>
    %c0_456 = arith.constant 0 : index
    %c0_457 = arith.constant 0 : index
    %1259 = vector.load %arg18[%c0_456, %c0_457] : memref<1x100xf32, #tpu.memory_space<vmem>>, vector<1x100xf32>
    %1260 = vector.broadcast %1259 : vector<1x100xf32> to vector<8x100xf32>
    %1261 = arith.addf %1258, %1260 : vector<8x100xf32>
    %1262 = vector.extract_strided_slice %1261 {offsets = [0, 0], sizes = [8, 80], strides = [1, 1]} : vector<8x100xf32> to vector<8x80xf32>
    %cst_458 = arith.constant 5.000000e-01 : f32
    %1263 = vector.broadcast %cst_458 : f32 to vector<8x80xf32>
    %1264 = arith.mulf %1263, %1262 : vector<8x80xf32>
    %1265 = math.tanh %1264 : vector<8x80xf32>
    %cst_459 = arith.constant 5.000000e-01 : f32
    %1266 = vector.broadcast %cst_459 : f32 to vector<8x80xf32>
    %1267 = arith.mulf %1266, %1265 : vector<8x80xf32>
    %cst_460 = arith.constant 5.000000e-01 : f32
    %1268 = vector.broadcast %cst_460 : f32 to vector<8x80xf32>
    %1269 = arith.addf %1267, %1268 : vector<8x80xf32>
    %1270 = vector.extract_strided_slice %1261 {offsets = [0, 80], sizes = [8, 20], strides = [1, 1]} : vector<8x100xf32> to vector<8x20xf32>
    %1271 = math.tanh %1270 : vector<8x20xf32>
    %c0_461 = arith.constant 0 : index
    %c0_462 = arith.constant 0 : index
    %1272 = vector.load %arg19[%c0_461, %c0_462] : memref<80x80xf32, #tpu.memory_space<vmem>>, vector<80x80xf32>
    %cst_463 = arith.constant dense<0.000000e+00> : vector<8x80xf32>
    %1273 = tpu.matmul %1269, %1272, %cst_463 {dimension_numbers = #tpu.dot_dimension_numbers<[1], [0], [0], [1], [0, 0, 1, 1], [], []>} : vector<8x80xf32>, vector<80x80xf32>, vector<8x80xf32> -> vector<8x80xf32>
    %c0_464 = arith.constant 0 : index
    %c0_465 = arith.constant 0 : index
    %1274 = vector.load %arg20[%c0_464, %c0_465] : memref<1x80xf32, #tpu.memory_space<vmem>>, vector<1x80xf32>
    %1275 = vector.broadcast %1274 : vector<1x80xf32> to vector<8x80xf32>
    %1276 = arith.addf %1273, %1275 : vector<8x80xf32>
    %cst_466 = arith.constant -1.500000e+00 : f32
    %cst_467 = arith.constant 1.500000e+00 : f32
    %1277 = vector.broadcast %cst_466 : f32 to vector<8x80xf32>
    %1278 = arith.maximumf %1277, %1276 : vector<8x80xf32>
    %1279 = vector.broadcast %cst_467 : f32 to vector<8x80xf32>
    %1280 = arith.minimumf %1279, %1278 : vector<8x80xf32>
    %1281 = arith.addf %1280, %1213 : vector<8x80xf32>
    %1282 = math.exp %1276 : vector<8x80xf32>
    %cst_468 = arith.constant 0.0316227749 : f32
    %cst_469 = arith.constant 31.622776 : f32
    %1283 = vector.broadcast %cst_468 : f32 to vector<8x80xf32>
    %1284 = arith.maximumf %1283, %1282 : vector<8x80xf32>
    %1285 = vector.broadcast %cst_469 : f32 to vector<8x80xf32>
    %1286 = arith.minimumf %1285, %1284 : vector<8x80xf32>
    %1287 = arith.select %387, %1281, %1286 : vector<8x80xi1>, vector<8x80xf32>
    %c8_470 = arith.constant 8 : index
    %c0_471 = arith.constant 0 : index
    %c0_472 = arith.constant 0 : index
    %1288 = vector.load %arg2[%c8_470, %c0_471, %c0_472] : memref<13x8x128xf32, #tpu.memory_space<vmem>>, vector<1x8x128xf32>
    %1289 = vector.shape_cast %1288 : vector<1x8x128xf32> to vector<8x128xf32>
    %1290 = vector.extract_strided_slice %1289 {offsets = [0, 0], sizes = [8, 20], strides = [1, 1]} : vector<8x128xf32> to vector<8x20xf32>
    %1291 = arith.addf %377, %1290 : vector<8x20xf32>
    %cst_473 = arith.constant dense<0xFF800000> : vector<8xf32>
    %1292 = vector.multi_reduction <maximumf>, %1291, %cst_473 [1] : vector<8x20xf32> to vector<8xf32>
    %1293 = vector.shape_cast %1292 : vector<8xf32> to vector<8x1xf32>
    %1294 = vector.broadcast %1293 : vector<8x1xf32> to vector<8x20xf32>
    %1295 = arith.cmpf oge, %1291, %1294 : vector<8x20xf32>
    %cst_474 = arith.constant 2.000000e+01 : f32
    %1296 = vector.broadcast %cst_474 : f32 to vector<8x20xf32>
    %1297 = arith.select %1295, %352, %1296 : vector<8x20xi1>, vector<8x20xf32>
    %cst_475 = arith.constant dense<0x7F800000> : vector<8xf32>
    %1298 = vector.multi_reduction <minimumf>, %1297, %cst_475 [1] : vector<8x20xf32> to vector<8xf32>
    %1299 = vector.shape_cast %1298 : vector<8xf32> to vector<8x1xf32>
    %1300 = vector.broadcast %1299 : vector<8x1xf32> to vector<8x40xf32>
    %1301 = arith.cmpf oeq, %394, %1300 : vector<8x40xf32>
    %1302 = arith.extui %1301 : vector<8x40xi1> to vector<8x40xi32>
    %1303 = arith.sitofp %1302 : vector<8x40xi32> to vector<8x40xf32>
    %1304 = vector.extract_strided_slice %1289 {offsets = [0, 20], sizes = [8, 1], strides = [1, 1]} : vector<8x128xf32> to vector<8x1xf32>
    %1305 = vector.extract_strided_slice %1289 {offsets = [0, 21], sizes = [8, 1], strides = [1, 1]} : vector<8x128xf32> to vector<8x1xf32>
    %1306 = vector.shape_cast %1304 : vector<8x1xf32> to vector<8x1xf32>
    %1307 = vector.broadcast %1306 : vector<8x1xf32> to vector<8x40xf32>
    %1308 = vector.shape_cast %1305 : vector<8x1xf32> to vector<8x1xf32>
    %1309 = vector.broadcast %1308 : vector<8x1xf32> to vector<8x40xf32>
    %1310 = arith.select %390, %1307, %1309 : vector<8x40xi1>, vector<8x40xf32>
    %1311 = vector.extract_strided_slice %1287 {offsets = [0, 0], sizes = [8, 40], strides = [1, 1]} : vector<8x80xf32> to vector<8x40xf32>
    %1312 = vector.extract_strided_slice %1287 {offsets = [0, 40], sizes = [8, 40], strides = [1, 1]} : vector<8x80xf32> to vector<8x40xf32>
    %1313 = arith.mulf %1312, %1310 : vector<8x40xf32>
    %1314 = arith.addf %1311, %1313 : vector<8x40xf32>
    %1315 = arith.mulf %1303, %1314 : vector<8x40xf32>
    %1316 = vector.extract_strided_slice %1315 {offsets = [0, 0], sizes = [8, 20], strides = [1, 1]} : vector<8x40xf32> to vector<8x20xf32>
    %cst_476 = arith.constant dense<0.000000e+00> : vector<8xf32>
    %1317 = vector.multi_reduction <add>, %1316, %cst_476 [1] : vector<8x20xf32> to vector<8xf32>
    %1318 = vector.shape_cast %1317 : vector<8xf32> to vector<8x1xf32>
    %1319 = vector.extract_strided_slice %1315 {offsets = [0, 20], sizes = [8, 20], strides = [1, 1]} : vector<8x40xf32> to vector<8x20xf32>
    %cst_477 = arith.constant dense<0.000000e+00> : vector<8xf32>
    %1320 = vector.multi_reduction <add>, %1319, %cst_477 [1] : vector<8x20xf32> to vector<8xf32>
    %1321 = vector.shape_cast %1320 : vector<8xf32> to vector<8x1xf32>
    %1322 = tpu.concatenate %1318, %1321 in 1 : vector<8x1xf32>, vector<8x1xf32> -> vector<8x2xf32>
    %1323 = tpu.concatenate %1287, %1271, %1322, %396 in 1 : vector<8x80xf32>, vector<8x20xf32>, vector<8x2xf32>, vector<8x26xf32> -> vector<8x128xf32>
    %c7_478 = arith.constant 7 : index
    %c0_479 = arith.constant 0 : index
    %c0_480 = arith.constant 0 : index
    %1324 = vector.load %arg21[%c7_478, %c0_479, %c0_480] : memref<12x8x128xf32, #tpu.memory_space<vmem>>, vector<1x8x128xf32>
    %1325 = vector.shape_cast %1324 : vector<1x8x128xf32> to vector<8x128xf32>
    %1326 = vector.shape_cast %1323 : vector<8x128xf32> to vector<1x8x128xf32>
    tpu.vector_store %arg21[%c7_478, %c0_479, %c0_480], %1326 {strides = array<i32>} : memref<12x8x128xf32, #tpu.memory_space<vmem>>, vector<1x8x128xf32>,
    %cst_481 = arith.constant 0.000000e+00 : f32
    %1327 = vector.broadcast %cst_481 : f32 to vector<8x80xf32>
    %1328 = arith.select %387, %1287, %1327 : vector<8x80xi1>, vector<8x80xf32>
    %1329 = vector.broadcast %1318 : vector<8x1xf32> to vector<8x120xf32>
    %1330 = vector.broadcast %383 : vector<1x120xf32> to vector<8x120xf32>
    %1331 = arith.mulf %1329, %1330 : vector<8x120xf32>
    %1332 = arith.addf %382, %1331 : vector<8x120xf32>
    %1333 = vector.broadcast %1321 : vector<8x1xf32> to vector<8x120xf32>
    %1334 = vector.broadcast %384 : vector<1x120xf32> to vector<8x120xf32>
    %1335 = arith.mulf %1333, %1334 : vector<8x120xf32>
    %1336 = arith.addf %1332, %1335 : vector<8x120xf32>
    %c0_482 = arith.constant 0 : index
    %c0_483 = arith.constant 0 : index
    %1337 = vector.load %arg15[%c0_482, %c0_483] : memref<40x120xf32, #tpu.memory_space<vmem>>, vector<40x120xf32>
    %cst_484 = arith.constant dense<0.000000e+00> : vector<8x120xf32>
    %1338 = tpu.matmul %1256, %1337, %cst_484 {dimension_numbers = #tpu.dot_dimension_numbers<[1], [0], [0], [1], [0, 0, 1, 1], [], []>} : vector<8x40xf32>, vector<40x120xf32>, vector<8x120xf32> -> vector<8x120xf32>
    %c0_485 = arith.constant 0 : index
    %c0_486 = arith.constant 0 : index
    %1339 = vector.load %arg16[%c0_485, %c0_486] : memref<1x120xf32, #tpu.memory_space<vmem>>, vector<1x120xf32>
    %1340 = vector.broadcast %1339 : vector<1x120xf32> to vector<8x120xf32>
    %1341 = arith.addf %1338, %1340 : vector<8x120xf32>
    %1342 = vector.extract_strided_slice %1336 {offsets = [0, 0], sizes = [8, 40], strides = [1, 1]} : vector<8x120xf32> to vector<8x40xf32>
    %1343 = vector.extract_strided_slice %1341 {offsets = [0, 0], sizes = [8, 40], strides = [1, 1]} : vector<8x120xf32> to vector<8x40xf32>
    %1344 = arith.addf %1342, %1343 : vector<8x40xf32>
    %cst_487 = arith.constant 5.000000e-01 : f32
    %1345 = vector.broadcast %cst_487 : f32 to vector<8x40xf32>
    %1346 = arith.mulf %1345, %1344 : vector<8x40xf32>
    %1347 = math.tanh %1346 : vector<8x40xf32>
    %cst_488 = arith.constant 5.000000e-01 : f32
    %1348 = vector.broadcast %cst_488 : f32 to vector<8x40xf32>
    %1349 = arith.mulf %1348, %1347 : vector<8x40xf32>
    %cst_489 = arith.constant 5.000000e-01 : f32
    %1350 = vector.broadcast %cst_489 : f32 to vector<8x40xf32>
    %1351 = arith.addf %1349, %1350 : vector<8x40xf32>
    %1352 = vector.extract_strided_slice %1336 {offsets = [0, 40], sizes = [8, 40], strides = [1, 1]} : vector<8x120xf32> to vector<8x40xf32>
    %1353 = vector.extract_strided_slice %1341 {offsets = [0, 40], sizes = [8, 40], strides = [1, 1]} : vector<8x120xf32> to vector<8x40xf32>
    %1354 = arith.addf %1352, %1353 : vector<8x40xf32>
    %cst_490 = arith.constant 5.000000e-01 : f32
    %1355 = vector.broadcast %cst_490 : f32 to vector<8x40xf32>
    %1356 = arith.mulf %1355, %1354 : vector<8x40xf32>
    %1357 = math.tanh %1356 : vector<8x40xf32>
    %cst_491 = arith.constant 5.000000e-01 : f32
    %1358 = vector.broadcast %cst_491 : f32 to vector<8x40xf32>
    %1359 = arith.mulf %1358, %1357 : vector<8x40xf32>
    %cst_492 = arith.constant 5.000000e-01 : f32
    %1360 = vector.broadcast %cst_492 : f32 to vector<8x40xf32>
    %1361 = arith.addf %1359, %1360 : vector<8x40xf32>
    %1362 = vector.extract_strided_slice %1336 {offsets = [0, 80], sizes = [8, 40], strides = [1, 1]} : vector<8x120xf32> to vector<8x40xf32>
    %1363 = vector.extract_strided_slice %1341 {offsets = [0, 80], sizes = [8, 40], strides = [1, 1]} : vector<8x120xf32> to vector<8x40xf32>
    %1364 = arith.mulf %1351, %1363 : vector<8x40xf32>
    %1365 = arith.addf %1362, %1364 : vector<8x40xf32>
    %1366 = math.tanh %1365 : vector<8x40xf32>
    %cst_493 = arith.constant 1.000000e+00 : f32
    %1367 = vector.broadcast %cst_493 : f32 to vector<8x40xf32>
    %1368 = arith.subf %1367, %1361 : vector<8x40xf32>
    %1369 = arith.mulf %1368, %1366 : vector<8x40xf32>
    %1370 = arith.mulf %1361, %1256 : vector<8x40xf32>
    %1371 = arith.addf %1369, %1370 : vector<8x40xf32>
    %c0_494 = arith.constant 0 : index
    %c0_495 = arith.constant 0 : index
    %1372 = vector.load %arg17[%c0_494, %c0_495] : memref<40x100xf32, #tpu.memory_space<vmem>>, vector<40x100xf32>
    %cst_496 = arith.constant dense<0.000000e+00> : vector<8x100xf32>
    %1373 = tpu.matmul %1371, %1372, %cst_496 {dimension_numbers = #tpu.dot_dimension_numbers<[1], [0], [0], [1], [0, 0, 1, 1], [], []>} : vector<8x40xf32>, vector<40x100xf32>, vector<8x100xf32> -> vector<8x100xf32>
    %c0_497 = arith.constant 0 : index
    %c0_498 = arith.constant 0 : index
    %1374 = vector.load %arg18[%c0_497, %c0_498] : memref<1x100xf32, #tpu.memory_space<vmem>>, vector<1x100xf32>
    %1375 = vector.broadcast %1374 : vector<1x100xf32> to vector<8x100xf32>
    %1376 = arith.addf %1373, %1375 : vector<8x100xf32>
    %1377 = vector.extract_strided_slice %1376 {offsets = [0, 0], sizes = [8, 80], strides = [1, 1]} : vector<8x100xf32> to vector<8x80xf32>
    %cst_499 = arith.constant 5.000000e-01 : f32
    %1378 = vector.broadcast %cst_499 : f32 to vector<8x80xf32>
    %1379 = arith.mulf %1378, %1377 : vector<8x80xf32>
    %1380 = math.tanh %1379 : vector<8x80xf32>
    %cst_500 = arith.constant 5.000000e-01 : f32
    %1381 = vector.broadcast %cst_500 : f32 to vector<8x80xf32>
    %1382 = arith.mulf %1381, %1380 : vector<8x80xf32>
    %cst_501 = arith.constant 5.000000e-01 : f32
    %1383 = vector.broadcast %cst_501 : f32 to vector<8x80xf32>
    %1384 = arith.addf %1382, %1383 : vector<8x80xf32>
    %1385 = vector.extract_strided_slice %1376 {offsets = [0, 80], sizes = [8, 20], strides = [1, 1]} : vector<8x100xf32> to vector<8x20xf32>
    %1386 = math.tanh %1385 : vector<8x20xf32>
    %c0_502 = arith.constant 0 : index
    %c0_503 = arith.constant 0 : index
    %1387 = vector.load %arg19[%c0_502, %c0_503] : memref<80x80xf32, #tpu.memory_space<vmem>>, vector<80x80xf32>
    %cst_504 = arith.constant dense<0.000000e+00> : vector<8x80xf32>
    %1388 = tpu.matmul %1384, %1387, %cst_504 {dimension_numbers = #tpu.dot_dimension_numbers<[1], [0], [0], [1], [0, 0, 1, 1], [], []>} : vector<8x80xf32>, vector<80x80xf32>, vector<8x80xf32> -> vector<8x80xf32>
    %c0_505 = arith.constant 0 : index
    %c0_506 = arith.constant 0 : index
    %1389 = vector.load %arg20[%c0_505, %c0_506] : memref<1x80xf32, #tpu.memory_space<vmem>>, vector<1x80xf32>
    %1390 = vector.broadcast %1389 : vector<1x80xf32> to vector<8x80xf32>
    %1391 = arith.addf %1388, %1390 : vector<8x80xf32>
    %cst_507 = arith.constant -1.500000e+00 : f32
    %cst_508 = arith.constant 1.500000e+00 : f32
    %1392 = vector.broadcast %cst_507 : f32 to vector<8x80xf32>
    %1393 = arith.maximumf %1392, %1391 : vector<8x80xf32>
    %1394 = vector.broadcast %cst_508 : f32 to vector<8x80xf32>
    %1395 = arith.minimumf %1394, %1393 : vector<8x80xf32>
    %1396 = arith.addf %1395, %1328 : vector<8x80xf32>
    %1397 = math.exp %1391 : vector<8x80xf32>
    %cst_509 = arith.constant 0.0316227749 : f32
    %cst_510 = arith.constant 31.622776 : f32
    %1398 = vector.broadcast %cst_509 : f32 to vector<8x80xf32>
    %1399 = arith.maximumf %1398, %1397 : vector<8x80xf32>
    %1400 = vector.broadcast %cst_510 : f32 to vector<8x80xf32>
    %1401 = arith.minimumf %1400, %1399 : vector<8x80xf32>
    %1402 = arith.select %387, %1396, %1401 : vector<8x80xi1>, vector<8x80xf32>
    %c9 = arith.constant 9 : index
    %c0_511 = arith.constant 0 : index
    %c0_512 = arith.constant 0 : index
    %1403 = vector.load %arg2[%c9, %c0_511, %c0_512] : memref<13x8x128xf32, #tpu.memory_space<vmem>>, vector<1x8x128xf32>
    %1404 = vector.shape_cast %1403 : vector<1x8x128xf32> to vector<8x128xf32>
    %1405 = vector.extract_strided_slice %1404 {offsets = [0, 0], sizes = [8, 20], strides = [1, 1]} : vector<8x128xf32> to vector<8x20xf32>
    %1406 = arith.addf %377, %1405 : vector<8x20xf32>
    %cst_513 = arith.constant dense<0xFF800000> : vector<8xf32>
    %1407 = vector.multi_reduction <maximumf>, %1406, %cst_513 [1] : vector<8x20xf32> to vector<8xf32>
    %1408 = vector.shape_cast %1407 : vector<8xf32> to vector<8x1xf32>
    %1409 = vector.broadcast %1408 : vector<8x1xf32> to vector<8x20xf32>
    %1410 = arith.cmpf oge, %1406, %1409 : vector<8x20xf32>
    %cst_514 = arith.constant 2.000000e+01 : f32
    %1411 = vector.broadcast %cst_514 : f32 to vector<8x20xf32>
    %1412 = arith.select %1410, %352, %1411 : vector<8x20xi1>, vector<8x20xf32>
    %cst_515 = arith.constant dense<0x7F800000> : vector<8xf32>
    %1413 = vector.multi_reduction <minimumf>, %1412, %cst_515 [1] : vector<8x20xf32> to vector<8xf32>
    %1414 = vector.shape_cast %1413 : vector<8xf32> to vector<8x1xf32>
    %1415 = vector.broadcast %1414 : vector<8x1xf32> to vector<8x40xf32>
    %1416 = arith.cmpf oeq, %394, %1415 : vector<8x40xf32>
    %1417 = arith.extui %1416 : vector<8x40xi1> to vector<8x40xi32>
    %1418 = arith.sitofp %1417 : vector<8x40xi32> to vector<8x40xf32>
    %1419 = vector.extract_strided_slice %1404 {offsets = [0, 20], sizes = [8, 1], strides = [1, 1]} : vector<8x128xf32> to vector<8x1xf32>
    %1420 = vector.extract_strided_slice %1404 {offsets = [0, 21], sizes = [8, 1], strides = [1, 1]} : vector<8x128xf32> to vector<8x1xf32>
    %1421 = vector.shape_cast %1419 : vector<8x1xf32> to vector<8x1xf32>
    %1422 = vector.broadcast %1421 : vector<8x1xf32> to vector<8x40xf32>
    %1423 = vector.shape_cast %1420 : vector<8x1xf32> to vector<8x1xf32>
    %1424 = vector.broadcast %1423 : vector<8x1xf32> to vector<8x40xf32>
    %1425 = arith.select %390, %1422, %1424 : vector<8x40xi1>, vector<8x40xf32>
    %1426 = vector.extract_strided_slice %1402 {offsets = [0, 0], sizes = [8, 40], strides = [1, 1]} : vector<8x80xf32> to vector<8x40xf32>
    %1427 = vector.extract_strided_slice %1402 {offsets = [0, 40], sizes = [8, 40], strides = [1, 1]} : vector<8x80xf32> to vector<8x40xf32>
    %1428 = arith.mulf %1427, %1425 : vector<8x40xf32>
    %1429 = arith.addf %1426, %1428 : vector<8x40xf32>
    %1430 = arith.mulf %1418, %1429 : vector<8x40xf32>
    %1431 = vector.extract_strided_slice %1430 {offsets = [0, 0], sizes = [8, 20], strides = [1, 1]} : vector<8x40xf32> to vector<8x20xf32>
    %cst_516 = arith.constant dense<0.000000e+00> : vector<8xf32>
    %1432 = vector.multi_reduction <add>, %1431, %cst_516 [1] : vector<8x20xf32> to vector<8xf32>
    %1433 = vector.shape_cast %1432 : vector<8xf32> to vector<8x1xf32>
    %1434 = vector.extract_strided_slice %1430 {offsets = [0, 20], sizes = [8, 20], strides = [1, 1]} : vector<8x40xf32> to vector<8x20xf32>
    %cst_517 = arith.constant dense<0.000000e+00> : vector<8xf32>
    %1435 = vector.multi_reduction <add>, %1434, %cst_517 [1] : vector<8x20xf32> to vector<8xf32>
    %1436 = vector.shape_cast %1435 : vector<8xf32> to vector<8x1xf32>
    %1437 = tpu.concatenate %1433, %1436 in 1 : vector<8x1xf32>, vector<8x1xf32> -> vector<8x2xf32>
    %1438 = tpu.concatenate %1402, %1386, %1437, %396 in 1 : vector<8x80xf32>, vector<8x20xf32>, vector<8x2xf32>, vector<8x26xf32> -> vector<8x128xf32>
    %c8_518 = arith.constant 8 : index
    %c0_519 = arith.constant 0 : index
    %c0_520 = arith.constant 0 : index
    %1439 = vector.load %arg21[%c8_518, %c0_519, %c0_520] : memref<12x8x128xf32, #tpu.memory_space<vmem>>, vector<1x8x128xf32>
    %1440 = vector.shape_cast %1439 : vector<1x8x128xf32> to vector<8x128xf32>
    %1441 = vector.shape_cast %1438 : vector<8x128xf32> to vector<1x8x128xf32>
    tpu.vector_store %arg21[%c8_518, %c0_519, %c0_520], %1441 {strides = array<i32>} : memref<12x8x128xf32, #tpu.memory_space<vmem>>, vector<1x8x128xf32>,
    %cst_521 = arith.constant 0.000000e+00 : f32
    %1442 = vector.broadcast %cst_521 : f32 to vector<8x80xf32>
    %1443 = arith.select %387, %1402, %1442 : vector<8x80xi1>, vector<8x80xf32>
    %1444 = vector.broadcast %1433 : vector<8x1xf32> to vector<8x120xf32>
    %1445 = vector.broadcast %383 : vector<1x120xf32> to vector<8x120xf32>
    %1446 = arith.mulf %1444, %1445 : vector<8x120xf32>
    %1447 = arith.addf %382, %1446 : vector<8x120xf32>
    %1448 = vector.broadcast %1436 : vector<8x1xf32> to vector<8x120xf32>
    %1449 = vector.broadcast %384 : vector<1x120xf32> to vector<8x120xf32>
    %1450 = arith.mulf %1448, %1449 : vector<8x120xf32>
    %1451 = arith.addf %1447, %1450 : vector<8x120xf32>
    %c0_522 = arith.constant 0 : index
    %c0_523 = arith.constant 0 : index
    %1452 = vector.load %arg15[%c0_522, %c0_523] : memref<40x120xf32, #tpu.memory_space<vmem>>, vector<40x120xf32>
    %cst_524 = arith.constant dense<0.000000e+00> : vector<8x120xf32>
    %1453 = tpu.matmul %1371, %1452, %cst_524 {dimension_numbers = #tpu.dot_dimension_numbers<[1], [0], [0], [1], [0, 0, 1, 1], [], []>} : vector<8x40xf32>, vector<40x120xf32>, vector<8x120xf32> -> vector<8x120xf32>
    %c0_525 = arith.constant 0 : index
    %c0_526 = arith.constant 0 : index
    %1454 = vector.load %arg16[%c0_525, %c0_526] : memref<1x120xf32, #tpu.memory_space<vmem>>, vector<1x120xf32>
    %1455 = vector.broadcast %1454 : vector<1x120xf32> to vector<8x120xf32>
    %1456 = arith.addf %1453, %1455 : vector<8x120xf32>
    %1457 = vector.extract_strided_slice %1451 {offsets = [0, 0], sizes = [8, 40], strides = [1, 1]} : vector<8x120xf32> to vector<8x40xf32>
    %1458 = vector.extract_strided_slice %1456 {offsets = [0, 0], sizes = [8, 40], strides = [1, 1]} : vector<8x120xf32> to vector<8x40xf32>
    %1459 = arith.addf %1457, %1458 : vector<8x40xf32>
    %cst_527 = arith.constant 5.000000e-01 : f32
    %1460 = vector.broadcast %cst_527 : f32 to vector<8x40xf32>
    %1461 = arith.mulf %1460, %1459 : vector<8x40xf32>
    %1462 = math.tanh %1461 : vector<8x40xf32>
    %cst_528 = arith.constant 5.000000e-01 : f32
    %1463 = vector.broadcast %cst_528 : f32 to vector<8x40xf32>
    %1464 = arith.mulf %1463, %1462 : vector<8x40xf32>
    %cst_529 = arith.constant 5.000000e-01 : f32
    %1465 = vector.broadcast %cst_529 : f32 to vector<8x40xf32>
    %1466 = arith.addf %1464, %1465 : vector<8x40xf32>
    %1467 = vector.extract_strided_slice %1451 {offsets = [0, 40], sizes = [8, 40], strides = [1, 1]} : vector<8x120xf32> to vector<8x40xf32>
    %1468 = vector.extract_strided_slice %1456 {offsets = [0, 40], sizes = [8, 40], strides = [1, 1]} : vector<8x120xf32> to vector<8x40xf32>
    %1469 = arith.addf %1467, %1468 : vector<8x40xf32>
    %cst_530 = arith.constant 5.000000e-01 : f32
    %1470 = vector.broadcast %cst_530 : f32 to vector<8x40xf32>
    %1471 = arith.mulf %1470, %1469 : vector<8x40xf32>
    %1472 = math.tanh %1471 : vector<8x40xf32>
    %cst_531 = arith.constant 5.000000e-01 : f32
    %1473 = vector.broadcast %cst_531 : f32 to vector<8x40xf32>
    %1474 = arith.mulf %1473, %1472 : vector<8x40xf32>
    %cst_532 = arith.constant 5.000000e-01 : f32
    %1475 = vector.broadcast %cst_532 : f32 to vector<8x40xf32>
    %1476 = arith.addf %1474, %1475 : vector<8x40xf32>
    %1477 = vector.extract_strided_slice %1451 {offsets = [0, 80], sizes = [8, 40], strides = [1, 1]} : vector<8x120xf32> to vector<8x40xf32>
    %1478 = vector.extract_strided_slice %1456 {offsets = [0, 80], sizes = [8, 40], strides = [1, 1]} : vector<8x120xf32> to vector<8x40xf32>
    %1479 = arith.mulf %1466, %1478 : vector<8x40xf32>
    %1480 = arith.addf %1477, %1479 : vector<8x40xf32>
    %1481 = math.tanh %1480 : vector<8x40xf32>
    %cst_533 = arith.constant 1.000000e+00 : f32
    %1482 = vector.broadcast %cst_533 : f32 to vector<8x40xf32>
    %1483 = arith.subf %1482, %1476 : vector<8x40xf32>
    %1484 = arith.mulf %1483, %1481 : vector<8x40xf32>
    %1485 = arith.mulf %1476, %1371 : vector<8x40xf32>
    %1486 = arith.addf %1484, %1485 : vector<8x40xf32>
    %c0_534 = arith.constant 0 : index
    %c0_535 = arith.constant 0 : index
    %1487 = vector.load %arg17[%c0_534, %c0_535] : memref<40x100xf32, #tpu.memory_space<vmem>>, vector<40x100xf32>
    %cst_536 = arith.constant dense<0.000000e+00> : vector<8x100xf32>
    %1488 = tpu.matmul %1486, %1487, %cst_536 {dimension_numbers = #tpu.dot_dimension_numbers<[1], [0], [0], [1], [0, 0, 1, 1], [], []>} : vector<8x40xf32>, vector<40x100xf32>, vector<8x100xf32> -> vector<8x100xf32>
    %c0_537 = arith.constant 0 : index
    %c0_538 = arith.constant 0 : index
    %1489 = vector.load %arg18[%c0_537, %c0_538] : memref<1x100xf32, #tpu.memory_space<vmem>>, vector<1x100xf32>
    %1490 = vector.broadcast %1489 : vector<1x100xf32> to vector<8x100xf32>
    %1491 = arith.addf %1488, %1490 : vector<8x100xf32>
    %1492 = vector.extract_strided_slice %1491 {offsets = [0, 0], sizes = [8, 80], strides = [1, 1]} : vector<8x100xf32> to vector<8x80xf32>
    %cst_539 = arith.constant 5.000000e-01 : f32
    %1493 = vector.broadcast %cst_539 : f32 to vector<8x80xf32>
    %1494 = arith.mulf %1493, %1492 : vector<8x80xf32>
    %1495 = math.tanh %1494 : vector<8x80xf32>
    %cst_540 = arith.constant 5.000000e-01 : f32
    %1496 = vector.broadcast %cst_540 : f32 to vector<8x80xf32>
    %1497 = arith.mulf %1496, %1495 : vector<8x80xf32>
    %cst_541 = arith.constant 5.000000e-01 : f32
    %1498 = vector.broadcast %cst_541 : f32 to vector<8x80xf32>
    %1499 = arith.addf %1497, %1498 : vector<8x80xf32>
    %1500 = vector.extract_strided_slice %1491 {offsets = [0, 80], sizes = [8, 20], strides = [1, 1]} : vector<8x100xf32> to vector<8x20xf32>
    %1501 = math.tanh %1500 : vector<8x20xf32>
    %c0_542 = arith.constant 0 : index
    %c0_543 = arith.constant 0 : index
    %1502 = vector.load %arg19[%c0_542, %c0_543] : memref<80x80xf32, #tpu.memory_space<vmem>>, vector<80x80xf32>
    %cst_544 = arith.constant dense<0.000000e+00> : vector<8x80xf32>
    %1503 = tpu.matmul %1499, %1502, %cst_544 {dimension_numbers = #tpu.dot_dimension_numbers<[1], [0], [0], [1], [0, 0, 1, 1], [], []>} : vector<8x80xf32>, vector<80x80xf32>, vector<8x80xf32> -> vector<8x80xf32>
    %c0_545 = arith.constant 0 : index
    %c0_546 = arith.constant 0 : index
    %1504 = vector.load %arg20[%c0_545, %c0_546] : memref<1x80xf32, #tpu.memory_space<vmem>>, vector<1x80xf32>
    %1505 = vector.broadcast %1504 : vector<1x80xf32> to vector<8x80xf32>
    %1506 = arith.addf %1503, %1505 : vector<8x80xf32>
    %cst_547 = arith.constant -1.500000e+00 : f32
    %cst_548 = arith.constant 1.500000e+00 : f32
    %1507 = vector.broadcast %cst_547 : f32 to vector<8x80xf32>
    %1508 = arith.maximumf %1507, %1506 : vector<8x80xf32>
    %1509 = vector.broadcast %cst_548 : f32 to vector<8x80xf32>
    %1510 = arith.minimumf %1509, %1508 : vector<8x80xf32>
    %1511 = arith.addf %1510, %1443 : vector<8x80xf32>
    %1512 = math.exp %1506 : vector<8x80xf32>
    %cst_549 = arith.constant 0.0316227749 : f32
    %cst_550 = arith.constant 31.622776 : f32
    %1513 = vector.broadcast %cst_549 : f32 to vector<8x80xf32>
    %1514 = arith.maximumf %1513, %1512 : vector<8x80xf32>
    %1515 = vector.broadcast %cst_550 : f32 to vector<8x80xf32>
    %1516 = arith.minimumf %1515, %1514 : vector<8x80xf32>
    %1517 = arith.select %387, %1511, %1516 : vector<8x80xi1>, vector<8x80xf32>
    %c10 = arith.constant 10 : index
    %c0_551 = arith.constant 0 : index
    %c0_552 = arith.constant 0 : index
    %1518 = vector.load %arg2[%c10, %c0_551, %c0_552] : memref<13x8x128xf32, #tpu.memory_space<vmem>>, vector<1x8x128xf32>
    %1519 = vector.shape_cast %1518 : vector<1x8x128xf32> to vector<8x128xf32>
    %1520 = vector.extract_strided_slice %1519 {offsets = [0, 0], sizes = [8, 20], strides = [1, 1]} : vector<8x128xf32> to vector<8x20xf32>
    %1521 = arith.addf %377, %1520 : vector<8x20xf32>
    %cst_553 = arith.constant dense<0xFF800000> : vector<8xf32>
    %1522 = vector.multi_reduction <maximumf>, %1521, %cst_553 [1] : vector<8x20xf32> to vector<8xf32>
    %1523 = vector.shape_cast %1522 : vector<8xf32> to vector<8x1xf32>
    %1524 = vector.broadcast %1523 : vector<8x1xf32> to vector<8x20xf32>
    %1525 = arith.cmpf oge, %1521, %1524 : vector<8x20xf32>
    %cst_554 = arith.constant 2.000000e+01 : f32
    %1526 = vector.broadcast %cst_554 : f32 to vector<8x20xf32>
    %1527 = arith.select %1525, %352, %1526 : vector<8x20xi1>, vector<8x20xf32>
    %cst_555 = arith.constant dense<0x7F800000> : vector<8xf32>
    %1528 = vector.multi_reduction <minimumf>, %1527, %cst_555 [1] : vector<8x20xf32> to vector<8xf32>
    %1529 = vector.shape_cast %1528 : vector<8xf32> to vector<8x1xf32>
    %1530 = vector.broadcast %1529 : vector<8x1xf32> to vector<8x40xf32>
    %1531 = arith.cmpf oeq, %394, %1530 : vector<8x40xf32>
    %1532 = arith.extui %1531 : vector<8x40xi1> to vector<8x40xi32>
    %1533 = arith.sitofp %1532 : vector<8x40xi32> to vector<8x40xf32>
    %1534 = vector.extract_strided_slice %1519 {offsets = [0, 20], sizes = [8, 1], strides = [1, 1]} : vector<8x128xf32> to vector<8x1xf32>
    %1535 = vector.extract_strided_slice %1519 {offsets = [0, 21], sizes = [8, 1], strides = [1, 1]} : vector<8x128xf32> to vector<8x1xf32>
    %1536 = vector.shape_cast %1534 : vector<8x1xf32> to vector<8x1xf32>
    %1537 = vector.broadcast %1536 : vector<8x1xf32> to vector<8x40xf32>
    %1538 = vector.shape_cast %1535 : vector<8x1xf32> to vector<8x1xf32>
    %1539 = vector.broadcast %1538 : vector<8x1xf32> to vector<8x40xf32>
    %1540 = arith.select %390, %1537, %1539 : vector<8x40xi1>, vector<8x40xf32>
    %1541 = vector.extract_strided_slice %1517 {offsets = [0, 0], sizes = [8, 40], strides = [1, 1]} : vector<8x80xf32> to vector<8x40xf32>
    %1542 = vector.extract_strided_slice %1517 {offsets = [0, 40], sizes = [8, 40], strides = [1, 1]} : vector<8x80xf32> to vector<8x40xf32>
    %1543 = arith.mulf %1542, %1540 : vector<8x40xf32>
    %1544 = arith.addf %1541, %1543 : vector<8x40xf32>
    %1545 = arith.mulf %1533, %1544 : vector<8x40xf32>
    %1546 = vector.extract_strided_slice %1545 {offsets = [0, 0], sizes = [8, 20], strides = [1, 1]} : vector<8x40xf32> to vector<8x20xf32>
    %cst_556 = arith.constant dense<0.000000e+00> : vector<8xf32>
    %1547 = vector.multi_reduction <add>, %1546, %cst_556 [1] : vector<8x20xf32> to vector<8xf32>
    %1548 = vector.shape_cast %1547 : vector<8xf32> to vector<8x1xf32>
    %1549 = vector.extract_strided_slice %1545 {offsets = [0, 20], sizes = [8, 20], strides = [1, 1]} : vector<8x40xf32> to vector<8x20xf32>
    %cst_557 = arith.constant dense<0.000000e+00> : vector<8xf32>
    %1550 = vector.multi_reduction <add>, %1549, %cst_557 [1] : vector<8x20xf32> to vector<8xf32>
    %1551 = vector.shape_cast %1550 : vector<8xf32> to vector<8x1xf32>
    %1552 = tpu.concatenate %1548, %1551 in 1 : vector<8x1xf32>, vector<8x1xf32> -> vector<8x2xf32>
    %1553 = tpu.concatenate %1517, %1501, %1552, %396 in 1 : vector<8x80xf32>, vector<8x20xf32>, vector<8x2xf32>, vector<8x26xf32> -> vector<8x128xf32>
    %c9_558 = arith.constant 9 : index
    %c0_559 = arith.constant 0 : index
    %c0_560 = arith.constant 0 : index
    %1554 = vector.load %arg21[%c9_558, %c0_559, %c0_560] : memref<12x8x128xf32, #tpu.memory_space<vmem>>, vector<1x8x128xf32>
    %1555 = vector.shape_cast %1554 : vector<1x8x128xf32> to vector<8x128xf32>
    %1556 = vector.shape_cast %1553 : vector<8x128xf32> to vector<1x8x128xf32>
    tpu.vector_store %arg21[%c9_558, %c0_559, %c0_560], %1556 {strides = array<i32>} : memref<12x8x128xf32, #tpu.memory_space<vmem>>, vector<1x8x128xf32>,
    %cst_561 = arith.constant 0.000000e+00 : f32
    %1557 = vector.broadcast %cst_561 : f32 to vector<8x80xf32>
    %1558 = arith.select %387, %1517, %1557 : vector<8x80xi1>, vector<8x80xf32>
    %1559 = vector.broadcast %1548 : vector<8x1xf32> to vector<8x120xf32>
    %1560 = vector.broadcast %383 : vector<1x120xf32> to vector<8x120xf32>
    %1561 = arith.mulf %1559, %1560 : vector<8x120xf32>
    %1562 = arith.addf %382, %1561 : vector<8x120xf32>
    %1563 = vector.broadcast %1551 : vector<8x1xf32> to vector<8x120xf32>
    %1564 = vector.broadcast %384 : vector<1x120xf32> to vector<8x120xf32>
    %1565 = arith.mulf %1563, %1564 : vector<8x120xf32>
    %1566 = arith.addf %1562, %1565 : vector<8x120xf32>
    %c0_562 = arith.constant 0 : index
    %c0_563 = arith.constant 0 : index
    %1567 = vector.load %arg15[%c0_562, %c0_563] : memref<40x120xf32, #tpu.memory_space<vmem>>, vector<40x120xf32>
    %cst_564 = arith.constant dense<0.000000e+00> : vector<8x120xf32>
    %1568 = tpu.matmul %1486, %1567, %cst_564 {dimension_numbers = #tpu.dot_dimension_numbers<[1], [0], [0], [1], [0, 0, 1, 1], [], []>} : vector<8x40xf32>, vector<40x120xf32>, vector<8x120xf32> -> vector<8x120xf32>
    %c0_565 = arith.constant 0 : index
    %c0_566 = arith.constant 0 : index
    %1569 = vector.load %arg16[%c0_565, %c0_566] : memref<1x120xf32, #tpu.memory_space<vmem>>, vector<1x120xf32>
    %1570 = vector.broadcast %1569 : vector<1x120xf32> to vector<8x120xf32>
    %1571 = arith.addf %1568, %1570 : vector<8x120xf32>
    %1572 = vector.extract_strided_slice %1566 {offsets = [0, 0], sizes = [8, 40], strides = [1, 1]} : vector<8x120xf32> to vector<8x40xf32>
    %1573 = vector.extract_strided_slice %1571 {offsets = [0, 0], sizes = [8, 40], strides = [1, 1]} : vector<8x120xf32> to vector<8x40xf32>
    %1574 = arith.addf %1572, %1573 : vector<8x40xf32>
    %cst_567 = arith.constant 5.000000e-01 : f32
    %1575 = vector.broadcast %cst_567 : f32 to vector<8x40xf32>
    %1576 = arith.mulf %1575, %1574 : vector<8x40xf32>
    %1577 = math.tanh %1576 : vector<8x40xf32>
    %cst_568 = arith.constant 5.000000e-01 : f32
    %1578 = vector.broadcast %cst_568 : f32 to vector<8x40xf32>
    %1579 = arith.mulf %1578, %1577 : vector<8x40xf32>
    %cst_569 = arith.constant 5.000000e-01 : f32
    %1580 = vector.broadcast %cst_569 : f32 to vector<8x40xf32>
    %1581 = arith.addf %1579, %1580 : vector<8x40xf32>
    %1582 = vector.extract_strided_slice %1566 {offsets = [0, 40], sizes = [8, 40], strides = [1, 1]} : vector<8x120xf32> to vector<8x40xf32>
    %1583 = vector.extract_strided_slice %1571 {offsets = [0, 40], sizes = [8, 40], strides = [1, 1]} : vector<8x120xf32> to vector<8x40xf32>
    %1584 = arith.addf %1582, %1583 : vector<8x40xf32>
    %cst_570 = arith.constant 5.000000e-01 : f32
    %1585 = vector.broadcast %cst_570 : f32 to vector<8x40xf32>
    %1586 = arith.mulf %1585, %1584 : vector<8x40xf32>
    %1587 = math.tanh %1586 : vector<8x40xf32>
    %cst_571 = arith.constant 5.000000e-01 : f32
    %1588 = vector.broadcast %cst_571 : f32 to vector<8x40xf32>
    %1589 = arith.mulf %1588, %1587 : vector<8x40xf32>
    %cst_572 = arith.constant 5.000000e-01 : f32
    %1590 = vector.broadcast %cst_572 : f32 to vector<8x40xf32>
    %1591 = arith.addf %1589, %1590 : vector<8x40xf32>
    %1592 = vector.extract_strided_slice %1566 {offsets = [0, 80], sizes = [8, 40], strides = [1, 1]} : vector<8x120xf32> to vector<8x40xf32>
    %1593 = vector.extract_strided_slice %1571 {offsets = [0, 80], sizes = [8, 40], strides = [1, 1]} : vector<8x120xf32> to vector<8x40xf32>
    %1594 = arith.mulf %1581, %1593 : vector<8x40xf32>
    %1595 = arith.addf %1592, %1594 : vector<8x40xf32>
    %1596 = math.tanh %1595 : vector<8x40xf32>
    %cst_573 = arith.constant 1.000000e+00 : f32
    %1597 = vector.broadcast %cst_573 : f32 to vector<8x40xf32>
    %1598 = arith.subf %1597, %1591 : vector<8x40xf32>
    %1599 = arith.mulf %1598, %1596 : vector<8x40xf32>
    %1600 = arith.mulf %1591, %1486 : vector<8x40xf32>
    %1601 = arith.addf %1599, %1600 : vector<8x40xf32>
    %c0_574 = arith.constant 0 : index
    %c0_575 = arith.constant 0 : index
    %1602 = vector.load %arg17[%c0_574, %c0_575] : memref<40x100xf32, #tpu.memory_space<vmem>>, vector<40x100xf32>
    %cst_576 = arith.constant dense<0.000000e+00> : vector<8x100xf32>
    %1603 = tpu.matmul %1601, %1602, %cst_576 {dimension_numbers = #tpu.dot_dimension_numbers<[1], [0], [0], [1], [0, 0, 1, 1], [], []>} : vector<8x40xf32>, vector<40x100xf32>, vector<8x100xf32> -> vector<8x100xf32>
    %c0_577 = arith.constant 0 : index
    %c0_578 = arith.constant 0 : index
    %1604 = vector.load %arg18[%c0_577, %c0_578] : memref<1x100xf32, #tpu.memory_space<vmem>>, vector<1x100xf32>
    %1605 = vector.broadcast %1604 : vector<1x100xf32> to vector<8x100xf32>
    %1606 = arith.addf %1603, %1605 : vector<8x100xf32>
    %1607 = vector.extract_strided_slice %1606 {offsets = [0, 0], sizes = [8, 80], strides = [1, 1]} : vector<8x100xf32> to vector<8x80xf32>
    %cst_579 = arith.constant 5.000000e-01 : f32
    %1608 = vector.broadcast %cst_579 : f32 to vector<8x80xf32>
    %1609 = arith.mulf %1608, %1607 : vector<8x80xf32>
    %1610 = math.tanh %1609 : vector<8x80xf32>
    %cst_580 = arith.constant 5.000000e-01 : f32
    %1611 = vector.broadcast %cst_580 : f32 to vector<8x80xf32>
    %1612 = arith.mulf %1611, %1610 : vector<8x80xf32>
    %cst_581 = arith.constant 5.000000e-01 : f32
    %1613 = vector.broadcast %cst_581 : f32 to vector<8x80xf32>
    %1614 = arith.addf %1612, %1613 : vector<8x80xf32>
    %1615 = vector.extract_strided_slice %1606 {offsets = [0, 80], sizes = [8, 20], strides = [1, 1]} : vector<8x100xf32> to vector<8x20xf32>
    %1616 = math.tanh %1615 : vector<8x20xf32>
    %c0_582 = arith.constant 0 : index
    %c0_583 = arith.constant 0 : index
    %1617 = vector.load %arg19[%c0_582, %c0_583] : memref<80x80xf32, #tpu.memory_space<vmem>>, vector<80x80xf32>
    %cst_584 = arith.constant dense<0.000000e+00> : vector<8x80xf32>
    %1618 = tpu.matmul %1614, %1617, %cst_584 {dimension_numbers = #tpu.dot_dimension_numbers<[1], [0], [0], [1], [0, 0, 1, 1], [], []>} : vector<8x80xf32>, vector<80x80xf32>, vector<8x80xf32> -> vector<8x80xf32>
    %c0_585 = arith.constant 0 : index
    %c0_586 = arith.constant 0 : index
    %1619 = vector.load %arg20[%c0_585, %c0_586] : memref<1x80xf32, #tpu.memory_space<vmem>>, vector<1x80xf32>
    %1620 = vector.broadcast %1619 : vector<1x80xf32> to vector<8x80xf32>
    %1621 = arith.addf %1618, %1620 : vector<8x80xf32>
    %cst_587 = arith.constant -1.500000e+00 : f32
    %cst_588 = arith.constant 1.500000e+00 : f32
    %1622 = vector.broadcast %cst_587 : f32 to vector<8x80xf32>
    %1623 = arith.maximumf %1622, %1621 : vector<8x80xf32>
    %1624 = vector.broadcast %cst_588 : f32 to vector<8x80xf32>
    %1625 = arith.minimumf %1624, %1623 : vector<8x80xf32>
    %1626 = arith.addf %1625, %1558 : vector<8x80xf32>
    %1627 = math.exp %1621 : vector<8x80xf32>
    %cst_589 = arith.constant 0.0316227749 : f32
    %cst_590 = arith.constant 31.622776 : f32
    %1628 = vector.broadcast %cst_589 : f32 to vector<8x80xf32>
    %1629 = arith.maximumf %1628, %1627 : vector<8x80xf32>
    %1630 = vector.broadcast %cst_590 : f32 to vector<8x80xf32>
    %1631 = arith.minimumf %1630, %1629 : vector<8x80xf32>
    %1632 = arith.select %387, %1626, %1631 : vector<8x80xi1>, vector<8x80xf32>
    %c11 = arith.constant 11 : index
    %c0_591 = arith.constant 0 : index
    %c0_592 = arith.constant 0 : index
    %1633 = vector.load %arg2[%c11, %c0_591, %c0_592] : memref<13x8x128xf32, #tpu.memory_space<vmem>>, vector<1x8x128xf32>
    %1634 = vector.shape_cast %1633 : vector<1x8x128xf32> to vector<8x128xf32>
    %1635 = vector.extract_strided_slice %1634 {offsets = [0, 0], sizes = [8, 20], strides = [1, 1]} : vector<8x128xf32> to vector<8x20xf32>
    %1636 = arith.addf %377, %1635 : vector<8x20xf32>
    %cst_593 = arith.constant dense<0xFF800000> : vector<8xf32>
    %1637 = vector.multi_reduction <maximumf>, %1636, %cst_593 [1] : vector<8x20xf32> to vector<8xf32>
    %1638 = vector.shape_cast %1637 : vector<8xf32> to vector<8x1xf32>
    %1639 = vector.broadcast %1638 : vector<8x1xf32> to vector<8x20xf32>
    %1640 = arith.cmpf oge, %1636, %1639 : vector<8x20xf32>
    %cst_594 = arith.constant 2.000000e+01 : f32
    %1641 = vector.broadcast %cst_594 : f32 to vector<8x20xf32>
    %1642 = arith.select %1640, %352, %1641 : vector<8x20xi1>, vector<8x20xf32>
    %cst_595 = arith.constant dense<0x7F800000> : vector<8xf32>
    %1643 = vector.multi_reduction <minimumf>, %1642, %cst_595 [1] : vector<8x20xf32> to vector<8xf32>
    %1644 = vector.shape_cast %1643 : vector<8xf32> to vector<8x1xf32>
    %1645 = vector.broadcast %1644 : vector<8x1xf32> to vector<8x40xf32>
    %1646 = arith.cmpf oeq, %394, %1645 : vector<8x40xf32>
    %1647 = arith.extui %1646 : vector<8x40xi1> to vector<8x40xi32>
    %1648 = arith.sitofp %1647 : vector<8x40xi32> to vector<8x40xf32>
    %1649 = vector.extract_strided_slice %1634 {offsets = [0, 20], sizes = [8, 1], strides = [1, 1]} : vector<8x128xf32> to vector<8x1xf32>
    %1650 = vector.extract_strided_slice %1634 {offsets = [0, 21], sizes = [8, 1], strides = [1, 1]} : vector<8x128xf32> to vector<8x1xf32>
    %1651 = vector.shape_cast %1649 : vector<8x1xf32> to vector<8x1xf32>
    %1652 = vector.broadcast %1651 : vector<8x1xf32> to vector<8x40xf32>
    %1653 = vector.shape_cast %1650 : vector<8x1xf32> to vector<8x1xf32>
    %1654 = vector.broadcast %1653 : vector<8x1xf32> to vector<8x40xf32>
    %1655 = arith.select %390, %1652, %1654 : vector<8x40xi1>, vector<8x40xf32>
    %1656 = vector.extract_strided_slice %1632 {offsets = [0, 0], sizes = [8, 40], strides = [1, 1]} : vector<8x80xf32> to vector<8x40xf32>
    %1657 = vector.extract_strided_slice %1632 {offsets = [0, 40], sizes = [8, 40], strides = [1, 1]} : vector<8x80xf32> to vector<8x40xf32>
    %1658 = arith.mulf %1657, %1655 : vector<8x40xf32>
    %1659 = arith.addf %1656, %1658 : vector<8x40xf32>
    %1660 = arith.mulf %1648, %1659 : vector<8x40xf32>
    %1661 = vector.extract_strided_slice %1660 {offsets = [0, 0], sizes = [8, 20], strides = [1, 1]} : vector<8x40xf32> to vector<8x20xf32>
    %cst_596 = arith.constant dense<0.000000e+00> : vector<8xf32>
    %1662 = vector.multi_reduction <add>, %1661, %cst_596 [1] : vector<8x20xf32> to vector<8xf32>
    %1663 = vector.shape_cast %1662 : vector<8xf32> to vector<8x1xf32>
    %1664 = vector.extract_strided_slice %1660 {offsets = [0, 20], sizes = [8, 20], strides = [1, 1]} : vector<8x40xf32> to vector<8x20xf32>
    %cst_597 = arith.constant dense<0.000000e+00> : vector<8xf32>
    %1665 = vector.multi_reduction <add>, %1664, %cst_597 [1] : vector<8x20xf32> to vector<8xf32>
    %1666 = vector.shape_cast %1665 : vector<8xf32> to vector<8x1xf32>
    %1667 = tpu.concatenate %1663, %1666 in 1 : vector<8x1xf32>, vector<8x1xf32> -> vector<8x2xf32>
    %1668 = tpu.concatenate %1632, %1616, %1667, %396 in 1 : vector<8x80xf32>, vector<8x20xf32>, vector<8x2xf32>, vector<8x26xf32> -> vector<8x128xf32>
    %c10_598 = arith.constant 10 : index
    %c0_599 = arith.constant 0 : index
    %c0_600 = arith.constant 0 : index
    %1669 = vector.load %arg21[%c10_598, %c0_599, %c0_600] : memref<12x8x128xf32, #tpu.memory_space<vmem>>, vector<1x8x128xf32>
    %1670 = vector.shape_cast %1669 : vector<1x8x128xf32> to vector<8x128xf32>
    %1671 = vector.shape_cast %1668 : vector<8x128xf32> to vector<1x8x128xf32>
    tpu.vector_store %arg21[%c10_598, %c0_599, %c0_600], %1671 {strides = array<i32>} : memref<12x8x128xf32, #tpu.memory_space<vmem>>, vector<1x8x128xf32>,
    %cst_601 = arith.constant 0.000000e+00 : f32
    %1672 = vector.broadcast %cst_601 : f32 to vector<8x80xf32>
    %1673 = arith.select %387, %1632, %1672 : vector<8x80xi1>, vector<8x80xf32>
    %1674 = vector.broadcast %1663 : vector<8x1xf32> to vector<8x120xf32>
    %1675 = vector.broadcast %383 : vector<1x120xf32> to vector<8x120xf32>
    %1676 = arith.mulf %1674, %1675 : vector<8x120xf32>
    %1677 = arith.addf %382, %1676 : vector<8x120xf32>
    %1678 = vector.broadcast %1666 : vector<8x1xf32> to vector<8x120xf32>
    %1679 = vector.broadcast %384 : vector<1x120xf32> to vector<8x120xf32>
    %1680 = arith.mulf %1678, %1679 : vector<8x120xf32>
    %1681 = arith.addf %1677, %1680 : vector<8x120xf32>
    %c0_602 = arith.constant 0 : index
    %c0_603 = arith.constant 0 : index
    %1682 = vector.load %arg15[%c0_602, %c0_603] : memref<40x120xf32, #tpu.memory_space<vmem>>, vector<40x120xf32>
    %cst_604 = arith.constant dense<0.000000e+00> : vector<8x120xf32>
    %1683 = tpu.matmul %1601, %1682, %cst_604 {dimension_numbers = #tpu.dot_dimension_numbers<[1], [0], [0], [1], [0, 0, 1, 1], [], []>} : vector<8x40xf32>, vector<40x120xf32>, vector<8x120xf32> -> vector<8x120xf32>
    %c0_605 = arith.constant 0 : index
    %c0_606 = arith.constant 0 : index
    %1684 = vector.load %arg16[%c0_605, %c0_606] : memref<1x120xf32, #tpu.memory_space<vmem>>, vector<1x120xf32>
    %1685 = vector.broadcast %1684 : vector<1x120xf32> to vector<8x120xf32>
    %1686 = arith.addf %1683, %1685 : vector<8x120xf32>
    %1687 = vector.extract_strided_slice %1681 {offsets = [0, 0], sizes = [8, 40], strides = [1, 1]} : vector<8x120xf32> to vector<8x40xf32>
    %1688 = vector.extract_strided_slice %1686 {offsets = [0, 0], sizes = [8, 40], strides = [1, 1]} : vector<8x120xf32> to vector<8x40xf32>
    %1689 = arith.addf %1687, %1688 : vector<8x40xf32>
    %cst_607 = arith.constant 5.000000e-01 : f32
    %1690 = vector.broadcast %cst_607 : f32 to vector<8x40xf32>
    %1691 = arith.mulf %1690, %1689 : vector<8x40xf32>
    %1692 = math.tanh %1691 : vector<8x40xf32>
    %cst_608 = arith.constant 5.000000e-01 : f32
    %1693 = vector.broadcast %cst_608 : f32 to vector<8x40xf32>
    %1694 = arith.mulf %1693, %1692 : vector<8x40xf32>
    %cst_609 = arith.constant 5.000000e-01 : f32
    %1695 = vector.broadcast %cst_609 : f32 to vector<8x40xf32>
    %1696 = arith.addf %1694, %1695 : vector<8x40xf32>
    %1697 = vector.extract_strided_slice %1681 {offsets = [0, 40], sizes = [8, 40], strides = [1, 1]} : vector<8x120xf32> to vector<8x40xf32>
    %1698 = vector.extract_strided_slice %1686 {offsets = [0, 40], sizes = [8, 40], strides = [1, 1]} : vector<8x120xf32> to vector<8x40xf32>
    %1699 = arith.addf %1697, %1698 : vector<8x40xf32>
    %cst_610 = arith.constant 5.000000e-01 : f32
    %1700 = vector.broadcast %cst_610 : f32 to vector<8x40xf32>
    %1701 = arith.mulf %1700, %1699 : vector<8x40xf32>
    %1702 = math.tanh %1701 : vector<8x40xf32>
    %cst_611 = arith.constant 5.000000e-01 : f32
    %1703 = vector.broadcast %cst_611 : f32 to vector<8x40xf32>
    %1704 = arith.mulf %1703, %1702 : vector<8x40xf32>
    %cst_612 = arith.constant 5.000000e-01 : f32
    %1705 = vector.broadcast %cst_612 : f32 to vector<8x40xf32>
    %1706 = arith.addf %1704, %1705 : vector<8x40xf32>
    %1707 = vector.extract_strided_slice %1681 {offsets = [0, 80], sizes = [8, 40], strides = [1, 1]} : vector<8x120xf32> to vector<8x40xf32>
    %1708 = vector.extract_strided_slice %1686 {offsets = [0, 80], sizes = [8, 40], strides = [1, 1]} : vector<8x120xf32> to vector<8x40xf32>
    %1709 = arith.mulf %1696, %1708 : vector<8x40xf32>
    %1710 = arith.addf %1707, %1709 : vector<8x40xf32>
    %1711 = math.tanh %1710 : vector<8x40xf32>
    %cst_613 = arith.constant 1.000000e+00 : f32
    %1712 = vector.broadcast %cst_613 : f32 to vector<8x40xf32>
    %1713 = arith.subf %1712, %1706 : vector<8x40xf32>
    %1714 = arith.mulf %1713, %1711 : vector<8x40xf32>
    %1715 = arith.mulf %1706, %1601 : vector<8x40xf32>
    %1716 = arith.addf %1714, %1715 : vector<8x40xf32>
    %c0_614 = arith.constant 0 : index
    %c0_615 = arith.constant 0 : index
    %1717 = vector.load %arg17[%c0_614, %c0_615] : memref<40x100xf32, #tpu.memory_space<vmem>>, vector<40x100xf32>
    %cst_616 = arith.constant dense<0.000000e+00> : vector<8x100xf32>
    %1718 = tpu.matmul %1716, %1717, %cst_616 {dimension_numbers = #tpu.dot_dimension_numbers<[1], [0], [0], [1], [0, 0, 1, 1], [], []>} : vector<8x40xf32>, vector<40x100xf32>, vector<8x100xf32> -> vector<8x100xf32>
    %c0_617 = arith.constant 0 : index
    %c0_618 = arith.constant 0 : index
    %1719 = vector.load %arg18[%c0_617, %c0_618] : memref<1x100xf32, #tpu.memory_space<vmem>>, vector<1x100xf32>
    %1720 = vector.broadcast %1719 : vector<1x100xf32> to vector<8x100xf32>
    %1721 = arith.addf %1718, %1720 : vector<8x100xf32>
    %1722 = vector.extract_strided_slice %1721 {offsets = [0, 0], sizes = [8, 80], strides = [1, 1]} : vector<8x100xf32> to vector<8x80xf32>
    %cst_619 = arith.constant 5.000000e-01 : f32
    %1723 = vector.broadcast %cst_619 : f32 to vector<8x80xf32>
    %1724 = arith.mulf %1723, %1722 : vector<8x80xf32>
    %1725 = math.tanh %1724 : vector<8x80xf32>
    %cst_620 = arith.constant 5.000000e-01 : f32
    %1726 = vector.broadcast %cst_620 : f32 to vector<8x80xf32>
    %1727 = arith.mulf %1726, %1725 : vector<8x80xf32>
    %cst_621 = arith.constant 5.000000e-01 : f32
    %1728 = vector.broadcast %cst_621 : f32 to vector<8x80xf32>
    %1729 = arith.addf %1727, %1728 : vector<8x80xf32>
    %1730 = vector.extract_strided_slice %1721 {offsets = [0, 80], sizes = [8, 20], strides = [1, 1]} : vector<8x100xf32> to vector<8x20xf32>
    %1731 = math.tanh %1730 : vector<8x20xf32>
    %c0_622 = arith.constant 0 : index
    %c0_623 = arith.constant 0 : index
    %1732 = vector.load %arg19[%c0_622, %c0_623] : memref<80x80xf32, #tpu.memory_space<vmem>>, vector<80x80xf32>
    %cst_624 = arith.constant dense<0.000000e+00> : vector<8x80xf32>
    %1733 = tpu.matmul %1729, %1732, %cst_624 {dimension_numbers = #tpu.dot_dimension_numbers<[1], [0], [0], [1], [0, 0, 1, 1], [], []>} : vector<8x80xf32>, vector<80x80xf32>, vector<8x80xf32> -> vector<8x80xf32>
    %c0_625 = arith.constant 0 : index
    %c0_626 = arith.constant 0 : index
    %1734 = vector.load %arg20[%c0_625, %c0_626] : memref<1x80xf32, #tpu.memory_space<vmem>>, vector<1x80xf32>
    %1735 = vector.broadcast %1734 : vector<1x80xf32> to vector<8x80xf32>
    %1736 = arith.addf %1733, %1735 : vector<8x80xf32>
    %cst_627 = arith.constant -1.500000e+00 : f32
    %cst_628 = arith.constant 1.500000e+00 : f32
    %1737 = vector.broadcast %cst_627 : f32 to vector<8x80xf32>
    %1738 = arith.maximumf %1737, %1736 : vector<8x80xf32>
    %1739 = vector.broadcast %cst_628 : f32 to vector<8x80xf32>
    %1740 = arith.minimumf %1739, %1738 : vector<8x80xf32>
    %1741 = arith.addf %1740, %1673 : vector<8x80xf32>
    %1742 = math.exp %1736 : vector<8x80xf32>
    %cst_629 = arith.constant 0.0316227749 : f32
    %cst_630 = arith.constant 31.622776 : f32
    %1743 = vector.broadcast %cst_629 : f32 to vector<8x80xf32>
    %1744 = arith.maximumf %1743, %1742 : vector<8x80xf32>
    %1745 = vector.broadcast %cst_630 : f32 to vector<8x80xf32>
    %1746 = arith.minimumf %1745, %1744 : vector<8x80xf32>
    %1747 = arith.select %387, %1741, %1746 : vector<8x80xi1>, vector<8x80xf32>
    %c12 = arith.constant 12 : index
    %c0_631 = arith.constant 0 : index
    %c0_632 = arith.constant 0 : index
    %1748 = vector.load %arg2[%c12, %c0_631, %c0_632] : memref<13x8x128xf32, #tpu.memory_space<vmem>>, vector<1x8x128xf32>
    %1749 = vector.shape_cast %1748 : vector<1x8x128xf32> to vector<8x128xf32>
    %1750 = vector.extract_strided_slice %1749 {offsets = [0, 0], sizes = [8, 20], strides = [1, 1]} : vector<8x128xf32> to vector<8x20xf32>
    %1751 = arith.addf %377, %1750 : vector<8x20xf32>
    %cst_633 = arith.constant dense<0xFF800000> : vector<8xf32>
    %1752 = vector.multi_reduction <maximumf>, %1751, %cst_633 [1] : vector<8x20xf32> to vector<8xf32>
    %1753 = vector.shape_cast %1752 : vector<8xf32> to vector<8x1xf32>
    %1754 = vector.broadcast %1753 : vector<8x1xf32> to vector<8x20xf32>
    %1755 = arith.cmpf oge, %1751, %1754 : vector<8x20xf32>
    %cst_634 = arith.constant 2.000000e+01 : f32
    %1756 = vector.broadcast %cst_634 : f32 to vector<8x20xf32>
    %1757 = arith.select %1755, %352, %1756 : vector<8x20xi1>, vector<8x20xf32>
    %cst_635 = arith.constant dense<0x7F800000> : vector<8xf32>
    %1758 = vector.multi_reduction <minimumf>, %1757, %cst_635 [1] : vector<8x20xf32> to vector<8xf32>
    %1759 = vector.shape_cast %1758 : vector<8xf32> to vector<8x1xf32>
    %1760 = vector.broadcast %1759 : vector<8x1xf32> to vector<8x40xf32>
    %1761 = arith.cmpf oeq, %394, %1760 : vector<8x40xf32>
    %1762 = arith.extui %1761 : vector<8x40xi1> to vector<8x40xi32>
    %1763 = arith.sitofp %1762 : vector<8x40xi32> to vector<8x40xf32>
    %1764 = vector.extract_strided_slice %1749 {offsets = [0, 20], sizes = [8, 1], strides = [1, 1]} : vector<8x128xf32> to vector<8x1xf32>
    %1765 = vector.extract_strided_slice %1749 {offsets = [0, 21], sizes = [8, 1], strides = [1, 1]} : vector<8x128xf32> to vector<8x1xf32>
    %1766 = vector.shape_cast %1764 : vector<8x1xf32> to vector<8x1xf32>
    %1767 = vector.broadcast %1766 : vector<8x1xf32> to vector<8x40xf32>
    %1768 = vector.shape_cast %1765 : vector<8x1xf32> to vector<8x1xf32>
    %1769 = vector.broadcast %1768 : vector<8x1xf32> to vector<8x40xf32>
    %1770 = arith.select %390, %1767, %1769 : vector<8x40xi1>, vector<8x40xf32>
    %1771 = vector.extract_strided_slice %1747 {offsets = [0, 0], sizes = [8, 40], strides = [1, 1]} : vector<8x80xf32> to vector<8x40xf32>
    %1772 = vector.extract_strided_slice %1747 {offsets = [0, 40], sizes = [8, 40], strides = [1, 1]} : vector<8x80xf32> to vector<8x40xf32>
    %1773 = arith.mulf %1772, %1770 : vector<8x40xf32>
    %1774 = arith.addf %1771, %1773 : vector<8x40xf32>
    %1775 = arith.mulf %1763, %1774 : vector<8x40xf32>
    %1776 = vector.extract_strided_slice %1775 {offsets = [0, 0], sizes = [8, 20], strides = [1, 1]} : vector<8x40xf32> to vector<8x20xf32>
    %cst_636 = arith.constant dense<0.000000e+00> : vector<8xf32>
    %1777 = vector.multi_reduction <add>, %1776, %cst_636 [1] : vector<8x20xf32> to vector<8xf32>
    %1778 = vector.shape_cast %1777 : vector<8xf32> to vector<8x1xf32>
    %1779 = vector.extract_strided_slice %1775 {offsets = [0, 20], sizes = [8, 20], strides = [1, 1]} : vector<8x40xf32> to vector<8x20xf32>
    %cst_637 = arith.constant dense<0.000000e+00> : vector<8xf32>
    %1780 = vector.multi_reduction <add>, %1779, %cst_637 [1] : vector<8x20xf32> to vector<8xf32>
    %1781 = vector.shape_cast %1780 : vector<8xf32> to vector<8x1xf32>
    %1782 = tpu.concatenate %1778, %1781 in 1 : vector<8x1xf32>, vector<8x1xf32> -> vector<8x2xf32>
    %1783 = tpu.concatenate %1747, %1731, %1782, %396 in 1 : vector<8x80xf32>, vector<8x20xf32>, vector<8x2xf32>, vector<8x26xf32> -> vector<8x128xf32>
    %c11_638 = arith.constant 11 : index
    %c0_639 = arith.constant 0 : index
    %c0_640 = arith.constant 0 : index
    %1784 = vector.load %arg21[%c11_638, %c0_639, %c0_640] : memref<12x8x128xf32, #tpu.memory_space<vmem>>, vector<1x8x128xf32>
    %1785 = vector.shape_cast %1784 : vector<1x8x128xf32> to vector<8x128xf32>
    %1786 = vector.shape_cast %1783 : vector<8x128xf32> to vector<1x8x128xf32>
    tpu.vector_store %arg21[%c11_638, %c0_639, %c0_640], %1786 {strides = array<i32>} : memref<12x8x128xf32, #tpu.memory_space<vmem>>, vector<1x8x128xf32>,
    return
  }
  func.func @transform_0(%arg0: i32) -> (i32, i32, i32) {
    %c0_i32 = arith.constant 0 : i32
    %c0_i32_0 = arith.constant 0 : i32
    %c0_i32_1 = arith.constant 0 : i32
    return %arg0, %c0_i32, %c0_i32_0 : i32, i32, i32
  }
  func.func @transform_1(%arg0: i32) -> (i32, i32, i32) {
    %c0_i32 = arith.constant 0 : i32
    %c0_i32_0 = arith.constant 0 : i32
    %c0_i32_1 = arith.constant 0 : i32
    return %c0_i32, %arg0, %c0_i32_0 : i32, i32, i32
  }
  func.func @transform_2(%arg0: i32) -> (i32, i32) {
    %c0_i32 = arith.constant 0 : i32
    %c0_i32_0 = arith.constant 0 : i32
    %c0_i32_1 = arith.constant 0 : i32
    return %c0_i32, %c0_i32_0 : i32, i32
  }
  func.func @transform_3(%arg0: i32) -> (i32, i32) {
    %c0_i32 = arith.constant 0 : i32
    %c0_i32_0 = arith.constant 0 : i32
    %c0_i32_1 = arith.constant 0 : i32
    return %c0_i32, %c0_i32_0 : i32, i32
  }
  func.func @transform_4(%arg0: i32) -> (i32, i32) {
    %c0_i32 = arith.constant 0 : i32
    %c0_i32_0 = arith.constant 0 : i32
    %c0_i32_1 = arith.constant 0 : i32
    return %c0_i32, %c0_i32_0 : i32, i32
  }
  func.func @transform_5(%arg0: i32) -> (i32, i32) {
    %c0_i32 = arith.constant 0 : i32
    %c0_i32_0 = arith.constant 0 : i32
    %c0_i32_1 = arith.constant 0 : i32
    return %c0_i32, %c0_i32_0 : i32, i32
  }
  func.func @transform_6(%arg0: i32) -> (i32, i32) {
    %c0_i32 = arith.constant 0 : i32
    %c0_i32_0 = arith.constant 0 : i32
    %c0_i32_1 = arith.constant 0 : i32
    return %c0_i32, %c0_i32_0 : i32, i32
  }
  func.func @transform_7(%arg0: i32) -> (i32, i32) {
    %c0_i32 = arith.constant 0 : i32
    %c0_i32_0 = arith.constant 0 : i32
    %c0_i32_1 = arith.constant 0 : i32
    return %c0_i32, %c0_i32_0 : i32, i32
  }
  func.func @transform_8(%arg0: i32) -> (i32, i32) {
    %c0_i32 = arith.constant 0 : i32
    %c0_i32_0 = arith.constant 0 : i32
    %c0_i32_1 = arith.constant 0 : i32
    return %c0_i32, %c0_i32_0 : i32, i32
  }
  func.func @transform_9(%arg0: i32) -> (i32, i32) {
    %c0_i32 = arith.constant 0 : i32
    %c0_i32_0 = arith.constant 0 : i32
    %c0_i32_1 = arith.constant 0 : i32
    return %c0_i32, %c0_i32_0 : i32, i32
  }
  func.func @transform_10(%arg0: i32) -> (i32, i32) {
    %c0_i32 = arith.constant 0 : i32
    %c0_i32_0 = arith.constant 0 : i32
    %c0_i32_1 = arith.constant 0 : i32
    return %c0_i32, %c0_i32_0 : i32, i32
  }
  func.func @transform_11(%arg0: i32) -> (i32, i32) {
    %c0_i32 = arith.constant 0 : i32
    %c0_i32_0 = arith.constant 0 : i32
    %c0_i32_1 = arith.constant 0 : i32
    return %c0_i32, %c0_i32_0 : i32, i32
  }
  func.func @transform_12(%arg0: i32) -> (i32, i32) {
    %c0_i32 = arith.constant 0 : i32
    %c0_i32_0 = arith.constant 0 : i32
    %c0_i32_1 = arith.constant 0 : i32
    return %c0_i32, %c0_i32_0 : i32, i32
  }
  func.func @transform_13(%arg0: i32) -> (i32, i32) {
    %c0_i32 = arith.constant 0 : i32
    %c0_i32_0 = arith.constant 0 : i32
    %c0_i32_1 = arith.constant 0 : i32
    return %c0_i32, %c0_i32_0 : i32, i32
  }
  func.func @transform_14(%arg0: i32) -> (i32, i32) {
    %c0_i32 = arith.constant 0 : i32
    %c0_i32_0 = arith.constant 0 : i32
    %c0_i32_1 = arith.constant 0 : i32
    return %c0_i32, %c0_i32_0 : i32, i32
  }
  func.func @transform_15(%arg0: i32) -> (i32, i32) {
    %c0_i32 = arith.constant 0 : i32
    %c0_i32_0 = arith.constant 0 : i32
    %c0_i32_1 = arith.constant 0 : i32
    return %c0_i32, %c0_i32_0 : i32, i32
  }
  func.func @transform_16(%arg0: i32) -> (i32, i32) {
    %c0_i32 = arith.constant 0 : i32
    %c0_i32_0 = arith.constant 0 : i32
    %c0_i32_1 = arith.constant 0 : i32
    return %c0_i32, %c0_i32_0 : i32, i32
  }
  func.func @transform_17(%arg0: i32) -> (i32, i32) {
    %c0_i32 = arith.constant 0 : i32
    %c0_i32_0 = arith.constant 0 : i32
    %c0_i32_1 = arith.constant 0 : i32
    return %c0_i32, %c0_i32_0 : i32, i32
  }
  func.func @transform_18(%arg0: i32) -> (i32, i32) {
    %c0_i32 = arith.constant 0 : i32
    %c0_i32_0 = arith.constant 0 : i32
    %c0_i32_1 = arith.constant 0 : i32
    return %c0_i32, %c0_i32_0 : i32, i32
  }
  func.func @transform_19(%arg0: i32) -> (i32, i32) {
    %c0_i32 = arith.constant 0 : i32
    %c0_i32_0 = arith.constant 0 : i32
    %c0_i32_1 = arith.constant 0 : i32
    return %c0_i32, %c0_i32_0 : i32, i32
  }
  func.func @transform_20(%arg0: i32) -> (i32, i32, i32) {
    %c0_i32 = arith.constant 0 : i32
    %c0_i32_0 = arith.constant 0 : i32
    %c0_i32_1 = arith.constant 0 : i32
    return %c0_i32, %arg0, %c0_i32_0 : i32, i32, i32
  }
}

</mosaic_0001>

<llo_original>
// kernel: cvae_future_forward.3
$region0: #{cvae_future_forward.3}
  #allocation0 [shape = 'u32[]', space=smem, size = 0x4, offset = 0x4, fixed_abs, tag = 'smem constant byte address 0x4 - core index']
  #allocation1 [shape = 'u32[144,128]{1,0:T(1,128)}', space=vmem, size = 0x12000, scoped, tag = 'internal scratch']
  #allocation2 [shape = 'f32[64,512]{1,0:T(8,128)}', space=vmem, size = 0x20000, scoped, tag = 'scratch operand']
  %s0 = inlined_call_operand.vmem [shape: f32[1,64,12], index: 0, kind: input, shape index: {}]
  %s1 = inlined_call_operand.vmem [shape: f32[13,8,128], index: 1, kind: input, shape index: {}]
  %s2 = inlined_call_operand.vmem [shape: f32[12,512], index: 2, kind: input, shape index: {}]
  %s3 = inlined_call_operand.vmem [shape: f32[128,512], index: 3, kind: input, shape index: {}]
  %s4 = inlined_call_operand.vmem [shape: f32[1,512], index: 4, kind: input, shape index: {}]
  %s5 = inlined_call_operand.vmem [shape: f32[12,512], index: 5, kind: input, shape index: {}]
  %s6 = inlined_call_operand.vmem [shape: f32[1,512], index: 6, kind: input, shape index: {}]
  %s7 = inlined_call_operand.vmem [shape: f32[128,256], index: 7, kind: input, shape index: {}]
  %s8 = inlined_call_operand.vmem [shape: f32[1,256], index: 8, kind: input, shape index: {}]
  %s9 = inlined_call_operand.vmem [shape: f32[256,60], index: 9, kind: input, shape index: {}]
  %s10 = inlined_call_operand.vmem [shape: f32[1,60], index: 10, kind: input, shape index: {}]
  %s11 = inlined_call_operand.vmem [shape: f32[128,120], index: 11, kind: input, shape index: {}]
  %s12 = inlined_call_operand.vmem [shape: f32[1,120], index: 12, kind: input, shape index: {}]
  %s13 = inlined_call_operand.vmem [shape: f32[2,120], index: 13, kind: input, shape index: {}]
  %s14 = inlined_call_operand.vmem [shape: f32[40,120], index: 14, kind: input, shape index: {}]
  %s15 = inlined_call_operand.vmem [shape: f32[1,120], index: 15, kind: input, shape index: {}]
  %s16 = inlined_call_operand.vmem [shape: f32[40,100], index: 16, kind: input, shape index: {}]
  %s17 = inlined_call_operand.vmem [shape: f32[1,100], index: 17, kind: input, shape index: {}]
  %s18 = inlined_call_operand.vmem [shape: f32[80,80], index: 18, kind: input, shape index: {}]
  %s19 = inlined_call_operand.vmem [shape: f32[1,80], index: 19, kind: input, shape index: {}]
  %s20 = inlined_call_operand.vmem [shape: f32[12,8,128], index: 20, kind: output, shape index: {}]
  %s21 = sld [smem:[#allocation0]]
  $region90: #{cvae_future_forward.3} parent=0
    _
  %s23 = ssub.s32 1, %s21
  %s24 = scalar_select 0, %s23, %s21
  // Predicated region
  $region2: #{cvae_future_forward.3} parent=0 // pred_check
    _
  $region3: #{cvae_future_forward.3} parent=0 // pred_check_branch
    %26 = sbr.rel (0) target = $region5
  $region4: #{cvae_future_forward.3} parent=0 // pred_region
    _
  $region5: #{cvae_future_forward.3} parent=0 // pred_fallthru
    _
  // Predicated region
  $region6: #{cvae_future_forward.3} parent=0 // pred_check
    _
  $region7: #{cvae_future_forward.3} parent=0 // pred_check_branch
    %28 = sbr.rel (0) target = $region9
  $region8: #{cvae_future_forward.3} parent=0 // pred_region
    _
  $region9: #{cvae_future_forward.3} parent=0 // pred_fallthru
    _
  // Predicated region
  $region10: #{cvae_future_forward.3} parent=0 // pred_check
    _
  $region11: #{cvae_future_forward.3} parent=0 // pred_check_branch
    %30 = sbr.rel (0) target = $region13
  $region12: #{cvae_future_forward.3} parent=0 // pred_region
    _
  $region13: #{cvae_future_forward.3} parent=0 // pred_fallthru
    _
  // Predicated region
  $region14: #{cvae_future_forward.3} parent=0 // pred_check
    _
  $region15: #{cvae_future_forward.3} parent=0 // pred_check_branch
    %32 = sbr.rel (0) target = $region17
  $region16: #{cvae_future_forward.3} parent=0 // pred_region
    _
  $region17: #{cvae_future_forward.3} parent=0 // pred_fallthru
    _
  // Predicated region
  $region18: #{cvae_future_forward.3} parent=0 // pred_check
    _
  $region19: #{cvae_future_forward.3} parent=0 // pred_check_branch
    %34 = sbr.rel (0) target = $region21
  $region20: #{cvae_future_forward.3} parent=0 // pred_region
    _
  $region21: #{cvae_future_forward.3} parent=0 // pred_fallthru
    _
  // Predicated region
  $region22: #{cvae_future_forward.3} parent=0 // pred_check
    _
  $region23: #{cvae_future_forward.3} parent=0 // pred_check_branch
    %36 = sbr.rel (0) target = $region25
  $region24: #{cvae_future_forward.3} parent=0 // pred_region
    _
  $region25: #{cvae_future_forward.3} parent=0 // pred_fallthru
    _
  // Predicated region
  $region26: #{cvae_future_forward.3} parent=0 // pred_check
    _
  $region27: #{cvae_future_forward.3} parent=0 // pred_check_branch
    %38 = sbr.rel (0) target = $region29
  $region28: #{cvae_future_forward.3} parent=0 // pred_region
    _
  $region29: #{cvae_future_forward.3} parent=0 // pred_fallthru
    _
  // Predicated region
  $region30: #{cvae_future_forward.3} parent=0 // pred_check
    _
  $region31: #{cvae_future_forward.3} parent=0 // pred_check_branch
    %40 = sbr.rel (0) target = $region33
  $region32: #{cvae_future_forward.3} parent=0 // pred_region
    _
  $region33: #{cvae_future_forward.3} parent=0 // pred_fallthru
    _
  // Predicated region
  $region34: #{cvae_future_forward.3} parent=0 // pred_check
    _
  $region35: #{cvae_future_forward.3} parent=0 // pred_check_branch
    %42 = sbr.rel (0) target = $region37
  $region36: #{cvae_future_forward.3} parent=0 // pred_region
    _
  $region37: #{cvae_future_forward.3} parent=0 // pred_fallthru
    _
  // Predicated region
  $region38: #{cvae_future_forward.3} parent=0 // pred_check
    _
  $region39: #{cvae_future_forward.3} parent=0 // pred_check_branch
    %44 = sbr.rel (0) target = $region41
  $region40: #{cvae_future_forward.3} parent=0 // pred_region
    _
  $region41: #{cvae_future_forward.3} parent=0 // pred_fallthru
    _
  // Predicated region
  $region42: #{cvae_future_forward.3} parent=0 // pred_check
    _
  $region43: #{cvae_future_forward.3} parent=0 // pred_check_branch
    %46 = sbr.rel (0) target = $region45
  $region44: #{cvae_future_forward.3} parent=0 // pred_region
    _
  $region45: #{cvae_future_forward.3} parent=0 // pred_fallthru
    _
  // Predicated region
  $region46: #{cvae_future_forward.3} parent=0 // pred_check
    _
  $region47: #{cvae_future_forward.3} parent=0 // pred_check_branch
    %48 = sbr.rel (0) target = $region49
  $region48: #{cvae_future_forward.3} parent=0 // pred_region
    _
  $region49: #{cvae_future_forward.3} parent=0 // pred_fallthru
    _
  // Predicated region
  $region50: #{cvae_future_forward.3} parent=0 // pred_check
    _
  $region51: #{cvae_future_forward.3} parent=0 // pred_check_branch
    %50 = sbr.rel (0) target = $region53
  $region52: #{cvae_future_forward.3} parent=0 // pred_region
    _
  $region53: #{cvae_future_forward.3} parent=0 // pred_fallthru
    _
  // Predicated region
  $region54: #{cvae_future_forward.3} parent=0 // pred_check
    _
  $region55: #{cvae_future_forward.3} parent=0 // pred_check_branch
    %52 = sbr.rel (0) target = $region57
  $region56: #{cvae_future_forward.3} parent=0 // pred_region
    _
  $region57: #{cvae_future_forward.3} parent=0 // pred_fallthru
    _
  // Predicated region
  $region58: #{cvae_future_forward.3} parent=0 // pred_check
    _
  $region59: #{cvae_future_forward.3} parent=0 // pred_check_branch
    %54 = sbr.rel (0) target = $region61
  $region60: #{cvae_future_forward.3} parent=0 // pred_region
    _
  $region61: #{cvae_future_forward.3} parent=0 // pred_fallthru
    _
  // Predicated region
  $region62: #{cvae_future_forward.3} parent=0 // pred_check
    _
  $region63: #{cvae_future_forward.3} parent=0 // pred_check_branch
    %56 = sbr.rel (0) target = $region65
  $region64: #{cvae_future_forward.3} parent=0 // pred_region
    _
  $region65: #{cvae_future_forward.3} parent=0 // pred_fallthru
    _
  // Predicated region
  $region66: #{cvae_future_forward.3} parent=0 // pred_check
    _
  $region67: #{cvae_future_forward.3} parent=0 // pred_check_branch
    %58 = sbr.rel (0) target = $region69
  $region68: #{cvae_future_forward.3} parent=0 // pred_region
    _
  $region69: #{cvae_future_forward.3} parent=0 // pred_fallthru
    _
  // Predicated region
  $region70: #{cvae_future_forward.3} parent=0 // pred_check
    _
  $region71: #{cvae_future_forward.3} parent=0 // pred_check_branch
    %60 = sbr.rel (0) target = $region73
  $region72: #{cvae_future_forward.3} parent=0 // pred_region
    _
  $region73: #{cvae_future_forward.3} parent=0 // pred_fallthru
    _
  // Predicated region
  $region74: #{cvae_future_forward.3} parent=0 // pred_check
    _
  $region75: #{cvae_future_forward.3} parent=0 // pred_check_branch
    %62 = sbr.rel (0) target = $region77
  $region76: #{cvae_future_forward.3} parent=0 // pred_region
    _
  $region77: #{cvae_future_forward.3} parent=0 // pred_fallthru
    _
  // Predicated region
  $region78: #{cvae_future_forward.3} parent=0 // pred_check
    _
  $region79: #{cvae_future_forward.3} parent=0 // pred_check_branch
    %64 = sbr.rel (0) target = $region81
  $region80: #{cvae_future_forward.3} parent=0 // pred_region
    _
  $region81: #{cvae_future_forward.3} parent=0 // pred_fallthru
    _
  %v65 = vld [vmem:[%s0] sm:$0xff]
  %v66 = vld [vmem:[%s0 + $0x8] sm:$0xff]
  %v67 = vld [vmem:[%s0 + $0x10] sm:$0xff]
  %v68 = vld [vmem:[%s0 + $0x18] sm:$0xff]
  %v69 = vld [vmem:[%s0 + $0x20] sm:$0xff]
  %v70 = vld [vmem:[%s0 + $0x28] sm:$0xff]
  %v71 = vld [vmem:[%s0 + $0x30] sm:$0xff]
  %v72 = vld [vmem:[%s0 + $0x38] sm:$0xff]
  %v73 = vld [vmem:[%s2] sm:$0xff]
  %v74 = vld [vmem:[%s2 + $0x8] sm:$0xff]
  %v75 = vld [vmem:[%s2 + $0x10] sm:$0xff]
  %v76 = vld [vmem:[%s2 + $0x18] sm:$0xff]
  %v77 = vld [vmem:[%s2 + $0x20] sm:$0xf]
  %v78 = vld [vmem:[%s2 + $0x28] sm:$0xf]
  %v79 = vld [vmem:[%s2 + $0x30] sm:$0xf]
  %v80 = vld [vmem:[%s2 + $0x38] sm:$0xf]
  %v81 = vld [vmem:[%s4] sm:$0xf]
  %v83 = vlaneseq
  %v84 = vshrl.u32 %v83, 7
  %v85 = vsub.s32 0, %v84
  %v86 = vrot.slane %v81, %v85
  %v87 = vlaneseq
  %v88 = vshrl.u32 %v87, 7
  %v89 = vsub.s32 1, %v88
  %v90 = vrot.slane %v81, %v89
  %v91 = vlaneseq
  %v92 = vshrl.u32 %v91, 7
  %v93 = vsub.s32 2, %v92
  %v94 = vrot.slane %v81, %v93
  %v95 = vlaneseq
  %v96 = vshrl.u32 %v95, 7
  %v97 = vsub.s32 3, %v96
  %v98 = vrot.slane %v81, %v97
  %vm103 = vcmask 97280
  %v105 = vsel %vm103, %v65, 0
  %v108 = vsel %vm103, %v66, 0
  %v111 = vsel %vm103, %v67, 0
  %v114 = vsel %vm103, %v68, 0
  %v117 = vsel %vm103, %v69, 0
  %v120 = vsel %vm103, %v70, 0
  %v123 = vsel %vm103, %v71, 0
  %v126 = vsel %vm103, %v72, 0
  %vm128 = vcmask 1043456
  %v130 = vsel %vm128, %v77, 0
  %v133 = vsel %vm128, %v78, 0
  %v136 = vsel %vm128, %v79, 0
  %v139 = vsel %vm128, %v80, 0
  %141 = vmatprep.subr.mxu0 %v74
  %142 = vmatpush1.msra.mxu0 %v73
  %143 = vmatprep.subr.mxu0 %v133
  %144 = vmatpush1.msra.mxu0 %v130
  %145 = vmatprep.subr.mxu0 0.0
  %146 = vmatpush1.msra.mxu0 0.0
  %147 = vmatprep.subr.mxu0 0.0
  %148 = vmatpush1.msra.mxu0 0.0
  %149 = vmatprep.subr.mxu0 0.0
  %150 = vmatpush1.msra.mxu0 0.0
  %151 = vmatprep.subr.mxu0 0.0
  %152 = vmatpush1.msra.mxu0 0.0
  %153 = vmatprep.subr.mxu0 0.0
  %154 = vmatpush1.msra.mxu0 0.0
  %155 = vmatprep.subr.mxu0 0.0
  %156 = vmatpush1.msra.mxu0 0.0
  %157 = vmatprep.subr.mxu0 0.0
  %158 = vmatpush1.msra.mxu0 0.0
  %159 = vmatprep.subr.mxu0 0.0
  %160 = vmatpush1.msra.mxu0 0.0
  %161 = vmatprep.subr.mxu0 0.0
  %162 = vmatpush1.msra.mxu0 0.0
  %163 = vmatprep.subr.mxu0 0.0
  %164 = vmatpush1.msra.mxu0 0.0
  %165 = vmatprep.subr.mxu0 0.0
  %166 = vmatpush1.msra.mxu0 0.0
  %167 = vmatprep.subr.mxu0 0.0
  %168 = vmatpush1.msra.mxu0 0.0
  %169 = vmatprep.subr.mxu0 0.0
  %170 = vmatpush1.msra.mxu0 0.0
  %171 = vmatprep.subr.mxu0 0.0
  %172 = vmatpush1.msra.mxu0 0.0
  %173 = vmatprep.subr.mxu0 0.0
  %174 = vmatpush1.msra.mxu0 0.0
  %175 = vmatprep.subr.mxu0 0.0
  %176 = vmatpush1.msra.mxu0 0.0
  %177 = vmatprep.subr.mxu0 0.0
  %178 = vmatpush1.msra.mxu0 0.0
  %179 = vmatprep.subr.mxu0 0.0
  %180 = vmatpush1.msra.mxu0 0.0
  %181 = vmatprep.subr.mxu0 0.0
  %182 = vmatpush1.msra.mxu0 0.0
  %183 = vmatprep.subr.mxu0 0.0
  %184 = vmatpush1.msra.mxu0 0.0
  %185 = vmatprep.subr.mxu0 0.0
  %186 = vmatpush1.msra.mxu0 0.0
  %187 = vmatprep.subr.mxu0 0.0
  %188 = vmatpush1.msra.mxu0 0.0
  %189 = vmatprep.subr.mxu0 0.0
  %190 = vmatpush1.msra.mxu0 0.0
  %191 = vmatprep.subr.mxu0 0.0
  %192 = vmatpush1.msra.mxu0 0.0
  %193 = vmatprep.subr.mxu0 0.0
  %194 = vmatpush1.msra.mxu0 0.0
  %195 = vmatprep.subr.mxu0 0.0
  %196 = vmatpush1.msra.mxu0 0.0
  %197 = vmatprep.subr.mxu0 0.0
  %198 = vmatpush1.msra.mxu0 0.0
  %199 = vmatprep.subr.mxu0 0.0
  %200 = vmatpush1.msra.mxu0 0.0
  %201 = vmatprep.subr.mxu0 0.0
  %202 = vmatpush1.msra.mxu0 0.0
  %203 = vmatprep.subr.mxu0 0.0
  %204 = vmatpush1.msra.mxu0 0.0
  %205 = vmatprep.mubr.f32.mxu0 0.0
  %206 = vmatmul.mubr.f32.gmra.mrb[0].mxu0 %v105
  %v207 = vpop.f32.mrb[0].mxu0
  %v208 = vadd.f32 %v86, %v207
  %v209 = vpop.f32.mrb[0].mxu0
  %v210 = vadd.f32 %v90, %v209
  %211 = vmatprep.mubr.f32.mxu0 0.0
  %212 = vmatmul.mubr.f32.gmra.mrb[0].mxu0 %v108
  %v213 = vpop.f32.mrb[0].mxu0
  %v214 = vadd.f32 %v86, %v213
  %v215 = vpop.f32.mrb[0].mxu0
  %v216 = vadd.f32 %v90, %v215
  %217 = vmatprep.mubr.f32.mxu0 0.0
  %218 = vmatmul.mubr.f32.gmra.mrb[0].mxu0 %v111
  %v219 = vpop.f32.mrb[0].mxu0
  %v220 = vadd.f32 %v86, %v219
  %v221 = vpop.f32.mrb[0].mxu0
  %v222 = vadd.f32 %v90, %v221
  %223 = vmatprep.mubr.f32.mxu0 0.0
  %224 = vmatmul.mubr.f32.gmra.mrb[0].mxu0 %v114
  %v225 = vpop.f32.mrb[0].mxu0
  %v226 = vadd.f32 %v86, %v225
  %v227 = vpop.f32.mrb[0].mxu0
  %v228 = vadd.f32 %v90, %v227
  %229 = vmatprep.mubr.f32.mxu0 0.0
  %230 = vmatmul.mubr.f32.gmra.mrb[0].mxu0 %v117
  %v231 = vpop.f32.mrb[0].mxu0
  %v232 = vadd.f32 %v86, %v231
  %v233 = vpop.f32.mrb[0].mxu0
  %v234 = vadd.f32 %v90, %v233
  %235 = vmatprep.mubr.f32.mxu0 0.0
  %236 = vmatmul.mubr.f32.gmra.mrb[0].mxu0 %v120
  %v237 = vpop.f32.mrb[0].mxu0
  %v238 = vadd.f32 %v86, %v237
  %v239 = vpop.f32.mrb[0].mxu0
  %v240 = vadd.f32 %v90, %v239
  %241 = vmatprep.mubr.f32.mxu0 0.0
  %242 = vmatmul.mubr.f32.gmra.mrb[0].mxu0 %v123
  %v243 = vpop.f32.mrb[0].mxu0
  %v244 = vadd.f32 %v86, %v243
  %v245 = vpop.f32.mrb[0].mxu0
  %v246 = vadd.f32 %v90, %v245
  %247 = vmatprep.mubr.f32.mxu0 0.0
  %248 = vmatmul.mubr.f32.gmra.mrb[0].mxu0 %v126
  %v249 = vpop.f32.mrb[0].mxu0
  %v250 = vadd.f32 %v86, %v249
  %v251 = vpop.f32.mrb[0].mxu0
  %v252 = vadd.f32 %v90, %v251
  %253 = vdwg.mxu0
  %254 = vmatprep.subr.mxu0 %v76
  %255 = vmatpush1.msra.mxu0 %v75
  %256 = vmatprep.subr.mxu0 %v139
  %257 = vmatpush1.msra.mxu0 %v136
  %258 = vmatprep.subr.mxu0 0.0
  %259 = vmatpush1.msra.mxu0 0.0
  %260 = vmatprep.subr.mxu0 0.0
  %261 = vmatpush1.msra.mxu0 0.0
  %262 = vmatprep.subr.mxu0 0.0
  %263 = vmatpush1.msra.mxu0 0.0
  %264 = vmatprep.subr.mxu0 0.0
  %265 = vmatpush1.msra.mxu0 0.0
  %266 = vmatprep.subr.mxu0 0.0
  %267 = vmatpush1.msra.mxu0 0.0
  %268 = vmatprep.subr.mxu0 0.0
  %269 = vmatpush1.msra.mxu0 0.0
  %270 = vmatprep.subr.mxu0 0.0
  %271 = vmatpush1.msra.mxu0 0.0
  %272 = vmatprep.subr.mxu0 0.0
  %273 = vmatpush1.msra.mxu0 0.0
  %274 = vmatprep.subr.mxu0 0.0
  %275 = vmatpush1.msra.mxu0 0.0
  %276 = vmatprep.subr.mxu0 0.0
  %277 = vmatpush1.msra.mxu0 0.0
  %278 = vmatprep.subr.mxu0 0.0
  %279 = vmatpush1.msra.mxu0 0.0
  %280 = vmatprep.subr.mxu0 0.0
  %281 = vmatpush1.msra.mxu0 0.0
  %282 = vmatprep.subr.mxu0 0.0
  %283 = vmatpush1.msra.mxu0 0.0
  %284 = vmatprep.subr.mxu0 0.0
  %285 = vmatpush1.msra.mxu0 0.0
  %286 = vmatprep.subr.mxu0 0.0
  %287 = vmatpush1.msra.mxu0 0.0
  %288 = vmatprep.subr.mxu0 0.0
  %289 = vmatpush1.msra.mxu0 0.0
  %290 = vmatprep.subr.mxu0 0.0
  %291 = vmatpush1.msra.mxu0 0.0
  %292 = vmatprep.subr.mxu0 0.0
  %293 = vmatpush1.msra.mxu0 0.0
  %294 = vmatprep.subr.mxu0 0.0
  %295 = vmatpush1.msra.mxu0 0.0
  %296 = vmatprep.subr.mxu0 0.0
  %297 = vmatpush1.msra.mxu0 0.0
  %298 = vmatprep.subr.mxu0 0.0
  %299 = vmatpush1.msra.mxu0 0.0
  %300 = vmatprep.subr.mxu0 0.0
  %301 = vmatpush1.msra.mxu0 0.0
  %302 = vmatprep.subr.mxu0 0.0
  %303 = vmatpush1.msra.mxu0 0.0
  %304 = vmatprep.subr.mxu0 0.0
  %305 = vmatpush1.msra.mxu0 0.0
  %306 = vmatprep.subr.mxu0 0.0
  %307 = vmatpush1.msra.mxu0 0.0
  %308 = vmatprep.subr.mxu0 0.0
  %309 = vmatpush1.msra.mxu0 0.0
  %310 = vmatprep.subr.mxu0 0.0
  %311 = vmatpush1.msra.mxu0 0.0
  %312 = vmatprep.subr.mxu0 0.0
  %313 = vmatpush1.msra.mxu0 0.0
  %314 = vmatprep.subr.mxu0 0.0
  %315 = vmatpush1.msra.mxu0 0.0
  %316 = vmatprep.subr.mxu0 0.0
  %317 = vmatpush1.msra.mxu0 0.0
  %318 = vmatprep.mubr.f32.mxu0 0.0
  %319 = vmatmul.mubr.f32.gmra.mrb[0].mxu0 %v105
  %v320 = vpop.f32.mrb[0].mxu0
  %v321 = vadd.f32 %v94, %v320
  %v322 = vpop.f32.mrb[0].mxu0
  %v323 = vadd.f32 %v98, %v322
  %324 = vmatprep.mubr.f32.mxu0 0.0
  %325 = vmatmul.mubr.f32.gmra.mrb[0].mxu0 %v108
  %v326 = vpop.f32.mrb[0].mxu0
  %v327 = vadd.f32 %v94, %v326
  %v328 = vpop.f32.mrb[0].mxu0
  %v329 = vadd.f32 %v98, %v328
  %330 = vmatprep.mubr.f32.mxu0 0.0
  %331 = vmatmul.mubr.f32.gmra.mrb[0].mxu0 %v111
  %v332 = vpop.f32.mrb[0].mxu0
  %v333 = vadd.f32 %v94, %v332
  %v334 = vpop.f32.mrb[0].mxu0
  %v335 = vadd.f32 %v98, %v334
  %336 = vmatprep.mubr.f32.mxu0 0.0
  %337 = vmatmul.mubr.f32.gmra.mrb[0].mxu0 %v114
  %v338 = vpop.f32.mrb[0].mxu0
  %v339 = vadd.f32 %v94, %v338
  %v340 = vpop.f32.mrb[0].mxu0
  %v341 = vadd.f32 %v98, %v340
  %342 = vmatprep.mubr.f32.mxu0 0.0
  %343 = vmatmul.mubr.f32.gmra.mrb[0].mxu0 %v117
  %v344 = vpop.f32.mrb[0].mxu0
  %v345 = vadd.f32 %v94, %v344
  %v346 = vpop.f32.mrb[0].mxu0
  %v347 = vadd.f32 %v98, %v346
  %348 = vmatprep.mubr.f32.mxu0 0.0
  %349 = vmatmul.mubr.f32.gmra.mrb[0].mxu0 %v120
  %v350 = vpop.f32.mrb[0].mxu0
  %v351 = vadd.f32 %v94, %v350
  %v352 = vpop.f32.mrb[0].mxu0
  %v353 = vadd.f32 %v98, %v352
  %354 = vmatprep.mubr.f32.mxu0 0.0
  %355 = vmatmul.mubr.f32.gmra.mrb[0].mxu0 %v123
  %v356 = vpop.f32.mrb[0].mxu0
  %v357 = vadd.f32 %v94, %v356
  %v358 = vpop.f32.mrb[0].mxu0
  %v359 = vadd.f32 %v98, %v358
  %360 = vmatprep.mubr.f32.mxu0 0.0
  %361 = vmatmul.mubr.f32.gmra.mrb[0].mxu0 %v126
  %v362 = vpop.f32.mrb[0].mxu0
  %v363 = vadd.f32 %v94, %v362
  %v364 = vpop.f32.mrb[0].mxu0
  %v365 = vadd.f32 %v98, %v364
  %366 = vdwg.mxu0
  %367 = vst [vmem:[#allocation2] sm:$0xff] %v208
  %368 = vst [vmem:[#allocation2 + $0x8] sm:$0xff] %v210
  %369 = vst [vmem:[#allocation2 + $0x10] sm:$0xff] %v321
  %370 = vst [vmem:[#allocation2 + $0x18] sm:$0xff] %v323
  %371 = vst [vmem:[#allocation2 + $0x20] sm:$0xff] %v214
  %372 = vst [vmem:[#allocation2 + $0x28] sm:$0xff] %v216
  %373 = vst [vmem:[#allocation2 + $0x30] sm:$0xff] %v327
  %374 = vst [vmem:[#allocation2 + $0x38] sm:$0xff] %v329
  %375 = vst [vmem:[#allocation2 + $0x40] sm:$0xff] %v220
  %376 = vst [vmem:[#allocation2 + $0x48] sm:$0xff] %v222
  %377 = vst [vmem:[#allocation2 + $0x50] sm:$0xff] %v333
  %378 = vst [vmem:[#allocation2 + $0x58] sm:$0xff] %v335
  %379 = vst [vmem:[#allocation2 + $0x60] sm:$0xff] %v226
  %380 = vst [vmem:[#allocation2 + $0x68] sm:$0xff] %v228
  %381 = vst [vmem:[#allocation2 + $0x70] sm:$0xff] %v339
  %382 = vst [vmem:[#allocation2 + $0x78] sm:$0xff] %v341
  %383 = vst [vmem:[#allocation2 + $0x80] sm:$0xff] %v232
  %384 = vst [vmem:[#allocation2 + $0x88] sm:$0xff] %v234
  %385 = vst [vmem:[#allocation2 + $0x90] sm:$0xff] %v345
  %386 = vst [vmem:[#allocation2 + $0x98] sm:$0xff] %v347
  %387 = vst [vmem:[#allocation2 + $0xa0] sm:$0xff] %v238
  %388 = vst [vmem:[#allocation2 + $0xa8] sm:$0xff] %v240
  %389 = vst [vmem:[#allocation2 + $0xb0] sm:$0xff] %v351
  %390 = vst [vmem:[#allocation2 + $0xb8] sm:$0xff] %v353
  %391 = vst [vmem:[#allocation2 + $0xc0] sm:$0xff] %v244
  %392 = vst [vmem:[#allocation2 + $0xc8] sm:$0xff] %v246
  %393 = vst [vmem:[#allocation2 + $0xd0] sm:$0xff] %v357
  %394 = vst [vmem:[#allocation2 + $0xd8] sm:$0xff] %v359
  %395 = vst [vmem:[#allocation2 + $0xe0] sm:$0xff] %v250
  %396 = vst [vmem:[#allocation2 + $0xe8] sm:$0xff] %v252
  %397 = vst [vmem:[#allocation2 + $0xf0] sm:$0xff] %v363
  %398 = vst [vmem:[#allocation2 + $0xf8] sm:$0xff] %v365
  %v399 = vld [vmem:[#allocation2] sm:$0xff]
  %v400 = vld [vmem:[#allocation2 + $0x8] sm:$0xff]
  %v401 = vld [vmem:[#allocation2 + $0x10] sm:$0xff]
  %v402 = vld [vmem:[#allocation2 + $0x18] sm:$0xff]
  %v403 = vld [vmem:[%s3] sm:$0xff]
  %v404 = vld [vmem:[%s3 + $0x8] sm:$0xff]
  %v405 = vld [vmem:[%s3 + $0x10] sm:$0xff]
  %v406 = vld [vmem:[%s3 + $0x18] sm:$0xff]
  %v407 = vld [vmem:[%s3 + $0x20] sm:$0xff]
  %v408 = vld [vmem:[%s3 + $0x28] sm:$0xff]
  %v409 = vld [vmem:[%s3 + $0x30] sm:$0xff]
  %v410 = vld [vmem:[%s3 + $0x38] sm:$0xff]
  %v411 = vld [vmem:[%s3 + $0x40] sm:$0xff]
  %v412 = vld [vmem:[%s3 + $0x48] sm:$0xff]
  %v413 = vld [vmem:[%s3 + $0x50] sm:$0xff]
  %v414 = vld [vmem:[%s3 + $0x58] sm:$0xff]
  %v415 = vld [vmem:[%s3 + $0x60] sm:$0xff]
  %v416 = vld [vmem:[%s3 + $0x68] sm:$0xff]
  %v417 = vld [vmem:[%s3 + $0x70] sm:$0xff]
  %v418 = vld [vmem:[%s3 + $0x78] sm:$0xff]
  %v419 = vld [vmem:[%s3 + $0x80] sm:$0xff]
  %v420 = vld [vmem:[%s3 + $0x88] sm:$0xff]
  %v421 = vld [vmem:[%s3 + $0x90] sm:$0xff]
  %v422 = vld [vmem:[%s3 + $0x98] sm:$0xff]
  %v423 = vld [vmem:[%s3 + $0xa0] sm:$0xff]
  %v424 = vld [vmem:[%s3 + $0xa8] sm:$0xff]
  %v425 = vld [vmem:[%s3 + $0xb0] sm:$0xff]
  %v426 = vld [vmem:[%s3 + $0xb8] sm:$0xff]
  %v427 = vld [vmem:[%s3 + $0xc0] sm:$0xff]
  %v428 = vld [vmem:[%s3 + $0xc8] sm:$0xff]
  %v429 = vld [vmem:[%s3 + $0xd0] sm:$0xff]
  %v430 = vld [vmem:[%s3 + $0xd8] sm:$0xff]
  %v431 = vld [vmem:[%s3 + $0xe0] sm:$0xff]
  %v432 = vld [vmem:[%s3 + $0xe8] sm:$0xff]
  %v433 = vld [vmem:[%s3 + $0xf0] sm:$0xff]
  %v434 = vld [vmem:[%s3 + $0xf8] sm:$0xff]
  %v435 = vld [vmem:[%s3 + $0x100] sm:$0xff]
  %v436 = vld [vmem:[%s3 + $0x108] sm:$0xff]
  %v437 = vld [vmem:[%s3 + $0x110] sm:$0xff]
  %v438 = vld [vmem:[%s3 + $0x118] sm:$0xff]
  %v439 = vld [vmem:[%s3 + $0x120] sm:$0xff]
  %v440 = vld [vmem:[%s3 + $0x128] sm:$0xff]
  %v441 = vld [vmem:[%s3 + $0x130] sm:$0xff]
  %v442 = vld [vmem:[%s3 + $0x138] sm:$0xff]
  %v443 = vld [vmem:[%s3 + $0x140] sm:$0xff]
  %v444 = vld [vmem:[%s3 + $0x148] sm:$0xff]
  %v445 = vld [vmem:[%s3 + $0x150] sm:$0xff]
  %v446 = vld [vmem:[%s3 + $0x158] sm:$0xff]
  %v447 = vld [vmem:[%s3 + $0x160] sm:$0xff]
  %v448 = vld [vmem:[%s3 + $0x168] sm:$0xff]
  %v449 = vld [vmem:[%s3 + $0x170] sm:$0xff]
  %v450 = vld [vmem:[%s3 + $0x178] sm:$0xff]
  %v451 = vld [vmem:[%s3 + $0x180] sm:$0xff]
  %v452 = vld [vmem:[%s3 + $0x188] sm:$0xff]
  %v453 = vld [vmem:[%s3 + $0x190] sm:$0xff]
  %v454 = vld [vmem:[%s3 + $0x198] sm:$0xff]
  %v455 = vld [vmem:[%s3 + $0x1a0] sm:$0xff]
  %v456 = vld [vmem:[%s3 + $0x1a8] sm:$0xff]
  %v457 = vld [vmem:[%s3 + $0x1b0] sm:$0xff]
  %v458 = vld [vmem:[%s3 + $0x1b8] sm:$0xff]
  %v459 = vld [vmem:[%s3 + $0x1c0] sm:$0xff]
  %v460 = vld [vmem:[%s3 + $0x1c8] sm:$0xff]
  %v461 = vld [vmem:[%s3 + $0x1d0] sm:$0xff]
  %v462 = vld [vmem:[%s3 + $0x1d8] sm:$0xff]
  %v463 = vld [vmem:[%s3 + $0x1e0] sm:$0xff]
  %v464 = vld [vmem:[%s3 + $0x1e8] sm:$0xff]
  %v465 = vld [vmem:[%s3 + $0x1f0] sm:$0xff]
  %v466 = vld [vmem:[%s3 + $0x1f8] sm:$0xff]
  %467 = vmatprep.subr.mxu0 %v404
  %468 = vmatpush1.msra.mxu0 %v403
  %469 = vmatprep.subr.mxu0 %v408
  %470 = vmatpush1.msra.mxu0 %v407
  %471 = vmatprep.subr.mxu0 %v412
  %472 = vmatpush1.msra.mxu0 %v411
  %473 = vmatprep.subr.mxu0 %v416
  %474 = vmatpush1.msra.mxu0 %v415
  %475 = vmatprep.subr.mxu0 %v420
  %476 = vmatpush1.msra.mxu0 %v419
  %477 = vmatprep.subr.mxu0 %v424
  %478 = vmatpush1.msra.mxu0 %v423
  %479 = vmatprep.subr.mxu0 %v428
  %480 = vmatpush1.msra.mxu0 %v427
  %481 = vmatprep.subr.mxu0 %v432
  %482 = vmatpush1.msra.mxu0 %v431
  %483 = vmatprep.subr.mxu0 %v436
  %484 = vmatpush1.msra.mxu0 %v435
  %485 = vmatprep.subr.mxu0 %v440
  %486 = vmatpush1.msra.mxu0 %v439
  %487 = vmatprep.subr.mxu0 %v444
  %488 = vmatpush1.msra.mxu0 %v443
  %489 = vmatprep.subr.mxu0 %v448
  %490 = vmatpush1.msra.mxu0 %v447
  %491 = vmatprep.subr.mxu0 %v452
  %492 = vmatpush1.msra.mxu0 %v451
  %493 = vmatprep.subr.mxu0 %v456
  %494 = vmatpush1.msra.mxu0 %v455
  %495 = vmatprep.subr.mxu0 %v460
  %496 = vmatpush1.msra.mxu0 %v459
  %497 = vmatprep.subr.mxu0 %v464
  %498 = vmatpush1.msra.mxu0 %v463
  %499 = vmatprep.subr.mxu0 0.0
  %500 = vmatpush1.msra.mxu0 0.0
  %501 = vmatprep.subr.mxu0 0.0
  %502 = vmatpush1.msra.mxu0 0.0
  %503 = vmatprep.subr.mxu0 0.0
  %504 = vmatpush1.msra.mxu0 0.0
  %505 = vmatprep.subr.mxu0 0.0
  %506 = vmatpush1.msra.mxu0 0.0
  %507 = vmatprep.subr.mxu0 0.0
  %508 = vmatpush1.msra.mxu0 0.0
  %509 = vmatprep.subr.mxu0 0.0
  %510 = vmatpush1.msra.mxu0 0.0
  %511 = vmatprep.subr.mxu0 0.0
  %512 = vmatpush1.msra.mxu0 0.0
  %513 = vmatprep.subr.mxu0 0.0
  %514 = vmatpush1.msra.mxu0 0.0
  %515 = vmatprep.subr.mxu0 0.0
  %516 = vmatpush1.msra.mxu0 0.0
  %517 = vmatprep.subr.mxu0 0.0
  %518 = vmatpush1.msra.mxu0 0.0
  %519 = vmatprep.subr.mxu0 0.0
  %520 = vmatpush1.msra.mxu0 0.0
  %521 = vmatprep.subr.mxu0 0.0
  %522 = vmatpush1.msra.mxu0 0.0
  %523 = vmatprep.subr.mxu0 0.0
  %524 = vmatpush1.msra.mxu0 0.0
  %525 = vmatprep.subr.mxu0 0.0
  %526 = vmatpush1.msra.mxu0 0.0
  %527 = vmatprep.subr.mxu0 0.0
  %528 = vmatpush1.msra.mxu0 0.0
  %529 = vmatprep.subr.mxu0 0.0
  %530 = vmatpush1.msra.mxu0 0.0
  %531 = vmatprep.mubr.f32.mxu0 0.0
  %532 = vmatmul.mubr.f32.gmra.mrb[0].mxu0 0.0
  %v533 = vpop.f32.mrb[0].mxu0
  %v534 = vadd.f32 0.0, %v533
  %v535 = vpop.f32.mrb[0].mxu0
  %v536 = vadd.f32 0.0, %v535
  %537 = vdwg.mxu0
  %538 = vmatprep.subr.mxu0 %v406
  %539 = vmatpush1.msra.mxu0 %v405
  %540 = vmatprep.subr.mxu0 %v410
  %541 = vmatpush1.msra.mxu0 %v409
  %542 = vmatprep.subr.mxu0 %v414
  %543 = vmatpush1.msra.mxu0 %v413
  %544 = vmatprep.subr.mxu0 %v418
  %545 = vmatpush1.msra.mxu0 %v417
  %546 = vmatprep.subr.mxu0 %v422
  %547 = vmatpush1.msra.mxu0 %v421
  %548 = vmatprep.subr.mxu0 %v426
  %549 = vmatpush1.msra.mxu0 %v425
  %550 = vmatprep.subr.mxu0 %v430
  %551 = vmatpush1.msra.mxu0 %v429
  %552 = vmatprep.subr.mxu0 %v434
  %553 = vmatpush1.msra.mxu0 %v433
  %554 = vmatprep.subr.mxu0 %v438
  %555 = vmatpush1.msra.mxu0 %v437
  %556 = vmatprep.subr.mxu0 %v442
  %557 = vmatpush1.msra.mxu0 %v441
  %558 = vmatprep.subr.mxu0 %v446
  %559 = vmatpush1.msra.mxu0 %v445
  %560 = vmatprep.subr.mxu0 %v450
  %561 = vmatpush1.msra.mxu0 %v449
  %562 = vmatprep.subr.mxu0 %v454
  %563 = vmatpush1.msra.mxu0 %v453
  %564 = vmatprep.subr.mxu0 %v458
  %565 = vmatpush1.msra.mxu0 %v457
  %566 = vmatprep.subr.mxu0 %v462
  %567 = vmatpush1.msra.mxu0 %v461
  %568 = vmatprep.subr.mxu0 %v466
  %569 = vmatpush1.msra.mxu0 %v465
  %570 = vmatprep.subr.mxu0 0.0
  %571 = vmatpush1.msra.mxu0 0.0
  %572 = vmatprep.subr.mxu0 0.0
  %573 = vmatpush1.msra.mxu0 0.0
  %574 = vmatprep.subr.mxu0 0.0
  %575 = vmatpush1.msra.mxu0 0.0
  %576 = vmatprep.subr.mxu0 0.0
  %577 = vmatpush1.msra.mxu0 0.0
  %578 = vmatprep.subr.mxu0 0.0
  %579 = vmatpush1.msra.mxu0 0.0
  %580 = vmatprep.subr.mxu0 0.0
  %581 = vmatpush1.msra.mxu0 0.0
  %582 = vmatprep.subr.mxu0 0.0
  %583 = vmatpush1.msra.mxu0 0.0
  %584 = vmatprep.subr.mxu0 0.0
  %585 = vmatpush1.msra.mxu0 0.0
  %586 = vmatprep.subr.mxu0 0.0
  %587 = vmatpush1.msra.mxu0 0.0
  %588 = vmatprep.subr.mxu0 0.0
  %589 = vmatpush1.msra.mxu0 0.0
  %590 = vmatprep.subr.mxu0 0.0
  %591 = vmatpush1.msra.mxu0 0.0
  %592 = vmatprep.subr.mxu0 0.0
  %593 = vmatpush1.msra.mxu0 0.0
  %594 = vmatprep.subr.mxu0 0.0
  %595 = vmatpush1.msra.mxu0 0.0
  %596 = vmatprep.subr.mxu0 0.0
  %597 = vmatpush1.msra.mxu0 0.0
  %598 = vmatprep.subr.mxu0 0.0
  %599 = vmatpush1.msra.mxu0 0.0
  %600 = vmatprep.subr.mxu0 0.0
  %601 = vmatpush1.msra.mxu0 0.0
  %602 = vmatprep.mubr.f32.mxu0 0.0
  %603 = vmatmul.mubr.f32.gmra.mrb[0].mxu0 0.0
  %v604 = vpop.f32.mrb[0].mxu0
  %v605 = vadd.f32 0.0, %v604
  %v606 = vpop.f32.mrb[0].mxu0
  %v607 = vadd.f32 0.0, %v606
  %608 = vdwg.mxu0
  %v609 = vadd.f32 %v399, %v534
  %v610 = vadd.f32 %v400, %v536
  %v611 = vadd.f32 %v401, %v605
  %v612 = vadd.f32 %v402, %v607
  %v613 = vmul.f32 %v609, 0.5
  %v614 = vtanh.pop %v613
  %v615 = vmul.f32 %v614, 0.5
  %v616 = vadd.f32 %v615, 0.5
  %v617 = vmul.f32 %v610, 0.5
  %v618 = vtanh.pop %v617
  %v619 = vmul.f32 %v618, 0.5
  %v620 = vadd.f32 %v619, 0.5
  %v621 = vtanh.pop %v611
  %v622 = vmul.f32 %v612, 0.5
  %v623 = vtanh.pop %v622
  %v624 = vmul.f32 %v623, 0.5
  %v625 = vadd.f32 %v624, 0.5
  %v626 = vmul.f32 %v620, 0.0
  %v627 = vmul.f32 %v616, %v621
  %v628 = vadd.f32 %v626, %v627
  %v629 = vtanh.pop %v628
  %v630 = vmul.f32 %v625, %v629
  %v631 = vld [vmem:[#allocation2 + $0x20] sm:$0xff]
  %v632 = vld [vmem:[#allocation2 + $0x28] sm:$0xff]
  %v633 = vld [vmem:[#allocation2 + $0x30] sm:$0xff]
  %v634 = vld [vmem:[#allocation2 + $0x38] sm:$0xff]
  %635 = vmatprep.subr.mxu0 %v404
  %636 = vmatpush1.msra.mxu0 %v403
  %637 = vmatprep.subr.mxu0 %v408
  %638 = vmatpush1.msra.mxu0 %v407
  %639 = vmatprep.subr.mxu0 %v412
  %640 = vmatpush1.msra.mxu0 %v411
  %641 = vmatprep.subr.mxu0 %v416
  %642 = vmatpush1.msra.mxu0 %v415
  %643 = vmatprep.subr.mxu0 %v420
  %644 = vmatpush1.msra.mxu0 %v419
  %645 = vmatprep.subr.mxu0 %v424
  %646 = vmatpush1.msra.mxu0 %v423
  %647 = vmatprep.subr.mxu0 %v428
  %648 = vmatpush1.msra.mxu0 %v427
  %649 = vmatprep.subr.mxu0 %v432
  %650 = vmatpush1.msra.mxu0 %v431
  %651 = vmatprep.subr.mxu0 %v436
  %652 = vmatpush1.msra.mxu0 %v435
  %653 = vmatprep.subr.mxu0 %v440
  %654 = vmatpush1.msra.mxu0 %v439
  %655 = vmatprep.subr.mxu0 %v444
  %656 = vmatpush1.msra.mxu0 %v443
  %657 = vmatprep.subr.mxu0 %v448
  %658 = vmatpush1.msra.mxu0 %v447
  %659 = vmatprep.subr.mxu0 %v452
  %660 = vmatpush1.msra.mxu0 %v451
  %661 = vmatprep.subr.mxu0 %v456
  %662 = vmatpush1.msra.mxu0 %v455
  %663 = vmatprep.subr.mxu0 %v460
  %664 = vmatpush1.msra.mxu0 %v459
  %665 = vmatprep.subr.mxu0 %v464
  %666 = vmatpush1.msra.mxu0 %v463
  %667 = vmatprep.subr.mxu0 0.0
  %668 = vmatpush1.msra.mxu0 0.0
  %669 = vmatprep.subr.mxu0 0.0
  %670 = vmatpush1.msra.mxu0 0.0
  %671 = vmatprep.subr.mxu0 0.0
  %672 = vmatpush1.msra.mxu0 0.0
  %673 = vmatprep.subr.mxu0 0.0
  %674 = vmatpush1.msra.mxu0 0.0
  %675 = vmatprep.subr.mxu0 0.0
  %676 = vmatpush1.msra.mxu0 0.0
  %677 = vmatprep.subr.mxu0 0.0
  %678 = vmatpush1.msra.mxu0 0.0
  %679 = vmatprep.subr.mxu0 0.0
  %680 = vmatpush1.msra.mxu0 0.0
  %681 = vmatprep.subr.mxu0 0.0
  %682 = vmatpush1.msra.mxu0 0.0
  %683 = vmatprep.subr.mxu0 0.0
  %684 = vmatpush1.msra.mxu0 0.0
  %685 = vmatprep.subr.mxu0 0.0
  %686 = vmatpush1.msra.mxu0 0.0
  %687 = vmatprep.subr.mxu0 0.0
  %688 = vmatpush1.msra.mxu0 0.0
  %689 = vmatprep.subr.mxu0 0.0
  %690 = vmatpush1.msra.mxu0 0.0
  %691 = vmatprep.subr.mxu0 0.0
  %692 = vmatpush1.msra.mxu0 0.0
  %693 = vmatprep.subr.mxu0 0.0
  %694 = vmatpush1.msra.mxu0 0.0
  %695 = vmatprep.subr.mxu0 0.0
  %696 = vmatpush1.msra.mxu0 0.0
  %697 = vmatprep.subr.mxu0 0.0
  %698 = vmatpush1.msra.mxu0 0.0
  %699 = vmatprep.mubr.f32.mxu0 0.0
  %700 = vmatmul.mubr.f32.gmra.mrb[0].mxu0 %v630
  %v701 = vpop.f32.mrb[0].mxu0
  %v702 = vadd.f32 0.0, %v701
  %v703 = vpop.f32.mrb[0].mxu0
  %v704 = vadd.f32 0.0, %v703
  %705 = vdwg.mxu0
  %706 = vmatprep.subr.mxu0 %v406
  %707 = vmatpush1.msra.mxu0 %v405
  %708 = vmatprep.subr.mxu0 %v410
  %709 = vmatpush1.msra.mxu0 %v409
  %710 = vmatprep.subr.mxu0 %v414
  %711 = vmatpush1.msra.mxu0 %v413
  %712 = vmatprep.subr.mxu0 %v418
  %713 = vmatpush1.msra.mxu0 %v417
  %714 = vmatprep.subr.mxu0 %v422
  %715 = vmatpush1.msra.mxu0 %v421
  %716 = vmatprep.subr.mxu0 %v426
  %717 = vmatpush1.msra.mxu0 %v425
  %718 = vmatprep.subr.mxu0 %v430
  %719 = vmatpush1.msra.mxu0 %v429
  %720 = vmatprep.subr.mxu0 %v434
  %721 = vmatpush1.msra.mxu0 %v433
  %722 = vmatprep.subr.mxu0 %v438
  %723 = vmatpush1.msra.mxu0 %v437
  %724 = vmatprep.subr.mxu0 %v442
  %725 = vmatpush1.msra.mxu0 %v441
  %726 = vmatprep.subr.mxu0 %v446
  %727 = vmatpush1.msra.mxu0 %v445
  %728 = vmatprep.subr.mxu0 %v450
  %729 = vmatpush1.msra.mxu0 %v449
  %730 = vmatprep.subr.mxu0 %v454
  %731 = vmatpush1.msra.mxu0 %v453
  %732 = vmatprep.subr.mxu0 %v458
  %733 = vmatpush1.msra.mxu0 %v457
  %734 = vmatprep.subr.mxu0 %v462
  %735 = vmatpush1.msra.mxu0 %v461
  %736 = vmatprep.subr.mxu0 %v466
  %737 = vmatpush1.msra.mxu0 %v465
  %738 = vmatprep.subr.mxu0 0.0
  %739 = vmatpush1.msra.mxu0 0.0
  %740 = vmatprep.subr.mxu0 0.0
  %741 = vmatpush1.msra.mxu0 0.0
  %742 = vmatprep.subr.mxu0 0.0
  %743 = vmatpush1.msra.mxu0 0.0
  %744 = vmatprep.subr.mxu0 0.0
  %745 = vmatpush1.msra.mxu0 0.0
  %746 = vmatprep.subr.mxu0 0.0
  %747 = vmatpush1.msra.mxu0 0.0
  %748 = vmatprep.subr.mxu0 0.0
  %749 = vmatpush1.msra.mxu0 0.0
  %750 = vmatprep.subr.mxu0 0.0
  %751 = vmatpush1.msra.mxu0 0.0
  %752 = vmatprep.subr.mxu0 0.0
  %753 = vmatpush1.msra.mxu0 0.0
  %754 = vmatprep.subr.mxu0 0.0
  %755 = vmatpush1.msra.mxu0 0.0
  %756 = vmatprep.subr.mxu0 0.0
  %757 = vmatpush1.msra.mxu0 0.0
  %758 = vmatprep.subr.mxu0 0.0
  %759 = vmatpush1.msra.mxu0 0.0
  %760 = vmatprep.subr.mxu0 0.0
  %761 = vmatpush1.msra.mxu0 0.0
  %762 = vmatprep.subr.mxu0 0.0
  %763 = vmatpush1.msra.mxu0 0.0
  %764 = vmatprep.subr.mxu0 0.0
  %765 = vmatpush1.msra.mxu0 0.0
  %766 = vmatprep.subr.mxu0 0.0
  %767 = vmatpush1.msra.mxu0 0.0
  %768 = vmatprep.subr.mxu0 0.0
  %769 = vmatpush1.msra.mxu0 0.0
  %770 = vmatprep.mubr.f32.mxu0 0.0
  %771 = vmatmul.mubr.f32.gmra.mrb[0].mxu0 %v630
  %v772 = vpop.f32.mrb[0].mxu0
  %v773 = vadd.f32 0.0, %v772
  %v774 = vpop.f32.mrb[0].mxu0
  %v775 = vadd.f32 0.0, %v774
  %776 = vdwg.mxu0
  %v777 = vadd.f32 %v631, %v702
  %v778 = vadd.f32 %v632, %v704
  %v779 = vadd.f32 %v633, %v773
  %v780 = vadd.f32 %v634, %v775
  %v781 = vmul.f32 %v777, 0.5
  %v782 = vtanh.pop %v781
  %v783 = vmul.f32 %v782, 0.5
  %v784 = vadd.f32 %v783, 0.5
  %v785 = vmul.f32 %v778, 0.5
  %v786 = vtanh.pop %v785
  %v787 = vmul.f32 %v786, 0.5
  %v788 = vadd.f32 %v787, 0.5
  %v789 = vtanh.pop %v779
  %v790 = vmul.f32 %v780, 0.5
  %v791 = vtanh.pop %v790
  %v792 = vmul.f32 %v791, 0.5
  %v793 = vadd.f32 %v792, 0.5
  %v794 = vmul.f32 %v788, %v628
  %v795 = vmul.f32 %v784, %v789
  %v796 = vadd.f32 %v794, %v795
  %v797 = vtanh.pop %v796
  %v798 = vmul.f32 %v793, %v797
  %v799 = vld [vmem:[#allocation2 + $0x40] sm:$0xff]
  %v800 = vld [vmem:[#allocation2 + $0x48] sm:$0xff]
  %v801 = vld [vmem:[#allocation2 + $0x50] sm:$0xff]
  %v802 = vld [vmem:[#allocation2 + $0x58] sm:$0xff]
  %803 = vmatprep.subr.mxu0 %v404
  %804 = vmatpush1.msra.mxu0 %v403
  %805 = vmatprep.subr.mxu0 %v408
  %806 = vmatpush1.msra.mxu0 %v407
  %807 = vmatprep.subr.mxu0 %v412
  %808 = vmatpush1.msra.mxu0 %v411
  %809 = vmatprep.subr.mxu0 %v416
  %810 = vmatpush1.msra.mxu0 %v415
  %811 = vmatprep.subr.mxu0 %v420
  %812 = vmatpush1.msra.mxu0 %v419
  %813 = vmatprep.subr.mxu0 %v424
  %814 = vmatpush1.msra.mxu0 %v423
  %815 = vmatprep.subr.mxu0 %v428
  %816 = vmatpush1.msra.mxu0 %v427
  %817 = vmatprep.subr.mxu0 %v432
  %818 = vmatpush1.msra.mxu0 %v431
  %819 = vmatprep.subr.mxu0 %v436
  %820 = vmatpush1.msra.mxu0 %v435
  %821 = vmatprep.subr.mxu0 %v440
  %822 = vmatpush1.msra.mxu0 %v439
  %823 = vmatprep.subr.mxu0 %v444
  %824 = vmatpush1.msra.mxu0 %v443
  %825 = vmatprep.subr.mxu0 %v448
  %826 = vmatpush1.msra.mxu0 %v447
  %827 = vmatprep.subr.mxu0 %v452
  %828 = vmatpush1.msra.mxu0 %v451
  %829 = vmatprep.subr.mxu0 %v456
  %830 = vmatpush1.msra.mxu0 %v455
  %831 = vmatprep.subr.mxu0 %v460
  %832 = vmatpush1.msra.mxu0 %v459
  %833 = vmatprep.subr.mxu0 %v464
  %834 = vmatpush1.msra.mxu0 %v463
  %835 = vmatprep.subr.mxu0 0.0
  %836 = vmatpush1.msra.mxu0 0.0
  %837 = vmatprep.subr.mxu0 0.0
  %838 = vmatpush1.msra.mxu0 0.0
  %839 = vmatprep.subr.mxu0 0.0
  %840 = vmatpush1.msra.mxu0 0.0
  %841 = vmatprep.subr.mxu0 0.0
  %842 = vmatpush1.msra.mxu0 0.0
  %843 = vmatprep.subr.mxu0 0.0
  %844 = vmatpush1.msra.mxu0 0.0
  %845 = vmatprep.subr.mxu0 0.0
  %846 = vmatpush1.msra.mxu0 0.0
  %847 = vmatprep.subr.mxu0 0.0
  %848 = vmatpush1.msra.mxu0 0.0
  %849 = vmatprep.subr.mxu0 0.0
  %850 = vmatpush1.msra.mxu0 0.0
  %851 = vmatprep.subr.mxu0 0.0
  %852 = vmatpush1.msra.mxu0 0.0
  %853 = vmatprep.subr.mxu0 0.0
  %854 = vmatpush1.msra.mxu0 0.0
  %855 = vmatprep.subr.mxu0 0.0
  %856 = vmatpush1.msra.mxu0 0.0
  %857 = vmatprep.subr.mxu0 0.0
  %858 = vmatpush1.msra.mxu0 0.0
  %859 = vmatprep.subr.mxu0 0.0
  %860 = vmatpush1.msra.mxu0 0.0
  %861 = vmatprep.subr.mxu0 0.0
  %862 = vmatpush1.msra.mxu0 0.0
  %863 = vmatprep.subr.mxu0 0.0
  %864 = vmatpush1.msra.mxu0 0.0
  %865 = vmatprep.subr.mxu0 0.0
  %866 = vmatpush1.msra.mxu0 0.0
  %867 = vmatprep.mubr.f32.mxu0 0.0
  %868 = vmatmul.mubr.f32.gmra.mrb[0].mxu0 %v798
  %v869 = vpop.f32.mrb[0].mxu0
  %v870 = vadd.f32 0.0, %v869
  %v871 = vpop.f32.mrb[0].mxu0
  %v872 = vadd.f32 0.0, %v871
  %873 = vdwg.mxu0
  %874 = vmatprep.subr.mxu0 %v406
  %875 = vmatpush1.msra.mxu0 %v405
  %876 = vmatprep.subr.mxu0 %v410
  %877 = vmatpush1.msra.mxu0 %v409
  %878 = vmatprep.subr.mxu0 %v414
  %879 = vmatpush1.msra.mxu0 %v413
  %880 = vmatprep.subr.mxu0 %v418
  %881 = vmatpush1.msra.mxu0 %v417
  %882 = vmatprep.subr.mxu0 %v422
  %883 = vmatpush1.msra.mxu0 %v421
  %884 = vmatprep.subr.mxu0 %v426
  %885 = vmatpush1.msra.mxu0 %v425
  %886 = vmatprep.subr.mxu0 %v430
  %887 = vmatpush1.msra.mxu0 %v429
  %888 = vmatprep.subr.mxu0 %v434
  %889 = vmatpush1.msra.mxu0 %v433
  %890 = vmatprep.subr.mxu0 %v438
  %891 = vmatpush1.msra.mxu0 %v437
  %892 = vmatprep.subr.mxu0 %v442
  %893 = vmatpush1.msra.mxu0 %v441
  %894 = vmatprep.subr.mxu0 %v446
  %895 = vmatpush1.msra.mxu0 %v445
  %896 = vmatprep.subr.mxu0 %v450
  %897 = vmatpush1.msra.mxu0 %v449
  %898 = vmatprep.subr.mxu0 %v454
  %899 = vmatpush1.msra.mxu0 %v453
  %900 = vmatprep.subr.mxu0 %v458
  %901 = vmatpush1.msra.mxu0 %v457
  %902 = vmatprep.subr.mxu0 %v462
  %903 = vmatpush1.msra.mxu0 %v461
  %904 = vmatprep.subr.mxu0 %v466
  %905 = vmatpush1.msra.mxu0 %v465
  %906 = vmatprep.subr.mxu0 0.0
  %907 = vmatpush1.msra.mxu0 0.0
  %908 = vmatprep.subr.mxu0 0.0
  %909 = vmatpush1.msra.mxu0 0.0
  %910 = vmatprep.subr.mxu0 0.0
  %911 = vmatpush1.msra.mxu0 0.0
  %912 = vmatprep.subr.mxu0 0.0
  %913 = vmatpush1.msra.mxu0 0.0
  %914 = vmatprep.subr.mxu0 0.0
  %915 = vmatpush1.msra.mxu0 0.0
  %916 = vmatprep.subr.mxu0 0.0
  %917 = vmatpush1.msra.mxu0 0.0
  %918 = vmatprep.subr.mxu0 0.0
  %919 = vmatpush1.msra.mxu0 0.0
  %920 = vmatprep.subr.mxu0 0.0
  %921 = vmatpush1.msra.mxu0 0.0
  %922 = vmatprep.subr.mxu0 0.0
  %923 = vmatpush1.msra.mxu0 0.0
  %924 = vmatprep.subr.mxu0 0.0
  %925 = vmatpush1.msra.mxu0 0.0
  %926 = vmatprep.subr.mxu0 0.0
  %927 = vmatpush1.msra.mxu0 0.0
  %928 = vmatprep.subr.mxu0 0.0
  %929 = vmatpush1.msra.mxu0 0.0
  %930 = vmatprep.subr.mxu0 0.0
  %931 = vmatpush1.msra.mxu0 0.0
  %932 = vmatprep.subr.mxu0 0.0
  %933 = vmatpush1.msra.mxu0 0.0
  %934 = vmatprep.subr.mxu0 0.0
  %935 = vmatpush1.msra.mxu0 0.0
  %936 = vmatprep.subr.mxu0 0.0
  %937 = vmatpush1.msra.mxu0 0.0
  %938 = vmatprep.mubr.f32.mxu0 0.0
  %939 = vmatmul.mubr.f32.gmra.mrb[0].mxu0 %v798
  %v940 = vpop.f32.mrb[0].mxu0
  %v941 = vadd.f32 0.0, %v940
  %v942 = vpop.f32.mrb[0].mxu0
  %v943 = vadd.f32 0.0, %v942
  %944 = vdwg.mxu0
  %v945 = vadd.f32 %v799, %v870
  %v946 = vadd.f32 %v800, %v872
  %v947 = vadd.f32 %v801, %v941
  %v948 = vadd.f32 %v802, %v943
  %v949 = vmul.f32 %v945, 0.5
  %v950 = vtanh.pop %v949
  %v951 = vmul.f32 %v950, 0.5
  %v952 = vadd.f32 %v951, 0.5
  %v953 = vmul.f32 %v946, 0.5
  %v954 = vtanh.pop %v953
  %v955 = vmul.f32 %v954, 0.5
  %v956 = vadd.f32 %v955, 0.5
  %v957 = vtanh.pop %v947
  %v958 = vmul.f32 %v948, 0.5
  %v959 = vtanh.pop %v958
  %v960 = vmul.f32 %v959, 0.5
  %v961 = vadd.f32 %v960, 0.5
  %v962 = vmul.f32 %v956, %v796
  %v963 = vmul.f32 %v952, %v957
  %v964 = vadd.f32 %v962, %v963
  %v965 = vtanh.pop %v964
  %v966 = vmul.f32 %v961, %v965
  %v967 = vld [vmem:[#allocation2 + $0x60] sm:$0xff]
  %v968 = vld [vmem:[#allocation2 + $0x68] sm:$0xff]
  %v969 = vld [vmem:[#allocation2 + $0x70] sm:$0xff]
  %v970 = vld [vmem:[#allocation2 + $0x78] sm:$0xff]
  %971 = vmatprep.subr.mxu0 %v404
  %972 = vmatpush1.msra.mxu0 %v403
  %973 = vmatprep.subr.mxu0 %v408
  %974 = vmatpush1.msra.mxu0 %v407
  %975 = vmatprep.subr.mxu0 %v412
  %976 = vmatpush1.msra.mxu0 %v411
  %977 = vmatprep.subr.mxu0 %v416
  %978 = vmatpush1.msra.mxu0 %v415
  %979 = vmatprep.subr.mxu0 %v420
  %980 = vmatpush1.msra.mxu0 %v419
  %981 = vmatprep.subr.mxu0 %v424
  %982 = vmatpush1.msra.mxu0 %v423
  %983 = vmatprep.subr.mxu0 %v428
  %984 = vmatpush1.msra.mxu0 %v427
  %985 = vmatprep.subr.mxu0 %v432
  %986 = vmatpush1.msra.mxu0 %v431
  %987 = vmatprep.subr.mxu0 %v436
  %988 = vmatpush1.msra.mxu0 %v435
  %989 = vmatprep.subr.mxu0 %v440
  %990 = vmatpush1.msra.mxu0 %v439
  %991 = vmatprep.subr.mxu0 %v444
  %992 = vmatpush1.msra.mxu0 %v443
  %993 = vmatprep.subr.mxu0 %v448
  %994 = vmatpush1.msra.mxu0 %v447
  %995 = vmatprep.subr.mxu0 %v452
  %996 = vmatpush1.msra.mxu0 %v451
  %997 = vmatprep.subr.mxu0 %v456
  %998 = vmatpush1.msra.mxu0 %v455
  %999 = vmatprep.subr.mxu0 %v460
  %1000 = vmatpush1.msra.mxu0 %v459
  %1001 = vmatprep.subr.mxu0 %v464
  %1002 = vmatpush1.msra.mxu0 %v463
  %1003 = vmatprep.subr.mxu0 0.0
  %1004 = vmatpush1.msra.mxu0 0.0
  %1005 = vmatprep.subr.mxu0 0.0
  %1006 = vmatpush1.msra.mxu0 0.0
  %1007 = vmatprep.subr.mxu0 0.0
  %1008 = vmatpush1.msra.mxu0 0.0
  %1009 = vmatprep.subr.mxu0 0.0
  %1010 = vmatpush1.msra.mxu0 0.0
  %1011 = vmatprep.subr.mxu0 0.0
  %1012 = vmatpush1.msra.mxu0 0.0
  %1013 = vmatprep.subr.mxu0 0.0
  %1014 = vmatpush1.msra.mxu0 0.0
  %1015 = vmatprep.subr.mxu0 0.0
  %1016 = vmatpush1.msra.mxu0 0.0
  %1017 = vmatprep.subr.mxu0 0.0
  %1018 = vmatpush1.msra.mxu0 0.0
  %1019 = vmatprep.subr.mxu0 0.0
  %1020 = vmatpush1.msra.mxu0 0.0
  %1021 = vmatprep.subr.mxu0 0.0
  %1022 = vmatpush1.msra.mxu0 0.0
  %1023 = vmatprep.subr.mxu0 0.0
  %1024 = vmatpush1.msra.mxu0 0.0
  %1025 = vmatprep.subr.mxu0 0.0
  %1026 = vmatpush1.msra.mxu0 0.0
  %1027 = vmatprep.subr.mxu0 0.0
  %1028 = vmatpush1.msra.mxu0 0.0
  %1029 = vmatprep.subr.mxu0 0.0
  %1030 = vmatpush1.msra.mxu0 0.0
  %1031 = vmatprep.subr.mxu0 0.0
  %1032 = vmatpush1.msra.mxu0 0.0
  %1033 = vmatprep.subr.mxu0 0.0
  %1034 = vmatpush1.msra.mxu0 0.0
  %1035 = vmatprep.mubr.f32.mxu0 0.0
  %1036 = vmatmul.mubr.f32.gmra.mrb[0].mxu0 %v966
  %v1037 = vpop.f32.mrb[0].mxu0
  %v1038 = vadd.f32 0.0, %v1037
  %v1039 = vpop.f32.mrb[0].mxu0
  %v1040 = vadd.f32 0.0, %v1039
  %1041 = vdwg.mxu0
  %1042 = vmatprep.subr.mxu0 %v406
  %1043 = vmatpush1.msra.mxu0 %v405
  %1044 = vmatprep.subr.mxu0 %v410
  %1045 = vmatpush1.msra.mxu0 %v409
  %1046 = vmatprep.subr.mxu0 %v414
  %1047 = vmatpush1.msra.mxu0 %v413
  %1048 = vmatprep.subr.mxu0 %v418
  %1049 = vmatpush1.msra.mxu0 %v417
  %1050 = vmatprep.subr.mxu0 %v422
  %1051 = vmatpush1.msra.mxu0 %v421
  %1052 = vmatprep.subr.mxu0 %v426
  %1053 = vmatpush1.msra.mxu0 %v425
  %1054 = vmatprep.subr.mxu0 %v430
  %1055 = vmatpush1.msra.mxu0 %v429
  %1056 = vmatprep.subr.mxu0 %v434
  %1057 = vmatpush1.msra.mxu0 %v433
  %1058 = vmatprep.subr.mxu0 %v438
  %1059 = vmatpush1.msra.mxu0 %v437
  %1060 = vmatprep.subr.mxu0 %v442
  %1061 = vmatpush1.msra.mxu0 %v441
  %1062 = vmatprep.subr.mxu0 %v446
  %1063 = vmatpush1.msra.mxu0 %v445
  %1064 = vmatprep.subr.mxu0 %v450
  %1065 = vmatpush1.msra.mxu0 %v449
  %1066 = vmatprep.subr.mxu0 %v454
  %1067 = vmatpush1.msra.mxu0 %v453
  %1068 = vmatprep.subr.mxu0 %v458
  %1069 = vmatpush1.msra.mxu0 %v457
  %1070 = vmatprep.subr.mxu0 %v462
  %1071 = vmatpush1.msra.mxu0 %v461
  %1072 = vmatprep.subr.mxu0 %v466
  %1073 = vmatpush1.msra.mxu0 %v465
  %1074 = vmatprep.subr.mxu0 0.0
  %1075 = vmatpush1.msra.mxu0 0.0
  %1076 = vmatprep.subr.mxu0 0.0
  %1077 = vmatpush1.msra.mxu0 0.0
  %1078 = vmatprep.subr.mxu0 0.0
  %1079 = vmatpush1.msra.mxu0 0.0
  %1080 = vmatprep.subr.mxu0 0.0
  %1081 = vmatpush1.msra.mxu0 0.0
  %1082 = vmatprep.subr.mxu0 0.0
  %1083 = vmatpush1.msra.mxu0 0.0
  %1084 = vmatprep.subr.mxu0 0.0
  %1085 = vmatpush1.msra.mxu0 0.0
  %1086 = vmatprep.subr.mxu0 0.0
  %1087 = vmatpush1.msra.mxu0 0.0
  %1088 = vmatprep.subr.mxu0 0.0
  %1089 = vmatpush1.msra.mxu0 0.0
  %1090 = vmatprep.subr.mxu0 0.0
  %1091 = vmatpush1.msra.mxu0 0.0
  %1092 = vmatprep.subr.mxu0 0.0
  %1093 = vmatpush1.msra.mxu0 0.0
  %1094 = vmatprep.subr.mxu0 0.0
  %1095 = vmatpush1.msra.mxu0 0.0
  %1096 = vmatprep.subr.mxu0 0.0
  %1097 = vmatpush1.msra.mxu0 0.0
  %1098 = vmatprep.subr.mxu0 0.0
  %1099 = vmatpush1.msra.mxu0 0.0
  %1100 = vmatprep.subr.mxu0 0.0
  %1101 = vmatpush1.msra.mxu0 0.0
  %1102 = vmatprep.subr.mxu0 0.0
  %1103 = vmatpush1.msra.mxu0 0.0
  %1104 = vmatprep.subr.mxu0 0.0
  %1105 = vmatpush1.msra.mxu0 0.0
  %1106 = vmatprep.mubr.f32.mxu0 0.0
  %1107 = vmatmul.mubr.f32.gmra.mrb[0].mxu0 %v966
  %v1108 = vpop.f32.mrb[0].mxu0
  %v1109 = vadd.f32 0.0, %v1108
  %v1110 = vpop.f32.mrb[0].mxu0
  %v1111 = vadd.f32 0.0, %v1110
  %1112 = vdwg.mxu0
  %v1113 = vadd.f32 %v967, %v1038
  %v1114 = vadd.f32 %v968, %v1040
  %v1115 = vadd.f32 %v969, %v1109
  %v1116 = vadd.f32 %v970, %v1111
  %v1117 = vmul.f32 %v1113, 0.5
  %v1118 = vtanh.pop %v1117
  %v1119 = vmul.f32 %v1118, 0.5
  %v1120 = vadd.f32 %v1119, 0.5
  %v1121 = vmul.f32 %v1114, 0.5
  %v1122 = vtanh.pop %v1121
  %v1123 = vmul.f32 %v1122, 0.5
  %v1124 = vadd.f32 %v1123, 0.5
  %v1125 = vtanh.pop %v1115
  %v1126 = vmul.f32 %v1116, 0.5
  %v1127 = vtanh.pop %v1126
  %v1128 = vmul.f32 %v1127, 0.5
  %v1129 = vadd.f32 %v1128, 0.5
  %v1130 = vmul.f32 %v1124, %v964
  %v1131 = vmul.f32 %v1120, %v1125
  %v1132 = vadd.f32 %v1130, %v1131
  %v1133 = vtanh.pop %v1132
  %v1134 = vmul.f32 %v1129, %v1133
  %v1135 = vld [vmem:[#allocation2 + $0x80] sm:$0xff]
  %v1136 = vld [vmem:[#allocation2 + $0x88] sm:$0xff]
  %v1137 = vld [vmem:[#allocation2 + $0x90] sm:$0xff]
  %v1138 = vld [vmem:[#allocation2 + $0x98] sm:$0xff]
  %1139 = vmatprep.subr.mxu0 %v404
  %1140 = vmatpush1.msra.mxu0 %v403
  %1141 = vmatprep.subr.mxu0 %v408
  %1142 = vmatpush1.msra.mxu0 %v407
  %1143 = vmatprep.subr.mxu0 %v412
  %1144 = vmatpush1.msra.mxu0 %v411
  %1145 = vmatprep.subr.mxu0 %v416
  %1146 = vmatpush1.msra.mxu0 %v415
  %1147 = vmatprep.subr.mxu0 %v420
  %1148 = vmatpush1.msra.mxu0 %v419
  %1149 = vmatprep.subr.mxu0 %v424
  %1150 = vmatpush1.msra.mxu0 %v423
  %1151 = vmatprep.subr.mxu0 %v428
  %1152 = vmatpush1.msra.mxu0 %v427
  %1153 = vmatprep.subr.mxu0 %v432
  %1154 = vmatpush1.msra.mxu0 %v431
  %1155 = vmatprep.subr.mxu0 %v436
  %1156 = vmatpush1.msra.mxu0 %v435
  %1157 = vmatprep.subr.mxu0 %v440
  %1158 = vmatpush1.msra.mxu0 %v439
  %1159 = vmatprep.subr.mxu0 %v444
  %1160 = vmatpush1.msra.mxu0 %v443
  %1161 = vmatprep.subr.mxu0 %v448
  %1162 = vmatpush1.msra.mxu0 %v447
  %1163 = vmatprep.subr.mxu0 %v452
  %1164 = vmatpush1.msra.mxu0 %v451
  %1165 = vmatprep.subr.mxu0 %v456
  %1166 = vmatpush1.msra.mxu0 %v455
  %1167 = vmatprep.subr.mxu0 %v460
  %1168 = vmatpush1.msra.mxu0 %v459
  %1169 = vmatprep.subr.mxu0 %v464
  %1170 = vmatpush1.msra.mxu0 %v463
  %1171 = vmatprep.subr.mxu0 0.0
  %1172 = vmatpush1.msra.mxu0 0.0
  %1173 = vmatprep.subr.mxu0 0.0
  %1174 = vmatpush1.msra.mxu0 0.0
  %1175 = vmatprep.subr.mxu0 0.0
  %1176 = vmatpush1.msra.mxu0 0.0
  %1177 = vmatprep.subr.mxu0 0.0
  %1178 = vmatpush1.msra.mxu0 0.0
  %1179 = vmatprep.subr.mxu0 0.0
  %1180 = vmatpush1.msra.mxu0 0.0
  %1181 = vmatprep.subr.mxu0 0.0
  %1182 = vmatpush1.msra.mxu0 0.0
  %1183 = vmatprep.subr.mxu0 0.0
  %1184 = vmatpush1.msra.mxu0 0.0
  %1185 = vmatprep.subr.mxu0 0.0
  %1186 = vmatpush1.msra.mxu0 0.0
  %1187 = vmatprep.subr.mxu0 0.0
  %1188 = vmatpush1.msra.mxu0 0.0
  %1189 = vmatprep.subr.mxu0 0.0
  %1190 = vmatpush1.msra.mxu0 0.0
  %1191 = vmatprep.subr.mxu0 0.0
  %1192 = vmatpush1.msra.mxu0 0.0
  %1193 = vmatprep.subr.mxu0 0.0
  %1194 = vmatpush1.msra.mxu0 0.0
  %1195 = vmatprep.subr.mxu0 0.0
  %1196 = vmatpush1.msra.mxu0 0.0
  %1197 = vmatprep.subr.mxu0 0.0
  %1198 = vmatpush1.msra.mxu0 0.0
  %1199 = vmatprep.subr.mxu0 0.0
  %1200 = vmatpush1.msra.mxu0 0.0
  %1201 = vmatprep.subr.mxu0 0.0
  %1202 = vmatpush1.msra.mxu0 0.0
  %1203 = vmatprep.mubr.f32.mxu0 0.0
  %1204 = vmatmul.mubr.f32.gmra.mrb[0].mxu0 %v1134
  %v1205 = vpop.f32.mrb[0].mxu0
  %v1206 = vadd.f32 0.0, %v1205
  %v1207 = vpop.f32.mrb[0].mxu0
  %v1208 = vadd.f32 0.0, %v1207
  %1209 = vdwg.mxu0
  %1210 = vmatprep.subr.mxu0 %v406
  %1211 = vmatpush1.msra.mxu0 %v405
  %1212 = vmatprep.subr.mxu0 %v410
  %1213 = vmatpush1.msra.mxu0 %v409
  %1214 = vmatprep.subr.mxu0 %v414
  %1215 = vmatpush1.msra.mxu0 %v413
  %1216 = vmatprep.subr.mxu0 %v418
  %1217 = vmatpush1.msra.mxu0 %v417
  %1218 = vmatprep.subr.mxu0 %v422
  %1219 = vmatpush1.msra.mxu0 %v421
  %1220 = vmatprep.subr.mxu0 %v426
  %1221 = vmatpush1.msra.mxu0 %v425
  %1222 = vmatprep.subr.mxu0 %v430
  %1223 = vmatpush1.msra.mxu0 %v429
  %1224 = vmatprep.subr.mxu0 %v434
  %1225 = vmatpush1.msra.mxu0 %v433
  %1226 = vmatprep.subr.mxu0 %v438
  %1227 = vmatpush1.msra.mxu0 %v437
  %1228 = vmatprep.subr.mxu0 %v442
  %1229 = vmatpush1.msra.mxu0 %v441
  %1230 = vmatprep.subr.mxu0 %v446
  %1231 = vmatpush1.msra.mxu0 %v445
  %1232 = vmatprep.subr.mxu0 %v450
  %1233 = vmatpush1.msra.mxu0 %v449
  %1234 = vmatprep.subr.mxu0 %v454
  %1235 = vmatpush1.msra.mxu0 %v453
  %1236 = vmatprep.subr.mxu0 %v458
  %1237 = vmatpush1.msra.mxu0 %v457
  %1238 = vmatprep.subr.mxu0 %v462
  %1239 = vmatpush1.msra.mxu0 %v461
  %1240 = vmatprep.subr.mxu0 %v466
  %1241 = vmatpush1.msra.mxu0 %v465
  %1242 = vmatprep.subr.mxu0 0.0
  %1243 = vmatpush1.msra.mxu0 0.0
  %1244 = vmatprep.subr.mxu0 0.0
  %1245 = vmatpush1.msra.mxu0 0.0
  %1246 = vmatprep.subr.mxu0 0.0
  %1247 = vmatpush1.msra.mxu0 0.0
  %1248 = vmatprep.subr.mxu0 0.0
  %1249 = vmatpush1.msra.mxu0 0.0
  %1250 = vmatprep.subr.mxu0 0.0
  %1251 = vmatpush1.msra.mxu0 0.0
  %1252 = vmatprep.subr.mxu0 0.0
  %1253 = vmatpush1.msra.mxu0 0.0
  %1254 = vmatprep.subr.mxu0 0.0
  %1255 = vmatpush1.msra.mxu0 0.0
  %1256 = vmatprep.subr.mxu0 0.0
  %1257 = vmatpush1.msra.mxu0 0.0
  %1258 = vmatprep.subr.mxu0 0.0
  %1259 = vmatpush1.msra.mxu0 0.0
  %1260 = vmatprep.subr.mxu0 0.0
  %1261 = vmatpush1.msra.mxu0 0.0
  %1262 = vmatprep.subr.mxu0 0.0
  %1263 = vmatpush1.msra.mxu0 0.0
  %1264 = vmatprep.subr.mxu0 0.0
  %1265 = vmatpush1.msra.mxu0 0.0
  %1266 = vmatprep.subr.mxu0 0.0
  %1267 = vmatpush1.msra.mxu0 0.0
  %1268 = vmatprep.subr.mxu0 0.0
  %1269 = vmatpush1.msra.mxu0 0.0
  %1270 = vmatprep.subr.mxu0 0.0
  %1271 = vmatpush1.msra.mxu0 0.0
  %1272 = vmatprep.subr.mxu0 0.0
  %1273 = vmatpush1.msra.mxu0 0.0
  %1274 = vmatprep.mubr.f32.mxu0 0.0
  %1275 = vmatmul.mubr.f32.gmra.mrb[0].mxu0 %v1134
  %v1276 = vpop.f32.mrb[0].mxu0
  %v1277 = vadd.f32 0.0, %v1276
  %v1278 = vpop.f32.mrb[0].mxu0
  %v1279 = vadd.f32 0.0, %v1278
  %1280 = vdwg.mxu0
  %v1281 = vadd.f32 %v1135, %v1206
  %v1282 = vadd.f32 %v1136, %v1208
  %v1283 = vadd.f32 %v1137, %v1277
  %v1284 = vadd.f32 %v1138, %v1279
  %v1285 = vmul.f32 %v1281, 0.5
  %v1286 = vtanh.pop %v1285
  %v1287 = vmul.f32 %v1286, 0.5
  %v1288 = vadd.f32 %v1287, 0.5
  %v1289 = vmul.f32 %v1282, 0.5
  %v1290 = vtanh.pop %v1289
  %v1291 = vmul.f32 %v1290, 0.5
  %v1292 = vadd.f32 %v1291, 0.5
  %v1293 = vtanh.pop %v1283
  %v1294 = vmul.f32 %v1284, 0.5
  %v1295 = vtanh.pop %v1294
  %v1296 = vmul.f32 %v1295, 0.5
  %v1297 = vadd.f32 %v1296, 0.5
  %v1298 = vmul.f32 %v1292, %v1132
  %v1299 = vmul.f32 %v1288, %v1293
  %v1300 = vadd.f32 %v1298, %v1299
  %v1301 = vtanh.pop %v1300
  %v1302 = vmul.f32 %v1297, %v1301
  %v1303 = vld [vmem:[#allocation2 + $0xa0] sm:$0xff]
  %v1304 = vld [vmem:[#allocation2 + $0xa8] sm:$0xff]
  %v1305 = vld [vmem:[#allocation2 + $0xb0] sm:$0xff]
  %v1306 = vld [vmem:[#allocation2 + $0xb8] sm:$0xff]
  %1307 = vmatprep.subr.mxu0 %v404
  %1308 = vmatpush1.msra.mxu0 %v403
  %1309 = vmatprep.subr.mxu0 %v408
  %1310 = vmatpush1.msra.mxu0 %v407
  %1311 = vmatprep.subr.mxu0 %v412
  %1312 = vmatpush1.msra.mxu0 %v411
  %1313 = vmatprep.subr.mxu0 %v416
  %1314 = vmatpush1.msra.mxu0 %v415
  %1315 = vmatprep.subr.mxu0 %v420
  %1316 = vmatpush1.msra.mxu0 %v419
  %1317 = vmatprep.subr.mxu0 %v424
  %1318 = vmatpush1.msra.mxu0 %v423
  %1319 = vmatprep.subr.mxu0 %v428
  %1320 = vmatpush1.msra.mxu0 %v427
  %1321 = vmatprep.subr.mxu0 %v432
  %1322 = vmatpush1.msra.mxu0 %v431
  %1323 = vmatprep.subr.mxu0 %v436
  %1324 = vmatpush1.msra.mxu0 %v435
  %1325 = vmatprep.subr.mxu0 %v440
  %1326 = vmatpush1.msra.mxu0 %v439
  %1327 = vmatprep.subr.mxu0 %v444
  %1328 = vmatpush1.msra.mxu0 %v443
  %1329 = vmatprep.subr.mxu0 %v448
  %1330 = vmatpush1.msra.mxu0 %v447
  %1331 = vmatprep.subr.mxu0 %v452
  %1332 = vmatpush1.msra.mxu0 %v451
  %1333 = vmatprep.subr.mxu0 %v456
  %1334 = vmatpush1.msra.mxu0 %v455
  %1335 = vmatprep.subr.mxu0 %v460
  %1336 = vmatpush1.msra.mxu0 %v459
  %1337 = vmatprep.subr.mxu0 %v464
  %1338 = vmatpush1.msra.mxu0 %v463
  %1339 = vmatprep.subr.mxu0 0.0
  %1340 = vmatpush1.msra.mxu0 0.0
  %1341 = vmatprep.subr.mxu0 0.0
  %1342 = vmatpush1.msra.mxu0 0.0
  %1343 = vmatprep.subr.mxu0 0.0
  %1344 = vmatpush1.msra.mxu0 0.0
  %1345 = vmatprep.subr.mxu0 0.0
  %1346 = vmatpush1.msra.mxu0 0.0
  %1347 = vmatprep.subr.mxu0 0.0
  %1348 = vmatpush1.msra.mxu0 0.0
  %1349 = vmatprep.subr.mxu0 0.0
  %1350 = vmatpush1.msra.mxu0 0.0
  %1351 = vmatprep.subr.mxu0 0.0
  %1352 = vmatpush1.msra.mxu0 0.0
  %1353 = vmatprep.subr.mxu0 0.0
  %1354 = vmatpush1.msra.mxu0 0.0
  %1355 = vmatprep.subr.mxu0 0.0
  %1356 = vmatpush1.msra.mxu0 0.0
  %1357 = vmatprep.subr.mxu0 0.0
  %1358 = vmatpush1.msra.mxu0 0.0
  %1359 = vmatprep.subr.mxu0 0.0
  %1360 = vmatpush1.msra.mxu0 0.0
  %1361 = vmatprep.subr.mxu0 0.0
  %1362 = vmatpush1.msra.mxu0 0.0
  %1363 = vmatprep.subr.mxu0 0.0
  %1364 = vmatpush1.msra.mxu0 0.0
  %1365 = vmatprep.subr.mxu0 0.0
  %1366 = vmatpush1.msra.mxu0 0.0
  %1367 = vmatprep.subr.mxu0 0.0
  %1368 = vmatpush1.msra.mxu0 0.0
  %1369 = vmatprep.subr.mxu0 0.0
  %1370 = vmatpush1.msra.mxu0 0.0
  %1371 = vmatprep.mubr.f32.mxu0 0.0
  %1372 = vmatmul.mubr.f32.gmra.mrb[0].mxu0 %v1302
  %v1373 = vpop.f32.mrb[0].mxu0
  %v1374 = vadd.f32 0.0, %v1373
  %v1375 = vpop.f32.mrb[0].mxu0
  %v1376 = vadd.f32 0.0, %v1375
  %1377 = vdwg.mxu0
  %1378 = vmatprep.subr.mxu0 %v406
  %1379 = vmatpush1.msra.mxu0 %v405
  %1380 = vmatprep.subr.mxu0 %v410
  %1381 = vmatpush1.msra.mxu0 %v409
  %1382 = vmatprep.subr.mxu0 %v414
  %1383 = vmatpush1.msra.mxu0 %v413
  %1384 = vmatprep.subr.mxu0 %v418
  %1385 = vmatpush1.msra.mxu0 %v417
  %1386 = vmatprep.subr.mxu0 %v422
  %1387 = vmatpush1.msra.mxu0 %v421
  %1388 = vmatprep.subr.mxu0 %v426
  %1389 = vmatpush1.msra.mxu0 %v425
  %1390 = vmatprep.subr.mxu0 %v430
  %1391 = vmatpush1.msra.mxu0 %v429
  %1392 = vmatprep.subr.mxu0 %v434
  %1393 = vmatpush1.msra.mxu0 %v433
  %1394 = vmatprep.subr.mxu0 %v438
  %1395 = vmatpush1.msra.mxu0 %v437
  %1396 = vmatprep.subr.mxu0 %v442
  %1397 = vmatpush1.msra.mxu0 %v441
  %1398 = vmatprep.subr.mxu0 %v446
  %1399 = vmatpush1.msra.mxu0 %v445
  %1400 = vmatprep.subr.mxu0 %v450
  %1401 = vmatpush1.msra.mxu0 %v449
  %1402 = vmatprep.subr.mxu0 %v454
  %1403 = vmatpush1.msra.mxu0 %v453
  %1404 = vmatprep.subr.mxu0 %v458
  %1405 = vmatpush1.msra.mxu0 %v457
  %1406 = vmatprep.subr.mxu0 %v462
  %1407 = vmatpush1.msra.mxu0 %v461
  %1408 = vmatprep.subr.mxu0 %v466
  %1409 = vmatpush1.msra.mxu0 %v465
  %1410 = vmatprep.subr.mxu0 0.0
  %1411 = vmatpush1.msra.mxu0 0.0
  %1412 = vmatprep.subr.mxu0 0.0
  %1413 = vmatpush1.msra.mxu0 0.0
  %1414 = vmatprep.subr.mxu0 0.0
  %1415 = vmatpush1.msra.mxu0 0.0
  %1416 = vmatprep.subr.mxu0 0.0
  %1417 = vmatpush1.msra.mxu0 0.0
  %1418 = vmatprep.subr.mxu0 0.0
  %1419 = vmatpush1.msra.mxu0 0.0
  %1420 = vmatprep.subr.mxu0 0.0
  %1421 = vmatpush1.msra.mxu0 0.0
  %1422 = vmatprep.subr.mxu0 0.0
  %1423 = vmatpush1.msra.mxu0 0.0
  %1424 = vmatprep.subr.mxu0 0.0
  %1425 = vmatpush1.msra.mxu0 0.0
  %1426 = vmatprep.subr.mxu0 0.0
  %1427 = vmatpush1.msra.mxu0 0.0
  %1428 = vmatprep.subr.mxu0 0.0
  %1429 = vmatpush1.msra.mxu0 0.0
  %1430 = vmatprep.subr.mxu0 0.0
  %1431 = vmatpush1.msra.mxu0 0.0
  %1432 = vmatprep.subr.mxu0 0.0
  %1433 = vmatpush1.msra.mxu0 0.0
  %1434 = vmatprep.subr.mxu0 0.0
  %1435 = vmatpush1.msra.mxu0 0.0
  %1436 = vmatprep.subr.mxu0 0.0
  %1437 = vmatpush1.msra.mxu0 0.0
  %1438 = vmatprep.subr.mxu0 0.0
  %1439 = vmatpush1.msra.mxu0 0.0
  %1440 = vmatprep.subr.mxu0 0.0
  %1441 = vmatpush1.msra.mxu0 0.0
  %1442 = vmatprep.mubr.f32.mxu0 0.0
  %1443 = vmatmul.mubr.f32.gmra.mrb[0].mxu0 %v1302
  %v1444 = vpop.f32.mrb[0].mxu0
  %v1445 = vadd.f32 0.0, %v1444
  %v1446 = vpop.f32.mrb[0].mxu0
  %v1447 = vadd.f32 0.0, %v1446
  %1448 = vdwg.mxu0
  %v1449 = vadd.f32 %v1303, %v1374
  %v1450 = vadd.f32 %v1304, %v1376
  %v1451 = vadd.f32 %v1305, %v1445
  %v1452 = vadd.f32 %v1306, %v1447
  %v1453 = vmul.f32 %v1449, 0.5
  %v1454 = vtanh.pop %v1453
  %v1455 = vmul.f32 %v1454, 0.5
  %v1456 = vadd.f32 %v1455, 0.5
  %v1457 = vmul.f32 %v1450, 0.5
  %v1458 = vtanh.pop %v1457
  %v1459 = vmul.f32 %v1458, 0.5
  %v1460 = vadd.f32 %v1459, 0.5
  %v1461 = vtanh.pop %v1451
  %v1462 = vmul.f32 %v1452, 0.5
  %v1463 = vtanh.pop %v1462
  %v1464 = vmul.f32 %v1463, 0.5
  %v1465 = vadd.f32 %v1464, 0.5
  %v1466 = vmul.f32 %v1460, %v1300
  %v1467 = vmul.f32 %v1456, %v1461
  %v1468 = vadd.f32 %v1466, %v1467
  %v1469 = vtanh.pop %v1468
  %v1470 = vmul.f32 %v1465, %v1469
  %v1471 = vld [vmem:[#allocation2 + $0xc0] sm:$0xff]
  %v1472 = vld [vmem:[#allocation2 + $0xc8] sm:$0xff]
  %v1473 = vld [vmem:[#allocation2 + $0xd0] sm:$0xff]
  %v1474 = vld [vmem:[#allocation2 + $0xd8] sm:$0xff]
  %1475 = vmatprep.subr.mxu0 %v404
  %1476 = vmatpush1.msra.mxu0 %v403
  %1477 = vmatprep.subr.mxu0 %v408
  %1478 = vmatpush1.msra.mxu0 %v407
  %1479 = vmatprep.subr.mxu0 %v412
  %1480 = vmatpush1.msra.mxu0 %v411
  %1481 = vmatprep.subr.mxu0 %v416
  %1482 = vmatpush1.msra.mxu0 %v415
  %1483 = vmatprep.subr.mxu0 %v420
  %1484 = vmatpush1.msra.mxu0 %v419
  %1485 = vmatprep.subr.mxu0 %v424
  %1486 = vmatpush1.msra.mxu0 %v423
  %1487 = vmatprep.subr.mxu0 %v428
  %1488 = vmatpush1.msra.mxu0 %v427
  %1489 = vmatprep.subr.mxu0 %v432
  %1490 = vmatpush1.msra.mxu0 %v431
  %1491 = vmatprep.subr.mxu0 %v436
  %1492 = vmatpush1.msra.mxu0 %v435
  %1493 = vmatprep.subr.mxu0 %v440
  %1494 = vmatpush1.msra.mxu0 %v439
  %1495 = vmatprep.subr.mxu0 %v444
  %1496 = vmatpush1.msra.mxu0 %v443
  %1497 = vmatprep.subr.mxu0 %v448
  %1498 = vmatpush1.msra.mxu0 %v447
  %1499 = vmatprep.subr.mxu0 %v452
  %1500 = vmatpush1.msra.mxu0 %v451
  %1501 = vmatprep.subr.mxu0 %v456
  %1502 = vmatpush1.msra.mxu0 %v455
  %1503 = vmatprep.subr.mxu0 %v460
  %1504 = vmatpush1.msra.mxu0 %v459
  %1505 = vmatprep.subr.mxu0 %v464
  %1506 = vmatpush1.msra.mxu0 %v463
  %1507 = vmatprep.subr.mxu0 0.0
  %1508 = vmatpush1.msra.mxu0 0.0
  %1509 = vmatprep.subr.mxu0 0.0
  %1510 = vmatpush1.msra.mxu0 0.0
  %1511 = vmatprep.subr.mxu0 0.0
  %1512 = vmatpush1.msra.mxu0 0.0
  %1513 = vmatprep.subr.mxu0 0.0
  %1514 = vmatpush1.msra.mxu0 0.0
  %1515 = vmatprep.subr.mxu0 0.0
  %1516 = vmatpush1.msra.mxu0 0.0
  %1517 = vmatprep.subr.mxu0 0.0
  %1518 = vmatpush1.msra.mxu0 0.0
  %1519 = vmatprep.subr.mxu0 0.0
  %1520 = vmatpush1.msra.mxu0 0.0
  %1521 = vmatprep.subr.mxu0 0.0
  %1522 = vmatpush1.msra.mxu0 0.0
  %1523 = vmatprep.subr.mxu0 0.0
  %1524 = vmatpush1.msra.mxu0 0.0
  %1525 = vmatprep.subr.mxu0 0.0
  %1526 = vmatpush1.msra.mxu0 0.0
  %1527 = vmatprep.subr.mxu0 0.0
  %1528 = vmatpush1.msra.mxu0 0.0
  %1529 = vmatprep.subr.mxu0 0.0
  %1530 = vmatpush1.msra.mxu0 0.0
  %1531 = vmatprep.subr.mxu0 0.0
  %1532 = vmatpush1.msra.mxu0 0.0
  %1533 = vmatprep.subr.mxu0 0.0
  %1534 = vmatpush1.msra.mxu0 0.0
  %1535 = vmatprep.subr.mxu0 0.0
  %1536 = vmatpush1.msra.mxu0 0.0
  %1537 = vmatprep.subr.mxu0 0.0
  %1538 = vmatpush1.msra.mxu0 0.0
  %1539 = vmatprep.mubr.f32.mxu0 0.0
  %1540 = vmatmul.mubr.f32.gmra.mrb[0].mxu0 %v1470
  %v1541 = vpop.f32.mrb[0].mxu0
  %v1542 = vadd.f32 0.0, %v1541
  %v1543 = vpop.f32.mrb[0].mxu0
  %v1544 = vadd.f32 0.0, %v1543
  %1545 = vdwg.mxu0
  %1546 = vmatprep.subr.mxu0 %v406
  %1547 = vmatpush1.msra.mxu0 %v405
  %1548 = vmatprep.subr.mxu0 %v410
  %1549 = vmatpush1.msra.mxu0 %v409
  %1550 = vmatprep.subr.mxu0 %v414
  %1551 = vmatpush1.msra.mxu0 %v413
  %1552 = vmatprep.subr.mxu0 %v418
  %1553 = vmatpush1.msra.mxu0 %v417
  %1554 = vmatprep.subr.mxu0 %v422
  %1555 = vmatpush1.msra.mxu0 %v421
  %1556 = vmatprep.subr.mxu0 %v426
  %1557 = vmatpush1.msra.mxu0 %v425
  %1558 = vmatprep.subr.mxu0 %v430
  %1559 = vmatpush1.msra.mxu0 %v429
  %1560 = vmatprep.subr.mxu0 %v434
  %1561 = vmatpush1.msra.mxu0 %v433
  %1562 = vmatprep.subr.mxu0 %v438
  %1563 = vmatpush1.msra.mxu0 %v437
  %1564 = vmatprep.subr.mxu0 %v442
  %1565 = vmatpush1.msra.mxu0 %v441
  %1566 = vmatprep.subr.mxu0 %v446
  %1567 = vmatpush1.msra.mxu0 %v445
  %1568 = vmatprep.subr.mxu0 %v450
  %1569 = vmatpush1.msra.mxu0 %v449
  %1570 = vmatprep.subr.mxu0 %v454
  %1571 = vmatpush1.msra.mxu0 %v453
  %1572 = vmatprep.subr.mxu0 %v458
  %1573 = vmatpush1.msra.mxu0 %v457
  %1574 = vmatprep.subr.mxu0 %v462
  %1575 = vmatpush1.msra.mxu0 %v461
  %1576 = vmatprep.subr.mxu0 %v466
  %1577 = vmatpush1.msra.mxu0 %v465
  %1578 = vmatprep.subr.mxu0 0.0
  %1579 = vmatpush1.msra.mxu0 0.0
  %1580 = vmatprep.subr.mxu0 0.0
  %1581 = vmatpush1.msra.mxu0 0.0
  %1582 = vmatprep.subr.mxu0 0.0
  %1583 = vmatpush1.msra.mxu0 0.0
  %1584 = vmatprep.subr.mxu0 0.0
  %1585 = vmatpush1.msra.mxu0 0.0
  %1586 = vmatprep.subr.mxu0 0.0
  %1587 = vmatpush1.msra.mxu0 0.0
  %1588 = vmatprep.subr.mxu0 0.0
  %1589 = vmatpush1.msra.mxu0 0.0
  %1590 = vmatprep.subr.mxu0 0.0
  %1591 = vmatpush1.msra.mxu0 0.0
  %1592 = vmatprep.subr.mxu0 0.0
  %1593 = vmatpush1.msra.mxu0 0.0
  %1594 = vmatprep.subr.mxu0 0.0
  %1595 = vmatpush1.msra.mxu0 0.0
  %1596 = vmatprep.subr.mxu0 0.0
  %1597 = vmatpush1.msra.mxu0 0.0
  %1598 = vmatprep.subr.mxu0 0.0
  %1599 = vmatpush1.msra.mxu0 0.0
  %1600 = vmatprep.subr.mxu0 0.0
  %1601 = vmatpush1.msra.mxu0 0.0
  %1602 = vmatprep.subr.mxu0 0.0
  %1603 = vmatpush1.msra.mxu0 0.0
  %1604 = vmatprep.subr.mxu0 0.0
  %1605 = vmatpush1.msra.mxu0 0.0
  %1606 = vmatprep.subr.mxu0 0.0
  %1607 = vmatpush1.msra.mxu0 0.0
  %1608 = vmatprep.subr.mxu0 0.0
  %1609 = vmatpush1.msra.mxu0 0.0
  %1610 = vmatprep.mubr.f32.mxu0 0.0
  %1611 = vmatmul.mubr.f32.gmra.mrb[0].mxu0 %v1470
  %v1612 = vpop.f32.mrb[0].mxu0
  %v1613 = vadd.f32 0.0, %v1612
  %v1614 = vpop.f32.mrb[0].mxu0
  %v1615 = vadd.f32 0.0, %v1614
  %1616 = vdwg.mxu0
  %v1617 = vadd.f32 %v1471, %v1542
  %v1618 = vadd.f32 %v1472, %v1544
  %v1619 = vadd.f32 %v1473, %v1613
  %v1620 = vadd.f32 %v1474, %v1615
  %v1621 = vmul.f32 %v1617, 0.5
  %v1622 = vtanh.pop %v1621
  %v1623 = vmul.f32 %v1622, 0.5
  %v1624 = vadd.f32 %v1623, 0.5
  %v1625 = vmul.f32 %v1618, 0.5
  %v1626 = vtanh.pop %v1625
  %v1627 = vmul.f32 %v1626, 0.5
  %v1628 = vadd.f32 %v1627, 0.5
  %v1629 = vtanh.pop %v1619
  %v1630 = vmul.f32 %v1620, 0.5
  %v1631 = vtanh.pop %v1630
  %v1632 = vmul.f32 %v1631, 0.5
  %v1633 = vadd.f32 %v1632, 0.5
  %v1634 = vmul.f32 %v1628, %v1468
  %v1635 = vmul.f32 %v1624, %v1629
  %v1636 = vadd.f32 %v1634, %v1635
  %v1637 = vtanh.pop %v1636
  %v1638 = vmul.f32 %v1633, %v1637
  %v1639 = vld [vmem:[#allocation2 + $0xe0] sm:$0xff]
  %v1640 = vld [vmem:[#allocation2 + $0xe8] sm:$0xff]
  %v1641 = vld [vmem:[#allocation2 + $0xf0] sm:$0xff]
  %v1642 = vld [vmem:[#allocation2 + $0xf8] sm:$0xff]
  %1643 = vmatprep.subr.mxu0 %v404
  %1644 = vmatpush1.msra.mxu0 %v403
  %1645 = vmatprep.subr.mxu0 %v408
  %1646 = vmatpush1.msra.mxu0 %v407
  %1647 = vmatprep.subr.mxu0 %v412
  %1648 = vmatpush1.msra.mxu0 %v411
  %1649 = vmatprep.subr.mxu0 %v416
  %1650 = vmatpush1.msra.mxu0 %v415
  %1651 = vmatprep.subr.mxu0 %v420
  %1652 = vmatpush1.msra.mxu0 %v419
  %1653 = vmatprep.subr.mxu0 %v424
  %1654 = vmatpush1.msra.mxu0 %v423
  %1655 = vmatprep.subr.mxu0 %v428
  %1656 = vmatpush1.msra.mxu0 %v427
  %1657 = vmatprep.subr.mxu0 %v432
  %1658 = vmatpush1.msra.mxu0 %v431
  %1659 = vmatprep.subr.mxu0 %v436
  %1660 = vmatpush1.msra.mxu0 %v435
  %1661 = vmatprep.subr.mxu0 %v440
  %1662 = vmatpush1.msra.mxu0 %v439
  %1663 = vmatprep.subr.mxu0 %v444
  %1664 = vmatpush1.msra.mxu0 %v443
  %1665 = vmatprep.subr.mxu0 %v448
  %1666 = vmatpush1.msra.mxu0 %v447
  %1667 = vmatprep.subr.mxu0 %v452
  %1668 = vmatpush1.msra.mxu0 %v451
  %1669 = vmatprep.subr.mxu0 %v456
  %1670 = vmatpush1.msra.mxu0 %v455
  %1671 = vmatprep.subr.mxu0 %v460
  %1672 = vmatpush1.msra.mxu0 %v459
  %1673 = vmatprep.subr.mxu0 %v464
  %1674 = vmatpush1.msra.mxu0 %v463
  %1675 = vmatprep.subr.mxu0 0.0
  %1676 = vmatpush1.msra.mxu0 0.0
  %1677 = vmatprep.subr.mxu0 0.0
  %1678 = vmatpush1.msra.mxu0 0.0
  %1679 = vmatprep.subr.mxu0 0.0
  %1680 = vmatpush1.msra.mxu0 0.0
  %1681 = vmatprep.subr.mxu0 0.0
  %1682 = vmatpush1.msra.mxu0 0.0
  %1683 = vmatprep.subr.mxu0 0.0
  %1684 = vmatpush1.msra.mxu0 0.0
  %1685 = vmatprep.subr.mxu0 0.0
  %1686 = vmatpush1.msra.mxu0 0.0
  %1687 = vmatprep.subr.mxu0 0.0
  %1688 = vmatpush1.msra.mxu0 0.0
  %1689 = vmatprep.subr.mxu0 0.0
  %1690 = vmatpush1.msra.mxu0 0.0
  %1691 = vmatprep.subr.mxu0 0.0
  %1692 = vmatpush1.msra.mxu0 0.0
  %1693 = vmatprep.subr.mxu0 0.0
  %1694 = vmatpush1.msra.mxu0 0.0
  %1695 = vmatprep.subr.mxu0 0.0
  %1696 = vmatpush1.msra.mxu0 0.0
  %1697 = vmatprep.subr.mxu0 0.0
  %1698 = vmatpush1.msra.mxu0 0.0
  %1699 = vmatprep.subr.mxu0 0.0
  %1700 = vmatpush1.msra.mxu0 0.0
  %1701 = vmatprep.subr.mxu0 0.0
  %1702 = vmatpush1.msra.mxu0 0.0
  %1703 = vmatprep.subr.mxu0 0.0
  %1704 = vmatpush1.msra.mxu0 0.0
  %1705 = vmatprep.subr.mxu0 0.0
  %1706 = vmatpush1.msra.mxu0 0.0
  %1707 = vmatprep.mubr.f32.mxu0 0.0
  %1708 = vmatmul.mubr.f32.gmra.mrb[0].mxu0 %v1638
  %v1709 = vpop.f32.mrb[0].mxu0
  %v1710 = vadd.f32 0.0, %v1709
  %v1711 = vpop.f32.mrb[0].mxu0
  %v1712 = vadd.f32 0.0, %v1711
  %1713 = vdwg.mxu0
  %1714 = vmatprep.subr.mxu0 %v406
  %1715 = vmatpush1.msra.mxu0 %v405
  %1716 = vmatprep.subr.mxu0 %v410
  %1717 = vmatpush1.msra.mxu0 %v409
  %1718 = vmatprep.subr.mxu0 %v414
  %1719 = vmatpush1.msra.mxu0 %v413
  %1720 = vmatprep.subr.mxu0 %v418
  %1721 = vmatpush1.msra.mxu0 %v417
  %1722 = vmatprep.subr.mxu0 %v422
  %1723 = vmatpush1.msra.mxu0 %v421
  %1724 = vmatprep.subr.mxu0 %v426
  %1725 = vmatpush1.msra.mxu0 %v425
  %1726 = vmatprep.subr.mxu0 %v430
  %1727 = vmatpush1.msra.mxu0 %v429
  %1728 = vmatprep.subr.mxu0 %v434
  %1729 = vmatpush1.msra.mxu0 %v433
  %1730 = vmatprep.subr.mxu0 %v438
  %1731 = vmatpush1.msra.mxu0 %v437
  %1732 = vmatprep.subr.mxu0 %v442
  %1733 = vmatpush1.msra.mxu0 %v441
  %1734 = vmatprep.subr.mxu0 %v446
  %1735 = vmatpush1.msra.mxu0 %v445
  %1736 = vmatprep.subr.mxu0 %v450
  %1737 = vmatpush1.msra.mxu0 %v449
  %1738 = vmatprep.subr.mxu0 %v454
  %1739 = vmatpush1.msra.mxu0 %v453
  %1740 = vmatprep.subr.mxu0 %v458
  %1741 = vmatpush1.msra.mxu0 %v457
  %1742 = vmatprep.subr.mxu0 %v462
  %1743 = vmatpush1.msra.mxu0 %v461
  %1744 = vmatprep.subr.mxu0 %v466
  %1745 = vmatpush1.msra.mxu0 %v465
  %1746 = vmatprep.subr.mxu0 0.0
  %1747 = vmatpush1.msra.mxu0 0.0
  %1748 = vmatprep.subr.mxu0 0.0
  %1749 = vmatpush1.msra.mxu0 0.0
  %1750 = vmatprep.subr.mxu0 0.0
  %1751 = vmatpush1.msra.mxu0 0.0
  %1752 = vmatprep.subr.mxu0 0.0
  %1753 = vmatpush1.msra.mxu0 0.0
  %1754 = vmatprep.subr.mxu0 0.0
  %1755 = vmatpush1.msra.mxu0 0.0
  %1756 = vmatprep.subr.mxu0 0.0
  %1757 = vmatpush1.msra.mxu0 0.0
  %1758 = vmatprep.subr.mxu0 0.0
  %1759 = vmatpush1.msra.mxu0 0.0
  %1760 = vmatprep.subr.mxu0 0.0
  %1761 = vmatpush1.msra.mxu0 0.0
  %1762 = vmatprep.subr.mxu0 0.0
  %1763 = vmatpush1.msra.mxu0 0.0
  %1764 = vmatprep.subr.mxu0 0.0
  %1765 = vmatpush1.msra.mxu0 0.0
  %1766 = vmatprep.subr.mxu0 0.0
  %1767 = vmatpush1.msra.mxu0 0.0
  %1768 = vmatprep.subr.mxu0 0.0
  %1769 = vmatpush1.msra.mxu0 0.0
  %1770 = vmatprep.subr.mxu0 0.0
  %1771 = vmatpush1.msra.mxu0 0.0
  %1772 = vmatprep.subr.mxu0 0.0
  %1773 = vmatpush1.msra.mxu0 0.0
  %1774 = vmatprep.subr.mxu0 0.0
  %1775 = vmatpush1.msra.mxu0 0.0
  %1776 = vmatprep.subr.mxu0 0.0
  %1777 = vmatpush1.msra.mxu0 0.0
  %1778 = vmatprep.mubr.f32.mxu0 0.0
  %1779 = vmatmul.mubr.f32.gmra.mrb[0].mxu0 %v1638
  %v1780 = vpop.f32.mrb[0].mxu0
  %v1781 = vadd.f32 0.0, %v1780
  %v1782 = vpop.f32.mrb[0].mxu0
  %v1783 = vadd.f32 0.0, %v1782
  %1784 = vdwg.mxu0
  %v1785 = vadd.f32 %v1639, %v1710
  %v1786 = vadd.f32 %v1640, %v1712
  %v1787 = vadd.f32 %v1641, %v1781
  %v1788 = vadd.f32 %v1642, %v1783
  %v1789 = vmul.f32 %v1785, 0.5
  %v1790 = vtanh.pop %v1789
  %v1791 = vmul.f32 %v1790, 0.5
  %v1792 = vadd.f32 %v1791, 0.5
  %v1793 = vmul.f32 %v1786, 0.5
  %v1794 = vtanh.pop %v1793
  %v1795 = vmul.f32 %v1794, 0.5
  %v1796 = vadd.f32 %v1795, 0.5
  %v1797 = vtanh.pop %v1787
  %v1798 = vmul.f32 %v1788, 0.5
  %v1799 = vtanh.pop %v1798
  %v1800 = vmul.f32 %v1799, 0.5
  %v1801 = vadd.f32 %v1800, 0.5
  %v1802 = vmul.f32 %v1796, %v1636
  %v1803 = vmul.f32 %v1792, %v1797
  %v1804 = vadd.f32 %v1802, %v1803
  %v1805 = vtanh.pop %v1804
  %v1806 = vmul.f32 %v1801, %v1805
  %v1807 = vld [vmem:[%s5] sm:$0xff]
  %v1808 = vld [vmem:[%s5 + $0x8] sm:$0xff]
  %v1809 = vld [vmem:[%s5 + $0x10] sm:$0xff]
  %v1810 = vld [vmem:[%s5 + $0x18] sm:$0xff]
  %v1811 = vld [vmem:[%s5 + $0x20] sm:$0xf]
  %v1812 = vld [vmem:[%s5 + $0x28] sm:$0xf]
  %v1813 = vld [vmem:[%s5 + $0x30] sm:$0xf]
  %v1814 = vld [vmem:[%s5 + $0x38] sm:$0xf]
  %v1815 = vld [vmem:[%s6] sm:$0xf]
  %v1817 = vlaneseq
  %v1818 = vshrl.u32 %v1817, 7
  %v1819 = vsub.s32 0, %v1818
  %v1820 = vrot.slane %v1815, %v1819
  %v1821 = vlaneseq
  %v1822 = vshrl.u32 %v1821, 7
  %v1823 = vsub.s32 2, %v1822
  %v1824 = vrot.slane %v1815, %v1823
  %v1825 = vlaneseq
  %v1826 = vshrl.u32 %v1825, 7
  %v1827 = vsub.s32 3, %v1826
  %v1828 = vrot.slane %v1815, %v1827
  %v1833 = vsel %vm128, %v1811, 0
  %v1836 = vsel %vm128, %v1812, 0
  %v1839 = vsel %vm128, %v1813, 0
  %v1842 = vsel %vm128, %v1814, 0
  %1844 = vmatprep.subr.mxu0 %v1808
  %1845 = vmatpush1.msra.mxu0 %v1807
  %1846 = vmatprep.subr.mxu0 %v1836
  %1847 = vmatpush1.msra.mxu0 %v1833
  %1848 = vmatprep.subr.mxu0 0.0
  %1849 = vmatpush1.msra.mxu0 0.0
  %1850 = vmatprep.subr.mxu0 0.0
  %1851 = vmatpush1.msra.mxu0 0.0
  %1852 = vmatprep.subr.mxu0 0.0
  %1853 = vmatpush1.msra.mxu0 0.0
  %1854 = vmatprep.subr.mxu0 0.0
  %1855 = vmatpush1.msra.mxu0 0.0
  %1856 = vmatprep.subr.mxu0 0.0
  %1857 = vmatpush1.msra.mxu0 0.0
  %1858 = vmatprep.subr.mxu0 0.0
  %1859 = vmatpush1.msra.mxu0 0.0
  %1860 = vmatprep.subr.mxu0 0.0
  %1861 = vmatpush1.msra.mxu0 0.0
  %1862 = vmatprep.subr.mxu0 0.0
  %1863 = vmatpush1.msra.mxu0 0.0
  %1864 = vmatprep.subr.mxu0 0.0
  %1865 = vmatpush1.msra.mxu0 0.0
  %1866 = vmatprep.subr.mxu0 0.0
  %1867 = vmatpush1.msra.mxu0 0.0
  %1868 = vmatprep.subr.mxu0 0.0
  %1869 = vmatpush1.msra.mxu0 0.0
  %1870 = vmatprep.subr.mxu0 0.0
  %1871 = vmatpush1.msra.mxu0 0.0
  %1872 = vmatprep.subr.mxu0 0.0
  %1873 = vmatpush1.msra.mxu0 0.0
  %1874 = vmatprep.subr.mxu0 0.0
  %1875 = vmatpush1.msra.mxu0 0.0
  %1876 = vmatprep.subr.mxu0 0.0
  %1877 = vmatpush1.msra.mxu0 0.0
  %1878 = vmatprep.subr.mxu0 0.0
  %1879 = vmatpush1.msra.mxu0 0.0
  %1880 = vmatprep.subr.mxu0 0.0
  %1881 = vmatpush1.msra.mxu0 0.0
  %1882 = vmatprep.subr.mxu0 0.0
  %1883 = vmatpush1.msra.mxu0 0.0
  %1884 = vmatprep.subr.mxu0 0.0
  %1885 = vmatpush1.msra.mxu0 0.0
  %1886 = vmatprep.subr.mxu0 0.0
  %1887 = vmatpush1.msra.mxu0 0.0
  %1888 = vmatprep.subr.mxu0 0.0
  %1889 = vmatpush1.msra.mxu0 0.0
  %1890 = vmatprep.subr.mxu0 0.0
  %1891 = vmatpush1.msra.mxu0 0.0
  %1892 = vmatprep.subr.mxu0 0.0
  %1893 = vmatpush1.msra.mxu0 0.0
  %1894 = vmatprep.subr.mxu0 0.0
  %1895 = vmatpush1.msra.mxu0 0.0
  %1896 = vmatprep.subr.mxu0 0.0
  %1897 = vmatpush1.msra.mxu0 0.0
  %1898 = vmatprep.subr.mxu0 0.0
  %1899 = vmatpush1.msra.mxu0 0.0
  %1900 = vmatprep.subr.mxu0 0.0
  %1901 = vmatpush1.msra.mxu0 0.0
  %1902 = vmatprep.subr.mxu0 0.0
  %1903 = vmatpush1.msra.mxu0 0.0
  %1904 = vmatprep.subr.mxu0 0.0
  %1905 = vmatpush1.msra.mxu0 0.0
  %1906 = vmatprep.subr.mxu0 0.0
  %1907 = vmatpush1.msra.mxu0 0.0
  %1908 = vmatprep.mubr.f32.mxu0 0.0
  %1909 = vmatmul.mubr.f32.gmra.mrb[0].mxu0 %v126
  %v1910 = vpop.f32.mrb[0].mxu0
  %v1911 = vadd.f32 %v1820, %v1910
  %v1912 = vpop.f32.mrb[0].mxu0
  %1913 = vdwg.mxu0
  %1914 = vmatprep.subr.mxu0 %v1810
  %1915 = vmatpush1.msra.mxu0 %v1809
  %1916 = vmatprep.subr.mxu0 %v1842
  %1917 = vmatpush1.msra.mxu0 %v1839
  %1918 = vmatprep.subr.mxu0 0.0
  %1919 = vmatpush1.msra.mxu0 0.0
  %1920 = vmatprep.subr.mxu0 0.0
  %1921 = vmatpush1.msra.mxu0 0.0
  %1922 = vmatprep.subr.mxu0 0.0
  %1923 = vmatpush1.msra.mxu0 0.0
  %1924 = vmatprep.subr.mxu0 0.0
  %1925 = vmatpush1.msra.mxu0 0.0
  %1926 = vmatprep.subr.mxu0 0.0
  %1927 = vmatpush1.msra.mxu0 0.0
  %1928 = vmatprep.subr.mxu0 0.0
  %1929 = vmatpush1.msra.mxu0 0.0
  %1930 = vmatprep.subr.mxu0 0.0
  %1931 = vmatpush1.msra.mxu0 0.0
  %1932 = vmatprep.subr.mxu0 0.0
  %1933 = vmatpush1.msra.mxu0 0.0
  %1934 = vmatprep.subr.mxu0 0.0
  %1935 = vmatpush1.msra.mxu0 0.0
  %1936 = vmatprep.subr.mxu0 0.0
  %1937 = vmatpush1.msra.mxu0 0.0
  %1938 = vmatprep.subr.mxu0 0.0
  %1939 = vmatpush1.msra.mxu0 0.0
  %1940 = vmatprep.subr.mxu0 0.0
  %1941 = vmatpush1.msra.mxu0 0.0
  %1942 = vmatprep.subr.mxu0 0.0
  %1943 = vmatpush1.msra.mxu0 0.0
  %1944 = vmatprep.subr.mxu0 0.0
  %1945 = vmatpush1.msra.mxu0 0.0
  %1946 = vmatprep.subr.mxu0 0.0
  %1947 = vmatpush1.msra.mxu0 0.0
  %1948 = vmatprep.subr.mxu0 0.0
  %1949 = vmatpush1.msra.mxu0 0.0
  %1950 = vmatprep.subr.mxu0 0.0
  %1951 = vmatpush1.msra.mxu0 0.0
  %1952 = vmatprep.subr.mxu0 0.0
  %1953 = vmatpush1.msra.mxu0 0.0
  %1954 = vmatprep.subr.mxu0 0.0
  %1955 = vmatpush1.msra.mxu0 0.0
  %1956 = vmatprep.subr.mxu0 0.0
  %1957 = vmatpush1.msra.mxu0 0.0
  %1958 = vmatprep.subr.mxu0 0.0
  %1959 = vmatpush1.msra.mxu0 0.0
  %1960 = vmatprep.subr.mxu0 0.0
  %1961 = vmatpush1.msra.mxu0 0.0
  %1962 = vmatprep.subr.mxu0 0.0
  %1963 = vmatpush1.msra.mxu0 0.0
  %1964 = vmatprep.subr.mxu0 0.0
  %1965 = vmatpush1.msra.mxu0 0.0
  %1966 = vmatprep.subr.mxu0 0.0
  %1967 = vmatpush1.msra.mxu0 0.0
  %1968 = vmatprep.subr.mxu0 0.0
  %1969 = vmatpush1.msra.mxu0 0.0
  %1970 = vmatprep.subr.mxu0 0.0
  %1971 = vmatpush1.msra.mxu0 0.0
  %1972 = vmatprep.subr.mxu0 0.0
  %1973 = vmatpush1.msra.mxu0 0.0
  %1974 = vmatprep.subr.mxu0 0.0
  %1975 = vmatpush1.msra.mxu0 0.0
  %1976 = vmatprep.subr.mxu0 0.0
  %1977 = vmatpush1.msra.mxu0 0.0
  %1978 = vmatprep.mubr.f32.mxu0 0.0
  %1979 = vmatmul.mubr.f32.gmra.mrb[0].mxu0 %v126
  %v1980 = vpop.f32.mrb[0].mxu0
  %v1981 = vadd.f32 %v1824, %v1980
  %v1982 = vpop.f32.mrb[0].mxu0
  %v1983 = vadd.f32 %v1828, %v1982
  %1984 = vdwg.mxu0
  %v1985 = vmul.f32 %v1911, 0.5
  %v1986 = vtanh.pop %v1985
  %v1987 = vmul.f32 %v1986, 0.5
  %v1988 = vadd.f32 %v1987, 0.5
  %v1989 = vtanh.pop %v1981
  %v1990 = vmul.f32 %v1988, %v1989
  %v1991 = vmul.f32 %v1983, 0.5
  %v1992 = vtanh.pop %v1991
  %v1993 = vmul.f32 %v1992, 0.5
  %v1994 = vadd.f32 %v1993, 0.5
  %v1995 = vtanh.pop %v1990
  %v1996 = vmul.f32 %v1994, %v1995
  %1998 = vrot.lane.b32.xlu0 %v1806, 96
  %v1999 = vpop.permute.xlu0 %1998
  %v2001 = vadd.f32 %v1806, %v1999
  %2002 = vrot.lane.b32.xlu0 %v1806, 64
  %v2003 = vpop.permute.xlu0 %2002
  %v2005 = vadd.f32 %v2001, %v2003
  %2007 = vrot.lane.b32.xlu0 %v1996, 96
  %v2008 = vpop.permute.xlu0 %2007
  %v2010 = vadd.f32 %v1996, %v2008
  %2011 = vrot.lane.b32.xlu0 %v1996, 64
  %v2012 = vpop.permute.xlu0 %2011
  %v2014 = vadd.f32 %v2010, %v2012
  %2016 = vrot.lane.b32.xlu0 %v2014, 32
  %v2017 = vpop.permute.xlu0 %2016
  %vm2019 = vcmask 261120
  %v2020 = vsel %vm2019, %v2005, %v2017
  %vm2021 = vcmask 523264
  %v2022 = vsel %vm2021, %v2020, %v1999
  %vm2023 = vcmask 785408
  %v2024 = vsel %vm2023, %v2022, %v1996
  %v2025 = vld [vmem:[%s7] sm:$0xff]
  %v2026 = vld [vmem:[%s7 + $0x8] sm:$0xff]
  %v2027 = vld [vmem:[%s7 + $0x10] sm:$0xff]
  %v2028 = vld [vmem:[%s7 + $0x18] sm:$0xff]
  %v2029 = vld [vmem:[%s7 + $0x20] sm:$0xff]
  %v2030 = vld [vmem:[%s7 + $0x28] sm:$0xff]
  %v2031 = vld [vmem:[%s7 + $0x30] sm:$0xff]
  %v2032 = vld [vmem:[%s7 + $0x38] sm:$0xff]
  %v2033 = vld [vmem:[%s7 + $0x40] sm:$0xff]
  %v2034 = vld [vmem:[%s7 + $0x48] sm:$0xff]
  %v2035 = vld [vmem:[%s7 + $0x50] sm:$0xff]
  %v2036 = vld [vmem:[%s7 + $0x58] sm:$0xff]
  %v2037 = vld [vmem:[%s7 + $0x60] sm:$0xff]
  %v2038 = vld [vmem:[%s7 + $0x68] sm:$0xff]
  %v2039 = vld [vmem:[%s7 + $0x70] sm:$0xff]
  %v2040 = vld [vmem:[%s7 + $0x78] sm:$0xff]
  %v2041 = vld [vmem:[%s7 + $0x80] sm:$0xff]
  %v2042 = vld [vmem:[%s7 + $0x88] sm:$0xff]
  %v2043 = vld [vmem:[%s7 + $0x90] sm:$0xff]
  %v2044 = vld [vmem:[%s7 + $0x98] sm:$0xff]
  %v2045 = vld [vmem:[%s7 + $0xa0] sm:$0xff]
  %v2046 = vld [vmem:[%s7 + $0xa8] sm:$0xff]
  %v2047 = vld [vmem:[%s7 + $0xb0] sm:$0xff]
  %v2048 = vld [vmem:[%s7 + $0xb8] sm:$0xff]
  %v2049 = vld [vmem:[%s7 + $0xc0] sm:$0xff]
  %v2050 = vld [vmem:[%s7 + $0xc8] sm:$0xff]
  %v2051 = vld [vmem:[%s7 + $0xd0] sm:$0xff]
  %v2052 = vld [vmem:[%s7 + $0xd8] sm:$0xff]
  %v2053 = vld [vmem:[%s7 + $0xe0] sm:$0xff]
  %v2054 = vld [vmem:[%s7 + $0xe8] sm:$0xff]
  %v2055 = vld [vmem:[%s7 + $0xf0] sm:$0xff]
  %v2056 = vld [vmem:[%s7 + $0xf8] sm:$0xff]
  %v2057 = vld [vmem:[%s8] sm:$0x3]
  %v2059 = vlaneseq
  %v2060 = vshrl.u32 %v2059, 7
  %v2061 = vsub.s32 0, %v2060
  %v2062 = vrot.slane %v2057, %v2061
  %v2063 = vlaneseq
  %v2064 = vshrl.u32 %v2063, 7
  %v2065 = vsub.s32 1, %v2064
  %v2066 = vrot.slane %v2057, %v2065
  %2069 = vmatprep.subr.mxu0 %v2026
  %2070 = vmatpush1.msra.mxu0 %v2025
  %2071 = vmatprep.subr.mxu0 %v2028
  %2072 = vmatpush1.msra.mxu0 %v2027
  %2073 = vmatprep.subr.mxu0 %v2030
  %2074 = vmatpush1.msra.mxu0 %v2029
  %2075 = vmatprep.subr.mxu0 %v2032
  %2076 = vmatpush1.msra.mxu0 %v2031
  %2077 = vmatprep.subr.mxu0 %v2034
  %2078 = vmatpush1.msra.mxu0 %v2033
  %2079 = vmatprep.subr.mxu0 %v2036
  %2080 = vmatpush1.msra.mxu0 %v2035
  %2081 = vmatprep.subr.mxu0 %v2038
  %2082 = vmatpush1.msra.mxu0 %v2037
  %2083 = vmatprep.subr.mxu0 %v2040
  %2084 = vmatpush1.msra.mxu0 %v2039
  %2085 = vmatprep.subr.mxu0 %v2042
  %2086 = vmatpush1.msra.mxu0 %v2041
  %2087 = vmatprep.subr.mxu0 %v2044
  %2088 = vmatpush1.msra.mxu0 %v2043
  %2089 = vmatprep.subr.mxu0 %v2046
  %2090 = vmatpush1.msra.mxu0 %v2045
  %2091 = vmatprep.subr.mxu0 %v2048
  %2092 = vmatpush1.msra.mxu0 %v2047
  %2093 = vmatprep.subr.mxu0 %v2050
  %2094 = vmatpush1.msra.mxu0 %v2049
  %2095 = vmatprep.subr.mxu0 %v2052
  %2096 = vmatpush1.msra.mxu0 %v2051
  %2097 = vmatprep.subr.mxu0 %v2054
  %2098 = vmatpush1.msra.mxu0 %v2053
  %2099 = vmatprep.subr.mxu0 %v2056
  %2100 = vmatpush1.msra.mxu0 %v2055
  %2101 = vmatprep.subr.mxu0 0.0
  %2102 = vmatpush1.msra.mxu0 0.0
  %2103 = vmatprep.subr.mxu0 0.0
  %2104 = vmatpush1.msra.mxu0 0.0
  %2105 = vmatprep.subr.mxu0 0.0
  %2106 = vmatpush1.msra.mxu0 0.0
  %2107 = vmatprep.subr.mxu0 0.0
  %2108 = vmatpush1.msra.mxu0 0.0
  %2109 = vmatprep.subr.mxu0 0.0
  %2110 = vmatpush1.msra.mxu0 0.0
  %2111 = vmatprep.subr.mxu0 0.0
  %2112 = vmatpush1.msra.mxu0 0.0
  %2113 = vmatprep.subr.mxu0 0.0
  %2114 = vmatpush1.msra.mxu0 0.0
  %2115 = vmatprep.subr.mxu0 0.0
  %2116 = vmatpush1.msra.mxu0 0.0
  %2117 = vmatprep.subr.mxu0 0.0
  %2118 = vmatpush1.msra.mxu0 0.0
  %2119 = vmatprep.subr.mxu0 0.0
  %2120 = vmatpush1.msra.mxu0 0.0
  %2121 = vmatprep.subr.mxu0 0.0
  %2122 = vmatpush1.msra.mxu0 0.0
  %2123 = vmatprep.subr.mxu0 0.0
  %2124 = vmatpush1.msra.mxu0 0.0
  %2125 = vmatprep.subr.mxu0 0.0
  %2126 = vmatpush1.msra.mxu0 0.0
  %2127 = vmatprep.subr.mxu0 0.0
  %2128 = vmatpush1.msra.mxu0 0.0
  %2129 = vmatprep.subr.mxu0 0.0
  %2130 = vmatpush1.msra.mxu0 0.0
  %2131 = vmatprep.subr.mxu0 0.0
  %2132 = vmatpush1.msra.mxu0 0.0
  %2133 = vmatprep.mubr.f32.mxu0 0.0
  %2134 = vmatmul.mubr.f32.gmra.mrb[0].mxu0 %v2024
  %v2135 = vpop.f32.mrb[0].mxu0
  %v2136 = vadd.f32 %v2062, %v2135
  %v2137 = vpop.f32.mrb[0].mxu0
  %v2138 = vadd.f32 %v2066, %v2137
  %2139 = vdwg.mxu0
  %v2140 = vmul.f32 %v2136, 0.5
  %v2141 = vmul.f32 %v2138, 0.5
  %v2142 = vtanh.pop %v2140
  %v2143 = vtanh.pop %v2141
  %v2144 = vmul.f32 %v2142, 0.5
  %v2145 = vmul.f32 %v2143, 0.5
  %v2146 = vadd.f32 %v2144, 0.5
  %v2147 = vadd.f32 %v2145, 0.5
  %v2148 = vld [vmem:[%s9] sm:$0xff]
  %v2149 = vld [vmem:[%s9 + $0x8] sm:$0xff]
  %v2150 = vld [vmem:[%s9 + $0x10] sm:$0xff]
  %v2151 = vld [vmem:[%s9 + $0x18] sm:$0xff]
  %v2152 = vld [vmem:[%s9 + $0x20] sm:$0xff]
  %v2153 = vld [vmem:[%s9 + $0x28] sm:$0xff]
  %v2154 = vld [vmem:[%s9 + $0x30] sm:$0xff]
  %v2155 = vld [vmem:[%s9 + $0x38] sm:$0xff]
  %v2156 = vld [vmem:[%s9 + $0x40] sm:$0xff]
  %v2157 = vld [vmem:[%s9 + $0x48] sm:$0xff]
  %v2158 = vld [vmem:[%s9 + $0x50] sm:$0xff]
  %v2159 = vld [vmem:[%s9 + $0x58] sm:$0xff]
  %v2160 = vld [vmem:[%s9 + $0x60] sm:$0xff]
  %v2161 = vld [vmem:[%s9 + $0x68] sm:$0xff]
  %v2162 = vld [vmem:[%s9 + $0x70] sm:$0xff]
  %v2163 = vld [vmem:[%s9 + $0x78] sm:$0xff]
  %v2164 = vld [vmem:[%s9 + $0x80] sm:$0xff]
  %v2165 = vld [vmem:[%s9 + $0x88] sm:$0xff]
  %v2166 = vld [vmem:[%s9 + $0x90] sm:$0xff]
  %v2167 = vld [vmem:[%s9 + $0x98] sm:$0xff]
  %v2168 = vld [vmem:[%s9 + $0xa0] sm:$0xff]
  %v2169 = vld [vmem:[%s9 + $0xa8] sm:$0xff]
  %v2170 = vld [vmem:[%s9 + $0xb0] sm:$0xff]
  %v2171 = vld [vmem:[%s9 + $0xb8] sm:$0xff]
  %v2172 = vld [vmem:[%s9 + $0xc0] sm:$0xff]
  %v2173 = vld [vmem:[%s9 + $0xc8] sm:$0xff]
  %v2174 = vld [vmem:[%s9 + $0xd0] sm:$0xff]
  %v2175 = vld [vmem:[%s9 + $0xd8] sm:$0xff]
  %v2176 = vld [vmem:[%s9 + $0xe0] sm:$0xff]
  %v2177 = vld [vmem:[%s9 + $0xe8] sm:$0xff]
  %v2178 = vld [vmem:[%s9 + $0xf0] sm:$0xff]
  %v2179 = vld [vmem:[%s9 + $0xf8] sm:$0xff]
  %v2180 = vld [vmem:[%s10] sm:$0x1]
  %v2182 = vlaneseq
  %v2183 = vshrl.u32 %v2182, 7
  %v2184 = vsub.s32 0, %v2183
  %v2185 = vrot.slane %v2180, %v2184
  %2187 = vmatprep.subr.mxu0 0.0
  %2188 = vmatpush1.msra.mxu0 %v2148
  %2189 = vmatprep.subr.mxu0 0.0
  %2190 = vmatpush1.msra.mxu0 %v2149
  %2191 = vmatprep.subr.mxu0 0.0
  %2192 = vmatpush1.msra.mxu0 %v2150
  %2193 = vmatprep.subr.mxu0 0.0
  %2194 = vmatpush1.msra.mxu0 %v2151
  %2195 = vmatprep.subr.mxu0 0.0
  %2196 = vmatpush1.msra.mxu0 %v2152
  %2197 = vmatprep.subr.mxu0 0.0
  %2198 = vmatpush1.msra.mxu0 %v2153
  %2199 = vmatprep.subr.mxu0 0.0
  %2200 = vmatpush1.msra.mxu0 %v2154
  %2201 = vmatprep.subr.mxu0 0.0
  %2202 = vmatpush1.msra.mxu0 %v2155
  %2203 = vmatprep.subr.mxu0 0.0
  %2204 = vmatpush1.msra.mxu0 %v2156
  %2205 = vmatprep.subr.mxu0 0.0
  %2206 = vmatpush1.msra.mxu0 %v2157
  %2207 = vmatprep.subr.mxu0 0.0
  %2208 = vmatpush1.msra.mxu0 %v2158
  %2209 = vmatprep.subr.mxu0 0.0
  %2210 = vmatpush1.msra.mxu0 %v2159
  %2211 = vmatprep.subr.mxu0 0.0
  %2212 = vmatpush1.msra.mxu0 %v2160
  %2213 = vmatprep.subr.mxu0 0.0
  %2214 = vmatpush1.msra.mxu0 %v2161
  %2215 = vmatprep.subr.mxu0 0.0
  %2216 = vmatpush1.msra.mxu0 %v2162
  %2217 = vmatprep.subr.mxu0 0.0
  %2218 = vmatpush1.msra.mxu0 %v2163
  %2219 = vmatprep.subr.mxu0 0.0
  %2220 = vmatpush1.msra.mxu0 %v2164
  %2221 = vmatprep.subr.mxu0 0.0
  %2222 = vmatpush1.msra.mxu0 %v2165
  %2223 = vmatprep.subr.mxu0 0.0
  %2224 = vmatpush1.msra.mxu0 %v2166
  %2225 = vmatprep.subr.mxu0 0.0
  %2226 = vmatpush1.msra.mxu0 %v2167
  %2227 = vmatprep.subr.mxu0 0.0
  %2228 = vmatpush1.msra.mxu0 %v2168
  %2229 = vmatprep.subr.mxu0 0.0
  %2230 = vmatpush1.msra.mxu0 %v2169
  %2231 = vmatprep.subr.mxu0 0.0
  %2232 = vmatpush1.msra.mxu0 %v2170
  %2233 = vmatprep.subr.mxu0 0.0
  %2234 = vmatpush1.msra.mxu0 %v2171
  %2235 = vmatprep.subr.mxu0 0.0
  %2236 = vmatpush1.msra.mxu0 %v2172
  %2237 = vmatprep.subr.mxu0 0.0
  %2238 = vmatpush1.msra.mxu0 %v2173
  %2239 = vmatprep.subr.mxu0 0.0
  %2240 = vmatpush1.msra.mxu0 %v2174
  %2241 = vmatprep.subr.mxu0 0.0
  %2242 = vmatpush1.msra.mxu0 %v2175
  %2243 = vmatprep.subr.mxu0 0.0
  %2244 = vmatpush1.msra.mxu0 %v2176
  %2245 = vmatprep.subr.mxu0 0.0
  %2246 = vmatpush1.msra.mxu0 %v2177
  %2247 = vmatprep.subr.mxu0 0.0
  %2248 = vmatpush1.msra.mxu0 %v2178
  %2249 = vmatprep.subr.mxu0 0.0
  %2250 = vmatpush1.msra.mxu0 %v2179
  %2251 = vmatprep.mubr.f32.mxu0 %v2147
  %2252 = vmatmul.mubr.f32.gmra.mrb[0].mxu0 %v2146
  %v2253 = vpop.f32.mrb[0].mxu0
  %v2254 = vadd.f32 %v2185, %v2253
  %v2255 = vpop.f32.mrb[0].mxu0
  %2256 = vdwg.mxu0
  %v2257 = vld [vmem:[%s1] sm:$0xff]
  %v2258 = vlaneseq
  %v2259 = vand.u32 %v2258, 127
  %v2260 = vcvt.s32.f32 %v2259
  %v2261 = vadd.f32 %v2254, %v2257
  %vm2262 = vcmask 162816
  %v2263 = vsel %vm2262, %v2261, -inf
  %2264 = vmax.xlane.f32.xlu0 %v2263
  %v2265 = vpop.xlane.xlu0 %2264
  %vm2266 = vcmp.ge.f32.partialorder %v2261, %v2265
  %v2267 = vsel %vm2266, %v2260, 20.0
  %v2268 = vsel %vm2262, %v2267, inf
  %2269 = vmin.xlane.f32.xlu0 %v2268
  %v2270 = vpop.xlane.xlu0 %2269
  %vm2271 = vcmp.eq.f32.partialorder %v2260, %v2270
  %v2272 = vsel %vm2271, 1, 0
  %v2273 = vcvt.s32.f32 %v2272
  %v2274 = vsel %vm2262, %v2273, -inf
  %2275 = vmax.xlane.f32.xlu0 %v2274
  %v2276 = vpop.xlane.xlu0 %2275
  %v2277 = vsub.f32 %v2273, %v2276
  %v2278 = vmul.f32 %v2277, 1.442695
  %v2279 = vpow.pop %v2278
  %v2280 = vsel %vm2262, %v2279, 0.0
  %2281 = vadd.xlane.f32.xlu0 %v2280
  %v2282 = vpop.xlane.xlu0 %2281
  %v2283 = vlog2.pop %v2282
  %v2284 = vmul.f32 %v2283, 0.6931472
  %v2285 = vadd.f32 %v2284, %v2276
  %v2286 = vsub.f32 %v2273, %v2285
  %v2287 = vld [vmem:[%s11] sm:$0xff]
  %v2288 = vld [vmem:[%s11 + $0x8] sm:$0xff]
  %v2289 = vld [vmem:[%s11 + $0x10] sm:$0xff]
  %v2290 = vld [vmem:[%s11 + $0x18] sm:$0xff]
  %v2291 = vld [vmem:[%s11 + $0x20] sm:$0xff]
  %v2292 = vld [vmem:[%s11 + $0x28] sm:$0xff]
  %v2293 = vld [vmem:[%s11 + $0x30] sm:$0xff]
  %v2294 = vld [vmem:[%s11 + $0x38] sm:$0xff]
  %v2295 = vld [vmem:[%s11 + $0x40] sm:$0xff]
  %v2296 = vld [vmem:[%s11 + $0x48] sm:$0xff]
  %v2297 = vld [vmem:[%s11 + $0x50] sm:$0xff]
  %v2298 = vld [vmem:[%s11 + $0x58] sm:$0xff]
  %v2299 = vld [vmem:[%s11 + $0x60] sm:$0xff]
  %v2300 = vld [vmem:[%s11 + $0x68] sm:$0xff]
  %v2301 = vld [vmem:[%s11 + $0x70] sm:$0xff]
  %v2302 = vld [vmem:[%s11 + $0x78] sm:$0xff]
  %v2303 = vld [vmem:[%s12] sm:$0x1]
  %v2305 = vlaneseq
  %v2306 = vshrl.u32 %v2305, 7
  %v2307 = vsub.s32 0, %v2306
  %v2308 = vrot.slane %v2303, %v2307
  %2310 = vmatprep.subr.mxu0 0.0
  %2311 = vmatpush1.msra.mxu0 %v2287
  %2312 = vmatprep.subr.mxu0 0.0
  %2313 = vmatpush1.msra.mxu0 %v2288
  %2314 = vmatprep.subr.mxu0 0.0
  %2315 = vmatpush1.msra.mxu0 %v2289
  %2316 = vmatprep.subr.mxu0 0.0
  %2317 = vmatpush1.msra.mxu0 %v2290
  %2318 = vmatprep.subr.mxu0 0.0
  %2319 = vmatpush1.msra.mxu0 %v2291
  %2320 = vmatprep.subr.mxu0 0.0
  %2321 = vmatpush1.msra.mxu0 %v2292
  %2322 = vmatprep.subr.mxu0 0.0
  %2323 = vmatpush1.msra.mxu0 %v2293
  %2324 = vmatprep.subr.mxu0 0.0
  %2325 = vmatpush1.msra.mxu0 %v2294
  %2326 = vmatprep.subr.mxu0 0.0
  %2327 = vmatpush1.msra.mxu0 %v2295
  %2328 = vmatprep.subr.mxu0 0.0
  %2329 = vmatpush1.msra.mxu0 %v2296
  %2330 = vmatprep.subr.mxu0 0.0
  %2331 = vmatpush1.msra.mxu0 %v2297
  %2332 = vmatprep.subr.mxu0 0.0
  %2333 = vmatpush1.msra.mxu0 %v2298
  %2334 = vmatprep.subr.mxu0 0.0
  %2335 = vmatpush1.msra.mxu0 %v2299
  %2336 = vmatprep.subr.mxu0 0.0
  %2337 = vmatpush1.msra.mxu0 %v2300
  %2338 = vmatprep.subr.mxu0 0.0
  %2339 = vmatpush1.msra.mxu0 %v2301
  %2340 = vmatprep.subr.mxu0 0.0
  %2341 = vmatpush1.msra.mxu0 %v2302
  %2342 = vmatprep.subr.mxu0 0.0
  %2343 = vmatpush1.msra.mxu0 0.0
  %2344 = vmatprep.subr.mxu0 0.0
  %2345 = vmatpush1.msra.mxu0 0.0
  %2346 = vmatprep.subr.mxu0 0.0
  %2347 = vmatpush1.msra.mxu0 0.0
  %2348 = vmatprep.subr.mxu0 0.0
  %2349 = vmatpush1.msra.mxu0 0.0
  %2350 = vmatprep.subr.mxu0 0.0
  %2351 = vmatpush1.msra.mxu0 0.0
  %2352 = vmatprep.subr.mxu0 0.0
  %2353 = vmatpush1.msra.mxu0 0.0
  %2354 = vmatprep.subr.mxu0 0.0
  %2355 = vmatpush1.msra.mxu0 0.0
  %2356 = vmatprep.subr.mxu0 0.0
  %2357 = vmatpush1.msra.mxu0 0.0
  %2358 = vmatprep.subr.mxu0 0.0
  %2359 = vmatpush1.msra.mxu0 0.0
  %2360 = vmatprep.subr.mxu0 0.0
  %2361 = vmatpush1.msra.mxu0 0.0
  %2362 = vmatprep.subr.mxu0 0.0
  %2363 = vmatpush1.msra.mxu0 0.0
  %2364 = vmatprep.subr.mxu0 0.0
  %2365 = vmatpush1.msra.mxu0 0.0
  %2366 = vmatprep.subr.mxu0 0.0
  %2367 = vmatpush1.msra.mxu0 0.0
  %2368 = vmatprep.subr.mxu0 0.0
  %2369 = vmatpush1.msra.mxu0 0.0
  %2370 = vmatprep.subr.mxu0 0.0
  %2371 = vmatpush1.msra.mxu0 0.0
  %2372 = vmatprep.subr.mxu0 0.0
  %2373 = vmatpush1.msra.mxu0 0.0
  %2374 = vmatprep.mubr.f32.mxu0 0.0
  %2375 = vmatmul.mubr.f32.gmra.mrb[0].mxu0 %v2024
  %v2376 = vpop.f32.mrb[0].mxu0
  %v2377 = vadd.f32 %v2308, %v2376
  %v2378 = vpop.f32.mrb[0].mxu0
  %2379 = vdwg.mxu0
  %v2380 = vld [vmem:[%s13] sm:$0x1]
  %v2381 = vld [vmem:[%s13 + $0x1] sm:$0x1]
  %vm2382 = vcmp.lt.s32.totalorder %v2259, 40
  %vm2383 = vcmp.lt.s32.totalorder %v2259, 20
  %v2384 = vsub.s32 %v2259, 20
  %v2385 = vsel %vm2383, %v2259, %v2384
  %v2386 = vcvt.s32.f32 %v2385
  %2387 = vset.pattern.permute.xlu0 1
  %2388 = vperm.xlu0 %2387, %v72
  %v2389 = vpop.permute.xlu0 %2388
  %v2391 = vsel %vm2382, %v2389, 0.0
  %2392 = vset.pattern.permute.xlu0 0
  %2393 = vperm.xlu0 %2392, %v72
  %v2394 = vpop.permute.xlu0 %2393
  %v2396 = vsel %vm2383, %v2394, %v2391
  %v2397 = vlaneseq
  %v2398 = vshrl.u32 %v2397, 7
  %v2399 = vsub.s32 0, %v2398
  %v2400 = vrot.slane %v2380, %v2399
  %v2401 = vmul.f32 %v2394, %v2400
  %v2402 = vadd.f32 %v2377, %v2401
  %v2403 = vlaneseq
  %v2404 = vshrl.u32 %v2403, 7
  %v2405 = vsub.s32 0, %v2404
  %v2406 = vrot.slane %v2381, %v2405
  %v2407 = vmul.f32 %v2389, %v2406
  %v2408 = vadd.f32 %v2402, %v2407
  %v2409 = vld [vmem:[%s14] sm:$0xff]
  %v2410 = vld [vmem:[%s14 + $0x8] sm:$0xff]
  %v2411 = vld [vmem:[%s14 + $0x10] sm:$0xff]
  %v2412 = vld [vmem:[%s14 + $0x18] sm:$0xff]
  %v2413 = vld [vmem:[%s14 + $0x20] sm:$0xff]
  %v2414 = vld [vmem:[%s15] sm:$0x1]
  %v2416 = vlaneseq
  %v2417 = vshrl.u32 %v2416, 7
  %v2418 = vsub.s32 0, %v2417
  %v2419 = vrot.slane %v2414, %v2418
  %2422 = vrot.lane.b32.xlu0 %v2254, 108
  %v2423 = vpop.permute.xlu0 %2422
  %vm2424 = vcmask 326656
  %v2425 = vsel %vm2424, %v2423, 0
  %2427 = vmatprep.subr.mxu0 0.0
  %2428 = vmatpush1.msra.mxu0 %v2409
  %2429 = vmatprep.subr.mxu0 0.0
  %2430 = vmatpush1.msra.mxu0 %v2410
  %2431 = vmatprep.subr.mxu0 0.0
  %2432 = vmatpush1.msra.mxu0 %v2411
  %2433 = vmatprep.subr.mxu0 0.0
  %2434 = vmatpush1.msra.mxu0 %v2412
  %2435 = vmatprep.subr.mxu0 0.0
  %2436 = vmatpush1.msra.mxu0 %v2413
  %2437 = vmatprep.subr.mxu0 0.0
  %2438 = vmatpush1.msra.mxu0 0.0
  %2439 = vmatprep.subr.mxu0 0.0
  %2440 = vmatpush1.msra.mxu0 0.0
  %2441 = vmatprep.subr.mxu0 0.0
  %2442 = vmatpush1.msra.mxu0 0.0
  %2443 = vmatprep.subr.mxu0 0.0
  %2444 = vmatpush1.msra.mxu0 0.0
  %2445 = vmatprep.subr.mxu0 0.0
  %2446 = vmatpush1.msra.mxu0 0.0
  %2447 = vmatprep.subr.mxu0 0.0
  %2448 = vmatpush1.msra.mxu0 0.0
  %2449 = vmatprep.subr.mxu0 0.0
  %2450 = vmatpush1.msra.mxu0 0.0
  %2451 = vmatprep.subr.mxu0 0.0
  %2452 = vmatpush1.msra.mxu0 0.0
  %2453 = vmatprep.subr.mxu0 0.0
  %2454 = vmatpush1.msra.mxu0 0.0
  %2455 = vmatprep.subr.mxu0 0.0
  %2456 = vmatpush1.msra.mxu0 0.0
  %2457 = vmatprep.subr.mxu0 0.0
  %2458 = vmatpush1.msra.mxu0 0.0
  %2459 = vmatprep.subr.mxu0 0.0
  %2460 = vmatpush1.msra.mxu0 0.0
  %2461 = vmatprep.subr.mxu0 0.0
  %2462 = vmatpush1.msra.mxu0 0.0
  %2463 = vmatprep.subr.mxu0 0.0
  %2464 = vmatpush1.msra.mxu0 0.0
  %2465 = vmatprep.subr.mxu0 0.0
  %2466 = vmatpush1.msra.mxu0 0.0
  %2467 = vmatprep.subr.mxu0 0.0
  %2468 = vmatpush1.msra.mxu0 0.0
  %2469 = vmatprep.subr.mxu0 0.0
  %2470 = vmatpush1.msra.mxu0 0.0
  %2471 = vmatprep.subr.mxu0 0.0
  %2472 = vmatpush1.msra.mxu0 0.0
  %2473 = vmatprep.subr.mxu0 0.0
  %2474 = vmatpush1.msra.mxu0 0.0
  %2475 = vmatprep.subr.mxu0 0.0
  %2476 = vmatpush1.msra.mxu0 0.0
  %2477 = vmatprep.subr.mxu0 0.0
  %2478 = vmatpush1.msra.mxu0 0.0
  %2479 = vmatprep.subr.mxu0 0.0
  %2480 = vmatpush1.msra.mxu0 0.0
  %2481 = vmatprep.subr.mxu0 0.0
  %2482 = vmatpush1.msra.mxu0 0.0
  %2483 = vmatprep.subr.mxu0 0.0
  %2484 = vmatpush1.msra.mxu0 0.0
  %2485 = vmatprep.subr.mxu0 0.0
  %2486 = vmatpush1.msra.mxu0 0.0
  %2487 = vmatprep.subr.mxu0 0.0
  %2488 = vmatpush1.msra.mxu0 0.0
  %2489 = vmatprep.subr.mxu0 0.0
  %2490 = vmatpush1.msra.mxu0 0.0
  %2491 = vmatprep.mubr.f32.mxu0 0.0
  %2492 = vmatmul.mubr.f32.gmra.mrb[0].mxu0 %v2425
  %v2493 = vpop.f32.mrb[0].mxu0
  %v2494 = vadd.f32 %v2419, %v2493
  %v2495 = vpop.f32.mrb[0].mxu0
  %2496 = vdwg.mxu0
  %v2497 = vadd.f32 %v2408, %v2494
  %v2498 = vmul.f32 %v2497, 0.5
  %v2499 = vtanh.pop %v2498
  %v2500 = vmul.f32 %v2499, 0.5
  %v2501 = vadd.f32 %v2500, 0.5
  %2503 = vrot.lane.b32.xlu0 %v2494, 48
  %v2504 = vpop.permute.xlu0 %2503
  %v2506 = vmul.f32 %v2501, %v2504
  %2508 = vrot.lane.b32.xlu0 %v2506, 80
  %v2509 = vpop.permute.xlu0 %2508
  %v2511 = vadd.f32 %v2408, %v2509
  %v2512 = vtanh.pop %v2511
  %v2513 = vsub.f32 1.0, %v2501
  %2515 = vrot.lane.b32.xlu0 %v2512, 88
  %v2516 = vpop.permute.xlu0 %2515
  %v2518 = vmul.f32 %v2513, %v2516
  %2519 = vrot.lane.b32.xlu0 %v2254, 20
  %v2520 = vpop.permute.xlu0 %2519
  %v2522 = vmul.f32 %v2501, %v2520
  %v2523 = vadd.f32 %v2518, %v2522
  %v2524 = vld [vmem:[%s16] sm:$0xff]
  %v2525 = vld [vmem:[%s16 + $0x8] sm:$0xff]
  %v2526 = vld [vmem:[%s16 + $0x10] sm:$0xff]
  %v2527 = vld [vmem:[%s16 + $0x18] sm:$0xff]
  %v2528 = vld [vmem:[%s16 + $0x20] sm:$0xff]
  %v2529 = vld [vmem:[%s17] sm:$0x1]
  %v2531 = vlaneseq
  %v2532 = vshrl.u32 %v2531, 7
  %v2533 = vsub.s32 0, %v2532
  %v2534 = vrot.slane %v2529, %v2533
  %2537 = vrot.lane.b32.xlu0 %v2523, 88
  %v2538 = vpop.permute.xlu0 %2537
  %v2539 = vsel %vm2424, %v2538, 0
  %2541 = vmatprep.subr.mxu0 0.0
  %2542 = vmatpush1.msra.mxu0 %v2524
  %2543 = vmatprep.subr.mxu0 0.0
  %2544 = vmatpush1.msra.mxu0 %v2525
  %2545 = vmatprep.subr.mxu0 0.0
  %2546 = vmatpush1.msra.mxu0 %v2526
  %2547 = vmatprep.subr.mxu0 0.0
  %2548 = vmatpush1.msra.mxu0 %v2527
  %2549 = vmatprep.subr.mxu0 0.0
  %2550 = vmatpush1.msra.mxu0 %v2528
  %2551 = vmatprep.subr.mxu0 0.0
  %2552 = vmatpush1.msra.mxu0 0.0
  %2553 = vmatprep.subr.mxu0 0.0
  %2554 = vmatpush1.msra.mxu0 0.0
  %2555 = vmatprep.subr.mxu0 0.0
  %2556 = vmatpush1.msra.mxu0 0.0
  %2557 = vmatprep.subr.mxu0 0.0
  %2558 = vmatpush1.msra.mxu0 0.0
  %2559 = vmatprep.subr.mxu0 0.0
  %2560 = vmatpush1.msra.mxu0 0.0
  %2561 = vmatprep.subr.mxu0 0.0
  %2562 = vmatpush1.msra.mxu0 0.0
  %2563 = vmatprep.subr.mxu0 0.0
  %2564 = vmatpush1.msra.mxu0 0.0
  %2565 = vmatprep.subr.mxu0 0.0
  %2566 = vmatpush1.msra.mxu0 0.0
  %2567 = vmatprep.subr.mxu0 0.0
  %2568 = vmatpush1.msra.mxu0 0.0
  %2569 = vmatprep.subr.mxu0 0.0
  %2570 = vmatpush1.msra.mxu0 0.0
  %2571 = vmatprep.subr.mxu0 0.0
  %2572 = vmatpush1.msra.mxu0 0.0
  %2573 = vmatprep.subr.mxu0 0.0
  %2574 = vmatpush1.msra.mxu0 0.0
  %2575 = vmatprep.subr.mxu0 0.0
  %2576 = vmatpush1.msra.mxu0 0.0
  %2577 = vmatprep.subr.mxu0 0.0
  %2578 = vmatpush1.msra.mxu0 0.0
  %2579 = vmatprep.subr.mxu0 0.0
  %2580 = vmatpush1.msra.mxu0 0.0
  %2581 = vmatprep.subr.mxu0 0.0
  %2582 = vmatpush1.msra.mxu0 0.0
  %2583 = vmatprep.subr.mxu0 0.0
  %2584 = vmatpush1.msra.mxu0 0.0
  %2585 = vmatprep.subr.mxu0 0.0
  %2586 = vmatpush1.msra.mxu0 0.0
  %2587 = vmatprep.subr.mxu0 0.0
  %2588 = vmatpush1.msra.mxu0 0.0
  %2589 = vmatprep.subr.mxu0 0.0
  %2590 = vmatpush1.msra.mxu0 0.0
  %2591 = vmatprep.subr.mxu0 0.0
  %2592 = vmatpush1.msra.mxu0 0.0
  %2593 = vmatprep.subr.mxu0 0.0
  %2594 = vmatpush1.msra.mxu0 0.0
  %2595 = vmatprep.subr.mxu0 0.0
  %2596 = vmatpush1.msra.mxu0 0.0
  %2597 = vmatprep.subr.mxu0 0.0
  %2598 = vmatpush1.msra.mxu0 0.0
  %2599 = vmatprep.subr.mxu0 0.0
  %2600 = vmatpush1.msra.mxu0 0.0
  %2601 = vmatprep.subr.mxu0 0.0
  %2602 = vmatpush1.msra.mxu0 0.0
  %2603 = vmatprep.subr.mxu0 0.0
  %2604 = vmatpush1.msra.mxu0 0.0
  %2605 = vmatprep.mubr.f32.mxu0 0.0
  %2606 = vmatmul.mubr.f32.gmra.mrb[0].mxu0 %v2539
  %v2607 = vpop.f32.mrb[0].mxu0
  %v2608 = vadd.f32 %v2534, %v2607
  %v2609 = vpop.f32.mrb[0].mxu0
  %2610 = vdwg.mxu0
  %v2611 = vmul.f32 %v2608, 0.5
  %v2612 = vtanh.pop %v2611
  %v2613 = vmul.f32 %v2612, 0.5
  %v2614 = vadd.f32 %v2613, 0.5
  %v2615 = vtanh.pop %v2608
  %v2616 = vld [vmem:[%s18] sm:$0xff]
  %v2617 = vld [vmem:[%s18 + $0x8] sm:$0xff]
  %v2618 = vld [vmem:[%s18 + $0x10] sm:$0xff]
  %v2619 = vld [vmem:[%s18 + $0x18] sm:$0xff]
  %v2620 = vld [vmem:[%s18 + $0x20] sm:$0xff]
  %v2621 = vld [vmem:[%s18 + $0x28] sm:$0xff]
  %v2622 = vld [vmem:[%s18 + $0x30] sm:$0xff]
  %v2623 = vld [vmem:[%s18 + $0x38] sm:$0xff]
  %v2624 = vld [vmem:[%s18 + $0x40] sm:$0xff]
  %v2625 = vld [vmem:[%s18 + $0x48] sm:$0xff]
  %v2626 = vld [vmem:[%s19] sm:$0x1]
  %v2628 = vlaneseq
  %v2629 = vshrl.u32 %v2628, 7
  %v2630 = vsub.s32 0, %v2629
  %v2631 = vrot.slane %v2626, %v2630
  %vm2633 = vcmask 654336
  %v2635 = vsel %vm2633, %v2614, 0
  %2637 = vmatprep.subr.mxu0 0.0
  %2638 = vmatpush1.msra.mxu0 %v2616
  %2639 = vmatprep.subr.mxu0 0.0
  %2640 = vmatpush1.msra.mxu0 %v2617
  %2641 = vmatprep.subr.mxu0 0.0
  %2642 = vmatpush1.msra.mxu0 %v2618
  %2643 = vmatprep.subr.mxu0 0.0
  %2644 = vmatpush1.msra.mxu0 %v2619
  %2645 = vmatprep.subr.mxu0 0.0
  %2646 = vmatpush1.msra.mxu0 %v2620
  %2647 = vmatprep.subr.mxu0 0.0
  %2648 = vmatpush1.msra.mxu0 %v2621
  %2649 = vmatprep.subr.mxu0 0.0
  %2650 = vmatpush1.msra.mxu0 %v2622
  %2651 = vmatprep.subr.mxu0 0.0
  %2652 = vmatpush1.msra.mxu0 %v2623
  %2653 = vmatprep.subr.mxu0 0.0
  %2654 = vmatpush1.msra.mxu0 %v2624
  %2655 = vmatprep.subr.mxu0 0.0
  %2656 = vmatpush1.msra.mxu0 %v2625
  %2657 = vmatprep.subr.mxu0 0.0
  %2658 = vmatpush1.msra.mxu0 0.0
  %2659 = vmatprep.subr.mxu0 0.0
  %2660 = vmatpush1.msra.mxu0 0.0
  %2661 = vmatprep.subr.mxu0 0.0
  %2662 = vmatpush1.msra.mxu0 0.0
  %2663 = vmatprep.subr.mxu0 0.0
  %2664 = vmatpush1.msra.mxu0 0.0
  %2665 = vmatprep.subr.mxu0 0.0
  %2666 = vmatpush1.msra.mxu0 0.0
  %2667 = vmatprep.subr.mxu0 0.0
  %2668 = vmatpush1.msra.mxu0 0.0
  %2669 = vmatprep.subr.mxu0 0.0
  %2670 = vmatpush1.msra.mxu0 0.0
  %2671 = vmatprep.subr.mxu0 0.0
  %2672 = vmatpush1.msra.mxu0 0.0
  %2673 = vmatprep.subr.mxu0 0.0
  %2674 = vmatpush1.msra.mxu0 0.0
  %2675 = vmatprep.subr.mxu0 0.0
  %2676 = vmatpush1.msra.mxu0 0.0
  %2677 = vmatprep.subr.mxu0 0.0
  %2678 = vmatpush1.msra.mxu0 0.0
  %2679 = vmatprep.subr.mxu0 0.0
  %2680 = vmatpush1.msra.mxu0 0.0
  %2681 = vmatprep.subr.mxu0 0.0
  %2682 = vmatpush1.msra.mxu0 0.0
  %2683 = vmatprep.subr.mxu0 0.0
  %2684 = vmatpush1.msra.mxu0 0.0
  %2685 = vmatprep.subr.mxu0 0.0
  %2686 = vmatpush1.msra.mxu0 0.0
  %2687 = vmatprep.subr.mxu0 0.0
  %2688 = vmatpush1.msra.mxu0 0.0
  %2689 = vmatprep.subr.mxu0 0.0
  %2690 = vmatpush1.msra.mxu0 0.0
  %2691 = vmatprep.subr.mxu0 0.0
  %2692 = vmatpush1.msra.mxu0 0.0
  %2693 = vmatprep.subr.mxu0 0.0
  %2694 = vmatpush1.msra.mxu0 0.0
  %2695 = vmatprep.subr.mxu0 0.0
  %2696 = vmatpush1.msra.mxu0 0.0
  %2697 = vmatprep.subr.mxu0 0.0
  %2698 = vmatpush1.msra.mxu0 0.0
  %2699 = vmatprep.subr.mxu0 0.0
  %2700 = vmatpush1.msra.mxu0 0.0
  %2701 = vmatprep.mubr.f32.mxu0 0.0
  %2702 = vmatmul.mubr.f32.gmra.mrb[0].mxu0 %v2635
  %v2703 = vpop.f32.mrb[0].mxu0
  %v2704 = vadd.f32 %v2631, %v2703
  %v2705 = vpop.f32.mrb[0].mxu0
  %2706 = vdwg.mxu0
  %v2707 = vmax.f32 %v2704, -1.5
  %v2708 = vmin.f32 %v2707, 1.5
  %v2709 = vadd.f32 %v2708, %v2396
  %v2710 = vmul.f32 %v2704, 1.442695
  %v2711 = vpow.pop %v2710
  %v2712 = vmax.f32 %v2711, 0.031622775
  %v2713 = vmin.f32 %v2712, 31.622776
  %v2714 = vsel %vm2382, %v2709, %v2713
  %s2715 = scalar_lea.vmem %s1, 8
  %v2716 = vld [vmem:[%s2715] sm:$0xff]
  %v2717 = vadd.f32 %v2286, %v2716
  %v2718 = vsel %vm2262, %v2717, -inf
  %2719 = vmax.xlane.f32.xlu0 %v2718
  %v2720 = vpop.xlane.xlu0 %2719
  %vm2721 = vcmp.ge.f32.partialorder %v2717, %v2720
  %v2722 = vsel %vm2721, %v2260, 20.0
  %v2723 = vsel %vm2262, %v2722, inf
  %2724 = vmin.xlane.f32.xlu0 %v2723
  %v2725 = vpop.xlane.xlu0 %2724
  %vm2726 = vcmp.eq.f32.partialorder %v2386, %v2725
  %v2727 = vsel %vm2726, 1, 0
  %v2728 = vcvt.s32.f32 %v2727
  %2730 = vset.pattern.permute.xlu0 20
  %2731 = vperm.xlu0 %2730, %v2716
  %v2732 = vpop.permute.xlu0 %2731
  %2734 = vset.pattern.permute.xlu0 21
  %2735 = vperm.xlu0 %2734, %v2716
  %v2736 = vpop.permute.xlu0 %2735
  %v2738 = vsel %vm2383, %v2732, %v2736
  %2740 = vrot.lane.b32.xlu0 %v2738, 40
  %v2741 = vpop.permute.xlu0 %2740
  %v2743 = vmul.f32 %v2714, %v2741
  %2745 = vrot.lane.b32.xlu0 %v2743, 88
  %v2746 = vpop.permute.xlu0 %2745
  %v2748 = vadd.f32 %v2714, %v2746
  %v2749 = vmul.f32 %v2728, %v2748
  %v2750 = vsel %vm2262, %v2749, 0.0
  %2751 = vadd.xlane.f32.xlu0 %v2750
  %v2752 = vpop.xlane.xlu0 %2751
  %2754 = vrot.lane.b32.xlu0 %v2749, 108
  %v2755 = vpop.permute.xlu0 %2754
  %v2757 = vsel %vm2262, %v2755, 0.0
  %2758 = vadd.xlane.f32.xlu0 %v2757
  %v2759 = vpop.xlane.xlu0 %2758
  %vm2760 = vcmask 7168
  %v2761 = vsel %vm2760, %v2752, %v2759
  %2763 = vrot.lane.b32.xlu0 %v2761, 100
  %v2764 = vpop.permute.xlu0 %2763
  %2767 = vrot.lane.b32.xlu0 %v2286, 102
  %v2768 = vpop.permute.xlu0 %2767
  %v2770 = vsel %vm2633, %v2714, %v2615
  %vm2771 = vcmask 818176
  %v2772 = vsel %vm2771, %v2770, %v2764
  %vm2773 = vcmask 834560
  %v2774 = vsel %vm2773, %v2772, %v2768
  %vm2775 = vcmask 998400
  %v2776 = vsel %vm2775, %v2774, 0.0
  %2777 = vst [vmem:[%s20] sm:$0xff] %v2776
  %v2778 = vsel %vm2382, %v2709, 0.0
  %v2779 = vmul.f32 %v2752, %v2400
  %v2780 = vadd.f32 %v2377, %v2779
  %v2781 = vmul.f32 %v2759, %v2406
  %v2782 = vadd.f32 %v2780, %v2781
  %v2783 = vld [vmem:[%s14] sm:$0xff]
  %v2784 = vld [vmem:[%s14 + $0x8] sm:$0xff]
  %v2785 = vld [vmem:[%s14 + $0x10] sm:$0xff]
  %v2786 = vld [vmem:[%s14 + $0x18] sm:$0xff]
  %v2787 = vld [vmem:[%s14 + $0x20] sm:$0xff]
  %v2788 = vld [vmem:[%s15] sm:$0x1]
  %v2790 = vlaneseq
  %v2791 = vshrl.u32 %v2790, 7
  %v2792 = vsub.s32 0, %v2791
  %v2793 = vrot.slane %v2788, %v2792
  %2795 = vmatprep.subr.mxu0 0.0
  %2796 = vmatpush1.msra.mxu0 %v2783
  %2797 = vmatprep.subr.mxu0 0.0
  %2798 = vmatpush1.msra.mxu0 %v2784
  %2799 = vmatprep.subr.mxu0 0.0
  %2800 = vmatpush1.msra.mxu0 %v2785
  %2801 = vmatprep.subr.mxu0 0.0
  %2802 = vmatpush1.msra.mxu0 %v2786
  %2803 = vmatprep.subr.mxu0 0.0
  %2804 = vmatpush1.msra.mxu0 %v2787
  %2805 = vmatprep.subr.mxu0 0.0
  %2806 = vmatpush1.msra.mxu0 0.0
  %2807 = vmatprep.subr.mxu0 0.0
  %2808 = vmatpush1.msra.mxu0 0.0
  %2809 = vmatprep.subr.mxu0 0.0
  %2810 = vmatpush1.msra.mxu0 0.0
  %2811 = vmatprep.subr.mxu0 0.0
  %2812 = vmatpush1.msra.mxu0 0.0
  %2813 = vmatprep.subr.mxu0 0.0
  %2814 = vmatpush1.msra.mxu0 0.0
  %2815 = vmatprep.subr.mxu0 0.0
  %2816 = vmatpush1.msra.mxu0 0.0
  %2817 = vmatprep.subr.mxu0 0.0
  %2818 = vmatpush1.msra.mxu0 0.0
  %2819 = vmatprep.subr.mxu0 0.0
  %2820 = vmatpush1.msra.mxu0 0.0
  %2821 = vmatprep.subr.mxu0 0.0
  %2822 = vmatpush1.msra.mxu0 0.0
  %2823 = vmatprep.subr.mxu0 0.0
  %2824 = vmatpush1.msra.mxu0 0.0
  %2825 = vmatprep.subr.mxu0 0.0
  %2826 = vmatpush1.msra.mxu0 0.0
  %2827 = vmatprep.subr.mxu0 0.0
  %2828 = vmatpush1.msra.mxu0 0.0
  %2829 = vmatprep.subr.mxu0 0.0
  %2830 = vmatpush1.msra.mxu0 0.0
  %2831 = vmatprep.subr.mxu0 0.0
  %2832 = vmatpush1.msra.mxu0 0.0
  %2833 = vmatprep.subr.mxu0 0.0
  %2834 = vmatpush1.msra.mxu0 0.0
  %2835 = vmatprep.subr.mxu0 0.0
  %2836 = vmatpush1.msra.mxu0 0.0
  %2837 = vmatprep.subr.mxu0 0.0
  %2838 = vmatpush1.msra.mxu0 0.0
  %2839 = vmatprep.subr.mxu0 0.0
  %2840 = vmatpush1.msra.mxu0 0.0
  %2841 = vmatprep.subr.mxu0 0.0
  %2842 = vmatpush1.msra.mxu0 0.0
  %2843 = vmatprep.subr.mxu0 0.0
  %2844 = vmatpush1.msra.mxu0 0.0
  %2845 = vmatprep.subr.mxu0 0.0
  %2846 = vmatpush1.msra.mxu0 0.0
  %2847 = vmatprep.subr.mxu0 0.0
  %2848 = vmatpush1.msra.mxu0 0.0
  %2849 = vmatprep.subr.mxu0 0.0
  %2850 = vmatpush1.msra.mxu0 0.0
  %2851 = vmatprep.subr.mxu0 0.0
  %2852 = vmatpush1.msra.mxu0 0.0
  %2853 = vmatprep.subr.mxu0 0.0
  %2854 = vmatpush1.msra.mxu0 0.0
  %2855 = vmatprep.subr.mxu0 0.0
  %2856 = vmatpush1.msra.mxu0 0.0
  %2857 = vmatprep.subr.mxu0 0.0
  %2858 = vmatpush1.msra.mxu0 0.0
  %2859 = vmatprep.mubr.f32.mxu0 0.0
  %2860 = vmatmul.mubr.f32.gmra.mrb[0].mxu0 %v2539
  %v2861 = vpop.f32.mrb[0].mxu0
  %v2862 = vadd.f32 %v2793, %v2861
  %v2863 = vpop.f32.mrb[0].mxu0
  %2864 = vdwg.mxu0
  %v2865 = vadd.f32 %v2782, %v2862
  %v2866 = vmul.f32 %v2865, 0.5
  %v2867 = vtanh.pop %v2866
  %v2868 = vmul.f32 %v2867, 0.5
  %v2869 = vadd.f32 %v2868, 0.5
  %2871 = vrot.lane.b32.xlu0 %v2862, 48
  %v2872 = vpop.permute.xlu0 %2871
  %v2874 = vmul.f32 %v2869, %v2872
  %2876 = vrot.lane.b32.xlu0 %v2874, 80
  %v2877 = vpop.permute.xlu0 %2876
  %v2879 = vadd.f32 %v2782, %v2877
  %v2880 = vtanh.pop %v2879
  %v2881 = vsub.f32 1.0, %v2869
  %2883 = vrot.lane.b32.xlu0 %v2880, 88
  %v2884 = vpop.permute.xlu0 %2883
  %v2886 = vmul.f32 %v2881, %v2884
  %v2887 = vmul.f32 %v2869, %v2523
  %v2888 = vadd.f32 %v2886, %v2887
  %v2889 = vld [vmem:[%s16] sm:$0xff]
  %v2890 = vld [vmem:[%s16 + $0x8] sm:$0xff]
  %v2891 = vld [vmem:[%s16 + $0x10] sm:$0xff]
  %v2892 = vld [vmem:[%s16 + $0x18] sm:$0xff]
  %v2893 = vld [vmem:[%s16 + $0x20] sm:$0xff]
  %v2894 = vld [vmem:[%s17] sm:$0x1]
  %v2896 = vlaneseq
  %v2897 = vshrl.u32 %v2896, 7
  %v2898 = vsub.s32 0, %v2897
  %v2899 = vrot.slane %v2894, %v2898
  %2902 = vrot.lane.b32.xlu0 %v2888, 88
  %v2903 = vpop.permute.xlu0 %2902
  %v2904 = vsel %vm2424, %v2903, 0
  %2906 = vmatprep.subr.mxu0 0.0
  %2907 = vmatpush1.msra.mxu0 %v2889
  %2908 = vmatprep.subr.mxu0 0.0
  %2909 = vmatpush1.msra.mxu0 %v2890
  %2910 = vmatprep.subr.mxu0 0.0
  %2911 = vmatpush1.msra.mxu0 %v2891
  %2912 = vmatprep.subr.mxu0 0.0
  %2913 = vmatpush1.msra.mxu0 %v2892
  %2914 = vmatprep.subr.mxu0 0.0
  %2915 = vmatpush1.msra.mxu0 %v2893
  %2916 = vmatprep.subr.mxu0 0.0
  %2917 = vmatpush1.msra.mxu0 0.0
  %2918 = vmatprep.subr.mxu0 0.0
  %2919 = vmatpush1.msra.mxu0 0.0
  %2920 = vmatprep.subr.mxu0 0.0
  %2921 = vmatpush1.msra.mxu0 0.0
  %2922 = vmatprep.subr.mxu0 0.0
  %2923 = vmatpush1.msra.mxu0 0.0
  %2924 = vmatprep.subr.mxu0 0.0
  %2925 = vmatpush1.msra.mxu0 0.0
  %2926 = vmatprep.subr.mxu0 0.0
  %2927 = vmatpush1.msra.mxu0 0.0
  %2928 = vmatprep.subr.mxu0 0.0
  %2929 = vmatpush1.msra.mxu0 0.0
  %2930 = vmatprep.subr.mxu0 0.0
  %2931 = vmatpush1.msra.mxu0 0.0
  %2932 = vmatprep.subr.mxu0 0.0
  %2933 = vmatpush1.msra.mxu0 0.0
  %2934 = vmatprep.subr.mxu0 0.0
  %2935 = vmatpush1.msra.mxu0 0.0
  %2936 = vmatprep.subr.mxu0 0.0
  %2937 = vmatpush1.msra.mxu0 0.0
  %2938 = vmatprep.subr.mxu0 0.0
  %2939 = vmatpush1.msra.mxu0 0.0
  %2940 = vmatprep.subr.mxu0 0.0
  %2941 = vmatpush1.msra.mxu0 0.0
  %2942 = vmatprep.subr.mxu0 0.0
  %2943 = vmatpush1.msra.mxu0 0.0
  %2944 = vmatprep.subr.mxu0 0.0
  %2945 = vmatpush1.msra.mxu0 0.0
  %2946 = vmatprep.subr.mxu0 0.0
  %2947 = vmatpush1.msra.mxu0 0.0
  %2948 = vmatprep.subr.mxu0 0.0
  %2949 = vmatpush1.msra.mxu0 0.0
  %2950 = vmatprep.subr.mxu0 0.0
  %2951 = vmatpush1.msra.mxu0 0.0
  %2952 = vmatprep.subr.mxu0 0.0
  %2953 = vmatpush1.msra.mxu0 0.0
  %2954 = vmatprep.subr.mxu0 0.0
  %2955 = vmatpush1.msra.mxu0 0.0
  %2956 = vmatprep.subr.mxu0 0.0
  %2957 = vmatpush1.msra.mxu0 0.0
  %2958 = vmatprep.subr.mxu0 0.0
  %2959 = vmatpush1.msra.mxu0 0.0
  %2960 = vmatprep.subr.mxu0 0.0
  %2961 = vmatpush1.msra.mxu0 0.0
  %2962 = vmatprep.subr.mxu0 0.0
  %2963 = vmatpush1.msra.mxu0 0.0
  %2964 = vmatprep.subr.mxu0 0.0
  %2965 = vmatpush1.msra.mxu0 0.0
  %2966 = vmatprep.subr.mxu0 0.0
  %2967 = vmatpush1.msra.mxu0 0.0
  %2968 = vmatprep.subr.mxu0 0.0
  %2969 = vmatpush1.msra.mxu0 0.0
  %2970 = vmatprep.mubr.f32.mxu0 0.0
  %2971 = vmatmul.mubr.f32.gmra.mrb[0].mxu0 %v2904
  %v2972 = vpop.f32.mrb[0].mxu0
  %v2973 = vadd.f32 %v2899, %v2972
  %v2974 = vpop.f32.mrb[0].mxu0
  %2975 = vdwg.mxu0
  %v2976 = vmul.f32 %v2973, 0.5
  %v2977 = vtanh.pop %v2976
  %v2978 = vmul.f32 %v2977, 0.5
  %v2979 = vadd.f32 %v2978, 0.5
  %v2980 = vtanh.pop %v2973
  %v2981 = vld [vmem:[%s18] sm:$0xff]
  %v2982 = vld [vmem:[%s18 + $0x8] sm:$0xff]
  %v2983 = vld [vmem:[%s18 + $0x10] sm:$0xff]
  %v2984 = vld [vmem:[%s18 + $0x18] sm:$0xff]
  %v2985 = vld [vmem:[%s18 + $0x20] sm:$0xff]
  %v2986 = vld [vmem:[%s18 + $0x28] sm:$0xff]
  %v2987 = vld [vmem:[%s18 + $0x30] sm:$0xff]
  %v2988 = vld [vmem:[%s18 + $0x38] sm:$0xff]
  %v2989 = vld [vmem:[%s18 + $0x40] sm:$0xff]
  %v2990 = vld [vmem:[%s18 + $0x48] sm:$0xff]
  %v2991 = vld [vmem:[%s19] sm:$0x1]
  %v2993 = vlaneseq
  %v2994 = vshrl.u32 %v2993, 7
  %v2995 = vsub.s32 0, %v2994
  %v2996 = vrot.slane %v2991, %v2995
  %v2999 = vsel %vm2633, %v2979, 0
  %3001 = vmatprep.subr.mxu0 0.0
  %3002 = vmatpush1.msra.mxu0 %v2981
  %3003 = vmatprep.subr.mxu0 0.0
  %3004 = vmatpush1.msra.mxu0 %v2982
  %3005 = vmatprep.subr.mxu0 0.0
  %3006 = vmatpush1.msra.mxu0 %v2983
  %3007 = vmatprep.subr.mxu0 0.0
  %3008 = vmatpush1.msra.mxu0 %v2984
  %3009 = vmatprep.subr.mxu0 0.0
  %3010 = vmatpush1.msra.mxu0 %v2985
  %3011 = vmatprep.subr.mxu0 0.0
  %3012 = vmatpush1.msra.mxu0 %v2986
  %3013 = vmatprep.subr.mxu0 0.0
  %3014 = vmatpush1.msra.mxu0 %v2987
  %3015 = vmatprep.subr.mxu0 0.0
  %3016 = vmatpush1.msra.mxu0 %v2988
  %3017 = vmatprep.subr.mxu0 0.0
  %3018 = vmatpush1.msra.mxu0 %v2989
  %3019 = vmatprep.subr.mxu0 0.0
  %3020 = vmatpush1.msra.mxu0 %v2990
  %3021 = vmatprep.subr.mxu0 0.0
  %3022 = vmatpush1.msra.mxu0 0.0
  %3023 = vmatprep.subr.mxu0 0.0
  %3024 = vmatpush1.msra.mxu0 0.0
  %3025 = vmatprep.subr.mxu0 0.0
  %3026 = vmatpush1.msra.mxu0 0.0
  %3027 = vmatprep.subr.mxu0 0.0
  %3028 = vmatpush1.msra.mxu0 0.0
  %3029 = vmatprep.subr.mxu0 0.0
  %3030 = vmatpush1.msra.mxu0 0.0
  %3031 = vmatprep.subr.mxu0 0.0
  %3032 = vmatpush1.msra.mxu0 0.0
  %3033 = vmatprep.subr.mxu0 0.0
  %3034 = vmatpush1.msra.mxu0 0.0
  %3035 = vmatprep.subr.mxu0 0.0
  %3036 = vmatpush1.msra.mxu0 0.0
  %3037 = vmatprep.subr.mxu0 0.0
  %3038 = vmatpush1.msra.mxu0 0.0
  %3039 = vmatprep.subr.mxu0 0.0
  %3040 = vmatpush1.msra.mxu0 0.0
  %3041 = vmatprep.subr.mxu0 0.0
  %3042 = vmatpush1.msra.mxu0 0.0
  %3043 = vmatprep.subr.mxu0 0.0
  %3044 = vmatpush1.msra.mxu0 0.0
  %3045 = vmatprep.subr.mxu0 0.0
  %3046 = vmatpush1.msra.mxu0 0.0
  %3047 = vmatprep.subr.mxu0 0.0
  %3048 = vmatpush1.msra.mxu0 0.0
  %3049 = vmatprep.subr.mxu0 0.0
  %3050 = vmatpush1.msra.mxu0 0.0
  %3051 = vmatprep.subr.mxu0 0.0
  %3052 = vmatpush1.msra.mxu0 0.0
  %3053 = vmatprep.subr.mxu0 0.0
  %3054 = vmatpush1.msra.mxu0 0.0
  %3055 = vmatprep.subr.mxu0 0.0
  %3056 = vmatpush1.msra.mxu0 0.0
  %3057 = vmatprep.subr.mxu0 0.0
  %3058 = vmatpush1.msra.mxu0 0.0
  %3059 = vmatprep.subr.mxu0 0.0
  %3060 = vmatpush1.msra.mxu0 0.0
  %3061 = vmatprep.subr.mxu0 0.0
  %3062 = vmatpush1.msra.mxu0 0.0
  %3063 = vmatprep.subr.mxu0 0.0
  %3064 = vmatpush1.msra.mxu0 0.0
  %3065 = vmatprep.mubr.f32.mxu0 0.0
  %3066 = vmatmul.mubr.f32.gmra.mrb[0].mxu0 %v2999
  %v3067 = vpop.f32.mrb[0].mxu0
  %v3068 = vadd.f32 %v2996, %v3067
  %v3069 = vpop.f32.mrb[0].mxu0
  %3070 = vdwg.mxu0
  %v3071 = vmax.f32 %v3068, -1.5
  %v3072 = vmin.f32 %v3071, 1.5
  %v3073 = vadd.f32 %v3072, %v2778
  %v3074 = vmul.f32 %v3068, 1.442695
  %v3075 = vpow.pop %v3074
  %v3076 = vmax.f32 %v3075, 0.031622775
  %v3077 = vmin.f32 %v3076, 31.622776
  %v3078 = vsel %vm2382, %v3073, %v3077
  %s3079 = scalar_lea.vmem %s1, 16
  %v3080 = vld [vmem:[%s3079] sm:$0xff]
  %v3081 = vadd.f32 %v2286, %v3080
  %v3082 = vsel %vm2262, %v3081, -inf
  %3083 = vmax.xlane.f32.xlu0 %v3082
  %v3084 = vpop.xlane.xlu0 %3083
  %vm3085 = vcmp.ge.f32.partialorder %v3081, %v3084
  %v3086 = vsel %vm3085, %v2260, 20.0
  %v3087 = vsel %vm2262, %v3086, inf
  %3088 = vmin.xlane.f32.xlu0 %v3087
  %v3089 = vpop.xlane.xlu0 %3088
  %vm3090 = vcmp.eq.f32.partialorder %v2386, %v3089
  %v3091 = vsel %vm3090, 1, 0
  %v3092 = vcvt.s32.f32 %v3091
  %3094 = vset.pattern.permute.xlu0 20
  %3095 = vperm.xlu0 %3094, %v3080
  %v3096 = vpop.permute.xlu0 %3095
  %3098 = vset.pattern.permute.xlu0 21
  %3099 = vperm.xlu0 %3098, %v3080
  %v3100 = vpop.permute.xlu0 %3099
  %v3102 = vsel %vm2383, %v3096, %v3100
  %3104 = vrot.lane.b32.xlu0 %v3102, 40
  %v3105 = vpop.permute.xlu0 %3104
  %v3107 = vmul.f32 %v3078, %v3105
  %3109 = vrot.lane.b32.xlu0 %v3107, 88
  %v3110 = vpop.permute.xlu0 %3109
  %v3112 = vadd.f32 %v3078, %v3110
  %v3113 = vmul.f32 %v3092, %v3112
  %v3114 = vsel %vm2262, %v3113, 0.0
  %3115 = vadd.xlane.f32.xlu0 %v3114
  %v3116 = vpop.xlane.xlu0 %3115
  %3118 = vrot.lane.b32.xlu0 %v3113, 108
  %v3119 = vpop.permute.xlu0 %3118
  %v3121 = vsel %vm2262, %v3119, 0.0
  %3122 = vadd.xlane.f32.xlu0 %v3121
  %v3123 = vpop.xlane.xlu0 %3122
  %v3124 = vsel %vm2760, %v3116, %v3123
  %3126 = vrot.lane.b32.xlu0 %v3124, 100
  %v3127 = vpop.permute.xlu0 %3126
  %v3129 = vsel %vm2633, %v3078, %v2980
  %v3130 = vsel %vm2771, %v3129, %v3127
  %v3131 = vsel %vm2773, %v3130, 0.0
  %s3132 = scalar_lea.vmem %s20, 8
  %3133 = vst [vmem:[%s3132] sm:$0xff] %v3131
  %v3134 = vsel %vm2382, %v3073, 0.0
  %v3135 = vmul.f32 %v3116, %v2400
  %v3136 = vadd.f32 %v2377, %v3135
  %v3137 = vmul.f32 %v3123, %v2406
  %v3138 = vadd.f32 %v3136, %v3137
  %v3139 = vld [vmem:[%s14] sm:$0xff]
  %v3140 = vld [vmem:[%s14 + $0x8] sm:$0xff]
  %v3141 = vld [vmem:[%s14 + $0x10] sm:$0xff]
  %v3142 = vld [vmem:[%s14 + $0x18] sm:$0xff]
  %v3143 = vld [vmem:[%s14 + $0x20] sm:$0xff]
  %v3144 = vld [vmem:[%s15] sm:$0x1]
  %v3146 = vlaneseq
  %v3147 = vshrl.u32 %v3146, 7
  %v3148 = vsub.s32 0, %v3147
  %v3149 = vrot.slane %v3144, %v3148
  %3151 = vmatprep.subr.mxu0 0.0
  %3152 = vmatpush1.msra.mxu0 %v3139
  %3153 = vmatprep.subr.mxu0 0.0
  %3154 = vmatpush1.msra.mxu0 %v3140
  %3155 = vmatprep.subr.mxu0 0.0
  %3156 = vmatpush1.msra.mxu0 %v3141
  %3157 = vmatprep.subr.mxu0 0.0
  %3158 = vmatpush1.msra.mxu0 %v3142
  %3159 = vmatprep.subr.mxu0 0.0
  %3160 = vmatpush1.msra.mxu0 %v3143
  %3161 = vmatprep.subr.mxu0 0.0
  %3162 = vmatpush1.msra.mxu0 0.0
  %3163 = vmatprep.subr.mxu0 0.0
  %3164 = vmatpush1.msra.mxu0 0.0
  %3165 = vmatprep.subr.mxu0 0.0
  %3166 = vmatpush1.msra.mxu0 0.0
  %3167 = vmatprep.subr.mxu0 0.0
  %3168 = vmatpush1.msra.mxu0 0.0
  %3169 = vmatprep.subr.mxu0 0.0
  %3170 = vmatpush1.msra.mxu0 0.0
  %3171 = vmatprep.subr.mxu0 0.0
  %3172 = vmatpush1.msra.mxu0 0.0
  %3173 = vmatprep.subr.mxu0 0.0
  %3174 = vmatpush1.msra.mxu0 0.0
  %3175 = vmatprep.subr.mxu0 0.0
  %3176 = vmatpush1.msra.mxu0 0.0
  %3177 = vmatprep.subr.mxu0 0.0
  %3178 = vmatpush1.msra.mxu0 0.0
  %3179 = vmatprep.subr.mxu0 0.0
  %3180 = vmatpush1.msra.mxu0 0.0
  %3181 = vmatprep.subr.mxu0 0.0
  %3182 = vmatpush1.msra.mxu0 0.0
  %3183 = vmatprep.subr.mxu0 0.0
  %3184 = vmatpush1.msra.mxu0 0.0
  %3185 = vmatprep.subr.mxu0 0.0
  %3186 = vmatpush1.msra.mxu0 0.0
  %3187 = vmatprep.subr.mxu0 0.0
  %3188 = vmatpush1.msra.mxu0 0.0
  %3189 = vmatprep.subr.mxu0 0.0
  %3190 = vmatpush1.msra.mxu0 0.0
  %3191 = vmatprep.subr.mxu0 0.0
  %3192 = vmatpush1.msra.mxu0 0.0
  %3193 = vmatprep.subr.mxu0 0.0
  %3194 = vmatpush1.msra.mxu0 0.0
  %3195 = vmatprep.subr.mxu0 0.0
  %3196 = vmatpush1.msra.mxu0 0.0
  %3197 = vmatprep.subr.mxu0 0.0
  %3198 = vmatpush1.msra.mxu0 0.0
  %3199 = vmatprep.subr.mxu0 0.0
  %3200 = vmatpush1.msra.mxu0 0.0
  %3201 = vmatprep.subr.mxu0 0.0
  %3202 = vmatpush1.msra.mxu0 0.0
  %3203 = vmatprep.subr.mxu0 0.0
  %3204 = vmatpush1.msra.mxu0 0.0
  %3205 = vmatprep.subr.mxu0 0.0
  %3206 = vmatpush1.msra.mxu0 0.0
  %3207 = vmatprep.subr.mxu0 0.0
  %3208 = vmatpush1.msra.mxu0 0.0
  %3209 = vmatprep.subr.mxu0 0.0
  %3210 = vmatpush1.msra.mxu0 0.0
  %3211 = vmatprep.subr.mxu0 0.0
  %3212 = vmatpush1.msra.mxu0 0.0
  %3213 = vmatprep.subr.mxu0 0.0
  %3214 = vmatpush1.msra.mxu0 0.0
  %3215 = vmatprep.mubr.f32.mxu0 0.0
  %3216 = vmatmul.mubr.f32.gmra.mrb[0].mxu0 %v2904
  %v3217 = vpop.f32.mrb[0].mxu0
  %v3218 = vadd.f32 %v3149, %v3217
  %v3219 = vpop.f32.mrb[0].mxu0
  %3220 = vdwg.mxu0
  %v3221 = vadd.f32 %v3138, %v3218
  %v3222 = vmul.f32 %v3221, 0.5
  %v3223 = vtanh.pop %v3222
  %v3224 = vmul.f32 %v3223, 0.5
  %v3225 = vadd.f32 %v3224, 0.5
  %3227 = vrot.lane.b32.xlu0 %v3218, 48
  %v3228 = vpop.permute.xlu0 %3227
  %v3230 = vmul.f32 %v3225, %v3228
  %3232 = vrot.lane.b32.xlu0 %v3230, 80
  %v3233 = vpop.permute.xlu0 %3232
  %v3235 = vadd.f32 %v3138, %v3233
  %v3236 = vtanh.pop %v3235
  %v3237 = vsub.f32 1.0, %v3225
  %3239 = vrot.lane.b32.xlu0 %v3236, 88
  %v3240 = vpop.permute.xlu0 %3239
  %v3242 = vmul.f32 %v3237, %v3240
  %v3243 = vmul.f32 %v3225, %v2888
  %v3244 = vadd.f32 %v3242, %v3243
  %v3245 = vld [vmem:[%s16] sm:$0xff]
  %v3246 = vld [vmem:[%s16 + $0x8] sm:$0xff]
  %v3247 = vld [vmem:[%s16 + $0x10] sm:$0xff]
  %v3248 = vld [vmem:[%s16 + $0x18] sm:$0xff]
  %v3249 = vld [vmem:[%s16 + $0x20] sm:$0xff]
  %v3250 = vld [vmem:[%s17] sm:$0x1]
  %v3252 = vlaneseq
  %v3253 = vshrl.u32 %v3252, 7
  %v3254 = vsub.s32 0, %v3253
  %v3255 = vrot.slane %v3250, %v3254
  %3258 = vrot.lane.b32.xlu0 %v3244, 88
  %v3259 = vpop.permute.xlu0 %3258
  %v3260 = vsel %vm2424, %v3259, 0
  %3262 = vmatprep.subr.mxu0 0.0
  %3263 = vmatpush1.msra.mxu0 %v3245
  %3264 = vmatprep.subr.mxu0 0.0
  %3265 = vmatpush1.msra.mxu0 %v3246
  %3266 = vmatprep.subr.mxu0 0.0
  %3267 = vmatpush1.msra.mxu0 %v3247
  %3268 = vmatprep.subr.mxu0 0.0
  %3269 = vmatpush1.msra.mxu0 %v3248
  %3270 = vmatprep.subr.mxu0 0.0
  %3271 = vmatpush1.msra.mxu0 %v3249
  %3272 = vmatprep.subr.mxu0 0.0
  %3273 = vmatpush1.msra.mxu0 0.0
  %3274 = vmatprep.subr.mxu0 0.0
  %3275 = vmatpush1.msra.mxu0 0.0
  %3276 = vmatprep.subr.mxu0 0.0
  %3277 = vmatpush1.msra.mxu0 0.0
  %3278 = vmatprep.subr.mxu0 0.0
  %3279 = vmatpush1.msra.mxu0 0.0
  %3280 = vmatprep.subr.mxu0 0.0
  %3281 = vmatpush1.msra.mxu0 0.0
  %3282 = vmatprep.subr.mxu0 0.0
  %3283 = vmatpush1.msra.mxu0 0.0
  %3284 = vmatprep.subr.mxu0 0.0
  %3285 = vmatpush1.msra.mxu0 0.0
  %3286 = vmatprep.subr.mxu0 0.0
  %3287 = vmatpush1.msra.mxu0 0.0
  %3288 = vmatprep.subr.mxu0 0.0
  %3289 = vmatpush1.msra.mxu0 0.0
  %3290 = vmatprep.subr.mxu0 0.0
  %3291 = vmatpush1.msra.mxu0 0.0
  %3292 = vmatprep.subr.mxu0 0.0
  %3293 = vmatpush1.msra.mxu0 0.0
  %3294 = vmatprep.subr.mxu0 0.0
  %3295 = vmatpush1.msra.mxu0 0.0
  %3296 = vmatprep.subr.mxu0 0.0
  %3297 = vmatpush1.msra.mxu0 0.0
  %3298 = vmatprep.subr.mxu0 0.0
  %3299 = vmatpush1.msra.mxu0 0.0
  %3300 = vmatprep.subr.mxu0 0.0
  %3301 = vmatpush1.msra.mxu0 0.0
  %3302 = vmatprep.subr.mxu0 0.0
  %3303 = vmatpush1.msra.mxu0 0.0
  %3304 = vmatprep.subr.mxu0 0.0
  %3305 = vmatpush1.msra.mxu0 0.0
  %3306 = vmatprep.subr.mxu0 0.0
  %3307 = vmatpush1.msra.mxu0 0.0
  %3308 = vmatprep.subr.mxu0 0.0
  %3309 = vmatpush1.msra.mxu0 0.0
  %3310 = vmatprep.subr.mxu0 0.0
  %3311 = vmatpush1.msra.mxu0 0.0
  %3312 = vmatprep.subr.mxu0 0.0
  %3313 = vmatpush1.msra.mxu0 0.0
  %3314 = vmatprep.subr.mxu0 0.0
  %3315 = vmatpush1.msra.mxu0 0.0
  %3316 = vmatprep.subr.mxu0 0.0
  %3317 = vmatpush1.msra.mxu0 0.0
  %3318 = vmatprep.subr.mxu0 0.0
  %3319 = vmatpush1.msra.mxu0 0.0
  %3320 = vmatprep.subr.mxu0 0.0
  %3321 = vmatpush1.msra.mxu0 0.0
  %3322 = vmatprep.subr.mxu0 0.0
  %3323 = vmatpush1.msra.mxu0 0.0
  %3324 = vmatprep.subr.mxu0 0.0
  %3325 = vmatpush1.msra.mxu0 0.0
  %3326 = vmatprep.mubr.f32.mxu0 0.0
  %3327 = vmatmul.mubr.f32.gmra.mrb[0].mxu0 %v3260
  %v3328 = vpop.f32.mrb[0].mxu0
  %v3329 = vadd.f32 %v3255, %v3328
  %v3330 = vpop.f32.mrb[0].mxu0
  %3331 = vdwg.mxu0
  %v3332 = vmul.f32 %v3329, 0.5
  %v3333 = vtanh.pop %v3332
  %v3334 = vmul.f32 %v3333, 0.5
  %v3335 = vadd.f32 %v3334, 0.5
  %v3336 = vtanh.pop %v3329
  %v3337 = vld [vmem:[%s18] sm:$0xff]
  %v3338 = vld [vmem:[%s18 + $0x8] sm:$0xff]
  %v3339 = vld [vmem:[%s18 + $0x10] sm:$0xff]
  %v3340 = vld [vmem:[%s18 + $0x18] sm:$0xff]
  %v3341 = vld [vmem:[%s18 + $0x20] sm:$0xff]
  %v3342 = vld [vmem:[%s18 + $0x28] sm:$0xff]
  %v3343 = vld [vmem:[%s18 + $0x30] sm:$0xff]
  %v3344 = vld [vmem:[%s18 + $0x38] sm:$0xff]
  %v3345 = vld [vmem:[%s18 + $0x40] sm:$0xff]
  %v3346 = vld [vmem:[%s18 + $0x48] sm:$0xff]
  %v3347 = vld [vmem:[%s19] sm:$0x1]
  %v3349 = vlaneseq
  %v3350 = vshrl.u32 %v3349, 7
  %v3351 = vsub.s32 0, %v3350
  %v3352 = vrot.slane %v3347, %v3351
  %v3355 = vsel %vm2633, %v3335, 0
  %3357 = vmatprep.subr.mxu0 0.0
  %3358 = vmatpush1.msra.mxu0 %v3337
  %3359 = vmatprep.subr.mxu0 0.0
  %3360 = vmatpush1.msra.mxu0 %v3338
  %3361 = vmatprep.subr.mxu0 0.0
  %3362 = vmatpush1.msra.mxu0 %v3339
  %3363 = vmatprep.subr.mxu0 0.0
  %3364 = vmatpush1.msra.mxu0 %v3340
  %3365 = vmatprep.subr.mxu0 0.0
  %3366 = vmatpush1.msra.mxu0 %v3341
  %3367 = vmatprep.subr.mxu0 0.0
  %3368 = vmatpush1.msra.mxu0 %v3342
  %3369 = vmatprep.subr.mxu0 0.0
  %3370 = vmatpush1.msra.mxu0 %v3343
  %3371 = vmatprep.subr.mxu0 0.0
  %3372 = vmatpush1.msra.mxu0 %v3344
  %3373 = vmatprep.subr.mxu0 0.0
  %3374 = vmatpush1.msra.mxu0 %v3345
  %3375 = vmatprep.subr.mxu0 0.0
  %3376 = vmatpush1.msra.mxu0 %v3346
  %3377 = vmatprep.subr.mxu0 0.0
  %3378 = vmatpush1.msra.mxu0 0.0
  %3379 = vmatprep.subr.mxu0 0.0
  %3380 = vmatpush1.msra.mxu0 0.0
  %3381 = vmatprep.subr.mxu0 0.0
  %3382 = vmatpush1.msra.mxu0 0.0
  %3383 = vmatprep.subr.mxu0 0.0
  %3384 = vmatpush1.msra.mxu0 0.0
  %3385 = vmatprep.subr.mxu0 0.0
  %3386 = vmatpush1.msra.mxu0 0.0
  %3387 = vmatprep.subr.mxu0 0.0
  %3388 = vmatpush1.msra.mxu0 0.0
  %3389 = vmatprep.subr.mxu0 0.0
  %3390 = vmatpush1.msra.mxu0 0.0
  %3391 = vmatprep.subr.mxu0 0.0
  %3392 = vmatpush1.msra.mxu0 0.0
  %3393 = vmatprep.subr.mxu0 0.0
  %3394 = vmatpush1.msra.mxu0 0.0
  %3395 = vmatprep.subr.mxu0 0.0
  %3396 = vmatpush1.msra.mxu0 0.0
  %3397 = vmatprep.subr.mxu0 0.0
  %3398 = vmatpush1.msra.mxu0 0.0
  %3399 = vmatprep.subr.mxu0 0.0
  %3400 = vmatpush1.msra.mxu0 0.0
  %3401 = vmatprep.subr.mxu0 0.0
  %3402 = vmatpush1.msra.mxu0 0.0
  %3403 = vmatprep.subr.mxu0 0.0
  %3404 = vmatpush1.msra.mxu0 0.0
  %3405 = vmatprep.subr.mxu0 0.0
  %3406 = vmatpush1.msra.mxu0 0.0
  %3407 = vmatprep.subr.mxu0 0.0
  %3408 = vmatpush1.msra.mxu0 0.0
  %3409 = vmatprep.subr.mxu0 0.0
  %3410 = vmatpush1.msra.mxu0 0.0
  %3411 = vmatprep.subr.mxu0 0.0
  %3412 = vmatpush1.msra.mxu0 0.0
  %3413 = vmatprep.subr.mxu0 0.0
  %3414 = vmatpush1.msra.mxu0 0.0
  %3415 = vmatprep.subr.mxu0 0.0
  %3416 = vmatpush1.msra.mxu0 0.0
  %3417 = vmatprep.subr.mxu0 0.0
  %3418 = vmatpush1.msra.mxu0 0.0
  %3419 = vmatprep.subr.mxu0 0.0
  %3420 = vmatpush1.msra.mxu0 0.0
  %3421 = vmatprep.mubr.f32.mxu0 0.0
  %3422 = vmatmul.mubr.f32.gmra.mrb[0].mxu0 %v3355
  %v3423 = vpop.f32.mrb[0].mxu0
  %v3424 = vadd.f32 %v3352, %v3423
  %v3425 = vpop.f32.mrb[0].mxu0
  %3426 = vdwg.mxu0
  %v3427 = vmax.f32 %v3424, -1.5
  %v3428 = vmin.f32 %v3427, 1.5
  %v3429 = vadd.f32 %v3428, %v3134
  %v3430 = vmul.f32 %v3424, 1.442695
  %v3431 = vpow.pop %v3430
  %v3432 = vmax.f32 %v3431, 0.031622775
  %v3433 = vmin.f32 %v3432, 31.622776
  %v3434 = vsel %vm2382, %v3429, %v3433
  %s3435 = scalar_lea.vmem %s1, 24
  %v3436 = vld [vmem:[%s3435] sm:$0xff]
  %v3437 = vadd.f32 %v2286, %v3436
  %v3438 = vsel %vm2262, %v3437, -inf
  %3439 = vmax.xlane.f32.xlu0 %v3438
  %v3440 = vpop.xlane.xlu0 %3439
  %vm3441 = vcmp.ge.f32.partialorder %v3437, %v3440
  %v3442 = vsel %vm3441, %v2260, 20.0
  %v3443 = vsel %vm2262, %v3442, inf
  %3444 = vmin.xlane.f32.xlu0 %v3443
  %v3445 = vpop.xlane.xlu0 %3444
  %vm3446 = vcmp.eq.f32.partialorder %v2386, %v3445
  %v3447 = vsel %vm3446, 1, 0
  %v3448 = vcvt.s32.f32 %v3447
  %3450 = vset.pattern.permute.xlu0 20
  %3451 = vperm.xlu0 %3450, %v3436
  %v3452 = vpop.permute.xlu0 %3451
  %3454 = vset.pattern.permute.xlu0 21
  %3455 = vperm.xlu0 %3454, %v3436
  %v3456 = vpop.permute.xlu0 %3455
  %v3458 = vsel %vm2383, %v3452, %v3456
  %3460 = vrot.lane.b32.xlu0 %v3458, 40
  %v3461 = vpop.permute.xlu0 %3460
  %v3463 = vmul.f32 %v3434, %v3461
  %3465 = vrot.lane.b32.xlu0 %v3463, 88
  %v3466 = vpop.permute.xlu0 %3465
  %v3468 = vadd.f32 %v3434, %v3466
  %v3469 = vmul.f32 %v3448, %v3468
  %v3470 = vsel %vm2262, %v3469, 0.0
  %3471 = vadd.xlane.f32.xlu0 %v3470
  %v3472 = vpop.xlane.xlu0 %3471
  %3474 = vrot.lane.b32.xlu0 %v3469, 108
  %v3475 = vpop.permute.xlu0 %3474
  %v3477 = vsel %vm2262, %v3475, 0.0
  %3478 = vadd.xlane.f32.xlu0 %v3477
  %v3479 = vpop.xlane.xlu0 %3478
  %v3480 = vsel %vm2760, %v3472, %v3479
  %3482 = vrot.lane.b32.xlu0 %v3480, 100
  %v3483 = vpop.permute.xlu0 %3482
  %v3485 = vsel %vm2633, %v3434, %v3336
  %v3486 = vsel %vm2771, %v3485, %v3483
  %v3487 = vsel %vm2773, %v3486, 0.0
  %s3488 = scalar_lea.vmem %s20, 16
  %3489 = vst [vmem:[%s3488] sm:$0xff] %v3487
  %v3490 = vsel %vm2382, %v3429, 0.0
  %v3491 = vmul.f32 %v3472, %v2400
  %v3492 = vadd.f32 %v2377, %v3491
  %v3493 = vmul.f32 %v3479, %v2406
  %v3494 = vadd.f32 %v3492, %v3493
  %v3495 = vld [vmem:[%s14] sm:$0xff]
  %v3496 = vld [vmem:[%s14 + $0x8] sm:$0xff]
  %v3497 = vld [vmem:[%s14 + $0x10] sm:$0xff]
  %v3498 = vld [vmem:[%s14 + $0x18] sm:$0xff]
  %v3499 = vld [vmem:[%s14 + $0x20] sm:$0xff]
  %v3500 = vld [vmem:[%s15] sm:$0x1]
  %v3502 = vlaneseq
  %v3503 = vshrl.u32 %v3502, 7
  %v3504 = vsub.s32 0, %v3503
  %v3505 = vrot.slane %v3500, %v3504
  %3507 = vmatprep.subr.mxu0 0.0
  %3508 = vmatpush1.msra.mxu0 %v3495
  %3509 = vmatprep.subr.mxu0 0.0
  %3510 = vmatpush1.msra.mxu0 %v3496
  %3511 = vmatprep.subr.mxu0 0.0
  %3512 = vmatpush1.msra.mxu0 %v3497
  %3513 = vmatprep.subr.mxu0 0.0
  %3514 = vmatpush1.msra.mxu0 %v3498
  %3515 = vmatprep.subr.mxu0 0.0
  %3516 = vmatpush1.msra.mxu0 %v3499
  %3517 = vmatprep.subr.mxu0 0.0
  %3518 = vmatpush1.msra.mxu0 0.0
  %3519 = vmatprep.subr.mxu0 0.0
  %3520 = vmatpush1.msra.mxu0 0.0
  %3521 = vmatprep.subr.mxu0 0.0
  %3522 = vmatpush1.msra.mxu0 0.0
  %3523 = vmatprep.subr.mxu0 0.0
  %3524 = vmatpush1.msra.mxu0 0.0
  %3525 = vmatprep.subr.mxu0 0.0
  %3526 = vmatpush1.msra.mxu0 0.0
  %3527 = vmatprep.subr.mxu0 0.0
  %3528 = vmatpush1.msra.mxu0 0.0
  %3529 = vmatprep.subr.mxu0 0.0
  %3530 = vmatpush1.msra.mxu0 0.0
  %3531 = vmatprep.subr.mxu0 0.0
  %3532 = vmatpush1.msra.mxu0 0.0
  %3533 = vmatprep.subr.mxu0 0.0
  %3534 = vmatpush1.msra.mxu0 0.0
  %3535 = vmatprep.subr.mxu0 0.0
  %3536 = vmatpush1.msra.mxu0 0.0
  %3537 = vmatprep.subr.mxu0 0.0
  %3538 = vmatpush1.msra.mxu0 0.0
  %3539 = vmatprep.subr.mxu0 0.0
  %3540 = vmatpush1.msra.mxu0 0.0
  %3541 = vmatprep.subr.mxu0 0.0
  %3542 = vmatpush1.msra.mxu0 0.0
  %3543 = vmatprep.subr.mxu0 0.0
  %3544 = vmatpush1.msra.mxu0 0.0
  %3545 = vmatprep.subr.mxu0 0.0
  %3546 = vmatpush1.msra.mxu0 0.0
  %3547 = vmatprep.subr.mxu0 0.0
  %3548 = vmatpush1.msra.mxu0 0.0
  %3549 = vmatprep.subr.mxu0 0.0
  %3550 = vmatpush1.msra.mxu0 0.0
  %3551 = vmatprep.subr.mxu0 0.0
  %3552 = vmatpush1.msra.mxu0 0.0
  %3553 = vmatprep.subr.mxu0 0.0
  %3554 = vmatpush1.msra.mxu0 0.0
  %3555 = vmatprep.subr.mxu0 0.0
  %3556 = vmatpush1.msra.mxu0 0.0
  %3557 = vmatprep.subr.mxu0 0.0
  %3558 = vmatpush1.msra.mxu0 0.0
  %3559 = vmatprep.subr.mxu0 0.0
  %3560 = vmatpush1.msra.mxu0 0.0
  %3561 = vmatprep.subr.mxu0 0.0
  %3562 = vmatpush1.msra.mxu0 0.0
  %3563 = vmatprep.subr.mxu0 0.0
  %3564 = vmatpush1.msra.mxu0 0.0
  %3565 = vmatprep.subr.mxu0 0.0
  %3566 = vmatpush1.msra.mxu0 0.0
  %3567 = vmatprep.subr.mxu0 0.0
  %3568 = vmatpush1.msra.mxu0 0.0
  %3569 = vmatprep.subr.mxu0 0.0
  %3570 = vmatpush1.msra.mxu0 0.0
  %3571 = vmatprep.mubr.f32.mxu0 0.0
  %3572 = vmatmul.mubr.f32.gmra.mrb[0].mxu0 %v3260
  %v3573 = vpop.f32.mrb[0].mxu0
  %v3574 = vadd.f32 %v3505, %v3573
  %v3575 = vpop.f32.mrb[0].mxu0
  %3576 = vdwg.mxu0
  %v3577 = vadd.f32 %v3494, %v3574
  %v3578 = vmul.f32 %v3577, 0.5
  %v3579 = vtanh.pop %v3578
  %v3580 = vmul.f32 %v3579, 0.5
  %v3581 = vadd.f32 %v3580, 0.5
  %3583 = vrot.lane.b32.xlu0 %v3574, 48
  %v3584 = vpop.permute.xlu0 %3583
  %v3586 = vmul.f32 %v3581, %v3584
  %3588 = vrot.lane.b32.xlu0 %v3586, 80
  %v3589 = vpop.permute.xlu0 %3588
  %v3591 = vadd.f32 %v3494, %v3589
  %v3592 = vtanh.pop %v3591
  %v3593 = vsub.f32 1.0, %v3581
  %3595 = vrot.lane.b32.xlu0 %v3592, 88
  %v3596 = vpop.permute.xlu0 %3595
  %v3598 = vmul.f32 %v3593, %v3596
  %v3599 = vmul.f32 %v3581, %v3244
  %v3600 = vadd.f32 %v3598, %v3599
  %v3601 = vld [vmem:[%s16] sm:$0xff]
  %v3602 = vld [vmem:[%s16 + $0x8] sm:$0xff]
  %v3603 = vld [vmem:[%s16 + $0x10] sm:$0xff]
  %v3604 = vld [vmem:[%s16 + $0x18] sm:$0xff]
  %v3605 = vld [vmem:[%s16 + $0x20] sm:$0xff]
  %v3606 = vld [vmem:[%s17] sm:$0x1]
  %v3608 = vlaneseq
  %v3609 = vshrl.u32 %v3608, 7
  %v3610 = vsub.s32 0, %v3609
  %v3611 = vrot.slane %v3606, %v3610
  %3614 = vrot.lane.b32.xlu0 %v3600, 88
  %v3615 = vpop.permute.xlu0 %3614
  %v3616 = vsel %vm2424, %v3615, 0
  %3618 = vmatprep.subr.mxu0 0.0
  %3619 = vmatpush1.msra.mxu0 %v3601
  %3620 = vmatprep.subr.mxu0 0.0
  %3621 = vmatpush1.msra.mxu0 %v3602
  %3622 = vmatprep.subr.mxu0 0.0
  %3623 = vmatpush1.msra.mxu0 %v3603
  %3624 = vmatprep.subr.mxu0 0.0
  %3625 = vmatpush1.msra.mxu0 %v3604
  %3626 = vmatprep.subr.mxu0 0.0
  %3627 = vmatpush1.msra.mxu0 %v3605
  %3628 = vmatprep.subr.mxu0 0.0
  %3629 = vmatpush1.msra.mxu0 0.0
  %3630 = vmatprep.subr.mxu0 0.0
  %3631 = vmatpush1.msra.mxu0 0.0
  %3632 = vmatprep.subr.mxu0 0.0
  %3633 = vmatpush1.msra.mxu0 0.0
  %3634 = vmatprep.subr.mxu0 0.0
  %3635 = vmatpush1.msra.mxu0 0.0
  %3636 = vmatprep.subr.mxu0 0.0
  %3637 = vmatpush1.msra.mxu0 0.0
  %3638 = vmatprep.subr.mxu0 0.0
  %3639 = vmatpush1.msra.mxu0 0.0
  %3640 = vmatprep.subr.mxu0 0.0
  %3641 = vmatpush1.msra.mxu0 0.0
  %3642 = vmatprep.subr.mxu0 0.0
  %3643 = vmatpush1.msra.mxu0 0.0
  %3644 = vmatprep.subr.mxu0 0.0
  %3645 = vmatpush1.msra.mxu0 0.0
  %3646 = vmatprep.subr.mxu0 0.0
  %3647 = vmatpush1.msra.mxu0 0.0
  %3648 = vmatprep.subr.mxu0 0.0
  %3649 = vmatpush1.msra.mxu0 0.0
  %3650 = vmatprep.subr.mxu0 0.0
  %3651 = vmatpush1.msra.mxu0 0.0
  %3652 = vmatprep.subr.mxu0 0.0
  %3653 = vmatpush1.msra.mxu0 0.0
  %3654 = vmatprep.subr.mxu0 0.0
  %3655 = vmatpush1.msra.mxu0 0.0
  %3656 = vmatprep.subr.mxu0 0.0
  %3657 = vmatpush1.msra.mxu0 0.0
  %3658 = vmatprep.subr.mxu0 0.0
  %3659 = vmatpush1.msra.mxu0 0.0
  %3660 = vmatprep.subr.mxu0 0.0
  %3661 = vmatpush1.msra.mxu0 0.0
  %3662 = vmatprep.subr.mxu0 0.0
  %3663 = vmatpush1.msra.mxu0 0.0
  %3664 = vmatprep.subr.mxu0 0.0
  %3665 = vmatpush1.msra.mxu0 0.0
  %3666 = vmatprep.subr.mxu0 0.0
  %3667 = vmatpush1.msra.mxu0 0.0
  %3668 = vmatprep.subr.mxu0 0.0
  %3669 = vmatpush1.msra.mxu0 0.0
  %3670 = vmatprep.subr.mxu0 0.0
  %3671 = vmatpush1.msra.mxu0 0.0
  %3672 = vmatprep.subr.mxu0 0.0
  %3673 = vmatpush1.msra.mxu0 0.0
  %3674 = vmatprep.subr.mxu0 0.0
  %3675 = vmatpush1.msra.mxu0 0.0
  %3676 = vmatprep.subr.mxu0 0.0
  %3677 = vmatpush1.msra.mxu0 0.0
  %3678 = vmatprep.subr.mxu0 0.0
  %3679 = vmatpush1.msra.mxu0 0.0
  %3680 = vmatprep.subr.mxu0 0.0
  %3681 = vmatpush1.msra.mxu0 0.0
  %3682 = vmatprep.mubr.f32.mxu0 0.0
  %3683 = vmatmul.mubr.f32.gmra.mrb[0].mxu0 %v3616
  %v3684 = vpop.f32.mrb[0].mxu0
  %v3685 = vadd.f32 %v3611, %v3684
  %v3686 = vpop.f32.mrb[0].mxu0
  %3687 = vdwg.mxu0
  %v3688 = vmul.f32 %v3685, 0.5
  %v3689 = vtanh.pop %v3688
  %v3690 = vmul.f32 %v3689, 0.5
  %v3691 = vadd.f32 %v3690, 0.5
  %v3692 = vtanh.pop %v3685
  %v3693 = vld [vmem:[%s18] sm:$0xff]
  %v3694 = vld [vmem:[%s18 + $0x8] sm:$0xff]
  %v3695 = vld [vmem:[%s18 + $0x10] sm:$0xff]
  %v3696 = vld [vmem:[%s18 + $0x18] sm:$0xff]
  %v3697 = vld [vmem:[%s18 + $0x20] sm:$0xff]
  %v3698 = vld [vmem:[%s18 + $0x28] sm:$0xff]
  %v3699 = vld [vmem:[%s18 + $0x30] sm:$0xff]
  %v3700 = vld [vmem:[%s18 + $0x38] sm:$0xff]
  %v3701 = vld [vmem:[%s18 + $0x40] sm:$0xff]
  %v3702 = vld [vmem:[%s18 + $0x48] sm:$0xff]
  %v3703 = vld [vmem:[%s19] sm:$0x1]
  %v3705 = vlaneseq
  %v3706 = vshrl.u32 %v3705, 7
  %v3707 = vsub.s32 0, %v3706
  %v3708 = vrot.slane %v3703, %v3707
  %v3711 = vsel %vm2633, %v3691, 0
  %3713 = vmatprep.subr.mxu0 0.0
  %3714 = vmatpush1.msra.mxu0 %v3693
  %3715 = vmatprep.subr.mxu0 0.0
  %3716 = vmatpush1.msra.mxu0 %v3694
  %3717 = vmatprep.subr.mxu0 0.0
  %3718 = vmatpush1.msra.mxu0 %v3695
  %3719 = vmatprep.subr.mxu0 0.0
  %3720 = vmatpush1.msra.mxu0 %v3696
  %3721 = vmatprep.subr.mxu0 0.0
  %3722 = vmatpush1.msra.mxu0 %v3697
  %3723 = vmatprep.subr.mxu0 0.0
  %3724 = vmatpush1.msra.mxu0 %v3698
  %3725 = vmatprep.subr.mxu0 0.0
  %3726 = vmatpush1.msra.mxu0 %v3699
  %3727 = vmatprep.subr.mxu0 0.0
  %3728 = vmatpush1.msra.mxu0 %v3700
  %3729 = vmatprep.subr.mxu0 0.0
  %3730 = vmatpush1.msra.mxu0 %v3701
  %3731 = vmatprep.subr.mxu0 0.0
  %3732 = vmatpush1.msra.mxu0 %v3702
  %3733 = vmatprep.subr.mxu0 0.0
  %3734 = vmatpush1.msra.mxu0 0.0
  %3735 = vmatprep.subr.mxu0 0.0
  %3736 = vmatpush1.msra.mxu0 0.0
  %3737 = vmatprep.subr.mxu0 0.0
  %3738 = vmatpush1.msra.mxu0 0.0
  %3739 = vmatprep.subr.mxu0 0.0
  %3740 = vmatpush1.msra.mxu0 0.0
  %3741 = vmatprep.subr.mxu0 0.0
  %3742 = vmatpush1.msra.mxu0 0.0
  %3743 = vmatprep.subr.mxu0 0.0
  %3744 = vmatpush1.msra.mxu0 0.0
  %3745 = vmatprep.subr.mxu0 0.0
  %3746 = vmatpush1.msra.mxu0 0.0
  %3747 = vmatprep.subr.mxu0 0.0
  %3748 = vmatpush1.msra.mxu0 0.0
  %3749 = vmatprep.subr.mxu0 0.0
  %3750 = vmatpush1.msra.mxu0 0.0
  %3751 = vmatprep.subr.mxu0 0.0
  %3752 = vmatpush1.msra.mxu0 0.0
  %3753 = vmatprep.subr.mxu0 0.0
  %3754 = vmatpush1.msra.mxu0 0.0
  %3755 = vmatprep.subr.mxu0 0.0
  %3756 = vmatpush1.msra.mxu0 0.0
  %3757 = vmatprep.subr.mxu0 0.0
  %3758 = vmatpush1.msra.mxu0 0.0
  %3759 = vmatprep.subr.mxu0 0.0
  %3760 = vmatpush1.msra.mxu0 0.0
  %3761 = vmatprep.subr.mxu0 0.0
  %3762 = vmatpush1.msra.mxu0 0.0
  %3763 = vmatprep.subr.mxu0 0.0
  %3764 = vmatpush1.msra.mxu0 0.0
  %3765 = vmatprep.subr.mxu0 0.0
  %3766 = vmatpush1.msra.mxu0 0.0
  %3767 = vmatprep.subr.mxu0 0.0
  %3768 = vmatpush1.msra.mxu0 0.0
  %3769 = vmatprep.subr.mxu0 0.0
  %3770 = vmatpush1.msra.mxu0 0.0
  %3771 = vmatprep.subr.mxu0 0.0
  %3772 = vmatpush1.msra.mxu0 0.0
  %3773 = vmatprep.subr.mxu0 0.0
  %3774 = vmatpush1.msra.mxu0 0.0
  %3775 = vmatprep.subr.mxu0 0.0
  %3776 = vmatpush1.msra.mxu0 0.0
  %3777 = vmatprep.mubr.f32.mxu0 0.0
  %3778 = vmatmul.mubr.f32.gmra.mrb[0].mxu0 %v3711
  %v3779 = vpop.f32.mrb[0].mxu0
  %v3780 = vadd.f32 %v3708, %v3779
  %v3781 = vpop.f32.mrb[0].mxu0
  %3782 = vdwg.mxu0
  %v3783 = vmax.f32 %v3780, -1.5
  %v3784 = vmin.f32 %v3783, 1.5
  %v3785 = vadd.f32 %v3784, %v3490
  %v3786 = vmul.f32 %v3780, 1.442695
  %v3787 = vpow.pop %v3786
  %v3788 = vmax.f32 %v3787, 0.031622775
  %v3789 = vmin.f32 %v3788, 31.622776
  %v3790 = vsel %vm2382, %v3785, %v3789
  %s3791 = scalar_lea.vmem %s1, 32
  %v3792 = vld [vmem:[%s3791] sm:$0xff]
  %v3793 = vadd.f32 %v2286, %v3792
  %v3794 = vsel %vm2262, %v3793, -inf
  %3795 = vmax.xlane.f32.xlu0 %v3794
  %v3796 = vpop.xlane.xlu0 %3795
  %vm3797 = vcmp.ge.f32.partialorder %v3793, %v3796
  %v3798 = vsel %vm3797, %v2260, 20.0
  %v3799 = vsel %vm2262, %v3798, inf
  %3800 = vmin.xlane.f32.xlu0 %v3799
  %v3801 = vpop.xlane.xlu0 %3800
  %vm3802 = vcmp.eq.f32.partialorder %v2386, %v3801
  %v3803 = vsel %vm3802, 1, 0
  %v3804 = vcvt.s32.f32 %v3803
  %3806 = vset.pattern.permute.xlu0 20
  %3807 = vperm.xlu0 %3806, %v3792
  %v3808 = vpop.permute.xlu0 %3807
  %3810 = vset.pattern.permute.xlu0 21
  %3811 = vperm.xlu0 %3810, %v3792
  %v3812 = vpop.permute.xlu0 %3811
  %v3814 = vsel %vm2383, %v3808, %v3812
  %3816 = vrot.lane.b32.xlu0 %v3814, 40
  %v3817 = vpop.permute.xlu0 %3816
  %v3819 = vmul.f32 %v3790, %v3817
  %3821 = vrot.lane.b32.xlu0 %v3819, 88
  %v3822 = vpop.permute.xlu0 %3821
  %v3824 = vadd.f32 %v3790, %v3822
  %v3825 = vmul.f32 %v3804, %v3824
  %v3826 = vsel %vm2262, %v3825, 0.0
  %3827 = vadd.xlane.f32.xlu0 %v3826
  %v3828 = vpop.xlane.xlu0 %3827
  %3830 = vrot.lane.b32.xlu0 %v3825, 108
  %v3831 = vpop.permute.xlu0 %3830
  %v3833 = vsel %vm2262, %v3831, 0.0
  %3834 = vadd.xlane.f32.xlu0 %v3833
  %v3835 = vpop.xlane.xlu0 %3834
  %v3836 = vsel %vm2760, %v3828, %v3835
  %3838 = vrot.lane.b32.xlu0 %v3836, 100
  %v3839 = vpop.permute.xlu0 %3838
  %v3841 = vsel %vm2633, %v3790, %v3692
  %v3842 = vsel %vm2771, %v3841, %v3839
  %v3843 = vsel %vm2773, %v3842, 0.0
  %s3844 = scalar_lea.vmem %s20, 24
  %3845 = vst [vmem:[%s3844] sm:$0xff] %v3843
  %v3846 = vsel %vm2382, %v3785, 0.0
  %v3847 = vmul.f32 %v3828, %v2400
  %v3848 = vadd.f32 %v2377, %v3847
  %v3849 = vmul.f32 %v3835, %v2406
  %v3850 = vadd.f32 %v3848, %v3849
  %v3851 = vld [vmem:[%s14] sm:$0xff]
  %v3852 = vld [vmem:[%s14 + $0x8] sm:$0xff]
  %v3853 = vld [vmem:[%s14 + $0x10] sm:$0xff]
  %v3854 = vld [vmem:[%s14 + $0x18] sm:$0xff]
  %v3855 = vld [vmem:[%s14 + $0x20] sm:$0xff]
  %v3856 = vld [vmem:[%s15] sm:$0x1]
  %v3858 = vlaneseq
  %v3859 = vshrl.u32 %v3858, 7
  %v3860 = vsub.s32 0, %v3859
  %v3861 = vrot.slane %v3856, %v3860
  %3863 = vmatprep.subr.mxu0 0.0
  %3864 = vmatpush1.msra.mxu0 %v3851
  %3865 = vmatprep.subr.mxu0 0.0
  %3866 = vmatpush1.msra.mxu0 %v3852
  %3867 = vmatprep.subr.mxu0 0.0
  %3868 = vmatpush1.msra.mxu0 %v3853
  %3869 = vmatprep.subr.mxu0 0.0
  %3870 = vmatpush1.msra.mxu0 %v3854
  %3871 = vmatprep.subr.mxu0 0.0
  %3872 = vmatpush1.msra.mxu0 %v3855
  %3873 = vmatprep.subr.mxu0 0.0
  %3874 = vmatpush1.msra.mxu0 0.0
  %3875 = vmatprep.subr.mxu0 0.0
  %3876 = vmatpush1.msra.mxu0 0.0
  %3877 = vmatprep.subr.mxu0 0.0
  %3878 = vmatpush1.msra.mxu0 0.0
  %3879 = vmatprep.subr.mxu0 0.0
  %3880 = vmatpush1.msra.mxu0 0.0
  %3881 = vmatprep.subr.mxu0 0.0
  %3882 = vmatpush1.msra.mxu0 0.0
  %3883 = vmatprep.subr.mxu0 0.0
  %3884 = vmatpush1.msra.mxu0 0.0
  %3885 = vmatprep.subr.mxu0 0.0
  %3886 = vmatpush1.msra.mxu0 0.0
  %3887 = vmatprep.subr.mxu0 0.0
  %3888 = vmatpush1.msra.mxu0 0.0
  %3889 = vmatprep.subr.mxu0 0.0
  %3890 = vmatpush1.msra.mxu0 0.0
  %3891 = vmatprep.subr.mxu0 0.0
  %3892 = vmatpush1.msra.mxu0 0.0
  %3893 = vmatprep.subr.mxu0 0.0
  %3894 = vmatpush1.msra.mxu0 0.0
  %3895 = vmatprep.subr.mxu0 0.0
  %3896 = vmatpush1.msra.mxu0 0.0
  %3897 = vmatprep.subr.mxu0 0.0
  %3898 = vmatpush1.msra.mxu0 0.0
  %3899 = vmatprep.subr.mxu0 0.0
  %3900 = vmatpush1.msra.mxu0 0.0
  %3901 = vmatprep.subr.mxu0 0.0
  %3902 = vmatpush1.msra.mxu0 0.0
  %3903 = vmatprep.subr.mxu0 0.0
  %3904 = vmatpush1.msra.mxu0 0.0
  %3905 = vmatprep.subr.mxu0 0.0
  %3906 = vmatpush1.msra.mxu0 0.0
  %3907 = vmatprep.subr.mxu0 0.0
  %3908 = vmatpush1.msra.mxu0 0.0
  %3909 = vmatprep.subr.mxu0 0.0
  %3910 = vmatpush1.msra.mxu0 0.0
  %3911 = vmatprep.subr.mxu0 0.0
  %3912 = vmatpush1.msra.mxu0 0.0
  %3913 = vmatprep.subr.mxu0 0.0
  %3914 = vmatpush1.msra.mxu0 0.0
  %3915 = vmatprep.subr.mxu0 0.0
  %3916 = vmatpush1.msra.mxu0 0.0
  %3917 = vmatprep.subr.mxu0 0.0
  %3918 = vmatpush1.msra.mxu0 0.0
  %3919 = vmatprep.subr.mxu0 0.0
  %3920 = vmatpush1.msra.mxu0 0.0
  %3921 = vmatprep.subr.mxu0 0.0
  %3922 = vmatpush1.msra.mxu0 0.0
  %3923 = vmatprep.subr.mxu0 0.0
  %3924 = vmatpush1.msra.mxu0 0.0
  %3925 = vmatprep.subr.mxu0 0.0
  %3926 = vmatpush1.msra.mxu0 0.0
  %3927 = vmatprep.mubr.f32.mxu0 0.0
  %3928 = vmatmul.mubr.f32.gmra.mrb[0].mxu0 %v3616
  %v3929 = vpop.f32.mrb[0].mxu0
  %v3930 = vadd.f32 %v3861, %v3929
  %v3931 = vpop.f32.mrb[0].mxu0
  %3932 = vdwg.mxu0
  %v3933 = vadd.f32 %v3850, %v3930
  %v3934 = vmul.f32 %v3933, 0.5
  %v3935 = vtanh.pop %v3934
  %v3936 = vmul.f32 %v3935, 0.5
  %v3937 = vadd.f32 %v3936, 0.5
  %3939 = vrot.lane.b32.xlu0 %v3930, 48
  %v3940 = vpop.permute.xlu0 %3939
  %v3942 = vmul.f32 %v3937, %v3940
  %3944 = vrot.lane.b32.xlu0 %v3942, 80
  %v3945 = vpop.permute.xlu0 %3944
  %v3947 = vadd.f32 %v3850, %v3945
  %v3948 = vtanh.pop %v3947
  %v3949 = vsub.f32 1.0, %v3937
  %3951 = vrot.lane.b32.xlu0 %v3948, 88
  %v3952 = vpop.permute.xlu0 %3951
  %v3954 = vmul.f32 %v3949, %v3952
  %v3955 = vmul.f32 %v3937, %v3600
  %v3956 = vadd.f32 %v3954, %v3955
  %v3957 = vld [vmem:[%s16] sm:$0xff]
  %v3958 = vld [vmem:[%s16 + $0x8] sm:$0xff]
  %v3959 = vld [vmem:[%s16 + $0x10] sm:$0xff]
  %v3960 = vld [vmem:[%s16 + $0x18] sm:$0xff]
  %v3961 = vld [vmem:[%s16 + $0x20] sm:$0xff]
  %v3962 = vld [vmem:[%s17] sm:$0x1]
  %v3964 = vlaneseq
  %v3965 = vshrl.u32 %v3964, 7
  %v3966 = vsub.s32 0, %v3965
  %v3967 = vrot.slane %v3962, %v3966
  %3970 = vrot.lane.b32.xlu0 %v3956, 88
  %v3971 = vpop.permute.xlu0 %3970
  %v3972 = vsel %vm2424, %v3971, 0
  %3974 = vmatprep.subr.mxu0 0.0
  %3975 = vmatpush1.msra.mxu0 %v3957
  %3976 = vmatprep.subr.mxu0 0.0
  %3977 = vmatpush1.msra.mxu0 %v3958
  %3978 = vmatprep.subr.mxu0 0.0
  %3979 = vmatpush1.msra.mxu0 %v3959
  %3980 = vmatprep.subr.mxu0 0.0
  %3981 = vmatpush1.msra.mxu0 %v3960
  %3982 = vmatprep.subr.mxu0 0.0
  %3983 = vmatpush1.msra.mxu0 %v3961
  %3984 = vmatprep.subr.mxu0 0.0
  %3985 = vmatpush1.msra.mxu0 0.0
  %3986 = vmatprep.subr.mxu0 0.0
  %3987 = vmatpush1.msra.mxu0 0.0
  %3988 = vmatprep.subr.mxu0 0.0
  %3989 = vmatpush1.msra.mxu0 0.0
  %3990 = vmatprep.subr.mxu0 0.0
  %3991 = vmatpush1.msra.mxu0 0.0
  %3992 = vmatprep.subr.mxu0 0.0
  %3993 = vmatpush1.msra.mxu0 0.0
  %3994 = vmatprep.subr.mxu0 0.0
  %3995 = vmatpush1.msra.mxu0 0.0
  %3996 = vmatprep.subr.mxu0 0.0
  %3997 = vmatpush1.msra.mxu0 0.0
  %3998 = vmatprep.subr.mxu0 0.0
  %3999 = vmatpush1.msra.mxu0 0.0
  %4000 = vmatprep.subr.mxu0 0.0
  %4001 = vmatpush1.msra.mxu0 0.0
  %4002 = vmatprep.subr.mxu0 0.0
  %4003 = vmatpush1.msra.mxu0 0.0
  %4004 = vmatprep.subr.mxu0 0.0
  %4005 = vmatpush1.msra.mxu0 0.0
  %4006 = vmatprep.subr.mxu0 0.0
  %4007 = vmatpush1.msra.mxu0 0.0
  %4008 = vmatprep.subr.mxu0 0.0
  %4009 = vmatpush1.msra.mxu0 0.0
  %4010 = vmatprep.subr.mxu0 0.0
  %4011 = vmatpush1.msra.mxu0 0.0
  %4012 = vmatprep.subr.mxu0 0.0
  %4013 = vmatpush1.msra.mxu0 0.0
  %4014 = vmatprep.subr.mxu0 0.0
  %4015 = vmatpush1.msra.mxu0 0.0
  %4016 = vmatprep.subr.mxu0 0.0
  %4017 = vmatpush1.msra.mxu0 0.0
  %4018 = vmatprep.subr.mxu0 0.0
  %4019 = vmatpush1.msra.mxu0 0.0
  %4020 = vmatprep.subr.mxu0 0.0
  %4021 = vmatpush1.msra.mxu0 0.0
  %4022 = vmatprep.subr.mxu0 0.0
  %4023 = vmatpush1.msra.mxu0 0.0
  %4024 = vmatprep.subr.mxu0 0.0
  %4025 = vmatpush1.msra.mxu0 0.0
  %4026 = vmatprep.subr.mxu0 0.0
  %4027 = vmatpush1.msra.mxu0 0.0
  %4028 = vmatprep.subr.mxu0 0.0
  %4029 = vmatpush1.msra.mxu0 0.0
  %4030 = vmatprep.subr.mxu0 0.0
  %4031 = vmatpush1.msra.mxu0 0.0
  %4032 = vmatprep.subr.mxu0 0.0
  %4033 = vmatpush1.msra.mxu0 0.0
  %4034 = vmatprep.subr.mxu0 0.0
  %4035 = vmatpush1.msra.mxu0 0.0
  %4036 = vmatprep.subr.mxu0 0.0
  %4037 = vmatpush1.msra.mxu0 0.0
  %4038 = vmatprep.mubr.f32.mxu0 0.0
  %4039 = vmatmul.mubr.f32.gmra.mrb[0].mxu0 %v3972
  %v4040 = vpop.f32.mrb[0].mxu0
  %v4041 = vadd.f32 %v3967, %v4040
  %v4042 = vpop.f32.mrb[0].mxu0
  %4043 = vdwg.mxu0
  %v4044 = vmul.f32 %v4041, 0.5
  %v4045 = vtanh.pop %v4044
  %v4046 = vmul.f32 %v4045, 0.5
  %v4047 = vadd.f32 %v4046, 0.5
  %v4048 = vtanh.pop %v4041
  %v4049 = vld [vmem:[%s18] sm:$0xff]
  %v4050 = vld [vmem:[%s18 + $0x8] sm:$0xff]
  %v4051 = vld [vmem:[%s18 + $0x10] sm:$0xff]
  %v4052 = vld [vmem:[%s18 + $0x18] sm:$0xff]
  %v4053 = vld [vmem:[%s18 + $0x20] sm:$0xff]
  %v4054 = vld [vmem:[%s18 + $0x28] sm:$0xff]
  %v4055 = vld [vmem:[%s18 + $0x30] sm:$0xff]
  %v4056 = vld [vmem:[%s18 + $0x38] sm:$0xff]
  %v4057 = vld [vmem:[%s18 + $0x40] sm:$0xff]
  %v4058 = vld [vmem:[%s18 + $0x48] sm:$0xff]
  %v4059 = vld [vmem:[%s19] sm:$0x1]
  %v4061 = vlaneseq
  %v4062 = vshrl.u32 %v4061, 7
  %v4063 = vsub.s32 0, %v4062
  %v4064 = vrot.slane %v4059, %v4063
  %v4067 = vsel %vm2633, %v4047, 0
  %4069 = vmatprep.subr.mxu0 0.0
  %4070 = vmatpush1.msra.mxu0 %v4049
  %4071 = vmatprep.subr.mxu0 0.0
  %4072 = vmatpush1.msra.mxu0 %v4050
  %4073 = vmatprep.subr.mxu0 0.0
  %4074 = vmatpush1.msra.mxu0 %v4051
  %4075 = vmatprep.subr.mxu0 0.0
  %4076 = vmatpush1.msra.mxu0 %v4052
  %4077 = vmatprep.subr.mxu0 0.0
  %4078 = vmatpush1.msra.mxu0 %v4053
  %4079 = vmatprep.subr.mxu0 0.0
  %4080 = vmatpush1.msra.mxu0 %v4054
  %4081 = vmatprep.subr.mxu0 0.0
  %4082 = vmatpush1.msra.mxu0 %v4055
  %4083 = vmatprep.subr.mxu0 0.0
  %4084 = vmatpush1.msra.mxu0 %v4056
  %4085 = vmatprep.subr.mxu0 0.0
  %4086 = vmatpush1.msra.mxu0 %v4057
  %4087 = vmatprep.subr.mxu0 0.0
  %4088 = vmatpush1.msra.mxu0 %v4058
  %4089 = vmatprep.subr.mxu0 0.0
  %4090 = vmatpush1.msra.mxu0 0.0
  %4091 = vmatprep.subr.mxu0 0.0
  %4092 = vmatpush1.msra.mxu0 0.0
  %4093 = vmatprep.subr.mxu0 0.0
  %4094 = vmatpush1.msra.mxu0 0.0
  %4095 = vmatprep.subr.mxu0 0.0
  %4096 = vmatpush1.msra.mxu0 0.0
  %4097 = vmatprep.subr.mxu0 0.0
  %4098 = vmatpush1.msra.mxu0 0.0
  %4099 = vmatprep.subr.mxu0 0.0
  %4100 = vmatpush1.msra.mxu0 0.0
  %4101 = vmatprep.subr.mxu0 0.0
  %4102 = vmatpush1.msra.mxu0 0.0
  %4103 = vmatprep.subr.mxu0 0.0
  %4104 = vmatpush1.msra.mxu0 0.0
  %4105 = vmatprep.subr.mxu0 0.0
  %4106 = vmatpush1.msra.mxu0 0.0
  %4107 = vmatprep.subr.mxu0 0.0
  %4108 = vmatpush1.msra.mxu0 0.0
  %4109 = vmatprep.subr.mxu0 0.0
  %4110 = vmatpush1.msra.mxu0 0.0
  %4111 = vmatprep.subr.mxu0 0.0
  %4112 = vmatpush1.msra.mxu0 0.0
  %4113 = vmatprep.subr.mxu0 0.0
  %4114 = vmatpush1.msra.mxu0 0.0
  %4115 = vmatprep.subr.mxu0 0.0
  %4116 = vmatpush1.msra.mxu0 0.0
  %4117 = vmatprep.subr.mxu0 0.0
  %4118 = vmatpush1.msra.mxu0 0.0
  %4119 = vmatprep.subr.mxu0 0.0
  %4120 = vmatpush1.msra.mxu0 0.0
  %4121 = vmatprep.subr.mxu0 0.0
  %4122 = vmatpush1.msra.mxu0 0.0
  %4123 = vmatprep.subr.mxu0 0.0
  %4124 = vmatpush1.msra.mxu0 0.0
  %4125 = vmatprep.subr.mxu0 0.0
  %4126 = vmatpush1.msra.mxu0 0.0
  %4127 = vmatprep.subr.mxu0 0.0
  %4128 = vmatpush1.msra.mxu0 0.0
  %4129 = vmatprep.subr.mxu0 0.0
  %4130 = vmatpush1.msra.mxu0 0.0
  %4131 = vmatprep.subr.mxu0 0.0
  %4132 = vmatpush1.msra.mxu0 0.0
  %4133 = vmatprep.mubr.f32.mxu0 0.0
  %4134 = vmatmul.mubr.f32.gmra.mrb[0].mxu0 %v4067
  %v4135 = vpop.f32.mrb[0].mxu0
  %v4136 = vadd.f32 %v4064, %v4135
  %v4137 = vpop.f32.mrb[0].mxu0
  %4138 = vdwg.mxu0
  %v4139 = vmax.f32 %v4136, -1.5
  %v4140 = vmin.f32 %v4139, 1.5
  %v4141 = vadd.f32 %v4140, %v3846
  %v4142 = vmul.f32 %v4136, 1.442695
  %v4143 = vpow.pop %v4142
  %v4144 = vmax.f32 %v4143, 0.031622775
  %v4145 = vmin.f32 %v4144, 31.622776
  %v4146 = vsel %vm2382, %v4141, %v4145
  %s4147 = scalar_lea.vmem %s1, 40
  %v4148 = vld [vmem:[%s4147] sm:$0xff]
  %v4149 = vadd.f32 %v2286, %v4148
  %v4150 = vsel %vm2262, %v4149, -inf
  %4151 = vmax.xlane.f32.xlu0 %v4150
  %v4152 = vpop.xlane.xlu0 %4151
  %vm4153 = vcmp.ge.f32.partialorder %v4149, %v4152
  %v4154 = vsel %vm4153, %v2260, 20.0
  %v4155 = vsel %vm2262, %v4154, inf
  %4156 = vmin.xlane.f32.xlu0 %v4155
  %v4157 = vpop.xlane.xlu0 %4156
  %vm4158 = vcmp.eq.f32.partialorder %v2386, %v4157
  %v4159 = vsel %vm4158, 1, 0
  %v4160 = vcvt.s32.f32 %v4159
  %4162 = vset.pattern.permute.xlu0 20
  %4163 = vperm.xlu0 %4162, %v4148
  %v4164 = vpop.permute.xlu0 %4163
  %4166 = vset.pattern.permute.xlu0 21
  %4167 = vperm.xlu0 %4166, %v4148
  %v4168 = vpop.permute.xlu0 %4167
  %v4170 = vsel %vm2383, %v4164, %v4168
  %4172 = vrot.lane.b32.xlu0 %v4170, 40
  %v4173 = vpop.permute.xlu0 %4172
  %v4175 = vmul.f32 %v4146, %v4173
  %4177 = vrot.lane.b32.xlu0 %v4175, 88
  %v4178 = vpop.permute.xlu0 %4177
  %v4180 = vadd.f32 %v4146, %v4178
  %v4181 = vmul.f32 %v4160, %v4180
  %v4182 = vsel %vm2262, %v4181, 0.0
  %4183 = vadd.xlane.f32.xlu0 %v4182
  %v4184 = vpop.xlane.xlu0 %4183
  %4186 = vrot.lane.b32.xlu0 %v4181, 108
  %v4187 = vpop.permute.xlu0 %4186
  %v4189 = vsel %vm2262, %v4187, 0.0
  %4190 = vadd.xlane.f32.xlu0 %v4189
  %v4191 = vpop.xlane.xlu0 %4190
  %v4192 = vsel %vm2760, %v4184, %v4191
  %4194 = vrot.lane.b32.xlu0 %v4192, 100
  %v4195 = vpop.permute.xlu0 %4194
  %v4197 = vsel %vm2633, %v4146, %v4048
  %v4198 = vsel %vm2771, %v4197, %v4195
  %v4199 = vsel %vm2773, %v4198, 0.0
  %s4200 = scalar_lea.vmem %s20, 32
  %4201 = vst [vmem:[%s4200] sm:$0xff] %v4199
  %v4202 = vsel %vm2382, %v4141, 0.0
  %v4203 = vmul.f32 %v4184, %v2400
  %v4204 = vadd.f32 %v2377, %v4203
  %v4205 = vmul.f32 %v4191, %v2406
  %v4206 = vadd.f32 %v4204, %v4205
  %v4207 = vld [vmem:[%s14] sm:$0xff]
  %v4208 = vld [vmem:[%s14 + $0x8] sm:$0xff]
  %v4209 = vld [vmem:[%s14 + $0x10] sm:$0xff]
  %v4210 = vld [vmem:[%s14 + $0x18] sm:$0xff]
  %v4211 = vld [vmem:[%s14 + $0x20] sm:$0xff]
  %v4212 = vld [vmem:[%s15] sm:$0x1]
  %v4214 = vlaneseq
  %v4215 = vshrl.u32 %v4214, 7
  %v4216 = vsub.s32 0, %v4215
  %v4217 = vrot.slane %v4212, %v4216
  %4219 = vmatprep.subr.mxu0 0.0
  %4220 = vmatpush1.msra.mxu0 %v4207
  %4221 = vmatprep.subr.mxu0 0.0
  %4222 = vmatpush1.msra.mxu0 %v4208
  %4223 = vmatprep.subr.mxu0 0.0
  %4224 = vmatpush1.msra.mxu0 %v4209
  %4225 = vmatprep.subr.mxu0 0.0
  %4226 = vmatpush1.msra.mxu0 %v4210
  %4227 = vmatprep.subr.mxu0 0.0
  %4228 = vmatpush1.msra.mxu0 %v4211
  %4229 = vmatprep.subr.mxu0 0.0
  %4230 = vmatpush1.msra.mxu0 0.0
  %4231 = vmatprep.subr.mxu0 0.0
  %4232 = vmatpush1.msra.mxu0 0.0
  %4233 = vmatprep.subr.mxu0 0.0
  %4234 = vmatpush1.msra.mxu0 0.0
  %4235 = vmatprep.subr.mxu0 0.0
  %4236 = vmatpush1.msra.mxu0 0.0
  %4237 = vmatprep.subr.mxu0 0.0
  %4238 = vmatpush1.msra.mxu0 0.0
  %4239 = vmatprep.subr.mxu0 0.0
  %4240 = vmatpush1.msra.mxu0 0.0
  %4241 = vmatprep.subr.mxu0 0.0
  %4242 = vmatpush1.msra.mxu0 0.0
  %4243 = vmatprep.subr.mxu0 0.0
  %4244 = vmatpush1.msra.mxu0 0.0
  %4245 = vmatprep.subr.mxu0 0.0
  %4246 = vmatpush1.msra.mxu0 0.0
  %4247 = vmatprep.subr.mxu0 0.0
  %4248 = vmatpush1.msra.mxu0 0.0
  %4249 = vmatprep.subr.mxu0 0.0
  %4250 = vmatpush1.msra.mxu0 0.0
  %4251 = vmatprep.subr.mxu0 0.0
  %4252 = vmatpush1.msra.mxu0 0.0
  %4253 = vmatprep.subr.mxu0 0.0
  %4254 = vmatpush1.msra.mxu0 0.0
  %4255 = vmatprep.subr.mxu0 0.0
  %4256 = vmatpush1.msra.mxu0 0.0
  %4257 = vmatprep.subr.mxu0 0.0
  %4258 = vmatpush1.msra.mxu0 0.0
  %4259 = vmatprep.subr.mxu0 0.0
  %4260 = vmatpush1.msra.mxu0 0.0
  %4261 = vmatprep.subr.mxu0 0.0
  %4262 = vmatpush1.msra.mxu0 0.0
  %4263 = vmatprep.subr.mxu0 0.0
  %4264 = vmatpush1.msra.mxu0 0.0
  %4265 = vmatprep.subr.mxu0 0.0
  %4266 = vmatpush1.msra.mxu0 0.0
  %4267 = vmatprep.subr.mxu0 0.0
  %4268 = vmatpush1.msra.mxu0 0.0
  %4269 = vmatprep.subr.mxu0 0.0
  %4270 = vmatpush1.msra.mxu0 0.0
  %4271 = vmatprep.subr.mxu0 0.0
  %4272 = vmatpush1.msra.mxu0 0.0
  %4273 = vmatprep.subr.mxu0 0.0
  %4274 = vmatpush1.msra.mxu0 0.0
  %4275 = vmatprep.subr.mxu0 0.0
  %4276 = vmatpush1.msra.mxu0 0.0
  %4277 = vmatprep.subr.mxu0 0.0
  %4278 = vmatpush1.msra.mxu0 0.0
  %4279 = vmatprep.subr.mxu0 0.0
  %4280 = vmatpush1.msra.mxu0 0.0
  %4281 = vmatprep.subr.mxu0 0.0
  %4282 = vmatpush1.msra.mxu0 0.0
  %4283 = vmatprep.mubr.f32.mxu0 0.0
  %4284 = vmatmul.mubr.f32.gmra.mrb[0].mxu0 %v3972
  %v4285 = vpop.f32.mrb[0].mxu0
  %v4286 = vadd.f32 %v4217, %v4285
  %v4287 = vpop.f32.mrb[0].mxu0
  %4288 = vdwg.mxu0
  %v4289 = vadd.f32 %v4206, %v4286
  %v4290 = vmul.f32 %v4289, 0.5
  %v4291 = vtanh.pop %v4290
  %v4292 = vmul.f32 %v4291, 0.5
  %v4293 = vadd.f32 %v4292, 0.5
  %4295 = vrot.lane.b32.xlu0 %v4286, 48
  %v4296 = vpop.permute.xlu0 %4295
  %v4298 = vmul.f32 %v4293, %v4296
  %4300 = vrot.lane.b32.xlu0 %v4298, 80
  %v4301 = vpop.permute.xlu0 %4300
  %v4303 = vadd.f32 %v4206, %v4301
  %v4304 = vtanh.pop %v4303
  %v4305 = vsub.f32 1.0, %v4293
  %4307 = vrot.lane.b32.xlu0 %v4304, 88
  %v4308 = vpop.permute.xlu0 %4307
  %v4310 = vmul.f32 %v4305, %v4308
  %v4311 = vmul.f32 %v4293, %v3956
  %v4312 = vadd.f32 %v4310, %v4311
  %v4313 = vld [vmem:[%s16] sm:$0xff]
  %v4314 = vld [vmem:[%s16 + $0x8] sm:$0xff]
  %v4315 = vld [vmem:[%s16 + $0x10] sm:$0xff]
  %v4316 = vld [vmem:[%s16 + $0x18] sm:$0xff]
  %v4317 = vld [vmem:[%s16 + $0x20] sm:$0xff]
  %v4318 = vld [vmem:[%s17] sm:$0x1]
  %v4320 = vlaneseq
  %v4321 = vshrl.u32 %v4320, 7
  %v4322 = vsub.s32 0, %v4321
  %v4323 = vrot.slane %v4318, %v4322
  %4326 = vrot.lane.b32.xlu0 %v4312, 88
  %v4327 = vpop.permute.xlu0 %4326
  %v4328 = vsel %vm2424, %v4327, 0
  %4330 = vmatprep.subr.mxu0 0.0
  %4331 = vmatpush1.msra.mxu0 %v4313
  %4332 = vmatprep.subr.mxu0 0.0
  %4333 = vmatpush1.msra.mxu0 %v4314
  %4334 = vmatprep.subr.mxu0 0.0
  %4335 = vmatpush1.msra.mxu0 %v4315
  %4336 = vmatprep.subr.mxu0 0.0
  %4337 = vmatpush1.msra.mxu0 %v4316
  %4338 = vmatprep.subr.mxu0 0.0
  %4339 = vmatpush1.msra.mxu0 %v4317
  %4340 = vmatprep.subr.mxu0 0.0
  %4341 = vmatpush1.msra.mxu0 0.0
  %4342 = vmatprep.subr.mxu0 0.0
  %4343 = vmatpush1.msra.mxu0 0.0
  %4344 = vmatprep.subr.mxu0 0.0
  %4345 = vmatpush1.msra.mxu0 0.0
  %4346 = vmatprep.subr.mxu0 0.0
  %4347 = vmatpush1.msra.mxu0 0.0
  %4348 = vmatprep.subr.mxu0 0.0
  %4349 = vmatpush1.msra.mxu0 0.0
  %4350 = vmatprep.subr.mxu0 0.0
  %4351 = vmatpush1.msra.mxu0 0.0
  %4352 = vmatprep.subr.mxu0 0.0
  %4353 = vmatpush1.msra.mxu0 0.0
  %4354 = vmatprep.subr.mxu0 0.0
  %4355 = vmatpush1.msra.mxu0 0.0
  %4356 = vmatprep.subr.mxu0 0.0
  %4357 = vmatpush1.msra.mxu0 0.0
  %4358 = vmatprep.subr.mxu0 0.0
  %4359 = vmatpush1.msra.mxu0 0.0
  %4360 = vmatprep.subr.mxu0 0.0
  %4361 = vmatpush1.msra.mxu0 0.0
  %4362 = vmatprep.subr.mxu0 0.0
  %4363 = vmatpush1.msra.mxu0 0.0
  %4364 = vmatprep.subr.mxu0 0.0
  %4365 = vmatpush1.msra.mxu0 0.0
  %4366 = vmatprep.subr.mxu0 0.0
  %4367 = vmatpush1.msra.mxu0 0.0
  %4368 = vmatprep.subr.mxu0 0.0
  %4369 = vmatpush1.msra.mxu0 0.0
  %4370 = vmatprep.subr.mxu0 0.0
  %4371 = vmatpush1.msra.mxu0 0.0
  %4372 = vmatprep.subr.mxu0 0.0
  %4373 = vmatpush1.msra.mxu0 0.0
  %4374 = vmatprep.subr.mxu0 0.0
  %4375 = vmatpush1.msra.mxu0 0.0
  %4376 = vmatprep.subr.mxu0 0.0
  %4377 = vmatpush1.msra.mxu0 0.0
  %4378 = vmatprep.subr.mxu0 0.0
  %4379 = vmatpush1.msra.mxu0 0.0
  %4380 = vmatprep.subr.mxu0 0.0
  %4381 = vmatpush1.msra.mxu0 0.0
  %4382 = vmatprep.subr.mxu0 0.0
  %4383 = vmatpush1.msra.mxu0 0.0
  %4384 = vmatprep.subr.mxu0 0.0
  %4385 = vmatpush1.msra.mxu0 0.0
  %4386 = vmatprep.subr.mxu0 0.0
  %4387 = vmatpush1.msra.mxu0 0.0
  %4388 = vmatprep.subr.mxu0 0.0
  %4389 = vmatpush1.msra.mxu0 0.0
  %4390 = vmatprep.subr.mxu0 0.0
  %4391 = vmatpush1.msra.mxu0 0.0
  %4392 = vmatprep.subr.mxu0 0.0
  %4393 = vmatpush1.msra.mxu0 0.0
  %4394 = vmatprep.mubr.f32.mxu0 0.0
  %4395 = vmatmul.mubr.f32.gmra.mrb[0].mxu0 %v4328
  %v4396 = vpop.f32.mrb[0].mxu0
  %v4397 = vadd.f32 %v4323, %v4396
  %v4398 = vpop.f32.mrb[0].mxu0
  %4399 = vdwg.mxu0
  %v4400 = vmul.f32 %v4397, 0.5
  %v4401 = vtanh.pop %v4400
  %v4402 = vmul.f32 %v4401, 0.5
  %v4403 = vadd.f32 %v4402, 0.5
  %v4404 = vtanh.pop %v4397
  %v4405 = vld [vmem:[%s18] sm:$0xff]
  %v4406 = vld [vmem:[%s18 + $0x8] sm:$0xff]
  %v4407 = vld [vmem:[%s18 + $0x10] sm:$0xff]
  %v4408 = vld [vmem:[%s18 + $0x18] sm:$0xff]
  %v4409 = vld [vmem:[%s18 + $0x20] sm:$0xff]
  %v4410 = vld [vmem:[%s18 + $0x28] sm:$0xff]
  %v4411 = vld [vmem:[%s18 + $0x30] sm:$0xff]
  %v4412 = vld [vmem:[%s18 + $0x38] sm:$0xff]
  %v4413 = vld [vmem:[%s18 + $0x40] sm:$0xff]
  %v4414 = vld [vmem:[%s18 + $0x48] sm:$0xff]
  %v4415 = vld [vmem:[%s19] sm:$0x1]
  %v4417 = vlaneseq
  %v4418 = vshrl.u32 %v4417, 7
  %v4419 = vsub.s32 0, %v4418
  %v4420 = vrot.slane %v4415, %v4419
  %v4423 = vsel %vm2633, %v4403, 0
  %4425 = vmatprep.subr.mxu0 0.0
  %4426 = vmatpush1.msra.mxu0 %v4405
  %4427 = vmatprep.subr.mxu0 0.0
  %4428 = vmatpush1.msra.mxu0 %v4406
  %4429 = vmatprep.subr.mxu0 0.0
  %4430 = vmatpush1.msra.mxu0 %v4407
  %4431 = vmatprep.subr.mxu0 0.0
  %4432 = vmatpush1.msra.mxu0 %v4408
  %4433 = vmatprep.subr.mxu0 0.0
  %4434 = vmatpush1.msra.mxu0 %v4409
  %4435 = vmatprep.subr.mxu0 0.0
  %4436 = vmatpush1.msra.mxu0 %v4410
  %4437 = vmatprep.subr.mxu0 0.0
  %4438 = vmatpush1.msra.mxu0 %v4411
  %4439 = vmatprep.subr.mxu0 0.0
  %4440 = vmatpush1.msra.mxu0 %v4412
  %4441 = vmatprep.subr.mxu0 0.0
  %4442 = vmatpush1.msra.mxu0 %v4413
  %4443 = vmatprep.subr.mxu0 0.0
  %4444 = vmatpush1.msra.mxu0 %v4414
  %4445 = vmatprep.subr.mxu0 0.0
  %4446 = vmatpush1.msra.mxu0 0.0
  %4447 = vmatprep.subr.mxu0 0.0
  %4448 = vmatpush1.msra.mxu0 0.0
  %4449 = vmatprep.subr.mxu0 0.0
  %4450 = vmatpush1.msra.mxu0 0.0
  %4451 = vmatprep.subr.mxu0 0.0
  %4452 = vmatpush1.msra.mxu0 0.0
  %4453 = vmatprep.subr.mxu0 0.0
  %4454 = vmatpush1.msra.mxu0 0.0
  %4455 = vmatprep.subr.mxu0 0.0
  %4456 = vmatpush1.msra.mxu0 0.0
  %4457 = vmatprep.subr.mxu0 0.0
  %4458 = vmatpush1.msra.mxu0 0.0
  %4459 = vmatprep.subr.mxu0 0.0
  %4460 = vmatpush1.msra.mxu0 0.0
  %4461 = vmatprep.subr.mxu0 0.0
  %4462 = vmatpush1.msra.mxu0 0.0
  %4463 = vmatprep.subr.mxu0 0.0
  %4464 = vmatpush1.msra.mxu0 0.0
  %4465 = vmatprep.subr.mxu0 0.0
  %4466 = vmatpush1.msra.mxu0 0.0
  %4467 = vmatprep.subr.mxu0 0.0
  %4468 = vmatpush1.msra.mxu0 0.0
  %4469 = vmatprep.subr.mxu0 0.0
  %4470 = vmatpush1.msra.mxu0 0.0
  %4471 = vmatprep.subr.mxu0 0.0
  %4472 = vmatpush1.msra.mxu0 0.0
  %4473 = vmatprep.subr.mxu0 0.0
  %4474 = vmatpush1.msra.mxu0 0.0
  %4475 = vmatprep.subr.mxu0 0.0
  %4476 = vmatpush1.msra.mxu0 0.0
  %4477 = vmatprep.subr.mxu0 0.0
  %4478 = vmatpush1.msra.mxu0 0.0
  %4479 = vmatprep.subr.mxu0 0.0
  %4480 = vmatpush1.msra.mxu0 0.0
  %4481 = vmatprep.subr.mxu0 0.0
  %4482 = vmatpush1.msra.mxu0 0.0
  %4483 = vmatprep.subr.mxu0 0.0
  %4484 = vmatpush1.msra.mxu0 0.0
  %4485 = vmatprep.subr.mxu0 0.0
  %4486 = vmatpush1.msra.mxu0 0.0
  %4487 = vmatprep.subr.mxu0 0.0
  %4488 = vmatpush1.msra.mxu0 0.0
  %4489 = vmatprep.mubr.f32.mxu0 0.0
  %4490 = vmatmul.mubr.f32.gmra.mrb[0].mxu0 %v4423
  %v4491 = vpop.f32.mrb[0].mxu0
  %v4492 = vadd.f32 %v4420, %v4491
  %v4493 = vpop.f32.mrb[0].mxu0
  %4494 = vdwg.mxu0
  %v4495 = vmax.f32 %v4492, -1.5
  %v4496 = vmin.f32 %v4495, 1.5
  %v4497 = vadd.f32 %v4496, %v4202
  %v4498 = vmul.f32 %v4492, 1.442695
  %v4499 = vpow.pop %v4498
  %v4500 = vmax.f32 %v4499, 0.031622775
  %v4501 = vmin.f32 %v4500, 31.622776
  %v4502 = vsel %vm2382, %v4497, %v4501
  %s4503 = scalar_lea.vmem %s1, 48
  %v4504 = vld [vmem:[%s4503] sm:$0xff]
  %v4505 = vadd.f32 %v2286, %v4504
  %v4506 = vsel %vm2262, %v4505, -inf
  %4507 = vmax.xlane.f32.xlu0 %v4506
  %v4508 = vpop.xlane.xlu0 %4507
  %vm4509 = vcmp.ge.f32.partialorder %v4505, %v4508
  %v4510 = vsel %vm4509, %v2260, 20.0
  %v4511 = vsel %vm2262, %v4510, inf
  %4512 = vmin.xlane.f32.xlu0 %v4511
  %v4513 = vpop.xlane.xlu0 %4512
  %vm4514 = vcmp.eq.f32.partialorder %v2386, %v4513
  %v4515 = vsel %vm4514, 1, 0
  %v4516 = vcvt.s32.f32 %v4515
  %4518 = vset.pattern.permute.xlu0 20
  %4519 = vperm.xlu0 %4518, %v4504
  %v4520 = vpop.permute.xlu0 %4519
  %4522 = vset.pattern.permute.xlu0 21
  %4523 = vperm.xlu0 %4522, %v4504
  %v4524 = vpop.permute.xlu0 %4523
  %v4526 = vsel %vm2383, %v4520, %v4524
  %4528 = vrot.lane.b32.xlu0 %v4526, 40
  %v4529 = vpop.permute.xlu0 %4528
  %v4531 = vmul.f32 %v4502, %v4529
  %4533 = vrot.lane.b32.xlu0 %v4531, 88
  %v4534 = vpop.permute.xlu0 %4533
  %v4536 = vadd.f32 %v4502, %v4534
  %v4537 = vmul.f32 %v4516, %v4536
  %v4538 = vsel %vm2262, %v4537, 0.0
  %4539 = vadd.xlane.f32.xlu0 %v4538
  %v4540 = vpop.xlane.xlu0 %4539
  %4542 = vrot.lane.b32.xlu0 %v4537, 108
  %v4543 = vpop.permute.xlu0 %4542
  %v4545 = vsel %vm2262, %v4543, 0.0
  %4546 = vadd.xlane.f32.xlu0 %v4545
  %v4547 = vpop.xlane.xlu0 %4546
  %v4548 = vsel %vm2760, %v4540, %v4547
  %4550 = vrot.lane.b32.xlu0 %v4548, 100
  %v4551 = vpop.permute.xlu0 %4550
  %v4553 = vsel %vm2633, %v4502, %v4404
  %v4554 = vsel %vm2771, %v4553, %v4551
  %v4555 = vsel %vm2773, %v4554, 0.0
  %s4556 = scalar_lea.vmem %s20, 40
  %4557 = vst [vmem:[%s4556] sm:$0xff] %v4555
  %v4558 = vsel %vm2382, %v4497, 0.0
  %v4559 = vmul.f32 %v4540, %v2400
  %v4560 = vadd.f32 %v2377, %v4559
  %v4561 = vmul.f32 %v4547, %v2406
  %v4562 = vadd.f32 %v4560, %v4561
  %v4563 = vld [vmem:[%s14] sm:$0xff]
  %v4564 = vld [vmem:[%s14 + $0x8] sm:$0xff]
  %v4565 = vld [vmem:[%s14 + $0x10] sm:$0xff]
  %v4566 = vld [vmem:[%s14 + $0x18] sm:$0xff]
  %v4567 = vld [vmem:[%s14 + $0x20] sm:$0xff]
  %v4568 = vld [vmem:[%s15] sm:$0x1]
  %v4570 = vlaneseq
  %v4571 = vshrl.u32 %v4570, 7
  %v4572 = vsub.s32 0, %v4571
  %v4573 = vrot.slane %v4568, %v4572
  %4575 = vmatprep.subr.mxu0 0.0
  %4576 = vmatpush1.msra.mxu0 %v4563
  %4577 = vmatprep.subr.mxu0 0.0
  %4578 = vmatpush1.msra.mxu0 %v4564
  %4579 = vmatprep.subr.mxu0 0.0
  %4580 = vmatpush1.msra.mxu0 %v4565
  %4581 = vmatprep.subr.mxu0 0.0
  %4582 = vmatpush1.msra.mxu0 %v4566
  %4583 = vmatprep.subr.mxu0 0.0
  %4584 = vmatpush1.msra.mxu0 %v4567
  %4585 = vmatprep.subr.mxu0 0.0
  %4586 = vmatpush1.msra.mxu0 0.0
  %4587 = vmatprep.subr.mxu0 0.0
  %4588 = vmatpush1.msra.mxu0 0.0
  %4589 = vmatprep.subr.mxu0 0.0
  %4590 = vmatpush1.msra.mxu0 0.0
  %4591 = vmatprep.subr.mxu0 0.0
  %4592 = vmatpush1.msra.mxu0 0.0
  %4593 = vmatprep.subr.mxu0 0.0
  %4594 = vmatpush1.msra.mxu0 0.0
  %4595 = vmatprep.subr.mxu0 0.0
  %4596 = vmatpush1.msra.mxu0 0.0
  %4597 = vmatprep.subr.mxu0 0.0
  %4598 = vmatpush1.msra.mxu0 0.0
  %4599 = vmatprep.subr.mxu0 0.0
  %4600 = vmatpush1.msra.mxu0 0.0
  %4601 = vmatprep.subr.mxu0 0.0
  %4602 = vmatpush1.msra.mxu0 0.0
  %4603 = vmatprep.subr.mxu0 0.0
  %4604 = vmatpush1.msra.mxu0 0.0
  %4605 = vmatprep.subr.mxu0 0.0
  %4606 = vmatpush1.msra.mxu0 0.0
  %4607 = vmatprep.subr.mxu0 0.0
  %4608 = vmatpush1.msra.mxu0 0.0
  %4609 = vmatprep.subr.mxu0 0.0
  %4610 = vmatpush1.msra.mxu0 0.0
  %4611 = vmatprep.subr.mxu0 0.0
  %4612 = vmatpush1.msra.mxu0 0.0
  %4613 = vmatprep.subr.mxu0 0.0
  %4614 = vmatpush1.msra.mxu0 0.0
  %4615 = vmatprep.subr.mxu0 0.0
  %4616 = vmatpush1.msra.mxu0 0.0
  %4617 = vmatprep.subr.mxu0 0.0
  %4618 = vmatpush1.msra.mxu0 0.0
  %4619 = vmatprep.subr.mxu0 0.0
  %4620 = vmatpush1.msra.mxu0 0.0
  %4621 = vmatprep.subr.mxu0 0.0
  %4622 = vmatpush1.msra.mxu0 0.0
  %4623 = vmatprep.subr.mxu0 0.0
  %4624 = vmatpush1.msra.mxu0 0.0
  %4625 = vmatprep.subr.mxu0 0.0
  %4626 = vmatpush1.msra.mxu0 0.0
  %4627 = vmatprep.subr.mxu0 0.0
  %4628 = vmatpush1.msra.mxu0 0.0
  %4629 = vmatprep.subr.mxu0 0.0
  %4630 = vmatpush1.msra.mxu0 0.0
  %4631 = vmatprep.subr.mxu0 0.0
  %4632 = vmatpush1.msra.mxu0 0.0
  %4633 = vmatprep.subr.mxu0 0.0
  %4634 = vmatpush1.msra.mxu0 0.0
  %4635 = vmatprep.subr.mxu0 0.0
  %4636 = vmatpush1.msra.mxu0 0.0
  %4637 = vmatprep.subr.mxu0 0.0
  %4638 = vmatpush1.msra.mxu0 0.0
  %4639 = vmatprep.mubr.f32.mxu0 0.0
  %4640 = vmatmul.mubr.f32.gmra.mrb[0].mxu0 %v4328
  %v4641 = vpop.f32.mrb[0].mxu0
  %v4642 = vadd.f32 %v4573, %v4641
  %v4643 = vpop.f32.mrb[0].mxu0
  %4644 = vdwg.mxu0
  %v4645 = vadd.f32 %v4562, %v4642
  %v4646 = vmul.f32 %v4645, 0.5
  %v4647 = vtanh.pop %v4646
  %v4648 = vmul.f32 %v4647, 0.5
  %v4649 = vadd.f32 %v4648, 0.5
  %4651 = vrot.lane.b32.xlu0 %v4642, 48
  %v4652 = vpop.permute.xlu0 %4651
  %v4654 = vmul.f32 %v4649, %v4652
  %4656 = vrot.lane.b32.xlu0 %v4654, 80
  %v4657 = vpop.permute.xlu0 %4656
  %v4659 = vadd.f32 %v4562, %v4657
  %v4660 = vtanh.pop %v4659
  %v4661 = vsub.f32 1.0, %v4649
  %4663 = vrot.lane.b32.xlu0 %v4660, 88
  %v4664 = vpop.permute.xlu0 %4663
  %v4666 = vmul.f32 %v4661, %v4664
  %v4667 = vmul.f32 %v4649, %v4312
  %v4668 = vadd.f32 %v4666, %v4667
  %v4669 = vld [vmem:[%s16] sm:$0xff]
  %v4670 = vld [vmem:[%s16 + $0x8] sm:$0xff]
  %v4671 = vld [vmem:[%s16 + $0x10] sm:$0xff]
  %v4672 = vld [vmem:[%s16 + $0x18] sm:$0xff]
  %v4673 = vld [vmem:[%s16 + $0x20] sm:$0xff]
  %v4674 = vld [vmem:[%s17] sm:$0x1]
  %v4676 = vlaneseq
  %v4677 = vshrl.u32 %v4676, 7
  %v4678 = vsub.s32 0, %v4677
  %v4679 = vrot.slane %v4674, %v4678
  %4682 = vrot.lane.b32.xlu0 %v4668, 88
  %v4683 = vpop.permute.xlu0 %4682
  %v4684 = vsel %vm2424, %v4683, 0
  %4686 = vmatprep.subr.mxu0 0.0
  %4687 = vmatpush1.msra.mxu0 %v4669
  %4688 = vmatprep.subr.mxu0 0.0
  %4689 = vmatpush1.msra.mxu0 %v4670
  %4690 = vmatprep.subr.mxu0 0.0
  %4691 = vmatpush1.msra.mxu0 %v4671
  %4692 = vmatprep.subr.mxu0 0.0
  %4693 = vmatpush1.msra.mxu0 %v4672
  %4694 = vmatprep.subr.mxu0 0.0
  %4695 = vmatpush1.msra.mxu0 %v4673
  %4696 = vmatprep.subr.mxu0 0.0
  %4697 = vmatpush1.msra.mxu0 0.0
  %4698 = vmatprep.subr.mxu0 0.0
  %4699 = vmatpush1.msra.mxu0 0.0
  %4700 = vmatprep.subr.mxu0 0.0
  %4701 = vmatpush1.msra.mxu0 0.0
  %4702 = vmatprep.subr.mxu0 0.0
  %4703 = vmatpush1.msra.mxu0 0.0
  %4704 = vmatprep.subr.mxu0 0.0
  %4705 = vmatpush1.msra.mxu0 0.0
  %4706 = vmatprep.subr.mxu0 0.0
  %4707 = vmatpush1.msra.mxu0 0.0
  %4708 = vmatprep.subr.mxu0 0.0
  %4709 = vmatpush1.msra.mxu0 0.0
  %4710 = vmatprep.subr.mxu0 0.0
  %4711 = vmatpush1.msra.mxu0 0.0
  %4712 = vmatprep.subr.mxu0 0.0
  %4713 = vmatpush1.msra.mxu0 0.0
  %4714 = vmatprep.subr.mxu0 0.0
  %4715 = vmatpush1.msra.mxu0 0.0
  %4716 = vmatprep.subr.mxu0 0.0
  %4717 = vmatpush1.msra.mxu0 0.0
  %4718 = vmatprep.subr.mxu0 0.0
  %4719 = vmatpush1.msra.mxu0 0.0
  %4720 = vmatprep.subr.mxu0 0.0
  %4721 = vmatpush1.msra.mxu0 0.0
  %4722 = vmatprep.subr.mxu0 0.0
  %4723 = vmatpush1.msra.mxu0 0.0
  %4724 = vmatprep.subr.mxu0 0.0
  %4725 = vmatpush1.msra.mxu0 0.0
  %4726 = vmatprep.subr.mxu0 0.0
  %4727 = vmatpush1.msra.mxu0 0.0
  %4728 = vmatprep.subr.mxu0 0.0
  %4729 = vmatpush1.msra.mxu0 0.0
  %4730 = vmatprep.subr.mxu0 0.0
  %4731 = vmatpush1.msra.mxu0 0.0
  %4732 = vmatprep.subr.mxu0 0.0
  %4733 = vmatpush1.msra.mxu0 0.0
  %4734 = vmatprep.subr.mxu0 0.0
  %4735 = vmatpush1.msra.mxu0 0.0
  %4736 = vmatprep.subr.mxu0 0.0
  %4737 = vmatpush1.msra.mxu0 0.0
  %4738 = vmatprep.subr.mxu0 0.0
  %4739 = vmatpush1.msra.mxu0 0.0
  %4740 = vmatprep.subr.mxu0 0.0
  %4741 = vmatpush1.msra.mxu0 0.0
  %4742 = vmatprep.subr.mxu0 0.0
  %4743 = vmatpush1.msra.mxu0 0.0
  %4744 = vmatprep.subr.mxu0 0.0
  %4745 = vmatpush1.msra.mxu0 0.0
  %4746 = vmatprep.subr.mxu0 0.0
  %4747 = vmatpush1.msra.mxu0 0.0
  %4748 = vmatprep.subr.mxu0 0.0
  %4749 = vmatpush1.msra.mxu0 0.0
  %4750 = vmatprep.mubr.f32.mxu0 0.0
  %4751 = vmatmul.mubr.f32.gmra.mrb[0].mxu0 %v4684
  %v4752 = vpop.f32.mrb[0].mxu0
  %v4753 = vadd.f32 %v4679, %v4752
  %v4754 = vpop.f32.mrb[0].mxu0
  %4755 = vdwg.mxu0
  %v4756 = vmul.f32 %v4753, 0.5
  %v4757 = vtanh.pop %v4756
  %v4758 = vmul.f32 %v4757, 0.5
  %v4759 = vadd.f32 %v4758, 0.5
  %v4760 = vtanh.pop %v4753
  %v4761 = vld [vmem:[%s18] sm:$0xff]
  %v4762 = vld [vmem:[%s18 + $0x8] sm:$0xff]
  %v4763 = vld [vmem:[%s18 + $0x10] sm:$0xff]
  %v4764 = vld [vmem:[%s18 + $0x18] sm:$0xff]
  %v4765 = vld [vmem:[%s18 + $0x20] sm:$0xff]
  %v4766 = vld [vmem:[%s18 + $0x28] sm:$0xff]
  %v4767 = vld [vmem:[%s18 + $0x30] sm:$0xff]
  %v4768 = vld [vmem:[%s18 + $0x38] sm:$0xff]
  %v4769 = vld [vmem:[%s18 + $0x40] sm:$0xff]
  %v4770 = vld [vmem:[%s18 + $0x48] sm:$0xff]
  %v4771 = vld [vmem:[%s19] sm:$0x1]
  %v4773 = vlaneseq
  %v4774 = vshrl.u32 %v4773, 7
  %v4775 = vsub.s32 0, %v4774
  %v4776 = vrot.slane %v4771, %v4775
  %v4779 = vsel %vm2633, %v4759, 0
  %4781 = vmatprep.subr.mxu0 0.0
  %4782 = vmatpush1.msra.mxu0 %v4761
  %4783 = vmatprep.subr.mxu0 0.0
  %4784 = vmatpush1.msra.mxu0 %v4762
  %4785 = vmatprep.subr.mxu0 0.0
  %4786 = vmatpush1.msra.mxu0 %v4763
  %4787 = vmatprep.subr.mxu0 0.0
  %4788 = vmatpush1.msra.mxu0 %v4764
  %4789 = vmatprep.subr.mxu0 0.0
  %4790 = vmatpush1.msra.mxu0 %v4765
  %4791 = vmatprep.subr.mxu0 0.0
  %4792 = vmatpush1.msra.mxu0 %v4766
  %4793 = vmatprep.subr.mxu0 0.0
  %4794 = vmatpush1.msra.mxu0 %v4767
  %4795 = vmatprep.subr.mxu0 0.0
  %4796 = vmatpush1.msra.mxu0 %v4768
  %4797 = vmatprep.subr.mxu0 0.0
  %4798 = vmatpush1.msra.mxu0 %v4769
  %4799 = vmatprep.subr.mxu0 0.0
  %4800 = vmatpush1.msra.mxu0 %v4770
  %4801 = vmatprep.subr.mxu0 0.0
  %4802 = vmatpush1.msra.mxu0 0.0
  %4803 = vmatprep.subr.mxu0 0.0
  %4804 = vmatpush1.msra.mxu0 0.0
  %4805 = vmatprep.subr.mxu0 0.0
  %4806 = vmatpush1.msra.mxu0 0.0
  %4807 = vmatprep.subr.mxu0 0.0
  %4808 = vmatpush1.msra.mxu0 0.0
  %4809 = vmatprep.subr.mxu0 0.0
  %4810 = vmatpush1.msra.mxu0 0.0
  %4811 = vmatprep.subr.mxu0 0.0
  %4812 = vmatpush1.msra.mxu0 0.0
  %4813 = vmatprep.subr.mxu0 0.0
  %4814 = vmatpush1.msra.mxu0 0.0
  %4815 = vmatprep.subr.mxu0 0.0
  %4816 = vmatpush1.msra.mxu0 0.0
  %4817 = vmatprep.subr.mxu0 0.0
  %4818 = vmatpush1.msra.mxu0 0.0
  %4819 = vmatprep.subr.mxu0 0.0
  %4820 = vmatpush1.msra.mxu0 0.0
  %4821 = vmatprep.subr.mxu0 0.0
  %4822 = vmatpush1.msra.mxu0 0.0
  %4823 = vmatprep.subr.mxu0 0.0
  %4824 = vmatpush1.msra.mxu0 0.0
  %4825 = vmatprep.subr.mxu0 0.0
  %4826 = vmatpush1.msra.mxu0 0.0
  %4827 = vmatprep.subr.mxu0 0.0
  %4828 = vmatpush1.msra.mxu0 0.0
  %4829 = vmatprep.subr.mxu0 0.0
  %4830 = vmatpush1.msra.mxu0 0.0
  %4831 = vmatprep.subr.mxu0 0.0
  %4832 = vmatpush1.msra.mxu0 0.0
  %4833 = vmatprep.subr.mxu0 0.0
  %4834 = vmatpush1.msra.mxu0 0.0
  %4835 = vmatprep.subr.mxu0 0.0
  %4836 = vmatpush1.msra.mxu0 0.0
  %4837 = vmatprep.subr.mxu0 0.0
  %4838 = vmatpush1.msra.mxu0 0.0
  %4839 = vmatprep.subr.mxu0 0.0
  %4840 = vmatpush1.msra.mxu0 0.0
  %4841 = vmatprep.subr.mxu0 0.0
  %4842 = vmatpush1.msra.mxu0 0.0
  %4843 = vmatprep.subr.mxu0 0.0
  %4844 = vmatpush1.msra.mxu0 0.0
  %4845 = vmatprep.mubr.f32.mxu0 0.0
  %4846 = vmatmul.mubr.f32.gmra.mrb[0].mxu0 %v4779
  %v4847 = vpop.f32.mrb[0].mxu0
  %v4848 = vadd.f32 %v4776, %v4847
  %v4849 = vpop.f32.mrb[0].mxu0
  %4850 = vdwg.mxu0
  %v4851 = vmax.f32 %v4848, -1.5
  %v4852 = vmin.f32 %v4851, 1.5
  %v4853 = vadd.f32 %v4852, %v4558
  %v4854 = vmul.f32 %v4848, 1.442695
  %v4855 = vpow.pop %v4854
  %v4856 = vmax.f32 %v4855, 0.031622775
  %v4857 = vmin.f32 %v4856, 31.622776
  %v4858 = vsel %vm2382, %v4853, %v4857
  %s4859 = scalar_lea.vmem %s1, 56
  %v4860 = vld [vmem:[%s4859] sm:$0xff]
  %v4861 = vadd.f32 %v2286, %v4860
  %v4862 = vsel %vm2262, %v4861, -inf
  %4863 = vmax.xlane.f32.xlu0 %v4862
  %v4864 = vpop.xlane.xlu0 %4863
  %vm4865 = vcmp.ge.f32.partialorder %v4861, %v4864
  %v4866 = vsel %vm4865, %v2260, 20.0
  %v4867 = vsel %vm2262, %v4866, inf
  %4868 = vmin.xlane.f32.xlu0 %v4867
  %v4869 = vpop.xlane.xlu0 %4868
  %vm4870 = vcmp.eq.f32.partialorder %v2386, %v4869
  %v4871 = vsel %vm4870, 1, 0
  %v4872 = vcvt.s32.f32 %v4871
  %4874 = vset.pattern.permute.xlu0 20
  %4875 = vperm.xlu0 %4874, %v4860
  %v4876 = vpop.permute.xlu0 %4875
  %4878 = vset.pattern.permute.xlu0 21
  %4879 = vperm.xlu0 %4878, %v4860
  %v4880 = vpop.permute.xlu0 %4879
  %v4882 = vsel %vm2383, %v4876, %v4880
  %4884 = vrot.lane.b32.xlu0 %v4882, 40
  %v4885 = vpop.permute.xlu0 %4884
  %v4887 = vmul.f32 %v4858, %v4885
  %4889 = vrot.lane.b32.xlu0 %v4887, 88
  %v4890 = vpop.permute.xlu0 %4889
  %v4892 = vadd.f32 %v4858, %v4890
  %v4893 = vmul.f32 %v4872, %v4892
  %v4894 = vsel %vm2262, %v4893, 0.0
  %4895 = vadd.xlane.f32.xlu0 %v4894
  %v4896 = vpop.xlane.xlu0 %4895
  %4898 = vrot.lane.b32.xlu0 %v4893, 108
  %v4899 = vpop.permute.xlu0 %4898
  %v4901 = vsel %vm2262, %v4899, 0.0
  %4902 = vadd.xlane.f32.xlu0 %v4901
  %v4903 = vpop.xlane.xlu0 %4902
  %v4904 = vsel %vm2760, %v4896, %v4903
  %4906 = vrot.lane.b32.xlu0 %v4904, 100
  %v4907 = vpop.permute.xlu0 %4906
  %v4909 = vsel %vm2633, %v4858, %v4760
  %v4910 = vsel %vm2771, %v4909, %v4907
  %v4911 = vsel %vm2773, %v4910, 0.0
  %s4912 = scalar_lea.vmem %s20, 48
  %4913 = vst [vmem:[%s4912] sm:$0xff] %v4911
  %v4914 = vsel %vm2382, %v4853, 0.0
  %v4915 = vmul.f32 %v4896, %v2400
  %v4916 = vadd.f32 %v2377, %v4915
  %v4917 = vmul.f32 %v4903, %v2406
  %v4918 = vadd.f32 %v4916, %v4917
  %v4919 = vld [vmem:[%s14] sm:$0xff]
  %v4920 = vld [vmem:[%s14 + $0x8] sm:$0xff]
  %v4921 = vld [vmem:[%s14 + $0x10] sm:$0xff]
  %v4922 = vld [vmem:[%s14 + $0x18] sm:$0xff]
  %v4923 = vld [vmem:[%s14 + $0x20] sm:$0xff]
  %v4924 = vld [vmem:[%s15] sm:$0x1]
  %v4926 = vlaneseq
  %v4927 = vshrl.u32 %v4926, 7
  %v4928 = vsub.s32 0, %v4927
  %v4929 = vrot.slane %v4924, %v4928
  %4931 = vmatprep.subr.mxu0 0.0
  %4932 = vmatpush1.msra.mxu0 %v4919
  %4933 = vmatprep.subr.mxu0 0.0
  %4934 = vmatpush1.msra.mxu0 %v4920
  %4935 = vmatprep.subr.mxu0 0.0
  %4936 = vmatpush1.msra.mxu0 %v4921
  %4937 = vmatprep.subr.mxu0 0.0
  %4938 = vmatpush1.msra.mxu0 %v4922
  %4939 = vmatprep.subr.mxu0 0.0
  %4940 = vmatpush1.msra.mxu0 %v4923
  %4941 = vmatprep.subr.mxu0 0.0
  %4942 = vmatpush1.msra.mxu0 0.0
  %4943 = vmatprep.subr.mxu0 0.0
  %4944 = vmatpush1.msra.mxu0 0.0
  %4945 = vmatprep.subr.mxu0 0.0
  %4946 = vmatpush1.msra.mxu0 0.0
  %4947 = vmatprep.subr.mxu0 0.0
  %4948 = vmatpush1.msra.mxu0 0.0
  %4949 = vmatprep.subr.mxu0 0.0
  %4950 = vmatpush1.msra.mxu0 0.0
  %4951 = vmatprep.subr.mxu0 0.0
  %4952 = vmatpush1.msra.mxu0 0.0
  %4953 = vmatprep.subr.mxu0 0.0
  %4954 = vmatpush1.msra.mxu0 0.0
  %4955 = vmatprep.subr.mxu0 0.0
  %4956 = vmatpush1.msra.mxu0 0.0
  %4957 = vmatprep.subr.mxu0 0.0
  %4958 = vmatpush1.msra.mxu0 0.0
  %4959 = vmatprep.subr.mxu0 0.0
  %4960 = vmatpush1.msra.mxu0 0.0
  %4961 = vmatprep.subr.mxu0 0.0
  %4962 = vmatpush1.msra.mxu0 0.0
  %4963 = vmatprep.subr.mxu0 0.0
  %4964 = vmatpush1.msra.mxu0 0.0
  %4965 = vmatprep.subr.mxu0 0.0
  %4966 = vmatpush1.msra.mxu0 0.0
  %4967 = vmatprep.subr.mxu0 0.0
  %4968 = vmatpush1.msra.mxu0 0.0
  %4969 = vmatprep.subr.mxu0 0.0
  %4970 = vmatpush1.msra.mxu0 0.0
  %4971 = vmatprep.subr.mxu0 0.0
  %4972 = vmatpush1.msra.mxu0 0.0
  %4973 = vmatprep.subr.mxu0 0.0
  %4974 = vmatpush1.msra.mxu0 0.0
  %4975 = vmatprep.subr.mxu0 0.0
  %4976 = vmatpush1.msra.mxu0 0.0
  %4977 = vmatprep.subr.mxu0 0.0
  %4978 = vmatpush1.msra.mxu0 0.0
  %4979 = vmatprep.subr.mxu0 0.0
  %4980 = vmatpush1.msra.mxu0 0.0
  %4981 = vmatprep.subr.mxu0 0.0
  %4982 = vmatpush1.msra.mxu0 0.0
  %4983 = vmatprep.subr.mxu0 0.0
  %4984 = vmatpush1.msra.mxu0 0.0
  %4985 = vmatprep.subr.mxu0 0.0
  %4986 = vmatpush1.msra.mxu0 0.0
  %4987 = vmatprep.subr.mxu0 0.0
  %4988 = vmatpush1.msra.mxu0 0.0
  %4989 = vmatprep.subr.mxu0 0.0
  %4990 = vmatpush1.msra.mxu0 0.0
  %4991 = vmatprep.subr.mxu0 0.0
  %4992 = vmatpush1.msra.mxu0 0.0
  %4993 = vmatprep.subr.mxu0 0.0
  %4994 = vmatpush1.msra.mxu0 0.0
  %4995 = vmatprep.mubr.f32.mxu0 0.0
  %4996 = vmatmul.mubr.f32.gmra.mrb[0].mxu0 %v4684
  %v4997 = vpop.f32.mrb[0].mxu0
  %v4998 = vadd.f32 %v4929, %v4997
  %v4999 = vpop.f32.mrb[0].mxu0
  %5000 = vdwg.mxu0
  %v5001 = vadd.f32 %v4918, %v4998
  %v5002 = vmul.f32 %v5001, 0.5
  %v5003 = vtanh.pop %v5002
  %v5004 = vmul.f32 %v5003, 0.5
  %v5005 = vadd.f32 %v5004, 0.5
  %5007 = vrot.lane.b32.xlu0 %v4998, 48
  %v5008 = vpop.permute.xlu0 %5007
  %v5010 = vmul.f32 %v5005, %v5008
  %5012 = vrot.lane.b32.xlu0 %v5010, 80
  %v5013 = vpop.permute.xlu0 %5012
  %v5015 = vadd.f32 %v4918, %v5013
  %v5016 = vtanh.pop %v5015
  %v5017 = vsub.f32 1.0, %v5005
  %5019 = vrot.lane.b32.xlu0 %v5016, 88
  %v5020 = vpop.permute.xlu0 %5019
  %v5022 = vmul.f32 %v5017, %v5020
  %v5023 = vmul.f32 %v5005, %v4668
  %v5024 = vadd.f32 %v5022, %v5023
  %v5025 = vld [vmem:[%s16] sm:$0xff]
  %v5026 = vld [vmem:[%s16 + $0x8] sm:$0xff]
  %v5027 = vld [vmem:[%s16 + $0x10] sm:$0xff]
  %v5028 = vld [vmem:[%s16 + $0x18] sm:$0xff]
  %v5029 = vld [vmem:[%s16 + $0x20] sm:$0xff]
  %v5030 = vld [vmem:[%s17] sm:$0x1]
  %v5032 = vlaneseq
  %v5033 = vshrl.u32 %v5032, 7
  %v5034 = vsub.s32 0, %v5033
  %v5035 = vrot.slane %v5030, %v5034
  %5038 = vrot.lane.b32.xlu0 %v5024, 88
  %v5039 = vpop.permute.xlu0 %5038
  %v5040 = vsel %vm2424, %v5039, 0
  %5042 = vmatprep.subr.mxu0 0.0
  %5043 = vmatpush1.msra.mxu0 %v5025
  %5044 = vmatprep.subr.mxu0 0.0
  %5045 = vmatpush1.msra.mxu0 %v5026
  %5046 = vmatprep.subr.mxu0 0.0
  %5047 = vmatpush1.msra.mxu0 %v5027
  %5048 = vmatprep.subr.mxu0 0.0
  %5049 = vmatpush1.msra.mxu0 %v5028
  %5050 = vmatprep.subr.mxu0 0.0
  %5051 = vmatpush1.msra.mxu0 %v5029
  %5052 = vmatprep.subr.mxu0 0.0
  %5053 = vmatpush1.msra.mxu0 0.0
  %5054 = vmatprep.subr.mxu0 0.0
  %5055 = vmatpush1.msra.mxu0 0.0
  %5056 = vmatprep.subr.mxu0 0.0
  %5057 = vmatpush1.msra.mxu0 0.0
  %5058 = vmatprep.subr.mxu0 0.0
  %5059 = vmatpush1.msra.mxu0 0.0
  %5060 = vmatprep.subr.mxu0 0.0
  %5061 = vmatpush1.msra.mxu0 0.0
  %5062 = vmatprep.subr.mxu0 0.0
  %5063 = vmatpush1.msra.mxu0 0.0
  %5064 = vmatprep.subr.mxu0 0.0
  %5065 = vmatpush1.msra.mxu0 0.0
  %5066 = vmatprep.subr.mxu0 0.0
  %5067 = vmatpush1.msra.mxu0 0.0
  %5068 = vmatprep.subr.mxu0 0.0
  %5069 = vmatpush1.msra.mxu0 0.0
  %5070 = vmatprep.subr.mxu0 0.0
  %5071 = vmatpush1.msra.mxu0 0.0
  %5072 = vmatprep.subr.mxu0 0.0
  %5073 = vmatpush1.msra.mxu0 0.0
  %5074 = vmatprep.subr.mxu0 0.0
  %5075 = vmatpush1.msra.mxu0 0.0
  %5076 = vmatprep.subr.mxu0 0.0
  %5077 = vmatpush1.msra.mxu0 0.0
  %5078 = vmatprep.subr.mxu0 0.0
  %5079 = vmatpush1.msra.mxu0 0.0
  %5080 = vmatprep.subr.mxu0 0.0
  %5081 = vmatpush1.msra.mxu0 0.0
  %5082 = vmatprep.subr.mxu0 0.0
  %5083 = vmatpush1.msra.mxu0 0.0
  %5084 = vmatprep.subr.mxu0 0.0
  %5085 = vmatpush1.msra.mxu0 0.0
  %5086 = vmatprep.subr.mxu0 0.0
  %5087 = vmatpush1.msra.mxu0 0.0
  %5088 = vmatprep.subr.mxu0 0.0
  %5089 = vmatpush1.msra.mxu0 0.0
  %5090 = vmatprep.subr.mxu0 0.0
  %5091 = vmatpush1.msra.mxu0 0.0
  %5092 = vmatprep.subr.mxu0 0.0
  %5093 = vmatpush1.msra.mxu0 0.0
  %5094 = vmatprep.subr.mxu0 0.0
  %5095 = vmatpush1.msra.mxu0 0.0
  %5096 = vmatprep.subr.mxu0 0.0
  %5097 = vmatpush1.msra.mxu0 0.0
  %5098 = vmatprep.subr.mxu0 0.0
  %5099 = vmatpush1.msra.mxu0 0.0
  %5100 = vmatprep.subr.mxu0 0.0
  %5101 = vmatpush1.msra.mxu0 0.0
  %5102 = vmatprep.subr.mxu0 0.0
  %5103 = vmatpush1.msra.mxu0 0.0
  %5104 = vmatprep.subr.mxu0 0.0
  %5105 = vmatpush1.msra.mxu0 0.0
  %5106 = vmatprep.mubr.f32.mxu0 0.0
  %5107 = vmatmul.mubr.f32.gmra.mrb[0].mxu0 %v5040
  %v5108 = vpop.f32.mrb[0].mxu0
  %v5109 = vadd.f32 %v5035, %v5108
  %v5110 = vpop.f32.mrb[0].mxu0
  %5111 = vdwg.mxu0
  %v5112 = vmul.f32 %v5109, 0.5
  %v5113 = vtanh.pop %v5112
  %v5114 = vmul.f32 %v5113, 0.5
  %v5115 = vadd.f32 %v5114, 0.5
  %v5116 = vtanh.pop %v5109
  %v5117 = vld [vmem:[%s18] sm:$0xff]
  %v5118 = vld [vmem:[%s18 + $0x8] sm:$0xff]
  %v5119 = vld [vmem:[%s18 + $0x10] sm:$0xff]
  %v5120 = vld [vmem:[%s18 + $0x18] sm:$0xff]
  %v5121 = vld [vmem:[%s18 + $0x20] sm:$0xff]
  %v5122 = vld [vmem:[%s18 + $0x28] sm:$0xff]
  %v5123 = vld [vmem:[%s18 + $0x30] sm:$0xff]
  %v5124 = vld [vmem:[%s18 + $0x38] sm:$0xff]
  %v5125 = vld [vmem:[%s18 + $0x40] sm:$0xff]
  %v5126 = vld [vmem:[%s18 + $0x48] sm:$0xff]
  %v5127 = vld [vmem:[%s19] sm:$0x1]
  %v5129 = vlaneseq
  %v5130 = vshrl.u32 %v5129, 7
  %v5131 = vsub.s32 0, %v5130
  %v5132 = vrot.slane %v5127, %v5131
  %v5135 = vsel %vm2633, %v5115, 0
  %5137 = vmatprep.subr.mxu0 0.0
  %5138 = vmatpush1.msra.mxu0 %v5117
  %5139 = vmatprep.subr.mxu0 0.0
  %5140 = vmatpush1.msra.mxu0 %v5118
  %5141 = vmatprep.subr.mxu0 0.0
  %5142 = vmatpush1.msra.mxu0 %v5119
  %5143 = vmatprep.subr.mxu0 0.0
  %5144 = vmatpush1.msra.mxu0 %v5120
  %5145 = vmatprep.subr.mxu0 0.0
  %5146 = vmatpush1.msra.mxu0 %v5121
  %5147 = vmatprep.subr.mxu0 0.0
  %5148 = vmatpush1.msra.mxu0 %v5122
  %5149 = vmatprep.subr.mxu0 0.0
  %5150 = vmatpush1.msra.mxu0 %v5123
  %5151 = vmatprep.subr.mxu0 0.0
  %5152 = vmatpush1.msra.mxu0 %v5124
  %5153 = vmatprep.subr.mxu0 0.0
  %5154 = vmatpush1.msra.mxu0 %v5125
  %5155 = vmatprep.subr.mxu0 0.0
  %5156 = vmatpush1.msra.mxu0 %v5126
  %5157 = vmatprep.subr.mxu0 0.0
  %5158 = vmatpush1.msra.mxu0 0.0
  %5159 = vmatprep.subr.mxu0 0.0
  %5160 = vmatpush1.msra.mxu0 0.0
  %5161 = vmatprep.subr.mxu0 0.0
  %5162 = vmatpush1.msra.mxu0 0.0
  %5163 = vmatprep.subr.mxu0 0.0
  %5164 = vmatpush1.msra.mxu0 0.0
  %5165 = vmatprep.subr.mxu0 0.0
  %5166 = vmatpush1.msra.mxu0 0.0
  %5167 = vmatprep.subr.mxu0 0.0
  %5168 = vmatpush1.msra.mxu0 0.0
  %5169 = vmatprep.subr.mxu0 0.0
  %5170 = vmatpush1.msra.mxu0 0.0
  %5171 = vmatprep.subr.mxu0 0.0
  %5172 = vmatpush1.msra.mxu0 0.0
  %5173 = vmatprep.subr.mxu0 0.0
  %5174 = vmatpush1.msra.mxu0 0.0
  %5175 = vmatprep.subr.mxu0 0.0
  %5176 = vmatpush1.msra.mxu0 0.0
  %5177 = vmatprep.subr.mxu0 0.0
  %5178 = vmatpush1.msra.mxu0 0.0
  %5179 = vmatprep.subr.mxu0 0.0
  %5180 = vmatpush1.msra.mxu0 0.0
  %5181 = vmatprep.subr.mxu0 0.0
  %5182 = vmatpush1.msra.mxu0 0.0
  %5183 = vmatprep.subr.mxu0 0.0
  %5184 = vmatpush1.msra.mxu0 0.0
  %5185 = vmatprep.subr.mxu0 0.0
  %5186 = vmatpush1.msra.mxu0 0.0
  %5187 = vmatprep.subr.mxu0 0.0
  %5188 = vmatpush1.msra.mxu0 0.0
  %5189 = vmatprep.subr.mxu0 0.0
  %5190 = vmatpush1.msra.mxu0 0.0
  %5191 = vmatprep.subr.mxu0 0.0
  %5192 = vmatpush1.msra.mxu0 0.0
  %5193 = vmatprep.subr.mxu0 0.0
  %5194 = vmatpush1.msra.mxu0 0.0
  %5195 = vmatprep.subr.mxu0 0.0
  %5196 = vmatpush1.msra.mxu0 0.0
  %5197 = vmatprep.subr.mxu0 0.0
  %5198 = vmatpush1.msra.mxu0 0.0
  %5199 = vmatprep.subr.mxu0 0.0
  %5200 = vmatpush1.msra.mxu0 0.0
  %5201 = vmatprep.mubr.f32.mxu0 0.0
  %5202 = vmatmul.mubr.f32.gmra.mrb[0].mxu0 %v5135
  %v5203 = vpop.f32.mrb[0].mxu0
  %v5204 = vadd.f32 %v5132, %v5203
  %v5205 = vpop.f32.mrb[0].mxu0
  %5206 = vdwg.mxu0
  %v5207 = vmax.f32 %v5204, -1.5
  %v5208 = vmin.f32 %v5207, 1.5
  %v5209 = vadd.f32 %v5208, %v4914
  %v5210 = vmul.f32 %v5204, 1.442695
  %v5211 = vpow.pop %v5210
  %v5212 = vmax.f32 %v5211, 0.031622775
  %v5213 = vmin.f32 %v5212, 31.622776
  %v5214 = vsel %vm2382, %v5209, %v5213
  %s5215 = scalar_lea.vmem %s1, 64
  %v5216 = vld [vmem:[%s5215] sm:$0xff]
  %v5217 = vadd.f32 %v2286, %v5216
  %v5218 = vsel %vm2262, %v5217, -inf
  %5219 = vmax.xlane.f32.xlu0 %v5218
  %v5220 = vpop.xlane.xlu0 %5219
  %vm5221 = vcmp.ge.f32.partialorder %v5217, %v5220
  %v5222 = vsel %vm5221, %v2260, 20.0
  %v5223 = vsel %vm2262, %v5222, inf
  %5224 = vmin.xlane.f32.xlu0 %v5223
  %v5225 = vpop.xlane.xlu0 %5224
  %vm5226 = vcmp.eq.f32.partialorder %v2386, %v5225
  %v5227 = vsel %vm5226, 1, 0
  %v5228 = vcvt.s32.f32 %v5227
  %5230 = vset.pattern.permute.xlu0 20
  %5231 = vperm.xlu0 %5230, %v5216
  %v5232 = vpop.permute.xlu0 %5231
  %5234 = vset.pattern.permute.xlu0 21
  %5235 = vperm.xlu0 %5234, %v5216
  %v5236 = vpop.permute.xlu0 %5235
  %v5238 = vsel %vm2383, %v5232, %v5236
  %5240 = vrot.lane.b32.xlu0 %v5238, 40
  %v5241 = vpop.permute.xlu0 %5240
  %v5243 = vmul.f32 %v5214, %v5241
  %5245 = vrot.lane.b32.xlu0 %v5243, 88
  %v5246 = vpop.permute.xlu0 %5245
  %v5248 = vadd.f32 %v5214, %v5246
  %v5249 = vmul.f32 %v5228, %v5248
  %v5250 = vsel %vm2262, %v5249, 0.0
  %5251 = vadd.xlane.f32.xlu0 %v5250
  %v5252 = vpop.xlane.xlu0 %5251
  %5254 = vrot.lane.b32.xlu0 %v5249, 108
  %v5255 = vpop.permute.xlu0 %5254
  %v5257 = vsel %vm2262, %v5255, 0.0
  %5258 = vadd.xlane.f32.xlu0 %v5257
  %v5259 = vpop.xlane.xlu0 %5258
  %v5260 = vsel %vm2760, %v5252, %v5259
  %5262 = vrot.lane.b32.xlu0 %v5260, 100
  %v5263 = vpop.permute.xlu0 %5262
  %v5265 = vsel %vm2633, %v5214, %v5116
  %v5266 = vsel %vm2771, %v5265, %v5263
  %v5267 = vsel %vm2773, %v5266, 0.0
  %s5268 = scalar_lea.vmem %s20, 56
  %5269 = vst [vmem:[%s5268] sm:$0xff] %v5267
  %v5270 = vsel %vm2382, %v5209, 0.0
  %v5271 = vmul.f32 %v5252, %v2400
  %v5272 = vadd.f32 %v2377, %v5271
  %v5273 = vmul.f32 %v5259, %v2406
  %v5274 = vadd.f32 %v5272, %v5273
  %v5275 = vld [vmem:[%s14] sm:$0xff]
  %v5276 = vld [vmem:[%s14 + $0x8] sm:$0xff]
  %v5277 = vld [vmem:[%s14 + $0x10] sm:$0xff]
  %v5278 = vld [vmem:[%s14 + $0x18] sm:$0xff]
  %v5279 = vld [vmem:[%s14 + $0x20] sm:$0xff]
  %v5280 = vld [vmem:[%s15] sm:$0x1]
  %v5282 = vlaneseq
  %v5283 = vshrl.u32 %v5282, 7
  %v5284 = vsub.s32 0, %v5283
  %v5285 = vrot.slane %v5280, %v5284
  %5287 = vmatprep.subr.mxu0 0.0
  %5288 = vmatpush1.msra.mxu0 %v5275
  %5289 = vmatprep.subr.mxu0 0.0
  %5290 = vmatpush1.msra.mxu0 %v5276
  %5291 = vmatprep.subr.mxu0 0.0
  %5292 = vmatpush1.msra.mxu0 %v5277
  %5293 = vmatprep.subr.mxu0 0.0
  %5294 = vmatpush1.msra.mxu0 %v5278
  %5295 = vmatprep.subr.mxu0 0.0
  %5296 = vmatpush1.msra.mxu0 %v5279
  %5297 = vmatprep.subr.mxu0 0.0
  %5298 = vmatpush1.msra.mxu0 0.0
  %5299 = vmatprep.subr.mxu0 0.0
  %5300 = vmatpush1.msra.mxu0 0.0
  %5301 = vmatprep.subr.mxu0 0.0
  %5302 = vmatpush1.msra.mxu0 0.0
  %5303 = vmatprep.subr.mxu0 0.0
  %5304 = vmatpush1.msra.mxu0 0.0
  %5305 = vmatprep.subr.mxu0 0.0
  %5306 = vmatpush1.msra.mxu0 0.0
  %5307 = vmatprep.subr.mxu0 0.0
  %5308 = vmatpush1.msra.mxu0 0.0
  %5309 = vmatprep.subr.mxu0 0.0
  %5310 = vmatpush1.msra.mxu0 0.0
  %5311 = vmatprep.subr.mxu0 0.0
  %5312 = vmatpush1.msra.mxu0 0.0
  %5313 = vmatprep.subr.mxu0 0.0
  %5314 = vmatpush1.msra.mxu0 0.0
  %5315 = vmatprep.subr.mxu0 0.0
  %5316 = vmatpush1.msra.mxu0 0.0
  %5317 = vmatprep.subr.mxu0 0.0
  %5318 = vmatpush1.msra.mxu0 0.0
  %5319 = vmatprep.subr.mxu0 0.0
  %5320 = vmatpush1.msra.mxu0 0.0
  %5321 = vmatprep.subr.mxu0 0.0
  %5322 = vmatpush1.msra.mxu0 0.0
  %5323 = vmatprep.subr.mxu0 0.0
  %5324 = vmatpush1.msra.mxu0 0.0
  %5325 = vmatprep.subr.mxu0 0.0
  %5326 = vmatpush1.msra.mxu0 0.0
  %5327 = vmatprep.subr.mxu0 0.0
  %5328 = vmatpush1.msra.mxu0 0.0
  %5329 = vmatprep.subr.mxu0 0.0
  %5330 = vmatpush1.msra.mxu0 0.0
  %5331 = vmatprep.subr.mxu0 0.0
  %5332 = vmatpush1.msra.mxu0 0.0
  %5333 = vmatprep.subr.mxu0 0.0
  %5334 = vmatpush1.msra.mxu0 0.0
  %5335 = vmatprep.subr.mxu0 0.0
  %5336 = vmatpush1.msra.mxu0 0.0
  %5337 = vmatprep.subr.mxu0 0.0
  %5338 = vmatpush1.msra.mxu0 0.0
  %5339 = vmatprep.subr.mxu0 0.0
  %5340 = vmatpush1.msra.mxu0 0.0
  %5341 = vmatprep.subr.mxu0 0.0
  %5342 = vmatpush1.msra.mxu0 0.0
  %5343 = vmatprep.subr.mxu0 0.0
  %5344 = vmatpush1.msra.mxu0 0.0
  %5345 = vmatprep.subr.mxu0 0.0
  %5346 = vmatpush1.msra.mxu0 0.0
  %5347 = vmatprep.subr.mxu0 0.0
  %5348 = vmatpush1.msra.mxu0 0.0
  %5349 = vmatprep.subr.mxu0 0.0
  %5350 = vmatpush1.msra.mxu0 0.0
  %5351 = vmatprep.mubr.f32.mxu0 0.0
  %5352 = vmatmul.mubr.f32.gmra.mrb[0].mxu0 %v5040
  %v5353 = vpop.f32.mrb[0].mxu0
  %v5354 = vadd.f32 %v5285, %v5353
  %v5355 = vpop.f32.mrb[0].mxu0
  %5356 = vdwg.mxu0
  %v5357 = vadd.f32 %v5274, %v5354
  %v5358 = vmul.f32 %v5357, 0.5
  %v5359 = vtanh.pop %v5358
  %v5360 = vmul.f32 %v5359, 0.5
  %v5361 = vadd.f32 %v5360, 0.5
  %5363 = vrot.lane.b32.xlu0 %v5354, 48
  %v5364 = vpop.permute.xlu0 %5363
  %v5366 = vmul.f32 %v5361, %v5364
  %5368 = vrot.lane.b32.xlu0 %v5366, 80
  %v5369 = vpop.permute.xlu0 %5368
  %v5371 = vadd.f32 %v5274, %v5369
  %v5372 = vtanh.pop %v5371
  %v5373 = vsub.f32 1.0, %v5361
  %5375 = vrot.lane.b32.xlu0 %v5372, 88
  %v5376 = vpop.permute.xlu0 %5375
  %v5378 = vmul.f32 %v5373, %v5376
  %v5379 = vmul.f32 %v5361, %v5024
  %v5380 = vadd.f32 %v5378, %v5379
  %v5381 = vld [vmem:[%s16] sm:$0xff]
  %v5382 = vld [vmem:[%s16 + $0x8] sm:$0xff]
  %v5383 = vld [vmem:[%s16 + $0x10] sm:$0xff]
  %v5384 = vld [vmem:[%s16 + $0x18] sm:$0xff]
  %v5385 = vld [vmem:[%s16 + $0x20] sm:$0xff]
  %v5386 = vld [vmem:[%s17] sm:$0x1]
  %v5388 = vlaneseq
  %v5389 = vshrl.u32 %v5388, 7
  %v5390 = vsub.s32 0, %v5389
  %v5391 = vrot.slane %v5386, %v5390
  %5394 = vrot.lane.b32.xlu0 %v5380, 88
  %v5395 = vpop.permute.xlu0 %5394
  %v5396 = vsel %vm2424, %v5395, 0
  %5398 = vmatprep.subr.mxu0 0.0
  %5399 = vmatpush1.msra.mxu0 %v5381
  %5400 = vmatprep.subr.mxu0 0.0
  %5401 = vmatpush1.msra.mxu0 %v5382
  %5402 = vmatprep.subr.mxu0 0.0
  %5403 = vmatpush1.msra.mxu0 %v5383
  %5404 = vmatprep.subr.mxu0 0.0
  %5405 = vmatpush1.msra.mxu0 %v5384
  %5406 = vmatprep.subr.mxu0 0.0
  %5407 = vmatpush1.msra.mxu0 %v5385
  %5408 = vmatprep.subr.mxu0 0.0
  %5409 = vmatpush1.msra.mxu0 0.0
  %5410 = vmatprep.subr.mxu0 0.0
  %5411 = vmatpush1.msra.mxu0 0.0
  %5412 = vmatprep.subr.mxu0 0.0
  %5413 = vmatpush1.msra.mxu0 0.0
  %5414 = vmatprep.subr.mxu0 0.0
  %5415 = vmatpush1.msra.mxu0 0.0
  %5416 = vmatprep.subr.mxu0 0.0
  %5417 = vmatpush1.msra.mxu0 0.0
  %5418 = vmatprep.subr.mxu0 0.0
  %5419 = vmatpush1.msra.mxu0 0.0
  %5420 = vmatprep.subr.mxu0 0.0
  %5421 = vmatpush1.msra.mxu0 0.0
  %5422 = vmatprep.subr.mxu0 0.0
  %5423 = vmatpush1.msra.mxu0 0.0
  %5424 = vmatprep.subr.mxu0 0.0
  %5425 = vmatpush1.msra.mxu0 0.0
  %5426 = vmatprep.subr.mxu0 0.0
  %5427 = vmatpush1.msra.mxu0 0.0
  %5428 = vmatprep.subr.mxu0 0.0
  %5429 = vmatpush1.msra.mxu0 0.0
  %5430 = vmatprep.subr.mxu0 0.0
  %5431 = vmatpush1.msra.mxu0 0.0
  %5432 = vmatprep.subr.mxu0 0.0
  %5433 = vmatpush1.msra.mxu0 0.0
  %5434 = vmatprep.subr.mxu0 0.0
  %5435 = vmatpush1.msra.mxu0 0.0
  %5436 = vmatprep.subr.mxu0 0.0
  %5437 = vmatpush1.msra.mxu0 0.0
  %5438 = vmatprep.subr.mxu0 0.0
  %5439 = vmatpush1.msra.mxu0 0.0
  %5440 = vmatprep.subr.mxu0 0.0
  %5441 = vmatpush1.msra.mxu0 0.0
  %5442 = vmatprep.subr.mxu0 0.0
  %5443 = vmatpush1.msra.mxu0 0.0
  %5444 = vmatprep.subr.mxu0 0.0
  %5445 = vmatpush1.msra.mxu0 0.0
  %5446 = vmatprep.subr.mxu0 0.0
  %5447 = vmatpush1.msra.mxu0 0.0
  %5448 = vmatprep.subr.mxu0 0.0
  %5449 = vmatpush1.msra.mxu0 0.0
  %5450 = vmatprep.subr.mxu0 0.0
  %5451 = vmatpush1.msra.mxu0 0.0
  %5452 = vmatprep.subr.mxu0 0.0
  %5453 = vmatpush1.msra.mxu0 0.0
  %5454 = vmatprep.subr.mxu0 0.0
  %5455 = vmatpush1.msra.mxu0 0.0
  %5456 = vmatprep.subr.mxu0 0.0
  %5457 = vmatpush1.msra.mxu0 0.0
  %5458 = vmatprep.subr.mxu0 0.0
  %5459 = vmatpush1.msra.mxu0 0.0
  %5460 = vmatprep.subr.mxu0 0.0
  %5461 = vmatpush1.msra.mxu0 0.0
  %5462 = vmatprep.mubr.f32.mxu0 0.0
  %5463 = vmatmul.mubr.f32.gmra.mrb[0].mxu0 %v5396
  %v5464 = vpop.f32.mrb[0].mxu0
  %v5465 = vadd.f32 %v5391, %v5464
  %v5466 = vpop.f32.mrb[0].mxu0
  %5467 = vdwg.mxu0
  %v5468 = vmul.f32 %v5465, 0.5
  %v5469 = vtanh.pop %v5468
  %v5470 = vmul.f32 %v5469, 0.5
  %v5471 = vadd.f32 %v5470, 0.5
  %v5472 = vtanh.pop %v5465
  %v5473 = vld [vmem:[%s18] sm:$0xff]
  %v5474 = vld [vmem:[%s18 + $0x8] sm:$0xff]
  %v5475 = vld [vmem:[%s18 + $0x10] sm:$0xff]
  %v5476 = vld [vmem:[%s18 + $0x18] sm:$0xff]
  %v5477 = vld [vmem:[%s18 + $0x20] sm:$0xff]
  %v5478 = vld [vmem:[%s18 + $0x28] sm:$0xff]
  %v5479 = vld [vmem:[%s18 + $0x30] sm:$0xff]
  %v5480 = vld [vmem:[%s18 + $0x38] sm:$0xff]
  %v5481 = vld [vmem:[%s18 + $0x40] sm:$0xff]
  %v5482 = vld [vmem:[%s18 + $0x48] sm:$0xff]
  %v5483 = vld [vmem:[%s19] sm:$0x1]
  %v5485 = vlaneseq
  %v5486 = vshrl.u32 %v5485, 7
  %v5487 = vsub.s32 0, %v5486
  %v5488 = vrot.slane %v5483, %v5487
  %v5491 = vsel %vm2633, %v5471, 0
  %5493 = vmatprep.subr.mxu0 0.0
  %5494 = vmatpush1.msra.mxu0 %v5473
  %5495 = vmatprep.subr.mxu0 0.0
  %5496 = vmatpush1.msra.mxu0 %v5474
  %5497 = vmatprep.subr.mxu0 0.0
  %5498 = vmatpush1.msra.mxu0 %v5475
  %5499 = vmatprep.subr.mxu0 0.0
  %5500 = vmatpush1.msra.mxu0 %v5476
  %5501 = vmatprep.subr.mxu0 0.0
  %5502 = vmatpush1.msra.mxu0 %v5477
  %5503 = vmatprep.subr.mxu0 0.0
  %5504 = vmatpush1.msra.mxu0 %v5478
  %5505 = vmatprep.subr.mxu0 0.0
  %5506 = vmatpush1.msra.mxu0 %v5479
  %5507 = vmatprep.subr.mxu0 0.0
  %5508 = vmatpush1.msra.mxu0 %v5480
  %5509 = vmatprep.subr.mxu0 0.0
  %5510 = vmatpush1.msra.mxu0 %v5481
  %5511 = vmatprep.subr.mxu0 0.0
  %5512 = vmatpush1.msra.mxu0 %v5482
  %5513 = vmatprep.subr.mxu0 0.0
  %5514 = vmatpush1.msra.mxu0 0.0
  %5515 = vmatprep.subr.mxu0 0.0
  %5516 = vmatpush1.msra.mxu0 0.0
  %5517 = vmatprep.subr.mxu0 0.0
  %5518 = vmatpush1.msra.mxu0 0.0
  %5519 = vmatprep.subr.mxu0 0.0
  %5520 = vmatpush1.msra.mxu0 0.0
  %5521 = vmatprep.subr.mxu0 0.0
  %5522 = vmatpush1.msra.mxu0 0.0
  %5523 = vmatprep.subr.mxu0 0.0
  %5524 = vmatpush1.msra.mxu0 0.0
  %5525 = vmatprep.subr.mxu0 0.0
  %5526 = vmatpush1.msra.mxu0 0.0
  %5527 = vmatprep.subr.mxu0 0.0
  %5528 = vmatpush1.msra.mxu0 0.0
  %5529 = vmatprep.subr.mxu0 0.0
  %5530 = vmatpush1.msra.mxu0 0.0
  %5531 = vmatprep.subr.mxu0 0.0
  %5532 = vmatpush1.msra.mxu0 0.0
  %5533 = vmatprep.subr.mxu0 0.0
  %5534 = vmatpush1.msra.mxu0 0.0
  %5535 = vmatprep.subr.mxu0 0.0
  %5536 = vmatpush1.msra.mxu0 0.0
  %5537 = vmatprep.subr.mxu0 0.0
  %5538 = vmatpush1.msra.mxu0 0.0
  %5539 = vmatprep.subr.mxu0 0.0
  %5540 = vmatpush1.msra.mxu0 0.0
  %5541 = vmatprep.subr.mxu0 0.0
  %5542 = vmatpush1.msra.mxu0 0.0
  %5543 = vmatprep.subr.mxu0 0.0
  %5544 = vmatpush1.msra.mxu0 0.0
  %5545 = vmatprep.subr.mxu0 0.0
  %5546 = vmatpush1.msra.mxu0 0.0
  %5547 = vmatprep.subr.mxu0 0.0
  %5548 = vmatpush1.msra.mxu0 0.0
  %5549 = vmatprep.subr.mxu0 0.0
  %5550 = vmatpush1.msra.mxu0 0.0
  %5551 = vmatprep.subr.mxu0 0.0
  %5552 = vmatpush1.msra.mxu0 0.0
  %5553 = vmatprep.subr.mxu0 0.0
  %5554 = vmatpush1.msra.mxu0 0.0
  %5555 = vmatprep.subr.mxu0 0.0
  %5556 = vmatpush1.msra.mxu0 0.0
  %5557 = vmatprep.mubr.f32.mxu0 0.0
  %5558 = vmatmul.mubr.f32.gmra.mrb[0].mxu0 %v5491
  %v5559 = vpop.f32.mrb[0].mxu0
  %v5560 = vadd.f32 %v5488, %v5559
  %v5561 = vpop.f32.mrb[0].mxu0
  %5562 = vdwg.mxu0
  %v5563 = vmax.f32 %v5560, -1.5
  %v5564 = vmin.f32 %v5563, 1.5
  %v5565 = vadd.f32 %v5564, %v5270
  %v5566 = vmul.f32 %v5560, 1.442695
  %v5567 = vpow.pop %v5566
  %v5568 = vmax.f32 %v5567, 0.031622775
  %v5569 = vmin.f32 %v5568, 31.622776
  %v5570 = vsel %vm2382, %v5565, %v5569
  %s5571 = scalar_lea.vmem %s1, 72
  %v5572 = vld [vmem:[%s5571] sm:$0xff]
  %v5573 = vadd.f32 %v2286, %v5572
  %v5574 = vsel %vm2262, %v5573, -inf
  %5575 = vmax.xlane.f32.xlu0 %v5574
  %v5576 = vpop.xlane.xlu0 %5575
  %vm5577 = vcmp.ge.f32.partialorder %v5573, %v5576
  %v5578 = vsel %vm5577, %v2260, 20.0
  %v5579 = vsel %vm2262, %v5578, inf
  %5580 = vmin.xlane.f32.xlu0 %v5579
  %v5581 = vpop.xlane.xlu0 %5580
  %vm5582 = vcmp.eq.f32.partialorder %v2386, %v5581
  %v5583 = vsel %vm5582, 1, 0
  %v5584 = vcvt.s32.f32 %v5583
  %5586 = vset.pattern.permute.xlu0 20
  %5587 = vperm.xlu0 %5586, %v5572
  %v5588 = vpop.permute.xlu0 %5587
  %5590 = vset.pattern.permute.xlu0 21
  %5591 = vperm.xlu0 %5590, %v5572
  %v5592 = vpop.permute.xlu0 %5591
  %v5594 = vsel %vm2383, %v5588, %v5592
  %5596 = vrot.lane.b32.xlu0 %v5594, 40
  %v5597 = vpop.permute.xlu0 %5596
  %v5599 = vmul.f32 %v5570, %v5597
  %5601 = vrot.lane.b32.xlu0 %v5599, 88
  %v5602 = vpop.permute.xlu0 %5601
  %v5604 = vadd.f32 %v5570, %v5602
  %v5605 = vmul.f32 %v5584, %v5604
  %v5606 = vsel %vm2262, %v5605, 0.0
  %5607 = vadd.xlane.f32.xlu0 %v5606
  %v5608 = vpop.xlane.xlu0 %5607
  %5610 = vrot.lane.b32.xlu0 %v5605, 108
  %v5611 = vpop.permute.xlu0 %5610
  %v5613 = vsel %vm2262, %v5611, 0.0
  %5614 = vadd.xlane.f32.xlu0 %v5613
  %v5615 = vpop.xlane.xlu0 %5614
  %v5616 = vsel %vm2760, %v5608, %v5615
  %5618 = vrot.lane.b32.xlu0 %v5616, 100
  %v5619 = vpop.permute.xlu0 %5618
  %v5621 = vsel %vm2633, %v5570, %v5472
  %v5622 = vsel %vm2771, %v5621, %v5619
  %v5623 = vsel %vm2773, %v5622, 0.0
  %s5624 = scalar_lea.vmem %s20, 64
  %5625 = vst [vmem:[%s5624] sm:$0xff] %v5623
  %v5626 = vsel %vm2382, %v5565, 0.0
  %v5627 = vmul.f32 %v5608, %v2400
  %v5628 = vadd.f32 %v2377, %v5627
  %v5629 = vmul.f32 %v5615, %v2406
  %v5630 = vadd.f32 %v5628, %v5629
  %v5631 = vld [vmem:[%s14] sm:$0xff]
  %v5632 = vld [vmem:[%s14 + $0x8] sm:$0xff]
  %v5633 = vld [vmem:[%s14 + $0x10] sm:$0xff]
  %v5634 = vld [vmem:[%s14 + $0x18] sm:$0xff]
  %v5635 = vld [vmem:[%s14 + $0x20] sm:$0xff]
  %v5636 = vld [vmem:[%s15] sm:$0x1]
  %v5638 = vlaneseq
  %v5639 = vshrl.u32 %v5638, 7
  %v5640 = vsub.s32 0, %v5639
  %v5641 = vrot.slane %v5636, %v5640
  %5643 = vmatprep.subr.mxu0 0.0
  %5644 = vmatpush1.msra.mxu0 %v5631
  %5645 = vmatprep.subr.mxu0 0.0
  %5646 = vmatpush1.msra.mxu0 %v5632
  %5647 = vmatprep.subr.mxu0 0.0
  %5648 = vmatpush1.msra.mxu0 %v5633
  %5649 = vmatprep.subr.mxu0 0.0
  %5650 = vmatpush1.msra.mxu0 %v5634
  %5651 = vmatprep.subr.mxu0 0.0
  %5652 = vmatpush1.msra.mxu0 %v5635
  %5653 = vmatprep.subr.mxu0 0.0
  %5654 = vmatpush1.msra.mxu0 0.0
  %5655 = vmatprep.subr.mxu0 0.0
  %5656 = vmatpush1.msra.mxu0 0.0
  %5657 = vmatprep.subr.mxu0 0.0
  %5658 = vmatpush1.msra.mxu0 0.0
  %5659 = vmatprep.subr.mxu0 0.0
  %5660 = vmatpush1.msra.mxu0 0.0
  %5661 = vmatprep.subr.mxu0 0.0
  %5662 = vmatpush1.msra.mxu0 0.0
  %5663 = vmatprep.subr.mxu0 0.0
  %5664 = vmatpush1.msra.mxu0 0.0
  %5665 = vmatprep.subr.mxu0 0.0
  %5666 = vmatpush1.msra.mxu0 0.0
  %5667 = vmatprep.subr.mxu0 0.0
  %5668 = vmatpush1.msra.mxu0 0.0
  %5669 = vmatprep.subr.mxu0 0.0
  %5670 = vmatpush1.msra.mxu0 0.0
  %5671 = vmatprep.subr.mxu0 0.0
  %5672 = vmatpush1.msra.mxu0 0.0
  %5673 = vmatprep.subr.mxu0 0.0
  %5674 = vmatpush1.msra.mxu0 0.0
  %5675 = vmatprep.subr.mxu0 0.0
  %5676 = vmatpush1.msra.mxu0 0.0
  %5677 = vmatprep.subr.mxu0 0.0
  %5678 = vmatpush1.msra.mxu0 0.0
  %5679 = vmatprep.subr.mxu0 0.0
  %5680 = vmatpush1.msra.mxu0 0.0
  %5681 = vmatprep.subr.mxu0 0.0
  %5682 = vmatpush1.msra.mxu0 0.0
  %5683 = vmatprep.subr.mxu0 0.0
  %5684 = vmatpush1.msra.mxu0 0.0
  %5685 = vmatprep.subr.mxu0 0.0
  %5686 = vmatpush1.msra.mxu0 0.0
  %5687 = vmatprep.subr.mxu0 0.0
  %5688 = vmatpush1.msra.mxu0 0.0
  %5689 = vmatprep.subr.mxu0 0.0
  %5690 = vmatpush1.msra.mxu0 0.0
  %5691 = vmatprep.subr.mxu0 0.0
  %5692 = vmatpush1.msra.mxu0 0.0
  %5693 = vmatprep.subr.mxu0 0.0
  %5694 = vmatpush1.msra.mxu0 0.0
  %5695 = vmatprep.subr.mxu0 0.0
  %5696 = vmatpush1.msra.mxu0 0.0
  %5697 = vmatprep.subr.mxu0 0.0
  %5698 = vmatpush1.msra.mxu0 0.0
  %5699 = vmatprep.subr.mxu0 0.0
  %5700 = vmatpush1.msra.mxu0 0.0
  %5701 = vmatprep.subr.mxu0 0.0
  %5702 = vmatpush1.msra.mxu0 0.0
  %5703 = vmatprep.subr.mxu0 0.0
  %5704 = vmatpush1.msra.mxu0 0.0
  %5705 = vmatprep.subr.mxu0 0.0
  %5706 = vmatpush1.msra.mxu0 0.0
  %5707 = vmatprep.mubr.f32.mxu0 0.0
  %5708 = vmatmul.mubr.f32.gmra.mrb[0].mxu0 %v5396
  %v5709 = vpop.f32.mrb[0].mxu0
  %v5710 = vadd.f32 %v5641, %v5709
  %v5711 = vpop.f32.mrb[0].mxu0
  %5712 = vdwg.mxu0
  %v5713 = vadd.f32 %v5630, %v5710
  %v5714 = vmul.f32 %v5713, 0.5
  %v5715 = vtanh.pop %v5714
  %v5716 = vmul.f32 %v5715, 0.5
  %v5717 = vadd.f32 %v5716, 0.5
  %5719 = vrot.lane.b32.xlu0 %v5710, 48
  %v5720 = vpop.permute.xlu0 %5719
  %v5722 = vmul.f32 %v5717, %v5720
  %5724 = vrot.lane.b32.xlu0 %v5722, 80
  %v5725 = vpop.permute.xlu0 %5724
  %v5727 = vadd.f32 %v5630, %v5725
  %v5728 = vtanh.pop %v5727
  %v5729 = vsub.f32 1.0, %v5717
  %5731 = vrot.lane.b32.xlu0 %v5728, 88
  %v5732 = vpop.permute.xlu0 %5731
  %v5734 = vmul.f32 %v5729, %v5732
  %v5735 = vmul.f32 %v5717, %v5380
  %v5736 = vadd.f32 %v5734, %v5735
  %v5737 = vld [vmem:[%s16] sm:$0xff]
  %v5738 = vld [vmem:[%s16 + $0x8] sm:$0xff]
  %v5739 = vld [vmem:[%s16 + $0x10] sm:$0xff]
  %v5740 = vld [vmem:[%s16 + $0x18] sm:$0xff]
  %v5741 = vld [vmem:[%s16 + $0x20] sm:$0xff]
  %v5742 = vld [vmem:[%s17] sm:$0x1]
  %v5744 = vlaneseq
  %v5745 = vshrl.u32 %v5744, 7
  %v5746 = vsub.s32 0, %v5745
  %v5747 = vrot.slane %v5742, %v5746
  %5750 = vrot.lane.b32.xlu0 %v5736, 88
  %v5751 = vpop.permute.xlu0 %5750
  %v5752 = vsel %vm2424, %v5751, 0
  %5754 = vmatprep.subr.mxu0 0.0
  %5755 = vmatpush1.msra.mxu0 %v5737
  %5756 = vmatprep.subr.mxu0 0.0
  %5757 = vmatpush1.msra.mxu0 %v5738
  %5758 = vmatprep.subr.mxu0 0.0
  %5759 = vmatpush1.msra.mxu0 %v5739
  %5760 = vmatprep.subr.mxu0 0.0
  %5761 = vmatpush1.msra.mxu0 %v5740
  %5762 = vmatprep.subr.mxu0 0.0
  %5763 = vmatpush1.msra.mxu0 %v5741
  %5764 = vmatprep.subr.mxu0 0.0
  %5765 = vmatpush1.msra.mxu0 0.0
  %5766 = vmatprep.subr.mxu0 0.0
  %5767 = vmatpush1.msra.mxu0 0.0
  %5768 = vmatprep.subr.mxu0 0.0
  %5769 = vmatpush1.msra.mxu0 0.0
  %5770 = vmatprep.subr.mxu0 0.0
  %5771 = vmatpush1.msra.mxu0 0.0
  %5772 = vmatprep.subr.mxu0 0.0
  %5773 = vmatpush1.msra.mxu0 0.0
  %5774 = vmatprep.subr.mxu0 0.0
  %5775 = vmatpush1.msra.mxu0 0.0
  %5776 = vmatprep.subr.mxu0 0.0
  %5777 = vmatpush1.msra.mxu0 0.0
  %5778 = vmatprep.subr.mxu0 0.0
  %5779 = vmatpush1.msra.mxu0 0.0
  %5780 = vmatprep.subr.mxu0 0.0
  %5781 = vmatpush1.msra.mxu0 0.0
  %5782 = vmatprep.subr.mxu0 0.0
  %5783 = vmatpush1.msra.mxu0 0.0
  %5784 = vmatprep.subr.mxu0 0.0
  %5785 = vmatpush1.msra.mxu0 0.0
  %5786 = vmatprep.subr.mxu0 0.0
  %5787 = vmatpush1.msra.mxu0 0.0
  %5788 = vmatprep.subr.mxu0 0.0
  %5789 = vmatpush1.msra.mxu0 0.0
  %5790 = vmatprep.subr.mxu0 0.0
  %5791 = vmatpush1.msra.mxu0 0.0
  %5792 = vmatprep.subr.mxu0 0.0
  %5793 = vmatpush1.msra.mxu0 0.0
  %5794 = vmatprep.subr.mxu0 0.0
  %5795 = vmatpush1.msra.mxu0 0.0
  %5796 = vmatprep.subr.mxu0 0.0
  %5797 = vmatpush1.msra.mxu0 0.0
  %5798 = vmatprep.subr.mxu0 0.0
  %5799 = vmatpush1.msra.mxu0 0.0
  %5800 = vmatprep.subr.mxu0 0.0
  %5801 = vmatpush1.msra.mxu0 0.0
  %5802 = vmatprep.subr.mxu0 0.0
  %5803 = vmatpush1.msra.mxu0 0.0
  %5804 = vmatprep.subr.mxu0 0.0
  %5805 = vmatpush1.msra.mxu0 0.0
  %5806 = vmatprep.subr.mxu0 0.0
  %5807 = vmatpush1.msra.mxu0 0.0
  %5808 = vmatprep.subr.mxu0 0.0
  %5809 = vmatpush1.msra.mxu0 0.0
  %5810 = vmatprep.subr.mxu0 0.0
  %5811 = vmatpush1.msra.mxu0 0.0
  %5812 = vmatprep.subr.mxu0 0.0
  %5813 = vmatpush1.msra.mxu0 0.0
  %5814 = vmatprep.subr.mxu0 0.0
  %5815 = vmatpush1.msra.mxu0 0.0
  %5816 = vmatprep.subr.mxu0 0.0
  %5817 = vmatpush1.msra.mxu0 0.0
  %5818 = vmatprep.mubr.f32.mxu0 0.0
  %5819 = vmatmul.mubr.f32.gmra.mrb[0].mxu0 %v5752
  %v5820 = vpop.f32.mrb[0].mxu0
  %v5821 = vadd.f32 %v5747, %v5820
  %v5822 = vpop.f32.mrb[0].mxu0
  %5823 = vdwg.mxu0
  %v5824 = vmul.f32 %v5821, 0.5
  %v5825 = vtanh.pop %v5824
  %v5826 = vmul.f32 %v5825, 0.5
  %v5827 = vadd.f32 %v5826, 0.5
  %v5828 = vtanh.pop %v5821
  %v5829 = vld [vmem:[%s18] sm:$0xff]
  %v5830 = vld [vmem:[%s18 + $0x8] sm:$0xff]
  %v5831 = vld [vmem:[%s18 + $0x10] sm:$0xff]
  %v5832 = vld [vmem:[%s18 + $0x18] sm:$0xff]
  %v5833 = vld [vmem:[%s18 + $0x20] sm:$0xff]
  %v5834 = vld [vmem:[%s18 + $0x28] sm:$0xff]
  %v5835 = vld [vmem:[%s18 + $0x30] sm:$0xff]
  %v5836 = vld [vmem:[%s18 + $0x38] sm:$0xff]
  %v5837 = vld [vmem:[%s18 + $0x40] sm:$0xff]
  %v5838 = vld [vmem:[%s18 + $0x48] sm:$0xff]
  %v5839 = vld [vmem:[%s19] sm:$0x1]
  %v5841 = vlaneseq
  %v5842 = vshrl.u32 %v5841, 7
  %v5843 = vsub.s32 0, %v5842
  %v5844 = vrot.slane %v5839, %v5843
  %v5847 = vsel %vm2633, %v5827, 0
  %5849 = vmatprep.subr.mxu0 0.0
  %5850 = vmatpush1.msra.mxu0 %v5829
  %5851 = vmatprep.subr.mxu0 0.0
  %5852 = vmatpush1.msra.mxu0 %v5830
  %5853 = vmatprep.subr.mxu0 0.0
  %5854 = vmatpush1.msra.mxu0 %v5831
  %5855 = vmatprep.subr.mxu0 0.0
  %5856 = vmatpush1.msra.mxu0 %v5832
  %5857 = vmatprep.subr.mxu0 0.0
  %5858 = vmatpush1.msra.mxu0 %v5833
  %5859 = vmatprep.subr.mxu0 0.0
  %5860 = vmatpush1.msra.mxu0 %v5834
  %5861 = vmatprep.subr.mxu0 0.0
  %5862 = vmatpush1.msra.mxu0 %v5835
  %5863 = vmatprep.subr.mxu0 0.0
  %5864 = vmatpush1.msra.mxu0 %v5836
  %5865 = vmatprep.subr.mxu0 0.0
  %5866 = vmatpush1.msra.mxu0 %v5837
  %5867 = vmatprep.subr.mxu0 0.0
  %5868 = vmatpush1.msra.mxu0 %v5838
  %5869 = vmatprep.subr.mxu0 0.0
  %5870 = vmatpush1.msra.mxu0 0.0
  %5871 = vmatprep.subr.mxu0 0.0
  %5872 = vmatpush1.msra.mxu0 0.0
  %5873 = vmatprep.subr.mxu0 0.0
  %5874 = vmatpush1.msra.mxu0 0.0
  %5875 = vmatprep.subr.mxu0 0.0
  %5876 = vmatpush1.msra.mxu0 0.0
  %5877 = vmatprep.subr.mxu0 0.0
  %5878 = vmatpush1.msra.mxu0 0.0
  %5879 = vmatprep.subr.mxu0 0.0
  %5880 = vmatpush1.msra.mxu0 0.0
  %5881 = vmatprep.subr.mxu0 0.0
  %5882 = vmatpush1.msra.mxu0 0.0
  %5883 = vmatprep.subr.mxu0 0.0
  %5884 = vmatpush1.msra.mxu0 0.0
  %5885 = vmatprep.subr.mxu0 0.0
  %5886 = vmatpush1.msra.mxu0 0.0
  %5887 = vmatprep.subr.mxu0 0.0
  %5888 = vmatpush1.msra.mxu0 0.0
  %5889 = vmatprep.subr.mxu0 0.0
  %5890 = vmatpush1.msra.mxu0 0.0
  %5891 = vmatprep.subr.mxu0 0.0
  %5892 = vmatpush1.msra.mxu0 0.0
  %5893 = vmatprep.subr.mxu0 0.0
  %5894 = vmatpush1.msra.mxu0 0.0
  %5895 = vmatprep.subr.mxu0 0.0
  %5896 = vmatpush1.msra.mxu0 0.0
  %5897 = vmatprep.subr.mxu0 0.0
  %5898 = vmatpush1.msra.mxu0 0.0
  %5899 = vmatprep.subr.mxu0 0.0
  %5900 = vmatpush1.msra.mxu0 0.0
  %5901 = vmatprep.subr.mxu0 0.0
  %5902 = vmatpush1.msra.mxu0 0.0
  %5903 = vmatprep.subr.mxu0 0.0
  %5904 = vmatpush1.msra.mxu0 0.0
  %5905 = vmatprep.subr.mxu0 0.0
  %5906 = vmatpush1.msra.mxu0 0.0
  %5907 = vmatprep.subr.mxu0 0.0
  %5908 = vmatpush1.msra.mxu0 0.0
  %5909 = vmatprep.subr.mxu0 0.0
  %5910 = vmatpush1.msra.mxu0 0.0
  %5911 = vmatprep.subr.mxu0 0.0
  %5912 = vmatpush1.msra.mxu0 0.0
  %5913 = vmatprep.mubr.f32.mxu0 0.0
  %5914 = vmatmul.mubr.f32.gmra.mrb[0].mxu0 %v5847
  %v5915 = vpop.f32.mrb[0].mxu0
  %v5916 = vadd.f32 %v5844, %v5915
  %v5917 = vpop.f32.mrb[0].mxu0
  %5918 = vdwg.mxu0
  %v5919 = vmax.f32 %v5916, -1.5
  %v5920 = vmin.f32 %v5919, 1.5
  %v5921 = vadd.f32 %v5920, %v5626
  %v5922 = vmul.f32 %v5916, 1.442695
  %v5923 = vpow.pop %v5922
  %v5924 = vmax.f32 %v5923, 0.031622775
  %v5925 = vmin.f32 %v5924, 31.622776
  %v5926 = vsel %vm2382, %v5921, %v5925
  %s5927 = scalar_lea.vmem %s1, 80
  %v5928 = vld [vmem:[%s5927] sm:$0xff]
  %v5929 = vadd.f32 %v2286, %v5928
  %v5930 = vsel %vm2262, %v5929, -inf
  %5931 = vmax.xlane.f32.xlu0 %v5930
  %v5932 = vpop.xlane.xlu0 %5931
  %vm5933 = vcmp.ge.f32.partialorder %v5929, %v5932
  %v5934 = vsel %vm5933, %v2260, 20.0
  %v5935 = vsel %vm2262, %v5934, inf
  %5936 = vmin.xlane.f32.xlu0 %v5935
  %v5937 = vpop.xlane.xlu0 %5936
  %vm5938 = vcmp.eq.f32.partialorder %v2386, %v5937
  %v5939 = vsel %vm5938, 1, 0
  %v5940 = vcvt.s32.f32 %v5939
  %5942 = vset.pattern.permute.xlu0 20
  %5943 = vperm.xlu0 %5942, %v5928
  %v5944 = vpop.permute.xlu0 %5943
  %5946 = vset.pattern.permute.xlu0 21
  %5947 = vperm.xlu0 %5946, %v5928
  %v5948 = vpop.permute.xlu0 %5947
  %v5950 = vsel %vm2383, %v5944, %v5948
  %5952 = vrot.lane.b32.xlu0 %v5950, 40
  %v5953 = vpop.permute.xlu0 %5952
  %v5955 = vmul.f32 %v5926, %v5953
  %5957 = vrot.lane.b32.xlu0 %v5955, 88
  %v5958 = vpop.permute.xlu0 %5957
  %v5960 = vadd.f32 %v5926, %v5958
  %v5961 = vmul.f32 %v5940, %v5960
  %v5962 = vsel %vm2262, %v5961, 0.0
  %5963 = vadd.xlane.f32.xlu0 %v5962
  %v5964 = vpop.xlane.xlu0 %5963
  %5966 = vrot.lane.b32.xlu0 %v5961, 108
  %v5967 = vpop.permute.xlu0 %5966
  %v5969 = vsel %vm2262, %v5967, 0.0
  %5970 = vadd.xlane.f32.xlu0 %v5969
  %v5971 = vpop.xlane.xlu0 %5970
  %v5972 = vsel %vm2760, %v5964, %v5971
  %5974 = vrot.lane.b32.xlu0 %v5972, 100
  %v5975 = vpop.permute.xlu0 %5974
  %v5977 = vsel %vm2633, %v5926, %v5828
  %v5978 = vsel %vm2771, %v5977, %v5975
  %v5979 = vsel %vm2773, %v5978, 0.0
  %s5980 = scalar_lea.vmem %s20, 72
  %5981 = vst [vmem:[%s5980] sm:$0xff] %v5979
  %v5982 = vsel %vm2382, %v5921, 0.0
  %v5983 = vmul.f32 %v5964, %v2400
  %v5984 = vadd.f32 %v2377, %v5983
  %v5985 = vmul.f32 %v5971, %v2406
  %v5986 = vadd.f32 %v5984, %v5985
  %v5987 = vld [vmem:[%s14] sm:$0xff]
  %v5988 = vld [vmem:[%s14 + $0x8] sm:$0xff]
  %v5989 = vld [vmem:[%s14 + $0x10] sm:$0xff]
  %v5990 = vld [vmem:[%s14 + $0x18] sm:$0xff]
  %v5991 = vld [vmem:[%s14 + $0x20] sm:$0xff]
  %v5992 = vld [vmem:[%s15] sm:$0x1]
  %v5994 = vlaneseq
  %v5995 = vshrl.u32 %v5994, 7
  %v5996 = vsub.s32 0, %v5995
  %v5997 = vrot.slane %v5992, %v5996
  %5999 = vmatprep.subr.mxu0 0.0
  %6000 = vmatpush1.msra.mxu0 %v5987
  %6001 = vmatprep.subr.mxu0 0.0
  %6002 = vmatpush1.msra.mxu0 %v5988
  %6003 = vmatprep.subr.mxu0 0.0
  %6004 = vmatpush1.msra.mxu0 %v5989
  %6005 = vmatprep.subr.mxu0 0.0
  %6006 = vmatpush1.msra.mxu0 %v5990
  %6007 = vmatprep.subr.mxu0 0.0
  %6008 = vmatpush1.msra.mxu0 %v5991
  %6009 = vmatprep.subr.mxu0 0.0
  %6010 = vmatpush1.msra.mxu0 0.0
  %6011 = vmatprep.subr.mxu0 0.0
  %6012 = vmatpush1.msra.mxu0 0.0
  %6013 = vmatprep.subr.mxu0 0.0
  %6014 = vmatpush1.msra.mxu0 0.0
  %6015 = vmatprep.subr.mxu0 0.0
  %6016 = vmatpush1.msra.mxu0 0.0
  %6017 = vmatprep.subr.mxu0 0.0
  %6018 = vmatpush1.msra.mxu0 0.0
  %6019 = vmatprep.subr.mxu0 0.0
  %6020 = vmatpush1.msra.mxu0 0.0
  %6021 = vmatprep.subr.mxu0 0.0
  %6022 = vmatpush1.msra.mxu0 0.0
  %6023 = vmatprep.subr.mxu0 0.0
  %6024 = vmatpush1.msra.mxu0 0.0
  %6025 = vmatprep.subr.mxu0 0.0
  %6026 = vmatpush1.msra.mxu0 0.0
  %6027 = vmatprep.subr.mxu0 0.0
  %6028 = vmatpush1.msra.mxu0 0.0
  %6029 = vmatprep.subr.mxu0 0.0
  %6030 = vmatpush1.msra.mxu0 0.0
  %6031 = vmatprep.subr.mxu0 0.0
  %6032 = vmatpush1.msra.mxu0 0.0
  %6033 = vmatprep.subr.mxu0 0.0
  %6034 = vmatpush1.msra.mxu0 0.0
  %6035 = vmatprep.subr.mxu0 0.0
  %6036 = vmatpush1.msra.mxu0 0.0
  %6037 = vmatprep.subr.mxu0 0.0
  %6038 = vmatpush1.msra.mxu0 0.0
  %6039 = vmatprep.subr.mxu0 0.0
  %6040 = vmatpush1.msra.mxu0 0.0
  %6041 = vmatprep.subr.mxu0 0.0
  %6042 = vmatpush1.msra.mxu0 0.0
  %6043 = vmatprep.subr.mxu0 0.0
  %6044 = vmatpush1.msra.mxu0 0.0
  %6045 = vmatprep.subr.mxu0 0.0
  %6046 = vmatpush1.msra.mxu0 0.0
  %6047 = vmatprep.subr.mxu0 0.0
  %6048 = vmatpush1.msra.mxu0 0.0
  %6049 = vmatprep.subr.mxu0 0.0
  %6050 = vmatpush1.msra.mxu0 0.0
  %6051 = vmatprep.subr.mxu0 0.0
  %6052 = vmatpush1.msra.mxu0 0.0
  %6053 = vmatprep.subr.mxu0 0.0
  %6054 = vmatpush1.msra.mxu0 0.0
  %6055 = vmatprep.subr.mxu0 0.0
  %6056 = vmatpush1.msra.mxu0 0.0
  %6057 = vmatprep.subr.mxu0 0.0
  %6058 = vmatpush1.msra.mxu0 0.0
  %6059 = vmatprep.subr.mxu0 0.0
  %6060 = vmatpush1.msra.mxu0 0.0
  %6061 = vmatprep.subr.mxu0 0.0
  %6062 = vmatpush1.msra.mxu0 0.0
  %6063 = vmatprep.mubr.f32.mxu0 0.0
  %6064 = vmatmul.mubr.f32.gmra.mrb[0].mxu0 %v5752
  %v6065 = vpop.f32.mrb[0].mxu0
  %v6066 = vadd.f32 %v5997, %v6065
  %v6067 = vpop.f32.mrb[0].mxu0
  %6068 = vdwg.mxu0
  %v6069 = vadd.f32 %v5986, %v6066
  %v6070 = vmul.f32 %v6069, 0.5
  %v6071 = vtanh.pop %v6070
  %v6072 = vmul.f32 %v6071, 0.5
  %v6073 = vadd.f32 %v6072, 0.5
  %6075 = vrot.lane.b32.xlu0 %v6066, 48
  %v6076 = vpop.permute.xlu0 %6075
  %v6078 = vmul.f32 %v6073, %v6076
  %6080 = vrot.lane.b32.xlu0 %v6078, 80
  %v6081 = vpop.permute.xlu0 %6080
  %v6083 = vadd.f32 %v5986, %v6081
  %v6084 = vtanh.pop %v6083
  %v6085 = vsub.f32 1.0, %v6073
  %6087 = vrot.lane.b32.xlu0 %v6084, 88
  %v6088 = vpop.permute.xlu0 %6087
  %v6090 = vmul.f32 %v6085, %v6088
  %v6091 = vmul.f32 %v6073, %v5736
  %v6092 = vadd.f32 %v6090, %v6091
  %v6093 = vld [vmem:[%s16] sm:$0xff]
  %v6094 = vld [vmem:[%s16 + $0x8] sm:$0xff]
  %v6095 = vld [vmem:[%s16 + $0x10] sm:$0xff]
  %v6096 = vld [vmem:[%s16 + $0x18] sm:$0xff]
  %v6097 = vld [vmem:[%s16 + $0x20] sm:$0xff]
  %v6098 = vld [vmem:[%s17] sm:$0x1]
  %v6100 = vlaneseq
  %v6101 = vshrl.u32 %v6100, 7
  %v6102 = vsub.s32 0, %v6101
  %v6103 = vrot.slane %v6098, %v6102
  %6106 = vrot.lane.b32.xlu0 %v6092, 88
  %v6107 = vpop.permute.xlu0 %6106
  %v6108 = vsel %vm2424, %v6107, 0
  %6110 = vmatprep.subr.mxu0 0.0
  %6111 = vmatpush1.msra.mxu0 %v6093
  %6112 = vmatprep.subr.mxu0 0.0
  %6113 = vmatpush1.msra.mxu0 %v6094
  %6114 = vmatprep.subr.mxu0 0.0
  %6115 = vmatpush1.msra.mxu0 %v6095
  %6116 = vmatprep.subr.mxu0 0.0
  %6117 = vmatpush1.msra.mxu0 %v6096
  %6118 = vmatprep.subr.mxu0 0.0
  %6119 = vmatpush1.msra.mxu0 %v6097
  %6120 = vmatprep.subr.mxu0 0.0
  %6121 = vmatpush1.msra.mxu0 0.0
  %6122 = vmatprep.subr.mxu0 0.0
  %6123 = vmatpush1.msra.mxu0 0.0
  %6124 = vmatprep.subr.mxu0 0.0
  %6125 = vmatpush1.msra.mxu0 0.0
  %6126 = vmatprep.subr.mxu0 0.0
  %6127 = vmatpush1.msra.mxu0 0.0
  %6128 = vmatprep.subr.mxu0 0.0
  %6129 = vmatpush1.msra.mxu0 0.0
  %6130 = vmatprep.subr.mxu0 0.0
  %6131 = vmatpush1.msra.mxu0 0.0
  %6132 = vmatprep.subr.mxu0 0.0
  %6133 = vmatpush1.msra.mxu0 0.0
  %6134 = vmatprep.subr.mxu0 0.0
  %6135 = vmatpush1.msra.mxu0 0.0
  %6136 = vmatprep.subr.mxu0 0.0
  %6137 = vmatpush1.msra.mxu0 0.0
  %6138 = vmatprep.subr.mxu0 0.0
  %6139 = vmatpush1.msra.mxu0 0.0
  %6140 = vmatprep.subr.mxu0 0.0
  %6141 = vmatpush1.msra.mxu0 0.0
  %6142 = vmatprep.subr.mxu0 0.0
  %6143 = vmatpush1.msra.mxu0 0.0
  %6144 = vmatprep.subr.mxu0 0.0
  %6145 = vmatpush1.msra.mxu0 0.0
  %6146 = vmatprep.subr.mxu0 0.0
  %6147 = vmatpush1.msra.mxu0 0.0
  %6148 = vmatprep.subr.mxu0 0.0
  %6149 = vmatpush1.msra.mxu0 0.0
  %6150 = vmatprep.subr.mxu0 0.0
  %6151 = vmatpush1.msra.mxu0 0.0
  %6152 = vmatprep.subr.mxu0 0.0
  %6153 = vmatpush1.msra.mxu0 0.0
  %6154 = vmatprep.subr.mxu0 0.0
  %6155 = vmatpush1.msra.mxu0 0.0
  %6156 = vmatprep.subr.mxu0 0.0
  %6157 = vmatpush1.msra.mxu0 0.0
  %6158 = vmatprep.subr.mxu0 0.0
  %6159 = vmatpush1.msra.mxu0 0.0
  %6160 = vmatprep.subr.mxu0 0.0
  %6161 = vmatpush1.msra.mxu0 0.0
  %6162 = vmatprep.subr.mxu0 0.0
  %6163 = vmatpush1.msra.mxu0 0.0
  %6164 = vmatprep.subr.mxu0 0.0
  %6165 = vmatpush1.msra.mxu0 0.0
  %6166 = vmatprep.subr.mxu0 0.0
  %6167 = vmatpush1.msra.mxu0 0.0
  %6168 = vmatprep.subr.mxu0 0.0
  %6169 = vmatpush1.msra.mxu0 0.0
  %6170 = vmatprep.subr.mxu0 0.0
  %6171 = vmatpush1.msra.mxu0 0.0
  %6172 = vmatprep.subr.mxu0 0.0
  %6173 = vmatpush1.msra.mxu0 0.0
  %6174 = vmatprep.mubr.f32.mxu0 0.0
  %6175 = vmatmul.mubr.f32.gmra.mrb[0].mxu0 %v6108
  %v6176 = vpop.f32.mrb[0].mxu0
  %v6177 = vadd.f32 %v6103, %v6176
  %v6178 = vpop.f32.mrb[0].mxu0
  %6179 = vdwg.mxu0
  %v6180 = vmul.f32 %v6177, 0.5
  %v6181 = vtanh.pop %v6180
  %v6182 = vmul.f32 %v6181, 0.5
  %v6183 = vadd.f32 %v6182, 0.5
  %v6184 = vtanh.pop %v6177
  %v6185 = vld [vmem:[%s18] sm:$0xff]
  %v6186 = vld [vmem:[%s18 + $0x8] sm:$0xff]
  %v6187 = vld [vmem:[%s18 + $0x10] sm:$0xff]
  %v6188 = vld [vmem:[%s18 + $0x18] sm:$0xff]
  %v6189 = vld [vmem:[%s18 + $0x20] sm:$0xff]
  %v6190 = vld [vmem:[%s18 + $0x28] sm:$0xff]
  %v6191 = vld [vmem:[%s18 + $0x30] sm:$0xff]
  %v6192 = vld [vmem:[%s18 + $0x38] sm:$0xff]
  %v6193 = vld [vmem:[%s18 + $0x40] sm:$0xff]
  %v6194 = vld [vmem:[%s18 + $0x48] sm:$0xff]
  %v6195 = vld [vmem:[%s19] sm:$0x1]
  %v6197 = vlaneseq
  %v6198 = vshrl.u32 %v6197, 7
  %v6199 = vsub.s32 0, %v6198
  %v6200 = vrot.slane %v6195, %v6199
  %v6203 = vsel %vm2633, %v6183, 0
  %6205 = vmatprep.subr.mxu0 0.0
  %6206 = vmatpush1.msra.mxu0 %v6185
  %6207 = vmatprep.subr.mxu0 0.0
  %6208 = vmatpush1.msra.mxu0 %v6186
  %6209 = vmatprep.subr.mxu0 0.0
  %6210 = vmatpush1.msra.mxu0 %v6187
  %6211 = vmatprep.subr.mxu0 0.0
  %6212 = vmatpush1.msra.mxu0 %v6188
  %6213 = vmatprep.subr.mxu0 0.0
  %6214 = vmatpush1.msra.mxu0 %v6189
  %6215 = vmatprep.subr.mxu0 0.0
  %6216 = vmatpush1.msra.mxu0 %v6190
  %6217 = vmatprep.subr.mxu0 0.0
  %6218 = vmatpush1.msra.mxu0 %v6191
  %6219 = vmatprep.subr.mxu0 0.0
  %6220 = vmatpush1.msra.mxu0 %v6192
  %6221 = vmatprep.subr.mxu0 0.0
  %6222 = vmatpush1.msra.mxu0 %v6193
  %6223 = vmatprep.subr.mxu0 0.0
  %6224 = vmatpush1.msra.mxu0 %v6194
  %6225 = vmatprep.subr.mxu0 0.0
  %6226 = vmatpush1.msra.mxu0 0.0
  %6227 = vmatprep.subr.mxu0 0.0
  %6228 = vmatpush1.msra.mxu0 0.0
  %6229 = vmatprep.subr.mxu0 0.0
  %6230 = vmatpush1.msra.mxu0 0.0
  %6231 = vmatprep.subr.mxu0 0.0
  %6232 = vmatpush1.msra.mxu0 0.0
  %6233 = vmatprep.subr.mxu0 0.0
  %6234 = vmatpush1.msra.mxu0 0.0
  %6235 = vmatprep.subr.mxu0 0.0
  %6236 = vmatpush1.msra.mxu0 0.0
  %6237 = vmatprep.subr.mxu0 0.0
  %6238 = vmatpush1.msra.mxu0 0.0
  %6239 = vmatprep.subr.mxu0 0.0
  %6240 = vmatpush1.msra.mxu0 0.0
  %6241 = vmatprep.subr.mxu0 0.0
  %6242 = vmatpush1.msra.mxu0 0.0
  %6243 = vmatprep.subr.mxu0 0.0
  %6244 = vmatpush1.msra.mxu0 0.0
  %6245 = vmatprep.subr.mxu0 0.0
  %6246 = vmatpush1.msra.mxu0 0.0
  %6247 = vmatprep.subr.mxu0 0.0
  %6248 = vmatpush1.msra.mxu0 0.0
  %6249 = vmatprep.subr.mxu0 0.0
  %6250 = vmatpush1.msra.mxu0 0.0
  %6251 = vmatprep.subr.mxu0 0.0
  %6252 = vmatpush1.msra.mxu0 0.0
  %6253 = vmatprep.subr.mxu0 0.0
  %6254 = vmatpush1.msra.mxu0 0.0
  %6255 = vmatprep.subr.mxu0 0.0
  %6256 = vmatpush1.msra.mxu0 0.0
  %6257 = vmatprep.subr.mxu0 0.0
  %6258 = vmatpush1.msra.mxu0 0.0
  %6259 = vmatprep.subr.mxu0 0.0
  %6260 = vmatpush1.msra.mxu0 0.0
  %6261 = vmatprep.subr.mxu0 0.0
  %6262 = vmatpush1.msra.mxu0 0.0
  %6263 = vmatprep.subr.mxu0 0.0
  %6264 = vmatpush1.msra.mxu0 0.0
  %6265 = vmatprep.subr.mxu0 0.0
  %6266 = vmatpush1.msra.mxu0 0.0
  %6267 = vmatprep.subr.mxu0 0.0
  %6268 = vmatpush1.msra.mxu0 0.0
  %6269 = vmatprep.mubr.f32.mxu0 0.0
  %6270 = vmatmul.mubr.f32.gmra.mrb[0].mxu0 %v6203
  %v6271 = vpop.f32.mrb[0].mxu0
  %v6272 = vadd.f32 %v6200, %v6271
  %v6273 = vpop.f32.mrb[0].mxu0
  %6274 = vdwg.mxu0
  %v6275 = vmax.f32 %v6272, -1.5
  %v6276 = vmin.f32 %v6275, 1.5
  %v6277 = vadd.f32 %v6276, %v5982
  %v6278 = vmul.f32 %v6272, 1.442695
  %v6279 = vpow.pop %v6278
  %v6280 = vmax.f32 %v6279, 0.031622775
  %v6281 = vmin.f32 %v6280, 31.622776
  %v6282 = vsel %vm2382, %v6277, %v6281
  %s6283 = scalar_lea.vmem %s1, 88
  %v6284 = vld [vmem:[%s6283] sm:$0xff]
  %v6285 = vadd.f32 %v2286, %v6284
  %v6286 = vsel %vm2262, %v6285, -inf
  %6287 = vmax.xlane.f32.xlu0 %v6286
  %v6288 = vpop.xlane.xlu0 %6287
  %vm6289 = vcmp.ge.f32.partialorder %v6285, %v6288
  %v6290 = vsel %vm6289, %v2260, 20.0
  %v6291 = vsel %vm2262, %v6290, inf
  %6292 = vmin.xlane.f32.xlu0 %v6291
  %v6293 = vpop.xlane.xlu0 %6292
  %vm6294 = vcmp.eq.f32.partialorder %v2386, %v6293
  %v6295 = vsel %vm6294, 1, 0
  %v6296 = vcvt.s32.f32 %v6295
  %6298 = vset.pattern.permute.xlu0 20
  %6299 = vperm.xlu0 %6298, %v6284
  %v6300 = vpop.permute.xlu0 %6299
  %6302 = vset.pattern.permute.xlu0 21
  %6303 = vperm.xlu0 %6302, %v6284
  %v6304 = vpop.permute.xlu0 %6303
  %v6306 = vsel %vm2383, %v6300, %v6304
  %6308 = vrot.lane.b32.xlu0 %v6306, 40
  %v6309 = vpop.permute.xlu0 %6308
  %v6311 = vmul.f32 %v6282, %v6309
  %6313 = vrot.lane.b32.xlu0 %v6311, 88
  %v6314 = vpop.permute.xlu0 %6313
  %v6316 = vadd.f32 %v6282, %v6314
  %v6317 = vmul.f32 %v6296, %v6316
  %v6318 = vsel %vm2262, %v6317, 0.0
  %6319 = vadd.xlane.f32.xlu0 %v6318
  %v6320 = vpop.xlane.xlu0 %6319
  %6322 = vrot.lane.b32.xlu0 %v6317, 108
  %v6323 = vpop.permute.xlu0 %6322
  %v6325 = vsel %vm2262, %v6323, 0.0
  %6326 = vadd.xlane.f32.xlu0 %v6325
  %v6327 = vpop.xlane.xlu0 %6326
  %v6328 = vsel %vm2760, %v6320, %v6327
  %6330 = vrot.lane.b32.xlu0 %v6328, 100
  %v6331 = vpop.permute.xlu0 %6330
  %v6333 = vsel %vm2633, %v6282, %v6184
  %v6334 = vsel %vm2771, %v6333, %v6331
  %v6335 = vsel %vm2773, %v6334, 0.0
  %s6336 = scalar_lea.vmem %s20, 80
  %6337 = vst [vmem:[%s6336] sm:$0xff] %v6335
  %v6338 = vsel %vm2382, %v6277, 0.0
  %v6339 = vmul.f32 %v6320, %v2400
  %v6340 = vadd.f32 %v2377, %v6339
  %v6341 = vmul.f32 %v6327, %v2406
  %v6342 = vadd.f32 %v6340, %v6341
  %v6343 = vld [vmem:[%s14] sm:$0xff]
  %v6344 = vld [vmem:[%s14 + $0x8] sm:$0xff]
  %v6345 = vld [vmem:[%s14 + $0x10] sm:$0xff]
  %v6346 = vld [vmem:[%s14 + $0x18] sm:$0xff]
  %v6347 = vld [vmem:[%s14 + $0x20] sm:$0xff]
  %v6348 = vld [vmem:[%s15] sm:$0x1]
  %v6350 = vlaneseq
  %v6351 = vshrl.u32 %v6350, 7
  %v6352 = vsub.s32 0, %v6351
  %v6353 = vrot.slane %v6348, %v6352
  %6355 = vmatprep.subr.mxu0 0.0
  %6356 = vmatpush1.msra.mxu0 %v6343
  %6357 = vmatprep.subr.mxu0 0.0
  %6358 = vmatpush1.msra.mxu0 %v6344
  %6359 = vmatprep.subr.mxu0 0.0
  %6360 = vmatpush1.msra.mxu0 %v6345
  %6361 = vmatprep.subr.mxu0 0.0
  %6362 = vmatpush1.msra.mxu0 %v6346
  %6363 = vmatprep.subr.mxu0 0.0
  %6364 = vmatpush1.msra.mxu0 %v6347
  %6365 = vmatprep.subr.mxu0 0.0
  %6366 = vmatpush1.msra.mxu0 0.0
  %6367 = vmatprep.subr.mxu0 0.0
  %6368 = vmatpush1.msra.mxu0 0.0
  %6369 = vmatprep.subr.mxu0 0.0
  %6370 = vmatpush1.msra.mxu0 0.0
  %6371 = vmatprep.subr.mxu0 0.0
  %6372 = vmatpush1.msra.mxu0 0.0
  %6373 = vmatprep.subr.mxu0 0.0
  %6374 = vmatpush1.msra.mxu0 0.0
  %6375 = vmatprep.subr.mxu0 0.0
  %6376 = vmatpush1.msra.mxu0 0.0
  %6377 = vmatprep.subr.mxu0 0.0
  %6378 = vmatpush1.msra.mxu0 0.0
  %6379 = vmatprep.subr.mxu0 0.0
  %6380 = vmatpush1.msra.mxu0 0.0
  %6381 = vmatprep.subr.mxu0 0.0
  %6382 = vmatpush1.msra.mxu0 0.0
  %6383 = vmatprep.subr.mxu0 0.0
  %6384 = vmatpush1.msra.mxu0 0.0
  %6385 = vmatprep.subr.mxu0 0.0
  %6386 = vmatpush1.msra.mxu0 0.0
  %6387 = vmatprep.subr.mxu0 0.0
  %6388 = vmatpush1.msra.mxu0 0.0
  %6389 = vmatprep.subr.mxu0 0.0
  %6390 = vmatpush1.msra.mxu0 0.0
  %6391 = vmatprep.subr.mxu0 0.0
  %6392 = vmatpush1.msra.mxu0 0.0
  %6393 = vmatprep.subr.mxu0 0.0
  %6394 = vmatpush1.msra.mxu0 0.0
  %6395 = vmatprep.subr.mxu0 0.0
  %6396 = vmatpush1.msra.mxu0 0.0
  %6397 = vmatprep.subr.mxu0 0.0
  %6398 = vmatpush1.msra.mxu0 0.0
  %6399 = vmatprep.subr.mxu0 0.0
  %6400 = vmatpush1.msra.mxu0 0.0
  %6401 = vmatprep.subr.mxu0 0.0
  %6402 = vmatpush1.msra.mxu0 0.0
  %6403 = vmatprep.subr.mxu0 0.0
  %6404 = vmatpush1.msra.mxu0 0.0
  %6405 = vmatprep.subr.mxu0 0.0
  %6406 = vmatpush1.msra.mxu0 0.0
  %6407 = vmatprep.subr.mxu0 0.0
  %6408 = vmatpush1.msra.mxu0 0.0
  %6409 = vmatprep.subr.mxu0 0.0
  %6410 = vmatpush1.msra.mxu0 0.0
  %6411 = vmatprep.subr.mxu0 0.0
  %6412 = vmatpush1.msra.mxu0 0.0
  %6413 = vmatprep.subr.mxu0 0.0
  %6414 = vmatpush1.msra.mxu0 0.0
  %6415 = vmatprep.subr.mxu0 0.0
  %6416 = vmatpush1.msra.mxu0 0.0
  %6417 = vmatprep.subr.mxu0 0.0
  %6418 = vmatpush1.msra.mxu0 0.0
  %6419 = vmatprep.mubr.f32.mxu0 0.0
  %6420 = vmatmul.mubr.f32.gmra.mrb[0].mxu0 %v6108
  %v6421 = vpop.f32.mrb[0].mxu0
  %v6422 = vadd.f32 %v6353, %v6421
  %v6423 = vpop.f32.mrb[0].mxu0
  %6424 = vdwg.mxu0
  %v6425 = vadd.f32 %v6342, %v6422
  %v6426 = vmul.f32 %v6425, 0.5
  %v6427 = vtanh.pop %v6426
  %v6428 = vmul.f32 %v6427, 0.5
  %v6429 = vadd.f32 %v6428, 0.5
  %6431 = vrot.lane.b32.xlu0 %v6422, 48
  %v6432 = vpop.permute.xlu0 %6431
  %v6434 = vmul.f32 %v6429, %v6432
  %6436 = vrot.lane.b32.xlu0 %v6434, 80
  %v6437 = vpop.permute.xlu0 %6436
  %v6439 = vadd.f32 %v6342, %v6437
  %v6440 = vtanh.pop %v6439
  %v6441 = vsub.f32 1.0, %v6429
  %6443 = vrot.lane.b32.xlu0 %v6440, 88
  %v6444 = vpop.permute.xlu0 %6443
  %v6446 = vmul.f32 %v6441, %v6444
  %v6447 = vmul.f32 %v6429, %v6092
  %v6448 = vadd.f32 %v6446, %v6447
  %v6449 = vld [vmem:[%s16] sm:$0xff]
  %v6450 = vld [vmem:[%s16 + $0x8] sm:$0xff]
  %v6451 = vld [vmem:[%s16 + $0x10] sm:$0xff]
  %v6452 = vld [vmem:[%s16 + $0x18] sm:$0xff]
  %v6453 = vld [vmem:[%s16 + $0x20] sm:$0xff]
  %v6454 = vld [vmem:[%s17] sm:$0x1]
  %v6456 = vlaneseq
  %v6457 = vshrl.u32 %v6456, 7
  %v6458 = vsub.s32 0, %v6457
  %v6459 = vrot.slane %v6454, %v6458
  %6462 = vrot.lane.b32.xlu0 %v6448, 88
  %v6463 = vpop.permute.xlu0 %6462
  %v6464 = vsel %vm2424, %v6463, 0
  %6466 = vmatprep.subr.mxu0 0.0
  %6467 = vmatpush1.msra.mxu0 %v6449
  %6468 = vmatprep.subr.mxu0 0.0
  %6469 = vmatpush1.msra.mxu0 %v6450
  %6470 = vmatprep.subr.mxu0 0.0
  %6471 = vmatpush1.msra.mxu0 %v6451
  %6472 = vmatprep.subr.mxu0 0.0
  %6473 = vmatpush1.msra.mxu0 %v6452
  %6474 = vmatprep.subr.mxu0 0.0
  %6475 = vmatpush1.msra.mxu0 %v6453
  %6476 = vmatprep.subr.mxu0 0.0
  %6477 = vmatpush1.msra.mxu0 0.0
  %6478 = vmatprep.subr.mxu0 0.0
  %6479 = vmatpush1.msra.mxu0 0.0
  %6480 = vmatprep.subr.mxu0 0.0
  %6481 = vmatpush1.msra.mxu0 0.0
  %6482 = vmatprep.subr.mxu0 0.0
  %6483 = vmatpush1.msra.mxu0 0.0
  %6484 = vmatprep.subr.mxu0 0.0
  %6485 = vmatpush1.msra.mxu0 0.0
  %6486 = vmatprep.subr.mxu0 0.0
  %6487 = vmatpush1.msra.mxu0 0.0
  %6488 = vmatprep.subr.mxu0 0.0
  %6489 = vmatpush1.msra.mxu0 0.0
  %6490 = vmatprep.subr.mxu0 0.0
  %6491 = vmatpush1.msra.mxu0 0.0
  %6492 = vmatprep.subr.mxu0 0.0
  %6493 = vmatpush1.msra.mxu0 0.0
  %6494 = vmatprep.subr.mxu0 0.0
  %6495 = vmatpush1.msra.mxu0 0.0
  %6496 = vmatprep.subr.mxu0 0.0
  %6497 = vmatpush1.msra.mxu0 0.0
  %6498 = vmatprep.subr.mxu0 0.0
  %6499 = vmatpush1.msra.mxu0 0.0
  %6500 = vmatprep.subr.mxu0 0.0
  %6501 = vmatpush1.msra.mxu0 0.0
  %6502 = vmatprep.subr.mxu0 0.0
  %6503 = vmatpush1.msra.mxu0 0.0
  %6504 = vmatprep.subr.mxu0 0.0
  %6505 = vmatpush1.msra.mxu0 0.0
  %6506 = vmatprep.subr.mxu0 0.0
  %6507 = vmatpush1.msra.mxu0 0.0
  %6508 = vmatprep.subr.mxu0 0.0
  %6509 = vmatpush1.msra.mxu0 0.0
  %6510 = vmatprep.subr.mxu0 0.0
  %6511 = vmatpush1.msra.mxu0 0.0
  %6512 = vmatprep.subr.mxu0 0.0
  %6513 = vmatpush1.msra.mxu0 0.0
  %6514 = vmatprep.subr.mxu0 0.0
  %6515 = vmatpush1.msra.mxu0 0.0
  %6516 = vmatprep.subr.mxu0 0.0
  %6517 = vmatpush1.msra.mxu0 0.0
  %6518 = vmatprep.subr.mxu0 0.0
  %6519 = vmatpush1.msra.mxu0 0.0
  %6520 = vmatprep.subr.mxu0 0.0
  %6521 = vmatpush1.msra.mxu0 0.0
  %6522 = vmatprep.subr.mxu0 0.0
  %6523 = vmatpush1.msra.mxu0 0.0
  %6524 = vmatprep.subr.mxu0 0.0
  %6525 = vmatpush1.msra.mxu0 0.0
  %6526 = vmatprep.subr.mxu0 0.0
  %6527 = vmatpush1.msra.mxu0 0.0
  %6528 = vmatprep.subr.mxu0 0.0
  %6529 = vmatpush1.msra.mxu0 0.0
  %6530 = vmatprep.mubr.f32.mxu0 0.0
  %6531 = vmatmul.mubr.f32.gmra.mrb[0].mxu0 %v6464
  %v6532 = vpop.f32.mrb[0].mxu0
  %v6533 = vadd.f32 %v6459, %v6532
  %v6534 = vpop.f32.mrb[0].mxu0
  %6535 = vdwg.mxu0
  %v6536 = vmul.f32 %v6533, 0.5
  %v6537 = vtanh.pop %v6536
  %v6538 = vmul.f32 %v6537, 0.5
  %v6539 = vadd.f32 %v6538, 0.5
  %v6540 = vtanh.pop %v6533
  %v6541 = vld [vmem:[%s18] sm:$0xff]
  %v6542 = vld [vmem:[%s18 + $0x8] sm:$0xff]
  %v6543 = vld [vmem:[%s18 + $0x10] sm:$0xff]
  %v6544 = vld [vmem:[%s18 + $0x18] sm:$0xff]
  %v6545 = vld [vmem:[%s18 + $0x20] sm:$0xff]
  %v6546 = vld [vmem:[%s18 + $0x28] sm:$0xff]
  %v6547 = vld [vmem:[%s18 + $0x30] sm:$0xff]
  %v6548 = vld [vmem:[%s18 + $0x38] sm:$0xff]
  %v6549 = vld [vmem:[%s18 + $0x40] sm:$0xff]
  %v6550 = vld [vmem:[%s18 + $0x48] sm:$0xff]
  %v6551 = vld [vmem:[%s19] sm:$0x1]
  %v6553 = vlaneseq
  %v6554 = vshrl.u32 %v6553, 7
  %v6555 = vsub.s32 0, %v6554
  %v6556 = vrot.slane %v6551, %v6555
  %v6559 = vsel %vm2633, %v6539, 0
  %6561 = vmatprep.subr.mxu0 0.0
  %6562 = vmatpush1.msra.mxu0 %v6541
  %6563 = vmatprep.subr.mxu0 0.0
  %6564 = vmatpush1.msra.mxu0 %v6542
  %6565 = vmatprep.subr.mxu0 0.0
  %6566 = vmatpush1.msra.mxu0 %v6543
  %6567 = vmatprep.subr.mxu0 0.0
  %6568 = vmatpush1.msra.mxu0 %v6544
  %6569 = vmatprep.subr.mxu0 0.0
  %6570 = vmatpush1.msra.mxu0 %v6545
  %6571 = vmatprep.subr.mxu0 0.0
  %6572 = vmatpush1.msra.mxu0 %v6546
  %6573 = vmatprep.subr.mxu0 0.0
  %6574 = vmatpush1.msra.mxu0 %v6547
  %6575 = vmatprep.subr.mxu0 0.0
  %6576 = vmatpush1.msra.mxu0 %v6548
  %6577 = vmatprep.subr.mxu0 0.0
  %6578 = vmatpush1.msra.mxu0 %v6549
  %6579 = vmatprep.subr.mxu0 0.0
  %6580 = vmatpush1.msra.mxu0 %v6550
  %6581 = vmatprep.subr.mxu0 0.0
  %6582 = vmatpush1.msra.mxu0 0.0
  %6583 = vmatprep.subr.mxu0 0.0
  %6584 = vmatpush1.msra.mxu0 0.0
  %6585 = vmatprep.subr.mxu0 0.0
  %6586 = vmatpush1.msra.mxu0 0.0
  %6587 = vmatprep.subr.mxu0 0.0
  %6588 = vmatpush1.msra.mxu0 0.0
  %6589 = vmatprep.subr.mxu0 0.0
  %6590 = vmatpush1.msra.mxu0 0.0
  %6591 = vmatprep.subr.mxu0 0.0
  %6592 = vmatpush1.msra.mxu0 0.0
  %6593 = vmatprep.subr.mxu0 0.0
  %6594 = vmatpush1.msra.mxu0 0.0
  %6595 = vmatprep.subr.mxu0 0.0
  %6596 = vmatpush1.msra.mxu0 0.0
  %6597 = vmatprep.subr.mxu0 0.0
  %6598 = vmatpush1.msra.mxu0 0.0
  %6599 = vmatprep.subr.mxu0 0.0
  %6600 = vmatpush1.msra.mxu0 0.0
  %6601 = vmatprep.subr.mxu0 0.0
  %6602 = vmatpush1.msra.mxu0 0.0
  %6603 = vmatprep.subr.mxu0 0.0
  %6604 = vmatpush1.msra.mxu0 0.0
  %6605 = vmatprep.subr.mxu0 0.0
  %6606 = vmatpush1.msra.mxu0 0.0
  %6607 = vmatprep.subr.mxu0 0.0
  %6608 = vmatpush1.msra.mxu0 0.0
  %6609 = vmatprep.subr.mxu0 0.0
  %6610 = vmatpush1.msra.mxu0 0.0
  %6611 = vmatprep.subr.mxu0 0.0
  %6612 = vmatpush1.msra.mxu0 0.0
  %6613 = vmatprep.subr.mxu0 0.0
  %6614 = vmatpush1.msra.mxu0 0.0
  %6615 = vmatprep.subr.mxu0 0.0
  %6616 = vmatpush1.msra.mxu0 0.0
  %6617 = vmatprep.subr.mxu0 0.0
  %6618 = vmatpush1.msra.mxu0 0.0
  %6619 = vmatprep.subr.mxu0 0.0
  %6620 = vmatpush1.msra.mxu0 0.0
  %6621 = vmatprep.subr.mxu0 0.0
  %6622 = vmatpush1.msra.mxu0 0.0
  %6623 = vmatprep.subr.mxu0 0.0
  %6624 = vmatpush1.msra.mxu0 0.0
  %6625 = vmatprep.mubr.f32.mxu0 0.0
  %6626 = vmatmul.mubr.f32.gmra.mrb[0].mxu0 %v6559
  %v6627 = vpop.f32.mrb[0].mxu0
  %v6628 = vadd.f32 %v6556, %v6627
  %v6629 = vpop.f32.mrb[0].mxu0
  %6630 = vdwg.mxu0
  %v6631 = vmax.f32 %v6628, -1.5
  %v6632 = vmin.f32 %v6631, 1.5
  %v6633 = vadd.f32 %v6632, %v6338
  %v6634 = vmul.f32 %v6628, 1.442695
  %v6635 = vpow.pop %v6634
  %v6636 = vmax.f32 %v6635, 0.031622775
  %v6637 = vmin.f32 %v6636, 31.622776
  %v6638 = vsel %vm2382, %v6633, %v6637
  %s6639 = scalar_lea.vmem %s1, 96
  %v6640 = vld [vmem:[%s6639] sm:$0xff]
  %v6641 = vadd.f32 %v2286, %v6640
  %v6642 = vsel %vm2262, %v6641, -inf
  %6643 = vmax.xlane.f32.xlu0 %v6642
  %v6644 = vpop.xlane.xlu0 %6643
  %vm6645 = vcmp.ge.f32.partialorder %v6641, %v6644
  %v6646 = vsel %vm6645, %v2260, 20.0
  %v6647 = vsel %vm2262, %v6646, inf
  %6648 = vmin.xlane.f32.xlu0 %v6647
  %v6649 = vpop.xlane.xlu0 %6648
  %vm6650 = vcmp.eq.f32.partialorder %v2386, %v6649
  %v6651 = vsel %vm6650, 1, 0
  %v6652 = vcvt.s32.f32 %v6651
  %6654 = vset.pattern.permute.xlu0 20
  %6655 = vperm.xlu0 %6654, %v6640
  %v6656 = vpop.permute.xlu0 %6655
  %6658 = vset.pattern.permute.xlu0 21
  %6659 = vperm.xlu0 %6658, %v6640
  %v6660 = vpop.permute.xlu0 %6659
  %v6662 = vsel %vm2383, %v6656, %v6660
  %6664 = vrot.lane.b32.xlu0 %v6662, 40
  %v6665 = vpop.permute.xlu0 %6664
  %v6667 = vmul.f32 %v6638, %v6665
  %6669 = vrot.lane.b32.xlu0 %v6667, 88
  %v6670 = vpop.permute.xlu0 %6669
  %v6672 = vadd.f32 %v6638, %v6670
  %v6673 = vmul.f32 %v6652, %v6672
  %v6674 = vsel %vm2262, %v6673, 0.0
  %6675 = vadd.xlane.f32.xlu0 %v6674
  %v6676 = vpop.xlane.xlu0 %6675
  %6678 = vrot.lane.b32.xlu0 %v6673, 108
  %v6679 = vpop.permute.xlu0 %6678
  %v6681 = vsel %vm2262, %v6679, 0.0
  %6682 = vadd.xlane.f32.xlu0 %v6681
  %v6683 = vpop.xlane.xlu0 %6682
  %v6684 = vsel %vm2760, %v6676, %v6683
  %6686 = vrot.lane.b32.xlu0 %v6684, 100
  %v6687 = vpop.permute.xlu0 %6686
  %v6689 = vsel %vm2633, %v6638, %v6540
  %v6690 = vsel %vm2771, %v6689, %v6687
  %v6691 = vsel %vm2773, %v6690, 0.0
  %s6692 = scalar_lea.vmem %s20, 88
  %6693 = vst [vmem:[%s6692] sm:$0xff] %v6691
  // Predicated region
  $region82: #{cvae_future_forward.3} parent=0 // pred_check
    _
  $region83: #{cvae_future_forward.3} parent=0 // pred_check_branch
    %6695 = sbr.rel (0) target = $region85
  $region84: #{cvae_future_forward.3} parent=0 // pred_region
    _
  $region85: #{cvae_future_forward.3} parent=0 // pred_fallthru
    _
  // Predicated region
  $region86: #{cvae_future_forward.3} parent=0 // pred_check
    _
  $region87: #{cvae_future_forward.3} parent=0 // pred_check_branch
    %6697 = sbr.rel (0) target = $region89
  $region88: #{cvae_future_forward.3} parent=0 // pred_region
    _
  $region89: #{cvae_future_forward.3} parent=0 // pred_fallthru
    _

</llo_original>
